<compile_context>
chip_gen: v7x
topology: tpu7x:2x2x1
jax: 0.10.0
libtpu: 0.0.40
codegen_flags: <defaults>
</compile_context>

<pallas_src>
import functools

import jax
import jax.numpy as jnp
from jax.experimental import pallas as pl
from jax.experimental.pallas import tpu as pltpu


LEAKY_SLOPE = 0.2
BN_EPS = 1e-5
_VMEM_LIMIT = 32 * 1024 * 1024   # scoped VMEM budget: safe on v5e/v6e and v7x (64 MiB)
_TM_MAX = 1024                   # max rows per M tile (per-step set stays << limit)


def _round_up(x, m):
    return (x + m - 1) // m * m


def _choose_tm(m, tm_max=_TM_MAX):
    """Largest multiple of 8 that divides m and is <= tm_max, preferring >= 2 tiles."""
    assert m % 8 == 0
    cap = min(tm_max, m)
    if m >= 16:
        cap = min(cap, m // 2)       # keep >= 2 grid steps so v7x megacore has work
    best = 8
    t = 8
    while t <= cap:
        if m % t == 0:
            best = t
        t += 8
    return best


# ---------------------------------------------------------------------------
# Kernel 1: conv-as-matmul  (patches[M,K] @ W[K,Cp])  with
#   - optional fused per-K-column affine + LeakyReLU prologue (previous layer's
#     BatchNorm apply, expanded along the patch-K axis),
#   - optional fused LeakyReLU epilogue (f32),
#   - optional fused BatchNorm partial statistics (per-channel sum / sumsq per
#     M tile) emitted as a small lane-dense extra output.
# ---------------------------------------------------------------------------
def _conv_mm_kernel(*refs, has_prologue, emit_stats, apply_act, negative_slope):
    if has_prologue:
        x_ref, scale_ref, shift_ref, w_ref, *out_refs = refs
    else:
        x_ref, w_ref, *out_refs = refs
        scale_ref = shift_ref = None
    if emit_stats:
        o_ref, stats_ref = out_refs
    else:
        (o_ref,) = out_refs

    x = x_ref[...]
    if has_prologue:                       # BN scale/shift + LeakyReLU on the patch tile
        xf = x.astype(jnp.float32) * scale_ref[...] + shift_ref[...]
        xf = jnp.where(xf >= 0, xf, negative_slope * xf)
        x = xf.astype(jnp.bfloat16)

    acc = jnp.dot(x, w_ref[...], preferred_element_type=jnp.float32)

    if emit_stats:                         # fused BN partial statistics (f32)
        cp = acc.shape[1]
        s1 = jnp.sum(acc, axis=0, keepdims=True)         # [1, Cp]  sum
        s2 = jnp.sum(acc * acc, axis=0, keepdims=True)   # [1, Cp]  sum of squares
        row = jax.lax.broadcasted_iota(jnp.int32, (8, cp), 0)
        stats_ref[0] = jnp.where(row == 0, s1, 0.0) + jnp.where(row == 1, s2, 0.0)

    if apply_act:                          # fused LeakyReLU epilogue (f32)
        acc = jnp.where(acc >= 0, acc, negative_slope * acc)
    o_ref[...] = acc.astype(o_ref.dtype)


def conv_matmul_pallas(patches, w_mat_padded, *, apply_act, emit_stats,
                       prologue=None, out_dtype=jnp.bfloat16,
                       negative_slope=LEAKY_SLOPE, tm_max=_TM_MAX):
    """patches [M,K] (bf16) @ w [K,Cp] (bf16, Cp%128==0) -> (out [Mp,Cp], stats|None)."""
    M, K = patches.shape
    K2, c_pad = w_mat_padded.shape
    assert K == K2 and c_pad % 128 == 0

    patches = patches.astype(jnp.bfloat16)          # no-op when already bf16
    m_pad = _round_up(M, 8)                         # only the tiny last layer pads
    if m_pad != M:
        patches = jnp.pad(patches, ((0, m_pad - M), (0, 0)))
    tm = _choose_tm(m_pad, tm_max)
    n_tiles = m_pad // tm

    inputs = [patches]
    in_specs = [pl.BlockSpec((tm, K), lambda i: (i, 0))]          # pipelined patch tile
    if prologue is not None:
        scale_k, shift_k = prologue
        inputs += [scale_k.reshape(1, K).astype(jnp.float32),
                   shift_k.reshape(1, K).astype(jnp.float32)]
        in_specs += [pl.BlockSpec((1, K), lambda i: (0, 0)),
                     pl.BlockSpec((1, K), lambda i: (0, 0))]
    inputs.append(w_mat_padded.astype(jnp.bfloat16))
    in_specs.append(pl.BlockSpec((K, c_pad), lambda i: (0, 0)))   # weights resident

    if emit_stats:
        out_shape = (jax.ShapeDtypeStruct((m_pad, c_pad), out_dtype),
                     jax.ShapeDtypeStruct((n_tiles, 8, c_pad), jnp.float32))
        out_specs = (pl.BlockSpec((tm, c_pad), lambda i: (i, 0)),
                     pl.BlockSpec((1, 8, c_pad), lambda i: (i, 0, 0)))
    else:
        out_shape = jax.ShapeDtypeStruct((m_pad, c_pad), out_dtype)
        out_specs = pl.BlockSpec((tm, c_pad), lambda i: (i, 0))

    kernel = functools.partial(_conv_mm_kernel,
                               has_prologue=prologue is not None,
                               emit_stats=emit_stats,
                               apply_act=apply_act,
                               negative_slope=negative_slope)
    out = pl.pallas_call(
        kernel,
        out_shape=out_shape,
        grid_spec=pltpu.PrefetchScalarGridSpec(
            num_scalar_prefetch=0,
            grid=(n_tiles,),
            in_specs=in_specs,
            out_specs=out_specs,
        ),
        compiler_params=pltpu.CompilerParams(
            dimension_semantics=("parallel",),
            vmem_limit_bytes=_VMEM_LIMIT,
        ),
    )(*inputs)

    if emit_stats:
        return out            # (y_pad, stats)
    return out, None


# ---------------------------------------------------------------------------
# Kernel 2: per-channel affine (precomputed BN scale/shift) + LeakyReLU.
# Only needed before convs with spatial zero padding (layer 2 -> layer 3).
# bf16 in / bf16 out, f32 math.
# ---------------------------------------------------------------------------
def _bn_lrelu_kernel(y_ref, scale_ref, shift_ref, o_ref, *, negative_slope):
    y = y_ref[...].astype(jnp.float32) * scale_ref[...] + shift_ref[...]
    y = jnp.where(y >= 0, y, negative_slope * y)
    o_ref[...] = y.astype(o_ref.dtype)


def bn_lrelu_pallas(y_pad, scale_pad, shift_pad,
                    *, negative_slope=LEAKY_SLOPE, tm_max=_TM_MAX):
    m_pad, c_pad = y_pad.shape
    tm = _choose_tm(m_pad, tm_max)
    n_tiles = m_pad // tm
    scale2 = scale_pad.reshape(1, c_pad).astype(jnp.float32)
    shift2 = shift_pad.reshape(1, c_pad).astype(jnp.float32)
    kernel = functools.partial(_bn_lrelu_kernel, negative_slope=negative_slope)
    return pl.pallas_call(
        kernel,
        out_shape=jax.ShapeDtypeStruct((m_pad, c_pad), jnp.bfloat16),
        grid_spec=pltpu.PrefetchScalarGridSpec(
            num_scalar_prefetch=0,
            grid=(n_tiles,),
            in_specs=[
                pl.BlockSpec((tm, c_pad), lambda i: (i, 0)),
                pl.BlockSpec((1, c_pad), lambda i: (0, 0)),
                pl.BlockSpec((1, c_pad), lambda i: (0, 0)),
            ],
            out_specs=pl.BlockSpec((tm, c_pad), lambda i: (i, 0)),
        ),
        compiler_params=pltpu.CompilerParams(
            dimension_semantics=("parallel",),
            vmem_limit_bytes=_VMEM_LIMIT,
        ),
    )(y_pad, scale2, shift2)


# ---------------------------------------------------------------------------
# Plain-JAX glue
# ---------------------------------------------------------------------------
def im2col(x_nhwc, k, stride, pad):
    """Extract conv patches (kept in x's dtype). Returns ([N*Ho*Wo, k*k*Cin], (N,Ho,Wo))."""
    # TODO(synk): patch extraction is still materialized in HBM; moving it into the
    # conv kernel (NHWC input with memory_space=pl.ANY + manual strided DMA per tile)
    # is the remaining traffic win.
    N, H, W, C = x_nhwc.shape
    xp = jnp.pad(x_nhwc, ((0, 0), (pad, pad), (pad, pad), (0, 0)))
    Ho = (H + 2 * pad - k) // stride + 1
    Wo = (W + 2 * pad - k) // stride + 1
    cols = []
    for i in range(k):
        for j in range(k):
            cols.append(
                xp[:, i:i + stride * Ho:stride, j:j + stride * Wo:stride, :]
            )
    patches = jnp.stack(cols, axis=3)                 # [N, Ho, Wo, k*k, C]
    return patches.reshape(N * Ho * Wo, k * k * C), (N, Ho, Wo)


def _weight_matrix(w_oihw):
    """PyTorch [Cout, Cin, kh, kw] -> [kh*kw*Cin, Cout] (matches im2col ordering)."""
    cout, cin, kh, kw = w_oihw.shape
    return jnp.transpose(w_oihw, (2, 3, 1, 0)).reshape(kh * kw * cin, cout)


def _bn_scale_shift(stats, m_rows, c, gamma, beta, eps=BN_EPS):
    """Reduce per-tile partial stats -> per-channel (scale, shift) in f32."""
    total = jnp.sum(stats[:, 0, :c], axis=0)
    total_sq = jnp.sum(stats[:, 1, :c], axis=0)
    mean = total / m_rows
    var = jnp.maximum(total_sq / m_rows - mean * mean, 0.0)   # biased var (PyTorch BN)
    scale = gamma * jax.lax.rsqrt(var + eps)
    shift = beta - mean * scale
    return scale, shift


def _pad_channels(v, c_pad):
    c = v.shape[0]
    if c_pad != c:
        v = jnp.pad(v, (0, c_pad - c))
    return v


def init_encoder_params(key, z_size, channels=3, std=0.02):
    """Synthetic init matching Encoder.weight_init(0, 0.02): normal conv weights,
    BN gamma=1 / beta=0."""
    ks = jax.random.split(key, 4)
    p = {}
    p["w1"] = std * jax.random.normal(ks[0], (64, channels, 4, 4), jnp.float32)
    p["w2"] = std * jax.random.normal(ks[1], (128, 64, 4, 4), jnp.float32)
    p["w3"] = std * jax.random.normal(ks[2], (256, 128, 4, 4), jnp.float32)
    p["w4"] = std * jax.random.normal(ks[3], (z_size, 256, 4, 4), jnp.float32)
    p["bn2_gamma"] = jnp.ones((128,), jnp.float32)
    p["bn2_beta"] = jnp.zeros((128,), jnp.float32)
    p["bn3_gamma"] = jnp.ones((256,), jnp.float32)
    p["bn3_beta"] = jnp.zeros((256,), jnp.float32)
    return p


def prepare_params(params):
    """One-time preprocessing hoisted off the forward path:
    weight transpose -> matmul layout, bf16 cast, lane (Cout) padding."""
    prep = {"bn2_gamma": params["bn2_gamma"], "bn2_beta": params["bn2_beta"],
            "bn3_gamma": params["bn3_gamma"], "bn3_beta": params["bn3_beta"]}
    for idx, name in enumerate(("w1", "w2", "w3", "w4"), start=1):
        wm = _weight_matrix(params[name]).astype(jnp.bfloat16)
        cout = wm.shape[1]
        c_pad = _round_up(cout, 128)
        if c_pad != cout:
            wm = jnp.pad(wm, ((0, 0), (0, c_pad - cout)))
        prep[f"wm{idx}"] = wm
        prep[f"cout{idx}"] = cout          # static python int (forward is closed over prep)
    return prep


def encoder_forward(prep, x_nchw):
    """Matches Encoder.forward: Sequential(...)(x).view(-1). Input is NCHW f32."""
    # NCHW -> NHWC, bf16 *before* im2col so patches are produced directly in bf16.
    x = jnp.transpose(x_nchw, (0, 2, 3, 1)).astype(jnp.bfloat16)

    # --- Conv2d(ch, 64, 4, 2, 1) + LeakyReLU(0.2)  (activation fused, bf16 out) ---
    patches, (n, ho, wo) = im2col(x, 4, 2, 1)
    y_pad, _ = conv_matmul_pallas(patches, prep["wm1"],
                                  apply_act=True, emit_stats=False,
                                  out_dtype=jnp.bfloat16)
    m, c = n * ho * wo, prep["cout1"]
    x = y_pad[:m, :c].reshape(n, ho, wo, c)

    # --- Conv2d(64, 128, 4, 2, 1) -> BatchNorm2d(128) -> LeakyReLU(0.2) ---
    patches, (n, ho, wo) = im2col(x, 4, 2, 1)
    y_pad, stats = conv_matmul_pallas(patches, prep["wm2"],
                                      apply_act=False, emit_stats=True,
                                      out_dtype=jnp.bfloat16)
    m, c = n * ho * wo, prep["cout2"]
    scale2, shift2 = _bn_scale_shift(stats, m, c,
                                     prep["bn2_gamma"], prep["bn2_beta"])
    c_pad = y_pad.shape[1]
    # TODO(synk): fusing this BN apply into conv3's prologue needs per-channel
    # (non-zero) spatial padding values so padded borders stay 0 after the affine;
    # kept as a tiny separate lane-dense pass for exactness.
    y_pad = bn_lrelu_pallas(y_pad, _pad_channels(scale2, c_pad),
                            _pad_channels(shift2, c_pad))
    x = y_pad[:m, :c].reshape(n, ho, wo, c)

    # --- Conv2d(128, 256, 4, 2, 1) -> (BN3 stats only; apply fused into conv4) ---
    patches, (n, ho, wo) = im2col(x, 4, 2, 1)
    y_pad, stats = conv_matmul_pallas(patches, prep["wm3"],
                                      apply_act=False, emit_stats=True,
                                      out_dtype=jnp.bfloat16)
    m, c = n * ho * wo, prep["cout3"]
    scale3, shift3 = _bn_scale_shift(stats, m, c,
                                     prep["bn3_gamma"], prep["bn3_beta"])
    x = y_pad[:m, :c].reshape(n, ho, wo, c)          # raw conv3 output (pre-BN), bf16

    # --- Conv2d(256, z, 4, 1, 0) with BN3 + LeakyReLU fused into the prologue ---
    # (pad=0 => no zero-padding issue; scale/shift expanded along the K axis).
    patches, (n, ho, wo) = im2col(x, 4, 1, 0)
    kk = 16
    scale_k = jnp.tile(scale3, kk)                   # K ordering is (i,j) outer, channel inner
    shift_k = jnp.tile(shift3, kk)
    y_pad, _ = conv_matmul_pallas(patches, prep["wm4"],
                                  apply_act=False, emit_stats=False,
                                  prologue=(scale_k, shift_k),
                                  out_dtype=jnp.float32)
    z = prep["cout4"]
    m = n * ho * wo
    y = y_pad[:m, :z].reshape(n, ho, wo, z)
    # PyTorch output is NCHW [N, z, Ho, Wo].view(-1)  (Ho=Wo=1 for 32x32 input).
    return jnp.transpose(y, (0, 3, 1, 2)).reshape(-1)


if __name__ == "__main__":
    key = jax.random.PRNGKey(0)
    k_param, k_x = jax.random.split(key)

    z_size = 32
    channels = 3
    batch = 2
    spatial = 32  # architecture implies 32x32 input (CIFAR) so the final conv is 1x1

    params = init_encoder_params(k_param, z_size, channels)
    prep = prepare_params(params)                         # one-time weight preprocessing
    x = jax.random.normal(k_x, (batch, channels, spatial, spatial), jnp.float32)  # NCHW

    fwd = jax.jit(functools.partial(encoder_forward, prep))
    out = jax.block_until_ready(fwd(x))
    assert out.shape == (batch * z_size,), out.shape
    assert jnp.all(jnp.isfinite(out))
    print("KERNEL_OK")
</pallas_src>

<mosaic_0001>
module attributes {stable_mosaic.version = 11 : i64} {
  func.func @_conv_mm_kernel(%arg0: i32, %arg1: memref<256x48xbf16, #tpu.memory_space<vmem>>, %arg2: memref<48x128xbf16, #tpu.memory_space<vmem>>, %arg3: memref<256x128xbf16, #tpu.memory_space<vmem>>) attributes {dimension_semantics = [#tpu.dimension_semantics<parallel>], iteration_bounds = array<i64: 2>, scalar_prefetch = 0 : i64, scratch_operands = 0 : i64, tpu.core_type = #tpu.core_type<tc>, window_params = [{transform_indices = @transform_0, window_bounds = array<i64: 256, 48>}, {pipeline_mode = #tpu.pipeline_mode<synchronous>, transform_indices = @transform_1, window_bounds = array<i64: 48, 128>}, {transform_indices = @transform_2, window_bounds = array<i64: 256, 128>}]} {
    %c0 = arith.constant 0 : index
    %c0_0 = arith.constant 0 : index
    %0 = vector.load %arg1[%c0, %c0_0] : memref<256x48xbf16, #tpu.memory_space<vmem>>, vector<256x48xbf16>
    %c0_1 = arith.constant 0 : index
    %c0_2 = arith.constant 0 : index
    %1 = vector.load %arg2[%c0_1, %c0_2] : memref<48x128xbf16, #tpu.memory_space<vmem>>, vector<48x128xbf16>
    %cst = arith.constant dense<0.000000e+00> : vector<256x128xf32>
    %2 = tpu.matmul %0, %1, %cst {dimension_numbers = #tpu.dot_dimension_numbers<[1], [0], [0], [1], [0, 0, 1, 1], [], []>} : vector<256x48xbf16>, vector<48x128xbf16>, vector<256x128xf32> -> vector<256x128xf32>
    %cst_3 = arith.constant 0.000000e+00 : f32
    %3 = vector.broadcast %cst_3 : f32 to vector<256x128xf32>
    %4 = arith.cmpf oge, %2, %3 : vector<256x128xf32>
    %cst_4 = arith.constant 2.000000e-01 : f32
    %5 = vector.broadcast %cst_4 : f32 to vector<256x128xf32>
    %6 = arith.mulf %5, %2 : vector<256x128xf32>
    %7 = arith.select %4, %2, %6 : vector<256x128xi1>, vector<256x128xf32>
    %8 = arith.truncf %7 : vector<256x128xf32> to vector<256x128xbf16>
    %c0_5 = arith.constant 0 : index
    %c0_6 = arith.constant 0 : index
    %9 = vector.load %arg3[%c0_5, %c0_6] : memref<256x128xbf16, #tpu.memory_space<vmem>>, vector<256x128xbf16>
    tpu.vector_store %arg3[%c0_5, %c0_6], %8 {strides = array<i32>} : memref<256x128xbf16, #tpu.memory_space<vmem>>, vector<256x128xbf16>,
    return
  }
  func.func @transform_0(%arg0: i32) -> (i32, i32) {
    %c0_i32 = arith.constant 0 : i32
    %c0_i32_0 = arith.constant 0 : i32
    return %arg0, %c0_i32 : i32, i32
  }
  func.func @transform_1(%arg0: i32) -> (i32, i32) {
    %c0_i32 = arith.constant 0 : i32
    %c0_i32_0 = arith.constant 0 : i32
    %c0_i32_1 = arith.constant 0 : i32
    return %c0_i32, %c0_i32_0 : i32, i32
  }
  func.func @transform_2(%arg0: i32) -> (i32, i32) {
    %c0_i32 = arith.constant 0 : i32
    %c0_i32_0 = arith.constant 0 : i32
    return %arg0, %c0_i32 : i32, i32
  }
}

module attributes {stable_mosaic.version = 11 : i64} {
  func.func @_conv_mm_kernel(%arg0: i32, %arg1: memref<64x1024xbf16, #tpu.memory_space<vmem>>, %arg2: memref<1024x128xbf16, #tpu.memory_space<vmem>>, %arg3: memref<64x128xbf16, #tpu.memory_space<vmem>>, %arg4: memref<1x8x128xf32, #tpu.memory_space<vmem>>) attributes {dimension_semantics = [#tpu.dimension_semantics<parallel>], iteration_bounds = array<i64: 2>, scalar_prefetch = 0 : i64, scratch_operands = 0 : i64, tpu.core_type = #tpu.core_type<tc>, window_params = [{transform_indices = @transform_0, window_bounds = array<i64: 64, 1024>}, {pipeline_mode = #tpu.pipeline_mode<synchronous>, transform_indices = @transform_1, window_bounds = array<i64: 1024, 128>}, {transform_indices = @transform_2, window_bounds = array<i64: 64, 128>}, {transform_indices = @transform_3, window_bounds = array<i64: 1, 8, 128>}]} {
    %c0 = arith.constant 0 : index
    %c0_0 = arith.constant 0 : index
    %0 = vector.load %arg1[%c0, %c0_0] : memref<64x1024xbf16, #tpu.memory_space<vmem>>, vector<64x1024xbf16>
    %c0_1 = arith.constant 0 : index
    %c0_2 = arith.constant 0 : index
    %1 = vector.load %arg2[%c0_1, %c0_2] : memref<1024x128xbf16, #tpu.memory_space<vmem>>, vector<1024x128xbf16>
    %cst = arith.constant dense<0.000000e+00> : vector<64x128xf32>
    %2 = tpu.matmul %0, %1, %cst {dimension_numbers = #tpu.dot_dimension_numbers<[1], [0], [0], [1], [0, 0, 1, 1], [], []>} : vector<64x1024xbf16>, vector<1024x128xbf16>, vector<64x128xf32> -> vector<64x128xf32>
    %cst_3 = arith.constant dense<0.000000e+00> : vector<128xf32>
    %3 = vector.multi_reduction <add>, %2, %cst_3 [0] : vector<64x128xf32> to vector<128xf32>
    %4 = vector.shape_cast %3 : vector<128xf32> to vector<1x128xf32>
    %5 = arith.mulf %2, %2 : vector<64x128xf32>
    %cst_4 = arith.constant dense<0.000000e+00> : vector<128xf32>
    %6 = vector.multi_reduction <add>, %5, %cst_4 [0] : vector<64x128xf32> to vector<128xf32>
    %7 = vector.shape_cast %6 : vector<128xf32> to vector<1x128xf32>
    %8 = tpu.iota {dimensions = array<i32: 0>} : vector<8x128xi32>
    %c0_i32 = arith.constant 0 : i32
    %9 = vector.broadcast %c0_i32 : i32 to vector<8x128xi32>
    %10 = arith.cmpi eq, %8, %9 : vector<8x128xi32>
    %cst_5 = arith.constant 0.000000e+00 : f32
    %11 = vector.shape_cast %4 : vector<1x128xf32> to vector<1x128xf32>
    %12 = vector.broadcast %11 : vector<1x128xf32> to vector<8x128xf32>
    %13 = vector.broadcast %cst_5 : f32 to vector<8x128xf32>
    %14 = arith.select %10, %12, %13 : vector<8x128xi1>, vector<8x128xf32>
    %c1_i32 = arith.constant 1 : i32
    %15 = vector.broadcast %c1_i32 : i32 to vector<8x128xi32>
    %16 = arith.cmpi eq, %8, %15 : vector<8x128xi32>
    %cst_6 = arith.constant 0.000000e+00 : f32
    %17 = vector.shape_cast %7 : vector<1x128xf32> to vector<1x128xf32>
    %18 = vector.broadcast %17 : vector<1x128xf32> to vector<8x128xf32>
    %19 = vector.broadcast %cst_6 : f32 to vector<8x128xf32>
    %20 = arith.select %16, %18, %19 : vector<8x128xi1>, vector<8x128xf32>
    %21 = arith.addf %14, %20 : vector<8x128xf32>
    %c0_7 = arith.constant 0 : index
    %c0_8 = arith.constant 0 : index
    %c0_9 = arith.constant 0 : index
    %22 = vector.load %arg4[%c0_7, %c0_8, %c0_9] : memref<1x8x128xf32, #tpu.memory_space<vmem>>, vector<1x8x128xf32>
    %23 = vector.shape_cast %22 : vector<1x8x128xf32> to vector<8x128xf32>
    %24 = vector.shape_cast %21 : vector<8x128xf32> to vector<1x8x128xf32>
    tpu.vector_store %arg4[%c0_7, %c0_8, %c0_9], %24 {strides = array<i32>} : memref<1x8x128xf32, #tpu.memory_space<vmem>>, vector<1x8x128xf32>,
    %25 = arith.truncf %2 : vector<64x128xf32> to vector<64x128xbf16>
    %c0_10 = arith.constant 0 : index
    %c0_11 = arith.constant 0 : index
    %26 = vector.load %arg3[%c0_10, %c0_11] : memref<64x128xbf16, #tpu.memory_space<vmem>>, vector<64x128xbf16>
    tpu.vector_store %arg3[%c0_10, %c0_11], %25 {strides = array<i32>} : memref<64x128xbf16, #tpu.memory_space<vmem>>, vector<64x128xbf16>,
    return
  }
  func.func @transform_0(%arg0: i32) -> (i32, i32) {
    %c0_i32 = arith.constant 0 : i32
    %c0_i32_0 = arith.constant 0 : i32
    return %arg0, %c0_i32 : i32, i32
  }
  func.func @transform_1(%arg0: i32) -> (i32, i32) {
    %c0_i32 = arith.constant 0 : i32
    %c0_i32_0 = arith.constant 0 : i32
    %c0_i32_1 = arith.constant 0 : i32
    return %c0_i32, %c0_i32_0 : i32, i32
  }
  func.func @transform_2(%arg0: i32) -> (i32, i32) {
    %c0_i32 = arith.constant 0 : i32
    %c0_i32_0 = arith.constant 0 : i32
    return %arg0, %c0_i32 : i32, i32
  }
  func.func @transform_3(%arg0: i32) -> (i32, i32, i32) {
    %c0_i32 = arith.constant 0 : i32
    %c0_i32_0 = arith.constant 0 : i32
    %c0_i32_1 = arith.constant 0 : i32
    return %arg0, %c0_i32, %c0_i32_0 : i32, i32, i32
  }
}

module attributes {stable_mosaic.version = 11 : i64} {
  func.func @_bn_lrelu_kernel(%arg0: i32, %arg1: memref<64x128xbf16, #tpu.memory_space<vmem>>, %arg2: memref<1x128xf32, #tpu.memory_space<vmem>>, %arg3: memref<1x128xf32, #tpu.memory_space<vmem>>, %arg4: memref<64x128xbf16, #tpu.memory_space<vmem>>) attributes {dimension_semantics = [#tpu.dimension_semantics<parallel>], iteration_bounds = array<i64: 2>, scalar_prefetch = 0 : i64, scratch_operands = 0 : i64, tpu.core_type = #tpu.core_type<tc>, window_params = [{transform_indices = @transform_0, window_bounds = array<i64: 64, 128>}, {pipeline_mode = #tpu.pipeline_mode<synchronous>, transform_indices = @transform_1, window_bounds = array<i64: 1, 128>}, {pipeline_mode = #tpu.pipeline_mode<synchronous>, transform_indices = @transform_2, window_bounds = array<i64: 1, 128>}, {transform_indices = @transform_3, window_bounds = array<i64: 64, 128>}]} {
    %c0 = arith.constant 0 : index
    %c0_0 = arith.constant 0 : index
    %0 = vector.load %arg1[%c0, %c0_0] : memref<64x128xbf16, #tpu.memory_space<vmem>>, vector<64x128xbf16>
    %1 = arith.extf %0 : vector<64x128xbf16> to vector<64x128xf32>
    %c0_1 = arith.constant 0 : index
    %c0_2 = arith.constant 0 : index
    %2 = vector.load %arg2[%c0_1, %c0_2] : memref<1x128xf32, #tpu.memory_space<vmem>>, vector<1x128xf32>
    %3 = vector.broadcast %2 : vector<1x128xf32> to vector<64x128xf32>
    %4 = arith.mulf %1, %3 : vector<64x128xf32>
    %c0_3 = arith.constant 0 : index
    %c0_4 = arith.constant 0 : index
    %5 = vector.load %arg3[%c0_3, %c0_4] : memref<1x128xf32, #tpu.memory_space<vmem>>, vector<1x128xf32>
    %6 = vector.broadcast %5 : vector<1x128xf32> to vector<64x128xf32>
    %7 = arith.addf %4, %6 : vector<64x128xf32>
    %cst = arith.constant 0.000000e+00 : f32
    %8 = vector.broadcast %cst : f32 to vector<64x128xf32>
    %9 = arith.cmpf oge, %7, %8 : vector<64x128xf32>
    %cst_5 = arith.constant 2.000000e-01 : f32
    %10 = vector.broadcast %cst_5 : f32 to vector<64x128xf32>
    %11 = arith.mulf %10, %7 : vector<64x128xf32>
    %12 = arith.select %9, %7, %11 : vector<64x128xi1>, vector<64x128xf32>
    %13 = arith.truncf %12 : vector<64x128xf32> to vector<64x128xbf16>
    %c0_6 = arith.constant 0 : index
    %c0_7 = arith.constant 0 : index
    %14 = vector.load %arg4[%c0_6, %c0_7] : memref<64x128xbf16, #tpu.memory_space<vmem>>, vector<64x128xbf16>
    tpu.vector_store %arg4[%c0_6, %c0_7], %13 {strides = array<i32>} : memref<64x128xbf16, #tpu.memory_space<vmem>>, vector<64x128xbf16>,
    return
  }
  func.func @transform_0(%arg0: i32) -> (i32, i32) {
    %c0_i32 = arith.constant 0 : i32
    %c0_i32_0 = arith.constant 0 : i32
    return %arg0, %c0_i32 : i32, i32
  }
  func.func @transform_1(%arg0: i32) -> (i32, i32) {
    %c0_i32 = arith.constant 0 : i32
    %c0_i32_0 = arith.constant 0 : i32
    %c0_i32_1 = arith.constant 0 : i32
    return %c0_i32, %c0_i32_0 : i32, i32
  }
  func.func @transform_2(%arg0: i32) -> (i32, i32) {
    %c0_i32 = arith.constant 0 : i32
    %c0_i32_0 = arith.constant 0 : i32
    %c0_i32_1 = arith.constant 0 : i32
    return %c0_i32, %c0_i32_0 : i32, i32
  }
  func.func @transform_3(%arg0: i32) -> (i32, i32) {
    %c0_i32 = arith.constant 0 : i32
    %c0_i32_0 = arith.constant 0 : i32
    return %arg0, %c0_i32 : i32, i32
  }
}

module attributes {stable_mosaic.version = 11 : i64} {
  func.func @_conv_mm_kernel(%arg0: i32, %arg1: memref<16x2048xbf16, #tpu.memory_space<vmem>>, %arg2: memref<2048x256xbf16, #tpu.memory_space<vmem>>, %arg3: memref<16x256xbf16, #tpu.memory_space<vmem>>, %arg4: memref<1x8x256xf32, #tpu.memory_space<vmem>>) attributes {dimension_semantics = [#tpu.dimension_semantics<parallel>], iteration_bounds = array<i64: 2>, scalar_prefetch = 0 : i64, scratch_operands = 0 : i64, tpu.core_type = #tpu.core_type<tc>, window_params = [{transform_indices = @transform_0, window_bounds = array<i64: 16, 2048>}, {pipeline_mode = #tpu.pipeline_mode<synchronous>, transform_indices = @transform_1, window_bounds = array<i64: 2048, 256>}, {transform_indices = @transform_2, window_bounds = array<i64: 16, 256>}, {transform_indices = @transform_3, window_bounds = array<i64: 1, 8, 256>}]} {
    %c0 = arith.constant 0 : index
    %c0_0 = arith.constant 0 : index
    %0 = vector.load %arg1[%c0, %c0_0] : memref<16x2048xbf16, #tpu.memory_space<vmem>>, vector<16x2048xbf16>
    %c0_1 = arith.constant 0 : index
    %c0_2 = arith.constant 0 : index
    %1 = vector.load %arg2[%c0_1, %c0_2] : memref<2048x256xbf16, #tpu.memory_space<vmem>>, vector<2048x256xbf16>
    %cst = arith.constant dense<0.000000e+00> : vector<16x256xf32>
    %2 = tpu.matmul %0, %1, %cst {dimension_numbers = #tpu.dot_dimension_numbers<[1], [0], [0], [1], [0, 0, 1, 1], [], []>} : vector<16x2048xbf16>, vector<2048x256xbf16>, vector<16x256xf32> -> vector<16x256xf32>
    %cst_3 = arith.constant dense<0.000000e+00> : vector<256xf32>
    %3 = vector.multi_reduction <add>, %2, %cst_3 [0] : vector<16x256xf32> to vector<256xf32>
    %4 = vector.shape_cast %3 : vector<256xf32> to vector<1x256xf32>
    %5 = arith.mulf %2, %2 : vector<16x256xf32>
    %cst_4 = arith.constant dense<0.000000e+00> : vector<256xf32>
    %6 = vector.multi_reduction <add>, %5, %cst_4 [0] : vector<16x256xf32> to vector<256xf32>
    %7 = vector.shape_cast %6 : vector<256xf32> to vector<1x256xf32>
    %8 = tpu.iota {dimensions = array<i32: 0>} : vector<8x256xi32>
    %c0_i32 = arith.constant 0 : i32
    %9 = vector.broadcast %c0_i32 : i32 to vector<8x256xi32>
    %10 = arith.cmpi eq, %8, %9 : vector<8x256xi32>
    %cst_5 = arith.constant 0.000000e+00 : f32
    %11 = vector.shape_cast %4 : vector<1x256xf32> to vector<1x256xf32>
    %12 = vector.broadcast %11 : vector<1x256xf32> to vector<8x256xf32>
    %13 = vector.broadcast %cst_5 : f32 to vector<8x256xf32>
    %14 = arith.select %10, %12, %13 : vector<8x256xi1>, vector<8x256xf32>
    %c1_i32 = arith.constant 1 : i32
    %15 = vector.broadcast %c1_i32 : i32 to vector<8x256xi32>
    %16 = arith.cmpi eq, %8, %15 : vector<8x256xi32>
    %cst_6 = arith.constant 0.000000e+00 : f32
    %17 = vector.shape_cast %7 : vector<1x256xf32> to vector<1x256xf32>
    %18 = vector.broadcast %17 : vector<1x256xf32> to vector<8x256xf32>
    %19 = vector.broadcast %cst_6 : f32 to vector<8x256xf32>
    %20 = arith.select %16, %18, %19 : vector<8x256xi1>, vector<8x256xf32>
    %21 = arith.addf %14, %20 : vector<8x256xf32>
    %c0_7 = arith.constant 0 : index
    %c0_8 = arith.constant 0 : index
    %c0_9 = arith.constant 0 : index
    %22 = vector.load %arg4[%c0_7, %c0_8, %c0_9] : memref<1x8x256xf32, #tpu.memory_space<vmem>>, vector<1x8x256xf32>
    %23 = vector.shape_cast %22 : vector<1x8x256xf32> to vector<8x256xf32>
    %24 = vector.shape_cast %21 : vector<8x256xf32> to vector<1x8x256xf32>
    tpu.vector_store %arg4[%c0_7, %c0_8, %c0_9], %24 {strides = array<i32>} : memref<1x8x256xf32, #tpu.memory_space<vmem>>, vector<1x8x256xf32>,
    %25 = arith.truncf %2 : vector<16x256xf32> to vector<16x256xbf16>
    %c0_10 = arith.constant 0 : index
    %c0_11 = arith.constant 0 : index
    %26 = vector.load %arg3[%c0_10, %c0_11] : memref<16x256xbf16, #tpu.memory_space<vmem>>, vector<16x256xbf16>
    tpu.vector_store %arg3[%c0_10, %c0_11], %25 {strides = array<i32>} : memref<16x256xbf16, #tpu.memory_space<vmem>>, vector<16x256xbf16>,
    return
  }
  func.func @transform_0(%arg0: i32) -> (i32, i32) {
    %c0_i32 = arith.constant 0 : i32
    %c0_i32_0 = arith.constant 0 : i32
    return %arg0, %c0_i32 : i32, i32
  }
  func.func @transform_1(%arg0: i32) -> (i32, i32) {
    %c0_i32 = arith.constant 0 : i32
    %c0_i32_0 = arith.constant 0 : i32
    %c0_i32_1 = arith.constant 0 : i32
    return %c0_i32, %c0_i32_0 : i32, i32
  }
  func.func @transform_2(%arg0: i32) -> (i32, i32) {
    %c0_i32 = arith.constant 0 : i32
    %c0_i32_0 = arith.constant 0 : i32
    return %arg0, %c0_i32 : i32, i32
  }
  func.func @transform_3(%arg0: i32) -> (i32, i32, i32) {
    %c0_i32 = arith.constant 0 : i32
    %c0_i32_0 = arith.constant 0 : i32
    %c0_i32_1 = arith.constant 0 : i32
    return %arg0, %c0_i32, %c0_i32_0 : i32, i32, i32
  }
}

module attributes {stable_mosaic.version = 11 : i64} {
  func.func @_conv_mm_kernel(%arg0: i32, %arg1: memref<8x4096xbf16, #tpu.memory_space<vmem>>, %arg2: memref<1x4096xf32, #tpu.memory_space<vmem>>, %arg3: memref<1x4096xf32, #tpu.memory_space<vmem>>, %arg4: memref<4096x128xbf16, #tpu.memory_space<vmem>>, %arg5: memref<8x128xf32, #tpu.memory_space<vmem>>) attributes {dimension_semantics = [#tpu.dimension_semantics<parallel>], iteration_bounds = array<i64: 1>, scalar_prefetch = 0 : i64, scratch_operands = 0 : i64, tpu.core_type = #tpu.core_type<tc>, window_params = [{transform_indices = @transform_0, window_bounds = array<i64: 8, 4096>}, {pipeline_mode = #tpu.pipeline_mode<synchronous>, transform_indices = @transform_1, window_bounds = array<i64: 1, 4096>}, {pipeline_mode = #tpu.pipeline_mode<synchronous>, transform_indices = @transform_2, window_bounds = array<i64: 1, 4096>}, {pipeline_mode = #tpu.pipeline_mode<synchronous>, transform_indices = @transform_3, window_bounds = array<i64: 4096, 128>}, {transform_indices = @transform_4, window_bounds = array<i64: 8, 128>}]} {
    %c0 = arith.constant 0 : index
    %c0_0 = arith.constant 0 : index
    %0 = vector.load %arg1[%c0, %c0_0] : memref<8x4096xbf16, #tpu.memory_space<vmem>>, vector<8x4096xbf16>
    %1 = arith.extf %0 : vector<8x4096xbf16> to vector<8x4096xf32>
    %c0_1 = arith.constant 0 : index
    %c0_2 = arith.constant 0 : index
    %2 = vector.load %arg2[%c0_1, %c0_2] : memref<1x4096xf32, #tpu.memory_space<vmem>>, vector<1x4096xf32>
    %3 = vector.broadcast %2 : vector<1x4096xf32> to vector<8x4096xf32>
    %4 = arith.mulf %1, %3 : vector<8x4096xf32>
    %c0_3 = arith.constant 0 : index
    %c0_4 = arith.constant 0 : index
    %5 = vector.load %arg3[%c0_3, %c0_4] : memref<1x4096xf32, #tpu.memory_space<vmem>>, vector<1x4096xf32>
    %6 = vector.broadcast %5 : vector<1x4096xf32> to vector<8x4096xf32>
    %7 = arith.addf %4, %6 : vector<8x4096xf32>
    %cst = arith.constant 0.000000e+00 : f32
    %8 = vector.broadcast %cst : f32 to vector<8x4096xf32>
    %9 = arith.cmpf oge, %7, %8 : vector<8x4096xf32>
    %cst_5 = arith.constant 2.000000e-01 : f32
    %10 = vector.broadcast %cst_5 : f32 to vector<8x4096xf32>
    %11 = arith.mulf %10, %7 : vector<8x4096xf32>
    %12 = arith.select %9, %7, %11 : vector<8x4096xi1>, vector<8x4096xf32>
    %13 = arith.truncf %12 : vector<8x4096xf32> to vector<8x4096xbf16>
    %c0_6 = arith.constant 0 : index
    %c0_7 = arith.constant 0 : index
    %14 = vector.load %arg4[%c0_6, %c0_7] : memref<4096x128xbf16, #tpu.memory_space<vmem>>, vector<4096x128xbf16>
    %cst_8 = arith.constant dense<0.000000e+00> : vector<8x128xf32>
    %15 = tpu.matmul %13, %14, %cst_8 {dimension_numbers = #tpu.dot_dimension_numbers<[1], [0], [0], [1], [0, 0, 1, 1], [], []>} : vector<8x4096xbf16>, vector<4096x128xbf16>, vector<8x128xf32> -> vector<8x128xf32>
    %c0_9 = arith.constant 0 : index
    %c0_10 = arith.constant 0 : index
    %16 = vector.load %arg5[%c0_9, %c0_10] : memref<8x128xf32, #tpu.memory_space<vmem>>, vector<8x128xf32>
    tpu.vector_store %arg5[%c0_9, %c0_10], %15 {strides = array<i32>} : memref<8x128xf32, #tpu.memory_space<vmem>>, vector<8x128xf32>,
    return
  }
  func.func @transform_0(%arg0: i32) -> (i32, i32) {
    %c0_i32 = arith.constant 0 : i32
    %c0_i32_0 = arith.constant 0 : i32
    return %arg0, %c0_i32 : i32, i32
  }
  func.func @transform_1(%arg0: i32) -> (i32, i32) {
    %c0_i32 = arith.constant 0 : i32
    %c0_i32_0 = arith.constant 0 : i32
    %c0_i32_1 = arith.constant 0 : i32
    return %c0_i32, %c0_i32_0 : i32, i32
  }
  func.func @transform_2(%arg0: i32) -> (i32, i32) {
    %c0_i32 = arith.constant 0 : i32
    %c0_i32_0 = arith.constant 0 : i32
    %c0_i32_1 = arith.constant 0 : i32
    return %c0_i32, %c0_i32_0 : i32, i32
  }
  func.func @transform_3(%arg0: i32) -> (i32, i32) {
    %c0_i32 = arith.constant 0 : i32
    %c0_i32_0 = arith.constant 0 : i32
    %c0_i32_1 = arith.constant 0 : i32
    return %c0_i32, %c0_i32_0 : i32, i32
  }
  func.func @transform_4(%arg0: i32) -> (i32, i32) {
    %c0_i32 = arith.constant 0 : i32
    %c0_i32_0 = arith.constant 0 : i32
    return %arg0, %c0_i32 : i32, i32
  }
}

</mosaic_0001>

<llo_original>
// kernel: encoder_forward.5
$region0: #{encoder_forward.5}
  #allocation0 [shape = 'u32[]', space=smem, size = 0x4, offset = 0x4, fixed_abs, tag = 'smem constant byte address 0x4 - core index']
  #allocation1 [shape = 'u32[144,128]{1,0:T(1,128)}', space=vmem, size = 0x12000, scoped, tag = 'internal scratch']
  %s0 = inlined_call_operand.vmem [shape: bf16[512,48], index: 0, kind: input, shape index: {}]
  %s1 = inlined_call_operand.vmem [shape: bf16[48,128], index: 1, kind: input, shape index: {}]
  %s2 = inlined_call_operand.vmem [shape: bf16[512,128], index: 2, kind: output, shape index: {}]
  %s3 = sld [smem:[#allocation0]]
  $region41: #{encoder_forward.5} parent=0
    _
  %s5 = ssub.s32 1, %s3
  %s6 = scalar_select 0, %s5, %s3
  loop: start=0, step=1, limit=4
  $region2: #{encoder_forward.5} parent=0 // loop_pre_header
    _
  $region3: #{encoder_forward.5} parent=0 // loop_header
    %s8 = sphi 0, %s12
    %p9 = scmp.ge.s32.totalorder %s8, 4
    %s18 = sphi 0, %s20
    %s21 = sphi 0, %s18
    %s22 = sphi 0, %s21
    %s38 = sphi 0, %s22
    %s42 = sphi 0, %s42
    %s44 = sphi 0, %s42
    %s45 = sphi 0, %s44
    %s59 = sphi 0, %s45
    %s65 = sphi 0, %s67
    %s68 = sphi 0, %s65
    %s69 = sphi 0, %s68
    %s85 = sphi 0, %s69
  $region4: #{encoder_forward.5} parent=0 // loop_header_branch
    %11 = sbr.rel (%p9) target = $region8
  $region5: #{encoder_forward.5} parent=0 // loop_body
    %s13 = ssub.s32 %s8, 1
    %s14 = ssub.s32 %s8, 2
    %s15 = sadd.s32 %s8, 1
    %s16 = ssub.s32 %s8, %s15
    %p17 = scmp.eq.s32.totalorder %s16, 0
    %s19 = sadd.s32 %s18, 1
    %s20 = scalar_select %p17, %s18, %s19
    %p23 = pneg %p17
    %p24 = scmp.eq.s32.totalorder %s8, 1
    %p25 = por %p23, %p24
    %p26 = scmp.ne.s32.totalorder %s18, %s21
    %p27 = scmp.eq.s32.totalorder %s8, 0
    %p28 = por %p26, %p27
    %p29 = scmp.ne.s32.totalorder %s18, %s21
    %p30 = scmp.eq.s32.totalorder %s13, 1
    %p31 = por %p29, %p30
    %p32 = scmp.ne.s32.totalorder %s21, %s22
    %p33 = scmp.eq.s32.totalorder %s13, 0
    %p34 = por %p32, %p33
    %p35 = scmp.ne.s32.totalorder %s21, %s22
    %p36 = scmp.eq.s32.totalorder %s14, 1
    %p37 = por %p35, %p36
    %p39 = scmp.ne.s32.totalorder %s22, %s38
    %p40 = scmp.eq.s32.totalorder %s14, 0
    %p41 = por %p39, %p40
    %s43 = sadd.s32 %s42, 1
    %p46 = scmp.eq.s32.totalorder %s8, 1
    %p47 = scmp.ne.s32.totalorder %s42, %s44
    %p48 = scmp.eq.s32.totalorder %s8, 0
    %p49 = por %p47, %p48
    %p50 = scmp.ne.s32.totalorder %s42, %s44
    %p51 = scmp.eq.s32.totalorder %s13, 1
    %p52 = por %p50, %p51
    %p53 = scmp.ne.s32.totalorder %s44, %s45
    %p54 = scmp.eq.s32.totalorder %s13, 0
    %p55 = por %p53, %p54
    %p56 = scmp.ne.s32.totalorder %s44, %s45
    %p57 = scmp.eq.s32.totalorder %s14, 1
    %p58 = por %p56, %p57
    %p60 = scmp.ne.s32.totalorder %s45, %s59
    %p61 = scmp.eq.s32.totalorder %s14, 0
    %p62 = por %p60, %p61
    %s63 = ssub.s32 %s8, %s15
    %p64 = scmp.eq.s32.totalorder %s63, 0
    %s66 = sadd.s32 %s65, 1
    %s67 = scalar_select %p64, %s65, %s66
    %p70 = pneg %p64
    %p71 = scmp.eq.s32.totalorder %s8, 1
    %p72 = por %p70, %p71
    %p73 = scmp.ne.s32.totalorder %s65, %s68
    %p74 = scmp.eq.s32.totalorder %s8, 0
    %p75 = por %p73, %p74
    %p76 = scmp.ne.s32.totalorder %s65, %s68
    %p77 = scmp.eq.s32.totalorder %s13, 1
    %p78 = por %p76, %p77
    %p79 = scmp.ne.s32.totalorder %s68, %s69
    %p80 = scmp.eq.s32.totalorder %s13, 0
    %p81 = por %p79, %p80
    %p82 = scmp.ne.s32.totalorder %s68, %s69
    %p83 = scmp.eq.s32.totalorder %s14, 1
    %p84 = por %p82, %p83
    %p86 = scmp.ne.s32.totalorder %s69, %s85
    %p87 = scmp.eq.s32.totalorder %s14, 0
    %p88 = por %p86, %p87
    %p89 = scmp.le.s32.totalorder 1, %s8
    %p90 = scmp.lt.s32.totalorder %s8, 3
    %p91 = pnand %p89, %p90
    %p92 = pneg %p91
    // Predicated region
    $region9: #{encoder_forward.5} parent=5 // pred_check
      _
    $region10: #{encoder_forward.5} parent=5 // pred_check_branch
      %94 = sbr.rel (%p91) target = $region12
    $region11: #{encoder_forward.5} parent=5 // pred_region
      %s95 = ssub.s32 %s8, 1
      // Predicated region
      $region13: #{encoder_forward.5} parent=11 // pred_check
        %p96 = pneg %p55
      $region14: #{encoder_forward.5} parent=11 // pred_check_branch
        %98 = sbr.rel (%p96) target = $region16
      $region15: #{encoder_forward.5} parent=11 // pred_region
        _
      $region16: #{encoder_forward.5} parent=11 // pred_fallthru
        _
    $region12: #{encoder_forward.5} parent=5 // pred_fallthru
      _
    %p99 = scmp.lt.s32.totalorder %s8, 2
    // Predicated region
    $region17: #{encoder_forward.5} parent=5 // pred_check
      %p100 = pneg %p99
    $region18: #{encoder_forward.5} parent=5 // pred_check_branch
      %102 = sbr.rel (%p100) target = $region20
    $region19: #{encoder_forward.5} parent=5 // pred_region
      // Predicated region
      $region21: #{encoder_forward.5} parent=19 // pred_check
        %p103 = pneg %p28
      $region22: #{encoder_forward.5} parent=19 // pred_check_branch
        %105 = sbr.rel (%p103) target = $region24
      $region23: #{encoder_forward.5} parent=19 // pred_region
        %s106 = smul.u32 32, %s8
        %p107 = scmp.lt.s32.totalorder %s106, 63
        %s108 = scalar_select %p107, %s106, 63
        %s109 = smul.addr %s108, 4
        %s110 = scalar_lea.vmem %s0, %s109
        %s111 = smul.u32 32, %s8
      $region24: #{encoder_forward.5} parent=19 // pred_fallthru
        _
    $region20: #{encoder_forward.5} parent=5 // pred_fallthru
      _
    %p112 = scmp.le.s32.totalorder 1, %s8
    %p113 = scmp.lt.s32.totalorder %s8, 3
    %p114 = pnand %p112, %p113
    %p115 = pneg %p114
    // Predicated region
    $region25: #{encoder_forward.5} parent=5 // pred_check
      _
    $region26: #{encoder_forward.5} parent=5 // pred_check_branch
      %117 = sbr.rel (%p114) target = $region28
    $region27: #{encoder_forward.5} parent=5 // pred_region
      %s118 = ssub.s32 %s8, 1
      %s119 = smul.u32 32, %s13
      %p120 = scmp.lt.s32.totalorder %s119, 63
      %s121 = scalar_select %p120, %s119, 63
      %s122 = smul.addr %s121, 4
      %s123 = scalar_lea.vmem %s0, %s122
      %p124 = pneg %p34
      %p125 = pneg %p31
      %p126 = pneg %p55
      %p127 = pneg %p52
      %p128 = pneg %p81
      %p129 = pneg %p78
      %s130 = smul.u32 32, %s13
      %p131 = scmp.lt.s32.totalorder %s130, 63
      %s132 = scalar_select %p131, %s130, 63
      %s133 = smul.addr %s132, 4
      %s134 = scalar_lea.vmem %s2, %s133
      %s135 = smul.u32 32, %s13
      %p136 = scmp.lt.s32.totalorder %s135, 63
      %s137 = scalar_select %p136, %s135, 63
      %s138 = smul.addr %s137, 4
      %s139 = scalar_lea.vmem %s0, %s138
      %s140 = smul.u32 32, %s13
      %s141 = smul.u32 32, %s13
      %p142 = scmp.lt.s32.totalorder %s141, 63
      %s143 = scalar_select %p142, %s141, 63
      %s144 = smul.addr %s143, 4
      %s145 = scalar_lea.vmem %s2, %s144
      %s146 = smul.u32 32, %s13
      %v148 = vld [vmem:[%s139] sm:$0xf]
      %v149 = vld [vmem:[%s139 + $0x4] sm:$0xf]
      %v150 = vld [vmem:[%s139 + $0x8] sm:$0xf]
      %v151 = vld [vmem:[%s139 + $0xc] sm:$0xf]
      %v152 = vld [vmem:[%s139 + $0x10] sm:$0xf]
      %v153 = vld [vmem:[%s139 + $0x14] sm:$0xf]
      %v154 = vld [vmem:[%s139 + $0x18] sm:$0xf]
      %v155 = vld [vmem:[%s139 + $0x1c] sm:$0xf]
      %v156 = vld [vmem:[%s139 + $0x20] sm:$0xf]
      %v157 = vld [vmem:[%s139 + $0x24] sm:$0xf]
      %v158 = vld [vmem:[%s139 + $0x28] sm:$0xf]
      %v159 = vld [vmem:[%s139 + $0x2c] sm:$0xf]
      %v160 = vld [vmem:[%s139 + $0x30] sm:$0xf]
      %v161 = vld [vmem:[%s139 + $0x34] sm:$0xf]
      %v162 = vld [vmem:[%s139 + $0x38] sm:$0xf]
      %v163 = vld [vmem:[%s139 + $0x3c] sm:$0xf]
      %v164 = vld [vmem:[%s139 + $0x40] sm:$0xf]
      %v165 = vld [vmem:[%s139 + $0x44] sm:$0xf]
      %v166 = vld [vmem:[%s139 + $0x48] sm:$0xf]
      %v167 = vld [vmem:[%s139 + $0x4c] sm:$0xf]
      %v168 = vld [vmem:[%s139 + $0x50] sm:$0xf]
      %v169 = vld [vmem:[%s139 + $0x54] sm:$0xf]
      %v170 = vld [vmem:[%s139 + $0x58] sm:$0xf]
      %v171 = vld [vmem:[%s139 + $0x5c] sm:$0xf]
      %v172 = vld [vmem:[%s139 + $0x60] sm:$0xf]
      %v173 = vld [vmem:[%s139 + $0x64] sm:$0xf]
      %v174 = vld [vmem:[%s139 + $0x68] sm:$0xf]
      %v175 = vld [vmem:[%s139 + $0x6c] sm:$0xf]
      %v176 = vld [vmem:[%s139 + $0x70] sm:$0xf]
      %v177 = vld [vmem:[%s139 + $0x74] sm:$0xf]
      %v178 = vld [vmem:[%s139 + $0x78] sm:$0xf]
      %v179 = vld [vmem:[%s139 + $0x7c] sm:$0xf]
      %v180 = vld [vmem:[%s1] sm:$0xf]
      %v181 = vld [vmem:[%s1 + $0x4] sm:$0xf]
      %v182 = vld [vmem:[%s1 + $0x8] sm:$0xf]
      %v183 = vld [vmem:[%s1 + $0xc] sm:$0xf]
      %v184 = vld [vmem:[%s1 + $0x10] sm:$0xf]
      %v185 = vld [vmem:[%s1 + $0x14] sm:$0xf]
      %v218 = vunpack.c.l.b16 %v148
      %v219 = vunpack.c.l.b16 %v149
      %v220 = vunpack.c.l.b16 %v150
      %v221 = vunpack.c.l.b16 %v151
      %v222 = vunpack.c.l.b16 %v152
      %v223 = vunpack.c.l.b16 %v153
      %v224 = vunpack.c.l.b16 %v154
      %v225 = vunpack.c.l.b16 %v155
      %v226 = vunpack.c.l.b16 %v156
      %v227 = vunpack.c.l.b16 %v157
      %v228 = vunpack.c.l.b16 %v158
      %v229 = vunpack.c.l.b16 %v159
      %v230 = vunpack.c.l.b16 %v160
      %v231 = vunpack.c.l.b16 %v161
      %v232 = vunpack.c.l.b16 %v162
      %v233 = vunpack.c.l.b16 %v163
      %v234 = vunpack.c.l.b16 %v164
      %v235 = vunpack.c.l.b16 %v165
      %v236 = vunpack.c.l.b16 %v166
      %v237 = vunpack.c.l.b16 %v167
      %v238 = vunpack.c.l.b16 %v168
      %v239 = vunpack.c.l.b16 %v169
      %v240 = vunpack.c.l.b16 %v170
      %v241 = vunpack.c.l.b16 %v171
      %v242 = vunpack.c.l.b16 %v172
      %v243 = vunpack.c.l.b16 %v173
      %v244 = vunpack.c.l.b16 %v174
      %v245 = vunpack.c.l.b16 %v175
      %v246 = vunpack.c.l.b16 %v176
      %v247 = vunpack.c.l.b16 %v177
      %v248 = vunpack.c.l.b16 %v178
      %v249 = vunpack.c.l.b16 %v179
      %v250 = vpack.c.b16 %v219, %v218
      %v251 = vpack.c.b16 %v221, %v220
      %v252 = vpack.c.b16 %v223, %v222
      %v253 = vpack.c.b16 %v225, %v224
      %v254 = vpack.c.b16 %v227, %v226
      %v255 = vpack.c.b16 %v229, %v228
      %v256 = vpack.c.b16 %v231, %v230
      %v257 = vpack.c.b16 %v233, %v232
      %v258 = vpack.c.b16 %v235, %v234
      %v259 = vpack.c.b16 %v237, %v236
      %v260 = vpack.c.b16 %v239, %v238
      %v261 = vpack.c.b16 %v241, %v240
      %v262 = vpack.c.b16 %v243, %v242
      %v263 = vpack.c.b16 %v245, %v244
      %v264 = vpack.c.b16 %v247, %v246
      %v265 = vpack.c.b16 %v249, %v248
      %v272 = vunpack.c.l.b16 %v180
      %v273 = vunpack.c.l.b16 %v181
      %v274 = vunpack.c.l.b16 %v182
      %v275 = vunpack.c.l.b16 %v183
      %v276 = vunpack.c.l.b16 %v184
      %v277 = vunpack.c.l.b16 %v185
      %v278 = vpack.c.b16 %v273, %v272
      %v279 = vpack.c.b16 %v275, %v274
      %v280 = vpack.c.b16 %v277, %v276
      %vm284 = vcmask 392192
      %v286 = vsel %vm284, %v250, 0
      %v289 = vsel %vm284, %v251, 0
      %v292 = vsel %vm284, %v252, 0
      %v295 = vsel %vm284, %v253, 0
      %v298 = vsel %vm284, %v254, 0
      %v301 = vsel %vm284, %v255, 0
      %v304 = vsel %vm284, %v256, 0
      %v307 = vsel %vm284, %v257, 0
      %v310 = vsel %vm284, %v258, 0
      %v313 = vsel %vm284, %v259, 0
      %v316 = vsel %vm284, %v260, 0
      %v319 = vsel %vm284, %v261, 0
      %v322 = vsel %vm284, %v262, 0
      %v325 = vsel %vm284, %v263, 0
      %v328 = vsel %vm284, %v264, 0
      %v331 = vsel %vm284, %v265, 0
      %333 = vmatprep.subr.bf16.mxu0 0
      %334 = vmatpush1.bf16.msra.mxu0 %v278
      %335 = vmatprep.subr.bf16.mxu0 0
      %336 = vmatpush1.bf16.msra.mxu0 %v279
      %337 = vmatprep.subr.bf16.mxu0 0
      %338 = vmatpush1.bf16.msra.mxu0 %v280
      %339 = vmatprep.subr.bf16.mxu0 0
      %340 = vmatpush1.bf16.msra.mxu0 0
      %341 = vmatprep.subr.bf16.mxu0 0
      %342 = vmatpush1.bf16.msra.mxu0 0
      %343 = vmatprep.subr.bf16.mxu0 0
      %344 = vmatpush1.bf16.msra.mxu0 0
      %345 = vmatprep.subr.bf16.mxu0 0
      %346 = vmatpush1.bf16.msra.mxu0 0
      %347 = vmatprep.subr.bf16.mxu0 0
      %348 = vmatpush1.bf16.msra.mxu0 0
      %349 = vmatprep.subr.bf16.mxu0 0
      %350 = vmatpush1.bf16.msra.mxu0 0
      %351 = vmatprep.subr.bf16.mxu0 0
      %352 = vmatpush1.bf16.msra.mxu0 0
      %353 = vmatprep.subr.bf16.mxu0 0
      %354 = vmatpush1.bf16.msra.mxu0 0
      %355 = vmatprep.subr.bf16.mxu0 0
      %356 = vmatpush1.bf16.msra.mxu0 0
      %357 = vmatprep.subr.bf16.mxu0 0
      %358 = vmatpush1.bf16.msra.mxu0 0
      %359 = vmatprep.subr.bf16.mxu0 0
      %360 = vmatpush1.bf16.msra.mxu0 0
      %361 = vmatprep.subr.bf16.mxu0 0
      %362 = vmatpush1.bf16.msra.mxu0 0
      %363 = vmatprep.subr.bf16.mxu0 0
      %364 = vmatpush1.bf16.msra.mxu0 0
      %365 = vmatprep.mubr.bf16.mxu0 0
      %366 = vmatmul.mubr.bf16.gmra.mrb[0].mxu0 %v286
      %v367 = vpop.f32.mrb[0].mxu0
      %v368 = vadd.f32 0.0, %v367
      %v369 = vpop.f32.mrb[0].mxu0
      %v370 = vpop.f32.mrb[0].mxu0
      %v371 = vadd.f32 0.0, %v370
      %v372 = vpop.f32.mrb[0].mxu0
      %373 = vmatprep.mubr.bf16.mxu0 0
      %374 = vmatmul.mubr.bf16.gmra.mrb[0].mxu0 %v289
      %v375 = vpop.f32.mrb[0].mxu0
      %v376 = vadd.f32 0.0, %v375
      %v377 = vpop.f32.mrb[0].mxu0
      %v378 = vpop.f32.mrb[0].mxu0
      %v379 = vadd.f32 0.0, %v378
      %v380 = vpop.f32.mrb[0].mxu0
      %381 = vmatprep.mubr.bf16.mxu0 0
      %382 = vmatmul.mubr.bf16.gmra.mrb[0].mxu0 %v292
      %v383 = vpop.f32.mrb[0].mxu0
      %v384 = vadd.f32 0.0, %v383
      %v385 = vpop.f32.mrb[0].mxu0
      %v386 = vpop.f32.mrb[0].mxu0
      %v387 = vadd.f32 0.0, %v386
      %v388 = vpop.f32.mrb[0].mxu0
      %389 = vmatprep.mubr.bf16.mxu0 0
      %390 = vmatmul.mubr.bf16.gmra.mrb[0].mxu0 %v295
      %v391 = vpop.f32.mrb[0].mxu0
      %v392 = vadd.f32 0.0, %v391
      %v393 = vpop.f32.mrb[0].mxu0
      %v394 = vpop.f32.mrb[0].mxu0
      %v395 = vadd.f32 0.0, %v394
      %v396 = vpop.f32.mrb[0].mxu0
      %397 = vmatprep.mubr.bf16.mxu0 0
      %398 = vmatmul.mubr.bf16.gmra.mrb[0].mxu0 %v298
      %v399 = vpop.f32.mrb[0].mxu0
      %v400 = vadd.f32 0.0, %v399
      %v401 = vpop.f32.mrb[0].mxu0
      %v402 = vpop.f32.mrb[0].mxu0
      %v403 = vadd.f32 0.0, %v402
      %v404 = vpop.f32.mrb[0].mxu0
      %405 = vmatprep.mubr.bf16.mxu0 0
      %406 = vmatmul.mubr.bf16.gmra.mrb[0].mxu0 %v301
      %v407 = vpop.f32.mrb[0].mxu0
      %v408 = vadd.f32 0.0, %v407
      %v409 = vpop.f32.mrb[0].mxu0
      %v410 = vpop.f32.mrb[0].mxu0
      %v411 = vadd.f32 0.0, %v410
      %v412 = vpop.f32.mrb[0].mxu0
      %413 = vmatprep.mubr.bf16.mxu0 0
      %414 = vmatmul.mubr.bf16.gmra.mrb[0].mxu0 %v304
      %v415 = vpop.f32.mrb[0].mxu0
      %v416 = vadd.f32 0.0, %v415
      %v417 = vpop.f32.mrb[0].mxu0
      %v418 = vpop.f32.mrb[0].mxu0
      %v419 = vadd.f32 0.0, %v418
      %v420 = vpop.f32.mrb[0].mxu0
      %421 = vmatprep.mubr.bf16.mxu0 0
      %422 = vmatmul.mubr.bf16.gmra.mrb[0].mxu0 %v307
      %v423 = vpop.f32.mrb[0].mxu0
      %v424 = vadd.f32 0.0, %v423
      %v425 = vpop.f32.mrb[0].mxu0
      %v426 = vpop.f32.mrb[0].mxu0
      %v427 = vadd.f32 0.0, %v426
      %v428 = vpop.f32.mrb[0].mxu0
      %429 = vmatprep.mubr.bf16.mxu0 0
      %430 = vmatmul.mubr.bf16.gmra.mrb[0].mxu0 %v310
      %v431 = vpop.f32.mrb[0].mxu0
      %v432 = vadd.f32 0.0, %v431
      %v433 = vpop.f32.mrb[0].mxu0
      %v434 = vpop.f32.mrb[0].mxu0
      %v435 = vadd.f32 0.0, %v434
      %v436 = vpop.f32.mrb[0].mxu0
      %437 = vmatprep.mubr.bf16.mxu0 0
      %438 = vmatmul.mubr.bf16.gmra.mrb[0].mxu0 %v313
      %v439 = vpop.f32.mrb[0].mxu0
      %v440 = vadd.f32 0.0, %v439
      %v441 = vpop.f32.mrb[0].mxu0
      %v442 = vpop.f32.mrb[0].mxu0
      %v443 = vadd.f32 0.0, %v442
      %v444 = vpop.f32.mrb[0].mxu0
      %445 = vmatprep.mubr.bf16.mxu0 0
      %446 = vmatmul.mubr.bf16.gmra.mrb[0].mxu0 %v316
      %v447 = vpop.f32.mrb[0].mxu0
      %v448 = vadd.f32 0.0, %v447
      %v449 = vpop.f32.mrb[0].mxu0
      %v450 = vpop.f32.mrb[0].mxu0
      %v451 = vadd.f32 0.0, %v450
      %v452 = vpop.f32.mrb[0].mxu0
      %453 = vmatprep.mubr.bf16.mxu0 0
      %454 = vmatmul.mubr.bf16.gmra.mrb[0].mxu0 %v319
      %v455 = vpop.f32.mrb[0].mxu0
      %v456 = vadd.f32 0.0, %v455
      %v457 = vpop.f32.mrb[0].mxu0
      %v458 = vpop.f32.mrb[0].mxu0
      %v459 = vadd.f32 0.0, %v458
      %v460 = vpop.f32.mrb[0].mxu0
      %461 = vmatprep.mubr.bf16.mxu0 0
      %462 = vmatmul.mubr.bf16.gmra.mrb[0].mxu0 %v322
      %v463 = vpop.f32.mrb[0].mxu0
      %v464 = vadd.f32 0.0, %v463
      %v465 = vpop.f32.mrb[0].mxu0
      %v466 = vpop.f32.mrb[0].mxu0
      %v467 = vadd.f32 0.0, %v466
      %v468 = vpop.f32.mrb[0].mxu0
      %469 = vmatprep.mubr.bf16.mxu0 0
      %470 = vmatmul.mubr.bf16.gmra.mrb[0].mxu0 %v325
      %v471 = vpop.f32.mrb[0].mxu0
      %v472 = vadd.f32 0.0, %v471
      %v473 = vpop.f32.mrb[0].mxu0
      %v474 = vpop.f32.mrb[0].mxu0
      %v475 = vadd.f32 0.0, %v474
      %v476 = vpop.f32.mrb[0].mxu0
      %477 = vmatprep.mubr.bf16.mxu0 0
      %478 = vmatmul.mubr.bf16.gmra.mrb[0].mxu0 %v328
      %v479 = vpop.f32.mrb[0].mxu0
      %v480 = vadd.f32 0.0, %v479
      %v481 = vpop.f32.mrb[0].mxu0
      %v482 = vpop.f32.mrb[0].mxu0
      %v483 = vadd.f32 0.0, %v482
      %v484 = vpop.f32.mrb[0].mxu0
      %485 = vmatprep.mubr.bf16.mxu0 0
      %486 = vmatmul.mubr.bf16.gmra.mrb[0].mxu0 %v331
      %v487 = vpop.f32.mrb[0].mxu0
      %v488 = vadd.f32 0.0, %v487
      %v489 = vpop.f32.mrb[0].mxu0
      %v490 = vpop.f32.mrb[0].mxu0
      %v491 = vadd.f32 0.0, %v490
      %v492 = vpop.f32.mrb[0].mxu0
      %493 = vdwg.mxu0
      %vm494 = vcmp.ge.f32.partialorder %v368, 0.0
      %vm495 = vcmp.ge.f32.partialorder %v371, 0.0
      %vm496 = vcmp.ge.f32.partialorder %v376, 0.0
      %vm497 = vcmp.ge.f32.partialorder %v379, 0.0
      %vm498 = vcmp.ge.f32.partialorder %v384, 0.0
      %vm499 = vcmp.ge.f32.partialorder %v387, 0.0
      %vm500 = vcmp.ge.f32.partialorder %v392, 0.0
      %vm501 = vcmp.ge.f32.partialorder %v395, 0.0
      %vm502 = vcmp.ge.f32.partialorder %v400, 0.0
      %vm503 = vcmp.ge.f32.partialorder %v403, 0.0
      %vm504 = vcmp.ge.f32.partialorder %v408, 0.0
      %vm505 = vcmp.ge.f32.partialorder %v411, 0.0
      %vm506 = vcmp.ge.f32.partialorder %v416, 0.0
      %vm507 = vcmp.ge.f32.partialorder %v419, 0.0
      %vm508 = vcmp.ge.f32.partialorder %v424, 0.0
      %vm509 = vcmp.ge.f32.partialorder %v427, 0.0
      %vm510 = vcmp.ge.f32.partialorder %v432, 0.0
      %vm511 = vcmp.ge.f32.partialorder %v435, 0.0
      %vm512 = vcmp.ge.f32.partialorder %v440, 0.0
      %vm513 = vcmp.ge.f32.partialorder %v443, 0.0
      %vm514 = vcmp.ge.f32.partialorder %v448, 0.0
      %vm515 = vcmp.ge.f32.partialorder %v451, 0.0
      %vm516 = vcmp.ge.f32.partialorder %v456, 0.0
      %vm517 = vcmp.ge.f32.partialorder %v459, 0.0
      %vm518 = vcmp.ge.f32.partialorder %v464, 0.0
      %vm519 = vcmp.ge.f32.partialorder %v467, 0.0
      %vm520 = vcmp.ge.f32.partialorder %v472, 0.0
      %vm521 = vcmp.ge.f32.partialorder %v475, 0.0
      %vm522 = vcmp.ge.f32.partialorder %v480, 0.0
      %vm523 = vcmp.ge.f32.partialorder %v483, 0.0
      %vm524 = vcmp.ge.f32.partialorder %v488, 0.0
      %vm525 = vcmp.ge.f32.partialorder %v491, 0.0
      %v526 = vmul.f32 %v368, 0.2
      %v527 = vmul.f32 %v371, 0.2
      %v528 = vmul.f32 %v376, 0.2
      %v529 = vmul.f32 %v379, 0.2
      %v530 = vmul.f32 %v384, 0.2
      %v531 = vmul.f32 %v387, 0.2
      %v532 = vmul.f32 %v392, 0.2
      %v533 = vmul.f32 %v395, 0.2
      %v534 = vmul.f32 %v400, 0.2
      %v535 = vmul.f32 %v403, 0.2
      %v536 = vmul.f32 %v408, 0.2
      %v537 = vmul.f32 %v411, 0.2
      %v538 = vmul.f32 %v416, 0.2
      %v539 = vmul.f32 %v419, 0.2
      %v540 = vmul.f32 %v424, 0.2
      %v541 = vmul.f32 %v427, 0.2
      %v542 = vmul.f32 %v432, 0.2
      %v543 = vmul.f32 %v435, 0.2
      %v544 = vmul.f32 %v440, 0.2
      %v545 = vmul.f32 %v443, 0.2
      %v546 = vmul.f32 %v448, 0.2
      %v547 = vmul.f32 %v451, 0.2
      %v548 = vmul.f32 %v456, 0.2
      %v549 = vmul.f32 %v459, 0.2
      %v550 = vmul.f32 %v464, 0.2
      %v551 = vmul.f32 %v467, 0.2
      %v552 = vmul.f32 %v472, 0.2
      %v553 = vmul.f32 %v475, 0.2
      %v554 = vmul.f32 %v480, 0.2
      %v555 = vmul.f32 %v483, 0.2
      %v556 = vmul.f32 %v488, 0.2
      %v557 = vmul.f32 %v491, 0.2
      %v558 = vsel %vm494, %v368, %v526
      %v559 = vsel %vm495, %v371, %v527
      %v560 = vsel %vm496, %v376, %v528
      %v561 = vsel %vm497, %v379, %v529
      %v562 = vsel %vm498, %v384, %v530
      %v563 = vsel %vm499, %v387, %v531
      %v564 = vsel %vm500, %v392, %v532
      %v565 = vsel %vm501, %v395, %v533
      %v566 = vsel %vm502, %v400, %v534
      %v567 = vsel %vm503, %v403, %v535
      %v568 = vsel %vm504, %v408, %v536
      %v569 = vsel %vm505, %v411, %v537
      %v570 = vsel %vm506, %v416, %v538
      %v571 = vsel %vm507, %v419, %v539
      %v572 = vsel %vm508, %v424, %v540
      %v573 = vsel %vm509, %v427, %v541
      %v574 = vsel %vm510, %v432, %v542
      %v575 = vsel %vm511, %v435, %v543
      %v576 = vsel %vm512, %v440, %v544
      %v577 = vsel %vm513, %v443, %v545
      %v578 = vsel %vm514, %v448, %v546
      %v579 = vsel %vm515, %v451, %v547
      %v580 = vsel %vm516, %v456, %v548
      %v581 = vsel %vm517, %v459, %v549
      %v582 = vsel %vm518, %v464, %v550
      %v583 = vsel %vm519, %v467, %v551
      %v584 = vsel %vm520, %v472, %v552
      %v585 = vsel %vm521, %v475, %v553
      %v586 = vsel %vm522, %v480, %v554
      %v587 = vsel %vm523, %v483, %v555
      %v588 = vsel %vm524, %v488, %v556
      %v589 = vsel %vm525, %v491, %v557
      %v590 = vpack.c.bf16 %v559, %v558
      %v591 = vpack.c.bf16 %v561, %v560
      %v592 = vpack.c.bf16 %v563, %v562
      %v593 = vpack.c.bf16 %v565, %v564
      %v594 = vpack.c.bf16 %v567, %v566
      %v595 = vpack.c.bf16 %v569, %v568
      %v596 = vpack.c.bf16 %v571, %v570
      %v597 = vpack.c.bf16 %v573, %v572
      %v598 = vpack.c.bf16 %v575, %v574
      %v599 = vpack.c.bf16 %v577, %v576
      %v600 = vpack.c.bf16 %v579, %v578
      %v601 = vpack.c.bf16 %v581, %v580
      %v602 = vpack.c.bf16 %v583, %v582
      %v603 = vpack.c.bf16 %v585, %v584
      %v604 = vpack.c.bf16 %v587, %v586
      %v605 = vpack.c.bf16 %v589, %v588
      %v622 = vunpack.c.l.b16 %v590
      %v623 = vunpack.c.h.b16 %v590
      %v624 = vunpack.c.l.b16 %v591
      %v625 = vunpack.c.h.b16 %v591
      %v626 = vunpack.c.l.b16 %v592
      %v627 = vunpack.c.h.b16 %v592
      %v628 = vunpack.c.l.b16 %v593
      %v629 = vunpack.c.h.b16 %v593
      %v630 = vunpack.c.l.b16 %v594
      %v631 = vunpack.c.h.b16 %v594
      %v632 = vunpack.c.l.b16 %v595
      %v633 = vunpack.c.h.b16 %v595
      %v634 = vunpack.c.l.b16 %v596
      %v635 = vunpack.c.h.b16 %v596
      %v636 = vunpack.c.l.b16 %v597
      %v637 = vunpack.c.h.b16 %v597
      %v638 = vunpack.c.l.b16 %v598
      %v639 = vunpack.c.h.b16 %v598
      %v640 = vunpack.c.l.b16 %v599
      %v641 = vunpack.c.h.b16 %v599
      %v642 = vunpack.c.l.b16 %v600
      %v643 = vunpack.c.h.b16 %v600
      %v644 = vunpack.c.l.b16 %v601
      %v645 = vunpack.c.h.b16 %v601
      %v646 = vunpack.c.l.b16 %v602
      %v647 = vunpack.c.h.b16 %v602
      %v648 = vunpack.c.l.b16 %v603
      %v649 = vunpack.c.h.b16 %v603
      %v650 = vunpack.c.l.b16 %v604
      %v651 = vunpack.c.h.b16 %v604
      %v652 = vunpack.c.l.b16 %v605
      %v653 = vunpack.c.h.b16 %v605
      %v654 = vpack.c.b16 %v622, %v622
      %v655 = vpack.c.b16 %v623, %v623
      %v656 = vpack.c.b16 %v624, %v624
      %v657 = vpack.c.b16 %v625, %v625
      %v658 = vpack.c.b16 %v626, %v626
      %v659 = vpack.c.b16 %v627, %v627
      %v660 = vpack.c.b16 %v628, %v628
      %v661 = vpack.c.b16 %v629, %v629
      %v662 = vpack.c.b16 %v630, %v630
      %v663 = vpack.c.b16 %v631, %v631
      %v664 = vpack.c.b16 %v632, %v632
      %v665 = vpack.c.b16 %v633, %v633
      %v666 = vpack.c.b16 %v634, %v634
      %v667 = vpack.c.b16 %v635, %v635
      %v668 = vpack.c.b16 %v636, %v636
      %v669 = vpack.c.b16 %v637, %v637
      %v670 = vpack.c.b16 %v638, %v638
      %v671 = vpack.c.b16 %v639, %v639
      %v672 = vpack.c.b16 %v640, %v640
      %v673 = vpack.c.b16 %v641, %v641
      %v674 = vpack.c.b16 %v642, %v642
      %v675 = vpack.c.b16 %v643, %v643
      %v676 = vpack.c.b16 %v644, %v644
      %v677 = vpack.c.b16 %v645, %v645
      %v678 = vpack.c.b16 %v646, %v646
      %v679 = vpack.c.b16 %v647, %v647
      %v680 = vpack.c.b16 %v648, %v648
      %v681 = vpack.c.b16 %v649, %v649
      %v682 = vpack.c.b16 %v650, %v650
      %v683 = vpack.c.b16 %v651, %v651
      %v684 = vpack.c.b16 %v652, %v652
      %v685 = vpack.c.b16 %v653, %v653
      %718 = vst [vmem:[%s145] sm:$0xf] %v654
      %719 = vst [vmem:[%s145 + $0x4] sm:$0xf] %v655
      %720 = vst [vmem:[%s145 + $0x8] sm:$0xf] %v656
      %721 = vst [vmem:[%s145 + $0xc] sm:$0xf] %v657
      %722 = vst [vmem:[%s145 + $0x10] sm:$0xf] %v658
      %723 = vst [vmem:[%s145 + $0x14] sm:$0xf] %v659
      %724 = vst [vmem:[%s145 + $0x18] sm:$0xf] %v660
      %725 = vst [vmem:[%s145 + $0x1c] sm:$0xf] %v661
      %726 = vst [vmem:[%s145 + $0x20] sm:$0xf] %v662
      %727 = vst [vmem:[%s145 + $0x24] sm:$0xf] %v663
      %728 = vst [vmem:[%s145 + $0x28] sm:$0xf] %v664
      %729 = vst [vmem:[%s145 + $0x2c] sm:$0xf] %v665
      %730 = vst [vmem:[%s145 + $0x30] sm:$0xf] %v666
      %731 = vst [vmem:[%s145 + $0x34] sm:$0xf] %v667
      %732 = vst [vmem:[%s145 + $0x38] sm:$0xf] %v668
      %733 = vst [vmem:[%s145 + $0x3c] sm:$0xf] %v669
      %734 = vst [vmem:[%s145 + $0x40] sm:$0xf] %v670
      %735 = vst [vmem:[%s145 + $0x44] sm:$0xf] %v671
      %736 = vst [vmem:[%s145 + $0x48] sm:$0xf] %v672
      %737 = vst [vmem:[%s145 + $0x4c] sm:$0xf] %v673
      %738 = vst [vmem:[%s145 + $0x50] sm:$0xf] %v674
      %739 = vst [vmem:[%s145 + $0x54] sm:$0xf] %v675
      %740 = vst [vmem:[%s145 + $0x58] sm:$0xf] %v676
      %741 = vst [vmem:[%s145 + $0x5c] sm:$0xf] %v677
      %742 = vst [vmem:[%s145 + $0x60] sm:$0xf] %v678
      %743 = vst [vmem:[%s145 + $0x64] sm:$0xf] %v679
      %744 = vst [vmem:[%s145 + $0x68] sm:$0xf] %v680
      %745 = vst [vmem:[%s145 + $0x6c] sm:$0xf] %v681
      %746 = vst [vmem:[%s145 + $0x70] sm:$0xf] %v682
      %747 = vst [vmem:[%s145 + $0x74] sm:$0xf] %v683
      %748 = vst [vmem:[%s145 + $0x78] sm:$0xf] %v684
      %749 = vst [vmem:[%s145 + $0x7c] sm:$0xf] %v685
      %s750 = smul.u32 32, %s13
      %p751 = scmp.lt.s32.totalorder %s750, 63
      %s752 = scalar_select %p751, %s750, 63
      %s753 = smul.addr %s752, 4
      %s754 = scalar_lea.vmem %s2, %s753
      // Predicated region
      $region29: #{encoder_forward.5} parent=27 // pred_check
        %p755 = pneg %p78
      $region30: #{encoder_forward.5} parent=27 // pred_check_branch
        %757 = sbr.rel (%p755) target = $region32
      $region31: #{encoder_forward.5} parent=27 // pred_region
        %s758 = smul.u32 32, %s13
      $region32: #{encoder_forward.5} parent=27 // pred_fallthru
        _
    $region28: #{encoder_forward.5} parent=5 // pred_fallthru
      _
    %p759 = scmp.le.s32.totalorder 2, %s8
    // Predicated region
    $region33: #{encoder_forward.5} parent=5 // pred_check
      %p760 = pneg %p759
    $region34: #{encoder_forward.5} parent=5 // pred_check_branch
      %762 = sbr.rel (%p760) target = $region36
    $region35: #{encoder_forward.5} parent=5 // pred_region
      %s763 = ssub.s32 %s8, 2
      // Predicated region
      $region37: #{encoder_forward.5} parent=35 // pred_check
        %p764 = pneg %p84
      $region38: #{encoder_forward.5} parent=35 // pred_check_branch
        %766 = sbr.rel (%p764) target = $region40
      $region39: #{encoder_forward.5} parent=35 // pred_region
        %s767 = smul.u32 32, %s14
        %p768 = scmp.lt.s32.totalorder %s767, 63
        %s769 = scalar_select %p768, %s767, 63
        %s770 = smul.addr %s769, 4
        %s771 = scalar_lea.vmem %s2, %s770
      $region40: #{encoder_forward.5} parent=35 // pred_fallthru
        _
    $region36: #{encoder_forward.5} parent=5 // pred_fallthru
      _
  $region6: #{encoder_forward.5} parent=0 // loop_footer
    %s12 = sadd.s32 1, %s8
  $region7: #{encoder_forward.5} parent=0 // loop_footer_branch
    %7 = sbr.rel target = $region3
  $region8: #{encoder_forward.5} parent=0 // loop_exit
    _

// kernel: encoder_forward.6
$region0: #{encoder_forward.6}
  #allocation0 [shape = 'u32[]', space=smem, size = 0x4, offset = 0x4, fixed_abs, tag = 'smem constant byte address 0x4 - core index']
  #allocation1 [shape = 'u32[144,128]{1,0:T(1,128)}', space=vmem, size = 0x12000, scoped, tag = 'internal scratch']
  %s0 = inlined_call_operand.vmem [shape: bf16[128,1024], index: 0, kind: input, shape index: {}]
  %s1 = inlined_call_operand.vmem [shape: bf16[1024,128], index: 1, kind: input, shape index: {}]
  %s2 = inlined_call_operand.vmem [shape: bf16[128,128], index: 2, kind: output, shape index: {0}]
  %s3 = inlined_call_operand.vmem [shape: f32[2,8,128], index: 3, kind: output, shape index: {1}]
  %4 = xla_tuple %s2, %s3
  %s5 = sld [smem:[#allocation0]]
  $region49: #{encoder_forward.6} parent=0
    _
  %s7 = ssub.s32 1, %s5
  %s8 = scalar_select 0, %s7, %s5
  loop: start=0, step=1, limit=4
  $region2: #{encoder_forward.6} parent=0 // loop_pre_header
    _
  $region3: #{encoder_forward.6} parent=0 // loop_header
    %s10 = sphi 0, %s14
    %p11 = scmp.ge.s32.totalorder %s10, 4
    %s20 = sphi 0, %s22
    %s23 = sphi 0, %s20
    %s24 = sphi 0, %s23
    %s40 = sphi 0, %s24
    %s44 = sphi 0, %s44
    %s46 = sphi 0, %s44
    %s47 = sphi 0, %s46
    %s61 = sphi 0, %s47
    %s67 = sphi 0, %s69
    %s70 = sphi 0, %s67
    %s71 = sphi 0, %s70
    %s87 = sphi 0, %s71
    %s93 = sphi 0, %s95
    %s96 = sphi 0, %s93
    %s97 = sphi 0, %s96
    %s113 = sphi 0, %s97
  $region4: #{encoder_forward.6} parent=0 // loop_header_branch
    %13 = sbr.rel (%p11) target = $region8
  $region5: #{encoder_forward.6} parent=0 // loop_body
    %s15 = ssub.s32 %s10, 1
    %s16 = ssub.s32 %s10, 2
    %s17 = sadd.s32 %s10, 1
    %s18 = ssub.s32 %s10, %s17
    %p19 = scmp.eq.s32.totalorder %s18, 0
    %s21 = sadd.s32 %s20, 1
    %s22 = scalar_select %p19, %s20, %s21
    %p25 = pneg %p19
    %p26 = scmp.eq.s32.totalorder %s10, 1
    %p27 = por %p25, %p26
    %p28 = scmp.ne.s32.totalorder %s20, %s23
    %p29 = scmp.eq.s32.totalorder %s10, 0
    %p30 = por %p28, %p29
    %p31 = scmp.ne.s32.totalorder %s20, %s23
    %p32 = scmp.eq.s32.totalorder %s15, 1
    %p33 = por %p31, %p32
    %p34 = scmp.ne.s32.totalorder %s23, %s24
    %p35 = scmp.eq.s32.totalorder %s15, 0
    %p36 = por %p34, %p35
    %p37 = scmp.ne.s32.totalorder %s23, %s24
    %p38 = scmp.eq.s32.totalorder %s16, 1
    %p39 = por %p37, %p38
    %p41 = scmp.ne.s32.totalorder %s24, %s40
    %p42 = scmp.eq.s32.totalorder %s16, 0
    %p43 = por %p41, %p42
    %s45 = sadd.s32 %s44, 1
    %p48 = scmp.eq.s32.totalorder %s10, 1
    %p49 = scmp.ne.s32.totalorder %s44, %s46
    %p50 = scmp.eq.s32.totalorder %s10, 0
    %p51 = por %p49, %p50
    %p52 = scmp.ne.s32.totalorder %s44, %s46
    %p53 = scmp.eq.s32.totalorder %s15, 1
    %p54 = por %p52, %p53
    %p55 = scmp.ne.s32.totalorder %s46, %s47
    %p56 = scmp.eq.s32.totalorder %s15, 0
    %p57 = por %p55, %p56
    %p58 = scmp.ne.s32.totalorder %s46, %s47
    %p59 = scmp.eq.s32.totalorder %s16, 1
    %p60 = por %p58, %p59
    %p62 = scmp.ne.s32.totalorder %s47, %s61
    %p63 = scmp.eq.s32.totalorder %s16, 0
    %p64 = por %p62, %p63
    %s65 = ssub.s32 %s10, %s17
    %p66 = scmp.eq.s32.totalorder %s65, 0
    %s68 = sadd.s32 %s67, 1
    %s69 = scalar_select %p66, %s67, %s68
    %p72 = pneg %p66
    %p73 = scmp.eq.s32.totalorder %s10, 1
    %p74 = por %p72, %p73
    %p75 = scmp.ne.s32.totalorder %s67, %s70
    %p76 = scmp.eq.s32.totalorder %s10, 0
    %p77 = por %p75, %p76
    %p78 = scmp.ne.s32.totalorder %s67, %s70
    %p79 = scmp.eq.s32.totalorder %s15, 1
    %p80 = por %p78, %p79
    %p81 = scmp.ne.s32.totalorder %s70, %s71
    %p82 = scmp.eq.s32.totalorder %s15, 0
    %p83 = por %p81, %p82
    %p84 = scmp.ne.s32.totalorder %s70, %s71
    %p85 = scmp.eq.s32.totalorder %s16, 1
    %p86 = por %p84, %p85
    %p88 = scmp.ne.s32.totalorder %s71, %s87
    %p89 = scmp.eq.s32.totalorder %s16, 0
    %p90 = por %p88, %p89
    %s91 = ssub.s32 %s10, %s17
    %p92 = scmp.eq.s32.totalorder %s91, 0
    %s94 = sadd.s32 %s93, 1
    %s95 = scalar_select %p92, %s93, %s94
    %p98 = pneg %p92
    %p99 = scmp.eq.s32.totalorder %s10, 1
    %p100 = por %p98, %p99
    %p101 = scmp.ne.s32.totalorder %s93, %s96
    %p102 = scmp.eq.s32.totalorder %s10, 0
    %p103 = por %p101, %p102
    %p104 = scmp.ne.s32.totalorder %s93, %s96
    %p105 = scmp.eq.s32.totalorder %s15, 1
    %p106 = por %p104, %p105
    %p107 = scmp.ne.s32.totalorder %s96, %s97
    %p108 = scmp.eq.s32.totalorder %s15, 0
    %p109 = por %p107, %p108
    %p110 = scmp.ne.s32.totalorder %s96, %s97
    %p111 = scmp.eq.s32.totalorder %s16, 1
    %p112 = por %p110, %p111
    %p114 = scmp.ne.s32.totalorder %s97, %s113
    %p115 = scmp.eq.s32.totalorder %s16, 0
    %p116 = por %p114, %p115
    %p117 = scmp.le.s32.totalorder 1, %s10
    %p118 = scmp.lt.s32.totalorder %s10, 3
    %p119 = pnand %p117, %p118
    %p120 = pneg %p119
    // Predicated region
    $region9: #{encoder_forward.6} parent=5 // pred_check
      _
    $region10: #{encoder_forward.6} parent=5 // pred_check_branch
      %122 = sbr.rel (%p119) target = $region12
    $region11: #{encoder_forward.6} parent=5 // pred_region
      %s123 = ssub.s32 %s10, 1
      // Predicated region
      $region13: #{encoder_forward.6} parent=11 // pred_check
        %p124 = pneg %p57
      $region14: #{encoder_forward.6} parent=11 // pred_check_branch
        %126 = sbr.rel (%p124) target = $region16
      $region15: #{encoder_forward.6} parent=11 // pred_region
        _
      $region16: #{encoder_forward.6} parent=11 // pred_fallthru
        _
    $region12: #{encoder_forward.6} parent=5 // pred_fallthru
      _
    %p127 = scmp.lt.s32.totalorder %s10, 2
    // Predicated region
    $region17: #{encoder_forward.6} parent=5 // pred_check
      %p128 = pneg %p127
    $region18: #{encoder_forward.6} parent=5 // pred_check_branch
      %130 = sbr.rel (%p128) target = $region20
    $region19: #{encoder_forward.6} parent=5 // pred_region
      // Predicated region
      $region21: #{encoder_forward.6} parent=19 // pred_check
        %p131 = pneg %p30
      $region22: #{encoder_forward.6} parent=19 // pred_check_branch
        %133 = sbr.rel (%p131) target = $region24
      $region23: #{encoder_forward.6} parent=19 // pred_region
        %s134 = smul.u32 8, %s10
        %p135 = scmp.lt.s32.totalorder %s134, 15
        %s136 = scalar_select %p135, %s134, 15
        %s137 = smul.addr %s136, 8
        %s138 = smul.addr %s137, 4
        %s139 = scalar_lea.vmem %s0, %s138
        %s140 = smul.u32 8, %s10
      $region24: #{encoder_forward.6} parent=19 // pred_fallthru
        _
    $region20: #{encoder_forward.6} parent=5 // pred_fallthru
      _
    %p141 = scmp.le.s32.totalorder 1, %s10
    %p142 = scmp.lt.s32.totalorder %s10, 3
    %p143 = pnand %p141, %p142
    %p144 = pneg %p143
    // Predicated region
    $region25: #{encoder_forward.6} parent=5 // pred_check
      _
    $region26: #{encoder_forward.6} parent=5 // pred_check_branch
      %146 = sbr.rel (%p143) target = $region28
    $region27: #{encoder_forward.6} parent=5 // pred_region
      %s147 = ssub.s32 %s10, 1
      %s148 = smul.u32 8, %s15
      %p149 = scmp.lt.s32.totalorder %s148, 15
      %s150 = scalar_select %p149, %s148, 15
      %s151 = smul.addr %s150, 8
      %s152 = smul.addr %s151, 4
      %s153 = scalar_lea.vmem %s0, %s152
      %p154 = pneg %p36
      %p155 = pneg %p33
      %p156 = pneg %p57
      %p157 = pneg %p54
      %p158 = pneg %p83
      %p159 = pneg %p80
      %s160 = smul.u32 8, %s15
      %p161 = scmp.lt.s32.totalorder %s160, 15
      %s162 = scalar_select %p161, %s160, 15
      %s163 = smul.addr %s162, 4
      %s164 = scalar_lea.vmem %s2, %s163
      %p165 = pneg %p109
      %p166 = pneg %p106
      %p167 = scmp.lt.s32.totalorder %s15, 1
      %s168 = scalar_select %p167, %s15, 1
      %s169 = smul.addr %s168, 8
      %s170 = scalar_lea.vmem %s3, %s169
      %s171 = smul.u32 8, %s15
      %p172 = scmp.lt.s32.totalorder %s171, 15
      %s173 = scalar_select %p172, %s171, 15
      %s174 = smul.addr %s173, 8
      %s175 = smul.addr %s174, 4
      %s176 = scalar_lea.vmem %s0, %s175
      %s177 = smul.u32 8, %s15
      %s178 = smul.u32 8, %s15
      %p179 = scmp.lt.s32.totalorder %s178, 15
      %s180 = scalar_select %p179, %s178, 15
      %s181 = smul.addr %s180, 4
      %s182 = scalar_lea.vmem %s2, %s181
      %s183 = smul.u32 8, %s15
      %p184 = scmp.lt.s32.totalorder %s15, 1
      %s185 = scalar_select %p184, %s15, 1
      %s186 = smul.addr %s185, 8
      %s187 = scalar_lea.vmem %s3, %s186
      %v189 = vld [vmem:[%s176] sm:$0xff]
      %v190 = vld [vmem:[%s176 + $0x8] sm:$0xff]
      %v191 = vld [vmem:[%s176 + $0x10] sm:$0xff]
      %v192 = vld [vmem:[%s176 + $0x18] sm:$0xff]
      %v193 = vld [vmem:[%s176 + $0x20] sm:$0xff]
      %v194 = vld [vmem:[%s176 + $0x28] sm:$0xff]
      %v195 = vld [vmem:[%s176 + $0x30] sm:$0xff]
      %v196 = vld [vmem:[%s176 + $0x38] sm:$0xff]
      %v197 = vld [vmem:[%s176 + $0x40] sm:$0xff]
      %v198 = vld [vmem:[%s176 + $0x48] sm:$0xff]
      %v199 = vld [vmem:[%s176 + $0x50] sm:$0xff]
      %v200 = vld [vmem:[%s176 + $0x58] sm:$0xff]
      %v201 = vld [vmem:[%s176 + $0x60] sm:$0xff]
      %v202 = vld [vmem:[%s176 + $0x68] sm:$0xff]
      %v203 = vld [vmem:[%s176 + $0x70] sm:$0xff]
      %v204 = vld [vmem:[%s176 + $0x78] sm:$0xff]
      %v205 = vld [vmem:[%s176 + $0x80] sm:$0xff]
      %v206 = vld [vmem:[%s176 + $0x88] sm:$0xff]
      %v207 = vld [vmem:[%s176 + $0x90] sm:$0xff]
      %v208 = vld [vmem:[%s176 + $0x98] sm:$0xff]
      %v209 = vld [vmem:[%s176 + $0xa0] sm:$0xff]
      %v210 = vld [vmem:[%s176 + $0xa8] sm:$0xff]
      %v211 = vld [vmem:[%s176 + $0xb0] sm:$0xff]
      %v212 = vld [vmem:[%s176 + $0xb8] sm:$0xff]
      %v213 = vld [vmem:[%s176 + $0xc0] sm:$0xff]
      %v214 = vld [vmem:[%s176 + $0xc8] sm:$0xff]
      %v215 = vld [vmem:[%s176 + $0xd0] sm:$0xff]
      %v216 = vld [vmem:[%s176 + $0xd8] sm:$0xff]
      %v217 = vld [vmem:[%s176 + $0xe0] sm:$0xff]
      %v218 = vld [vmem:[%s176 + $0xe8] sm:$0xff]
      %v219 = vld [vmem:[%s176 + $0xf0] sm:$0xff]
      %v220 = vld [vmem:[%s176 + $0xf8] sm:$0xff]
      %v221 = vld [vmem:[%s1] sm:$0xf]
      %v222 = vld [vmem:[%s1 + $0x4] sm:$0xf]
      %v223 = vld [vmem:[%s1 + $0x8] sm:$0xf]
      %v224 = vld [vmem:[%s1 + $0xc] sm:$0xf]
      %v225 = vld [vmem:[%s1 + $0x10] sm:$0xf]
      %v226 = vld [vmem:[%s1 + $0x14] sm:$0xf]
      %v227 = vld [vmem:[%s1 + $0x18] sm:$0xf]
      %v228 = vld [vmem:[%s1 + $0x1c] sm:$0xf]
      %v229 = vld [vmem:[%s1 + $0x20] sm:$0xf]
      %v230 = vld [vmem:[%s1 + $0x24] sm:$0xf]
      %v231 = vld [vmem:[%s1 + $0x28] sm:$0xf]
      %v232 = vld [vmem:[%s1 + $0x2c] sm:$0xf]
      %v233 = vld [vmem:[%s1 + $0x30] sm:$0xf]
      %v234 = vld [vmem:[%s1 + $0x34] sm:$0xf]
      %v235 = vld [vmem:[%s1 + $0x38] sm:$0xf]
      %v236 = vld [vmem:[%s1 + $0x3c] sm:$0xf]
      %v237 = vld [vmem:[%s1 + $0x40] sm:$0xf]
      %v238 = vld [vmem:[%s1 + $0x44] sm:$0xf]
      %v239 = vld [vmem:[%s1 + $0x48] sm:$0xf]
      %v240 = vld [vmem:[%s1 + $0x4c] sm:$0xf]
      %v241 = vld [vmem:[%s1 + $0x50] sm:$0xf]
      %v242 = vld [vmem:[%s1 + $0x54] sm:$0xf]
      %v243 = vld [vmem:[%s1 + $0x58] sm:$0xf]
      %v244 = vld [vmem:[%s1 + $0x5c] sm:$0xf]
      %v245 = vld [vmem:[%s1 + $0x60] sm:$0xf]
      %v246 = vld [vmem:[%s1 + $0x64] sm:$0xf]
      %v247 = vld [vmem:[%s1 + $0x68] sm:$0xf]
      %v248 = vld [vmem:[%s1 + $0x6c] sm:$0xf]
      %v249 = vld [vmem:[%s1 + $0x70] sm:$0xf]
      %v250 = vld [vmem:[%s1 + $0x74] sm:$0xf]
      %v251 = vld [vmem:[%s1 + $0x78] sm:$0xf]
      %v252 = vld [vmem:[%s1 + $0x7c] sm:$0xf]
      %v253 = vld [vmem:[%s1 + $0x80] sm:$0xf]
      %v254 = vld [vmem:[%s1 + $0x84] sm:$0xf]
      %v255 = vld [vmem:[%s1 + $0x88] sm:$0xf]
      %v256 = vld [vmem:[%s1 + $0x8c] sm:$0xf]
      %v257 = vld [vmem:[%s1 + $0x90] sm:$0xf]
      %v258 = vld [vmem:[%s1 + $0x94] sm:$0xf]
      %v259 = vld [vmem:[%s1 + $0x98] sm:$0xf]
      %v260 = vld [vmem:[%s1 + $0x9c] sm:$0xf]
      %v261 = vld [vmem:[%s1 + $0xa0] sm:$0xf]
      %v262 = vld [vmem:[%s1 + $0xa4] sm:$0xf]
      %v263 = vld [vmem:[%s1 + $0xa8] sm:$0xf]
      %v264 = vld [vmem:[%s1 + $0xac] sm:$0xf]
      %v265 = vld [vmem:[%s1 + $0xb0] sm:$0xf]
      %v266 = vld [vmem:[%s1 + $0xb4] sm:$0xf]
      %v267 = vld [vmem:[%s1 + $0xb8] sm:$0xf]
      %v268 = vld [vmem:[%s1 + $0xbc] sm:$0xf]
      %v269 = vld [vmem:[%s1 + $0xc0] sm:$0xf]
      %v270 = vld [vmem:[%s1 + $0xc4] sm:$0xf]
      %v271 = vld [vmem:[%s1 + $0xc8] sm:$0xf]
      %v272 = vld [vmem:[%s1 + $0xcc] sm:$0xf]
      %v273 = vld [vmem:[%s1 + $0xd0] sm:$0xf]
      %v274 = vld [vmem:[%s1 + $0xd4] sm:$0xf]
      %v275 = vld [vmem:[%s1 + $0xd8] sm:$0xf]
      %v276 = vld [vmem:[%s1 + $0xdc] sm:$0xf]
      %v277 = vld [vmem:[%s1 + $0xe0] sm:$0xf]
      %v278 = vld [vmem:[%s1 + $0xe4] sm:$0xf]
      %v279 = vld [vmem:[%s1 + $0xe8] sm:$0xf]
      %v280 = vld [vmem:[%s1 + $0xec] sm:$0xf]
      %v281 = vld [vmem:[%s1 + $0xf0] sm:$0xf]
      %v282 = vld [vmem:[%s1 + $0xf4] sm:$0xf]
      %v283 = vld [vmem:[%s1 + $0xf8] sm:$0xf]
      %v284 = vld [vmem:[%s1 + $0xfc] sm:$0xf]
      %v285 = vld [vmem:[%s1 + $0x100] sm:$0xf]
      %v286 = vld [vmem:[%s1 + $0x104] sm:$0xf]
      %v287 = vld [vmem:[%s1 + $0x108] sm:$0xf]
      %v288 = vld [vmem:[%s1 + $0x10c] sm:$0xf]
      %v289 = vld [vmem:[%s1 + $0x110] sm:$0xf]
      %v290 = vld [vmem:[%s1 + $0x114] sm:$0xf]
      %v291 = vld [vmem:[%s1 + $0x118] sm:$0xf]
      %v292 = vld [vmem:[%s1 + $0x11c] sm:$0xf]
      %v293 = vld [vmem:[%s1 + $0x120] sm:$0xf]
      %v294 = vld [vmem:[%s1 + $0x124] sm:$0xf]
      %v295 = vld [vmem:[%s1 + $0x128] sm:$0xf]
      %v296 = vld [vmem:[%s1 + $0x12c] sm:$0xf]
      %v297 = vld [vmem:[%s1 + $0x130] sm:$0xf]
      %v298 = vld [vmem:[%s1 + $0x134] sm:$0xf]
      %v299 = vld [vmem:[%s1 + $0x138] sm:$0xf]
      %v300 = vld [vmem:[%s1 + $0x13c] sm:$0xf]
      %v301 = vld [vmem:[%s1 + $0x140] sm:$0xf]
      %v302 = vld [vmem:[%s1 + $0x144] sm:$0xf]
      %v303 = vld [vmem:[%s1 + $0x148] sm:$0xf]
      %v304 = vld [vmem:[%s1 + $0x14c] sm:$0xf]
      %v305 = vld [vmem:[%s1 + $0x150] sm:$0xf]
      %v306 = vld [vmem:[%s1 + $0x154] sm:$0xf]
      %v307 = vld [vmem:[%s1 + $0x158] sm:$0xf]
      %v308 = vld [vmem:[%s1 + $0x15c] sm:$0xf]
      %v309 = vld [vmem:[%s1 + $0x160] sm:$0xf]
      %v310 = vld [vmem:[%s1 + $0x164] sm:$0xf]
      %v311 = vld [vmem:[%s1 + $0x168] sm:$0xf]
      %v312 = vld [vmem:[%s1 + $0x16c] sm:$0xf]
      %v313 = vld [vmem:[%s1 + $0x170] sm:$0xf]
      %v314 = vld [vmem:[%s1 + $0x174] sm:$0xf]
      %v315 = vld [vmem:[%s1 + $0x178] sm:$0xf]
      %v316 = vld [vmem:[%s1 + $0x17c] sm:$0xf]
      %v317 = vld [vmem:[%s1 + $0x180] sm:$0xf]
      %v318 = vld [vmem:[%s1 + $0x184] sm:$0xf]
      %v319 = vld [vmem:[%s1 + $0x188] sm:$0xf]
      %v320 = vld [vmem:[%s1 + $0x18c] sm:$0xf]
      %v321 = vld [vmem:[%s1 + $0x190] sm:$0xf]
      %v322 = vld [vmem:[%s1 + $0x194] sm:$0xf]
      %v323 = vld [vmem:[%s1 + $0x198] sm:$0xf]
      %v324 = vld [vmem:[%s1 + $0x19c] sm:$0xf]
      %v325 = vld [vmem:[%s1 + $0x1a0] sm:$0xf]
      %v326 = vld [vmem:[%s1 + $0x1a4] sm:$0xf]
      %v327 = vld [vmem:[%s1 + $0x1a8] sm:$0xf]
      %v328 = vld [vmem:[%s1 + $0x1ac] sm:$0xf]
      %v329 = vld [vmem:[%s1 + $0x1b0] sm:$0xf]
      %v330 = vld [vmem:[%s1 + $0x1b4] sm:$0xf]
      %v331 = vld [vmem:[%s1 + $0x1b8] sm:$0xf]
      %v332 = vld [vmem:[%s1 + $0x1bc] sm:$0xf]
      %v333 = vld [vmem:[%s1 + $0x1c0] sm:$0xf]
      %v334 = vld [vmem:[%s1 + $0x1c4] sm:$0xf]
      %v335 = vld [vmem:[%s1 + $0x1c8] sm:$0xf]
      %v336 = vld [vmem:[%s1 + $0x1cc] sm:$0xf]
      %v337 = vld [vmem:[%s1 + $0x1d0] sm:$0xf]
      %v338 = vld [vmem:[%s1 + $0x1d4] sm:$0xf]
      %v339 = vld [vmem:[%s1 + $0x1d8] sm:$0xf]
      %v340 = vld [vmem:[%s1 + $0x1dc] sm:$0xf]
      %v341 = vld [vmem:[%s1 + $0x1e0] sm:$0xf]
      %v342 = vld [vmem:[%s1 + $0x1e4] sm:$0xf]
      %v343 = vld [vmem:[%s1 + $0x1e8] sm:$0xf]
      %v344 = vld [vmem:[%s1 + $0x1ec] sm:$0xf]
      %v345 = vld [vmem:[%s1 + $0x1f0] sm:$0xf]
      %v346 = vld [vmem:[%s1 + $0x1f4] sm:$0xf]
      %v347 = vld [vmem:[%s1 + $0x1f8] sm:$0xf]
      %v348 = vld [vmem:[%s1 + $0x1fc] sm:$0xf]
      %v381 = vunpack.c.l.b16 %v189
      %v382 = vunpack.c.h.b16 %v189
      %v383 = vunpack.c.l.b16 %v190
      %v384 = vunpack.c.h.b16 %v190
      %v385 = vunpack.c.l.b16 %v191
      %v386 = vunpack.c.h.b16 %v191
      %v387 = vunpack.c.l.b16 %v192
      %v388 = vunpack.c.h.b16 %v192
      %v389 = vunpack.c.l.b16 %v193
      %v390 = vunpack.c.h.b16 %v193
      %v391 = vunpack.c.l.b16 %v194
      %v392 = vunpack.c.h.b16 %v194
      %v393 = vunpack.c.l.b16 %v195
      %v394 = vunpack.c.h.b16 %v195
      %v395 = vunpack.c.l.b16 %v196
      %v396 = vunpack.c.h.b16 %v196
      %v397 = vunpack.c.l.b16 %v197
      %v398 = vunpack.c.h.b16 %v197
      %v399 = vunpack.c.l.b16 %v198
      %v400 = vunpack.c.h.b16 %v198
      %v401 = vunpack.c.l.b16 %v199
      %v402 = vunpack.c.h.b16 %v199
      %v403 = vunpack.c.l.b16 %v200
      %v404 = vunpack.c.h.b16 %v200
      %v405 = vunpack.c.l.b16 %v201
      %v406 = vunpack.c.h.b16 %v201
      %v407 = vunpack.c.l.b16 %v202
      %v408 = vunpack.c.h.b16 %v202
      %v409 = vunpack.c.l.b16 %v203
      %v410 = vunpack.c.h.b16 %v203
      %v411 = vunpack.c.l.b16 %v204
      %v412 = vunpack.c.h.b16 %v204
      %v413 = vunpack.c.l.b16 %v205
      %v414 = vunpack.c.h.b16 %v205
      %v415 = vunpack.c.l.b16 %v206
      %v416 = vunpack.c.h.b16 %v206
      %v417 = vunpack.c.l.b16 %v207
      %v418 = vunpack.c.h.b16 %v207
      %v419 = vunpack.c.l.b16 %v208
      %v420 = vunpack.c.h.b16 %v208
      %v421 = vunpack.c.l.b16 %v209
      %v422 = vunpack.c.h.b16 %v209
      %v423 = vunpack.c.l.b16 %v210
      %v424 = vunpack.c.h.b16 %v210
      %v425 = vunpack.c.l.b16 %v211
      %v426 = vunpack.c.h.b16 %v211
      %v427 = vunpack.c.l.b16 %v212
      %v428 = vunpack.c.h.b16 %v212
      %v429 = vunpack.c.l.b16 %v213
      %v430 = vunpack.c.h.b16 %v213
      %v431 = vunpack.c.l.b16 %v214
      %v432 = vunpack.c.h.b16 %v214
      %v433 = vunpack.c.l.b16 %v215
      %v434 = vunpack.c.h.b16 %v215
      %v435 = vunpack.c.l.b16 %v216
      %v436 = vunpack.c.h.b16 %v216
      %v437 = vunpack.c.l.b16 %v217
      %v438 = vunpack.c.h.b16 %v217
      %v439 = vunpack.c.l.b16 %v218
      %v440 = vunpack.c.h.b16 %v218
      %v441 = vunpack.c.l.b16 %v219
      %v442 = vunpack.c.h.b16 %v219
      %v443 = vunpack.c.l.b16 %v220
      %v444 = vunpack.c.h.b16 %v220
      %v445 = vpack.c.b16 %v389, %v381
      %v446 = vpack.c.b16 %v390, %v382
      %v447 = vpack.c.b16 %v391, %v383
      %v448 = vpack.c.b16 %v392, %v384
      %v449 = vpack.c.b16 %v393, %v385
      %v450 = vpack.c.b16 %v394, %v386
      %v451 = vpack.c.b16 %v395, %v387
      %v452 = vpack.c.b16 %v396, %v388
      %v453 = vpack.c.b16 %v405, %v397
      %v454 = vpack.c.b16 %v406, %v398
      %v455 = vpack.c.b16 %v407, %v399
      %v456 = vpack.c.b16 %v408, %v400
      %v457 = vpack.c.b16 %v409, %v401
      %v458 = vpack.c.b16 %v410, %v402
      %v459 = vpack.c.b16 %v411, %v403
      %v460 = vpack.c.b16 %v412, %v404
      %v461 = vpack.c.b16 %v421, %v413
      %v462 = vpack.c.b16 %v422, %v414
      %v463 = vpack.c.b16 %v423, %v415
      %v464 = vpack.c.b16 %v424, %v416
      %v465 = vpack.c.b16 %v425, %v417
      %v466 = vpack.c.b16 %v426, %v418
      %v467 = vpack.c.b16 %v427, %v419
      %v468 = vpack.c.b16 %v428, %v420
      %v469 = vpack.c.b16 %v437, %v429
      %v470 = vpack.c.b16 %v438, %v430
      %v471 = vpack.c.b16 %v439, %v431
      %v472 = vpack.c.b16 %v440, %v432
      %v473 = vpack.c.b16 %v441, %v433
      %v474 = vpack.c.b16 %v442, %v434
      %v475 = vpack.c.b16 %v443, %v435
      %v476 = vpack.c.b16 %v444, %v436
      %v637 = vunpack.c.l.b16 %v221
      %v638 = vunpack.c.l.b16 %v222
      %v639 = vunpack.c.l.b16 %v223
      %v640 = vunpack.c.l.b16 %v224
      %v641 = vunpack.c.l.b16 %v225
      %v642 = vunpack.c.l.b16 %v226
      %v643 = vunpack.c.l.b16 %v227
      %v644 = vunpack.c.l.b16 %v228
      %v645 = vunpack.c.l.b16 %v229
      %v646 = vunpack.c.l.b16 %v230
      %v647 = vunpack.c.l.b16 %v231
      %v648 = vunpack.c.l.b16 %v232
      %v649 = vunpack.c.l.b16 %v233
      %v650 = vunpack.c.l.b16 %v234
      %v651 = vunpack.c.l.b16 %v235
      %v652 = vunpack.c.l.b16 %v236
      %v653 = vunpack.c.l.b16 %v237
      %v654 = vunpack.c.l.b16 %v238
      %v655 = vunpack.c.l.b16 %v239
      %v656 = vunpack.c.l.b16 %v240
      %v657 = vunpack.c.l.b16 %v241
      %v658 = vunpack.c.l.b16 %v242
      %v659 = vunpack.c.l.b16 %v243
      %v660 = vunpack.c.l.b16 %v244
      %v661 = vunpack.c.l.b16 %v245
      %v662 = vunpack.c.l.b16 %v246
      %v663 = vunpack.c.l.b16 %v247
      %v664 = vunpack.c.l.b16 %v248
      %v665 = vunpack.c.l.b16 %v249
      %v666 = vunpack.c.l.b16 %v250
      %v667 = vunpack.c.l.b16 %v251
      %v668 = vunpack.c.l.b16 %v252
      %v669 = vunpack.c.l.b16 %v253
      %v670 = vunpack.c.l.b16 %v254
      %v671 = vunpack.c.l.b16 %v255
      %v672 = vunpack.c.l.b16 %v256
      %v673 = vunpack.c.l.b16 %v257
      %v674 = vunpack.c.l.b16 %v258
      %v675 = vunpack.c.l.b16 %v259
      %v676 = vunpack.c.l.b16 %v260
      %v677 = vunpack.c.l.b16 %v261
      %v678 = vunpack.c.l.b16 %v262
      %v679 = vunpack.c.l.b16 %v263
      %v680 = vunpack.c.l.b16 %v264
      %v681 = vunpack.c.l.b16 %v265
      %v682 = vunpack.c.l.b16 %v266
      %v683 = vunpack.c.l.b16 %v267
      %v684 = vunpack.c.l.b16 %v268
      %v685 = vunpack.c.l.b16 %v269
      %v686 = vunpack.c.l.b16 %v270
      %v687 = vunpack.c.l.b16 %v271
      %v688 = vunpack.c.l.b16 %v272
      %v689 = vunpack.c.l.b16 %v273
      %v690 = vunpack.c.l.b16 %v274
      %v691 = vunpack.c.l.b16 %v275
      %v692 = vunpack.c.l.b16 %v276
      %v693 = vunpack.c.l.b16 %v277
      %v694 = vunpack.c.l.b16 %v278
      %v695 = vunpack.c.l.b16 %v279
      %v696 = vunpack.c.l.b16 %v280
      %v697 = vunpack.c.l.b16 %v281
      %v698 = vunpack.c.l.b16 %v282
      %v699 = vunpack.c.l.b16 %v283
      %v700 = vunpack.c.l.b16 %v284
      %v701 = vunpack.c.l.b16 %v285
      %v702 = vunpack.c.l.b16 %v286
      %v703 = vunpack.c.l.b16 %v287
      %v704 = vunpack.c.l.b16 %v288
      %v705 = vunpack.c.l.b16 %v289
      %v706 = vunpack.c.l.b16 %v290
      %v707 = vunpack.c.l.b16 %v291
      %v708 = vunpack.c.l.b16 %v292
      %v709 = vunpack.c.l.b16 %v293
      %v710 = vunpack.c.l.b16 %v294
      %v711 = vunpack.c.l.b16 %v295
      %v712 = vunpack.c.l.b16 %v296
      %v713 = vunpack.c.l.b16 %v297
      %v714 = vunpack.c.l.b16 %v298
      %v715 = vunpack.c.l.b16 %v299
      %v716 = vunpack.c.l.b16 %v300
      %v717 = vunpack.c.l.b16 %v301
      %v718 = vunpack.c.l.b16 %v302
      %v719 = vunpack.c.l.b16 %v303
      %v720 = vunpack.c.l.b16 %v304
      %v721 = vunpack.c.l.b16 %v305
      %v722 = vunpack.c.l.b16 %v306
      %v723 = vunpack.c.l.b16 %v307
      %v724 = vunpack.c.l.b16 %v308
      %v725 = vunpack.c.l.b16 %v309
      %v726 = vunpack.c.l.b16 %v310
      %v727 = vunpack.c.l.b16 %v311
      %v728 = vunpack.c.l.b16 %v312
      %v729 = vunpack.c.l.b16 %v313
      %v730 = vunpack.c.l.b16 %v314
      %v731 = vunpack.c.l.b16 %v315
      %v732 = vunpack.c.l.b16 %v316
      %v733 = vunpack.c.l.b16 %v317
      %v734 = vunpack.c.l.b16 %v318
      %v735 = vunpack.c.l.b16 %v319
      %v736 = vunpack.c.l.b16 %v320
      %v737 = vunpack.c.l.b16 %v321
      %v738 = vunpack.c.l.b16 %v322
      %v739 = vunpack.c.l.b16 %v323
      %v740 = vunpack.c.l.b16 %v324
      %v741 = vunpack.c.l.b16 %v325
      %v742 = vunpack.c.l.b16 %v326
      %v743 = vunpack.c.l.b16 %v327
      %v744 = vunpack.c.l.b16 %v328
      %v745 = vunpack.c.l.b16 %v329
      %v746 = vunpack.c.l.b16 %v330
      %v747 = vunpack.c.l.b16 %v331
      %v748 = vunpack.c.l.b16 %v332
      %v749 = vunpack.c.l.b16 %v333
      %v750 = vunpack.c.l.b16 %v334
      %v751 = vunpack.c.l.b16 %v335
      %v752 = vunpack.c.l.b16 %v336
      %v753 = vunpack.c.l.b16 %v337
      %v754 = vunpack.c.l.b16 %v338
      %v755 = vunpack.c.l.b16 %v339
      %v756 = vunpack.c.l.b16 %v340
      %v757 = vunpack.c.l.b16 %v341
      %v758 = vunpack.c.l.b16 %v342
      %v759 = vunpack.c.l.b16 %v343
      %v760 = vunpack.c.l.b16 %v344
      %v761 = vunpack.c.l.b16 %v345
      %v762 = vunpack.c.l.b16 %v346
      %v763 = vunpack.c.l.b16 %v347
      %v764 = vunpack.c.l.b16 %v348
      %v765 = vpack.c.b16 %v638, %v637
      %v766 = vpack.c.b16 %v640, %v639
      %v767 = vpack.c.b16 %v642, %v641
      %v768 = vpack.c.b16 %v644, %v643
      %v769 = vpack.c.b16 %v646, %v645
      %v770 = vpack.c.b16 %v648, %v647
      %v771 = vpack.c.b16 %v650, %v649
      %v772 = vpack.c.b16 %v652, %v651
      %v773 = vpack.c.b16 %v654, %v653
      %v774 = vpack.c.b16 %v656, %v655
      %v775 = vpack.c.b16 %v658, %v657
      %v776 = vpack.c.b16 %v660, %v659
      %v777 = vpack.c.b16 %v662, %v661
      %v778 = vpack.c.b16 %v664, %v663
      %v779 = vpack.c.b16 %v666, %v665
      %v780 = vpack.c.b16 %v668, %v667
      %v781 = vpack.c.b16 %v670, %v669
      %v782 = vpack.c.b16 %v672, %v671
      %v783 = vpack.c.b16 %v674, %v673
      %v784 = vpack.c.b16 %v676, %v675
      %v785 = vpack.c.b16 %v678, %v677
      %v786 = vpack.c.b16 %v680, %v679
      %v787 = vpack.c.b16 %v682, %v681
      %v788 = vpack.c.b16 %v684, %v683
      %v789 = vpack.c.b16 %v686, %v685
      %v790 = vpack.c.b16 %v688, %v687
      %v791 = vpack.c.b16 %v690, %v689
      %v792 = vpack.c.b16 %v692, %v691
      %v793 = vpack.c.b16 %v694, %v693
      %v794 = vpack.c.b16 %v696, %v695
      %v795 = vpack.c.b16 %v698, %v697
      %v796 = vpack.c.b16 %v700, %v699
      %v797 = vpack.c.b16 %v702, %v701
      %v798 = vpack.c.b16 %v704, %v703
      %v799 = vpack.c.b16 %v706, %v705
      %v800 = vpack.c.b16 %v708, %v707
      %v801 = vpack.c.b16 %v710, %v709
      %v802 = vpack.c.b16 %v712, %v711
      %v803 = vpack.c.b16 %v714, %v713
      %v804 = vpack.c.b16 %v716, %v715
      %v805 = vpack.c.b16 %v718, %v717
      %v806 = vpack.c.b16 %v720, %v719
      %v807 = vpack.c.b16 %v722, %v721
      %v808 = vpack.c.b16 %v724, %v723
      %v809 = vpack.c.b16 %v726, %v725
      %v810 = vpack.c.b16 %v728, %v727
      %v811 = vpack.c.b16 %v730, %v729
      %v812 = vpack.c.b16 %v732, %v731
      %v813 = vpack.c.b16 %v734, %v733
      %v814 = vpack.c.b16 %v736, %v735
      %v815 = vpack.c.b16 %v738, %v737
      %v816 = vpack.c.b16 %v740, %v739
      %v817 = vpack.c.b16 %v742, %v741
      %v818 = vpack.c.b16 %v744, %v743
      %v819 = vpack.c.b16 %v746, %v745
      %v820 = vpack.c.b16 %v748, %v747
      %v821 = vpack.c.b16 %v750, %v749
      %v822 = vpack.c.b16 %v752, %v751
      %v823 = vpack.c.b16 %v754, %v753
      %v824 = vpack.c.b16 %v756, %v755
      %v825 = vpack.c.b16 %v758, %v757
      %v826 = vpack.c.b16 %v760, %v759
      %v827 = vpack.c.b16 %v762, %v761
      %v828 = vpack.c.b16 %v764, %v763
      %893 = vmatprep.subr.bf16.mxu0 0
      %894 = vmatpush1.bf16.msra.mxu0 %v765
      %895 = vmatprep.subr.bf16.mxu0 0
      %896 = vmatpush1.bf16.msra.mxu0 %v766
      %897 = vmatprep.subr.bf16.mxu0 0
      %898 = vmatpush1.bf16.msra.mxu0 %v767
      %899 = vmatprep.subr.bf16.mxu0 0
      %900 = vmatpush1.bf16.msra.mxu0 %v768
      %901 = vmatprep.subr.bf16.mxu0 0
      %902 = vmatpush1.bf16.msra.mxu0 %v769
      %903 = vmatprep.subr.bf16.mxu0 0
      %904 = vmatpush1.bf16.msra.mxu0 %v770
      %905 = vmatprep.subr.bf16.mxu0 0
      %906 = vmatpush1.bf16.msra.mxu0 %v771
      %907 = vmatprep.subr.bf16.mxu0 0
      %908 = vmatpush1.bf16.msra.mxu0 %v772
      %909 = vmatprep.subr.bf16.mxu0 0
      %910 = vmatpush1.bf16.msra.mxu0 %v773
      %911 = vmatprep.subr.bf16.mxu0 0
      %912 = vmatpush1.bf16.msra.mxu0 %v774
      %913 = vmatprep.subr.bf16.mxu0 0
      %914 = vmatpush1.bf16.msra.mxu0 %v775
      %915 = vmatprep.subr.bf16.mxu0 0
      %916 = vmatpush1.bf16.msra.mxu0 %v776
      %917 = vmatprep.subr.bf16.mxu0 0
      %918 = vmatpush1.bf16.msra.mxu0 %v777
      %919 = vmatprep.subr.bf16.mxu0 0
      %920 = vmatpush1.bf16.msra.mxu0 %v778
      %921 = vmatprep.subr.bf16.mxu0 0
      %922 = vmatpush1.bf16.msra.mxu0 %v779
      %923 = vmatprep.subr.bf16.mxu0 0
      %924 = vmatpush1.bf16.msra.mxu0 %v780
      %925 = vmatprep.mubr.bf16.mxu0 %v446
      %926 = vmatmul.mubr.bf16.gmra.mrb[0].mxu0 %v445
      %v927 = vpop.f32.mrb[0].mxu0
      %v928 = vadd.f32 0.0, %v927
      %v929 = vpop.f32.mrb[0].mxu0
      %v930 = vpop.f32.mrb[0].mxu0
      %v931 = vadd.f32 0.0, %v930
      %v932 = vpop.f32.mrb[0].mxu0
      %933 = vmatprep.mubr.bf16.mxu0 %v454
      %934 = vmatmul.mubr.bf16.gmra.mrb[0].mxu0 %v453
      %v935 = vpop.f32.mrb[0].mxu0
      %v936 = vadd.f32 0.0, %v935
      %v937 = vpop.f32.mrb[0].mxu0
      %v938 = vpop.f32.mrb[0].mxu0
      %v939 = vadd.f32 0.0, %v938
      %v940 = vpop.f32.mrb[0].mxu0
      %941 = vmatprep.mubr.bf16.mxu0 %v462
      %942 = vmatmul.mubr.bf16.gmra.mrb[0].mxu0 %v461
      %v943 = vpop.f32.mrb[0].mxu0
      %v944 = vadd.f32 0.0, %v943
      %v945 = vpop.f32.mrb[0].mxu0
      %v946 = vpop.f32.mrb[0].mxu0
      %v947 = vadd.f32 0.0, %v946
      %v948 = vpop.f32.mrb[0].mxu0
      %949 = vmatprep.mubr.bf16.mxu0 %v470
      %950 = vmatmul.mubr.bf16.gmra.mrb[0].mxu0 %v469
      %v951 = vpop.f32.mrb[0].mxu0
      %v952 = vadd.f32 0.0, %v951
      %v953 = vpop.f32.mrb[0].mxu0
      %v954 = vpop.f32.mrb[0].mxu0
      %v955 = vadd.f32 0.0, %v954
      %v956 = vpop.f32.mrb[0].mxu0
      %957 = vdwg.mxu0
      %958 = vmatprep.subr.bf16.mxu0 0
      %959 = vmatpush1.bf16.msra.mxu0 %v781
      %960 = vmatprep.subr.bf16.mxu0 0
      %961 = vmatpush1.bf16.msra.mxu0 %v782
      %962 = vmatprep.subr.bf16.mxu0 0
      %963 = vmatpush1.bf16.msra.mxu0 %v783
      %964 = vmatprep.subr.bf16.mxu0 0
      %965 = vmatpush1.bf16.msra.mxu0 %v784
      %966 = vmatprep.subr.bf16.mxu0 0
      %967 = vmatpush1.bf16.msra.mxu0 %v785
      %968 = vmatprep.subr.bf16.mxu0 0
      %969 = vmatpush1.bf16.msra.mxu0 %v786
      %970 = vmatprep.subr.bf16.mxu0 0
      %971 = vmatpush1.bf16.msra.mxu0 %v787
      %972 = vmatprep.subr.bf16.mxu0 0
      %973 = vmatpush1.bf16.msra.mxu0 %v788
      %974 = vmatprep.subr.bf16.mxu0 0
      %975 = vmatpush1.bf16.msra.mxu0 %v789
      %976 = vmatprep.subr.bf16.mxu0 0
      %977 = vmatpush1.bf16.msra.mxu0 %v790
      %978 = vmatprep.subr.bf16.mxu0 0
      %979 = vmatpush1.bf16.msra.mxu0 %v791
      %980 = vmatprep.subr.bf16.mxu0 0
      %981 = vmatpush1.bf16.msra.mxu0 %v792
      %982 = vmatprep.subr.bf16.mxu0 0
      %983 = vmatpush1.bf16.msra.mxu0 %v793
      %984 = vmatprep.subr.bf16.mxu0 0
      %985 = vmatpush1.bf16.msra.mxu0 %v794
      %986 = vmatprep.subr.bf16.mxu0 0
      %987 = vmatpush1.bf16.msra.mxu0 %v795
      %988 = vmatprep.subr.bf16.mxu0 0
      %989 = vmatpush1.bf16.msra.mxu0 %v796
      %990 = vmatprep.mubr.bf16.mxu0 %v448
      %991 = vmatmul.mubr.bf16.gmra.mrb[0].mxu0 %v447
      %v992 = vpop.f32.mrb[0].mxu0
      %v993 = vadd.f32 %v928, %v992
      %v994 = vpop.f32.mrb[0].mxu0
      %v995 = vpop.f32.mrb[0].mxu0
      %v996 = vadd.f32 %v931, %v995
      %v997 = vpop.f32.mrb[0].mxu0
      %998 = vmatprep.mubr.bf16.mxu0 %v456
      %999 = vmatmul.mubr.bf16.gmra.mrb[0].mxu0 %v455
      %v1000 = vpop.f32.mrb[0].mxu0
      %v1001 = vadd.f32 %v936, %v1000
      %v1002 = vpop.f32.mrb[0].mxu0
      %v1003 = vpop.f32.mrb[0].mxu0
      %v1004 = vadd.f32 %v939, %v1003
      %v1005 = vpop.f32.mrb[0].mxu0
      %1006 = vmatprep.mubr.bf16.mxu0 %v464
      %1007 = vmatmul.mubr.bf16.gmra.mrb[0].mxu0 %v463
      %v1008 = vpop.f32.mrb[0].mxu0
      %v1009 = vadd.f32 %v944, %v1008
      %v1010 = vpop.f32.mrb[0].mxu0
      %v1011 = vpop.f32.mrb[0].mxu0
      %v1012 = vadd.f32 %v947, %v1011
      %v1013 = vpop.f32.mrb[0].mxu0
      %1014 = vmatprep.mubr.bf16.mxu0 %v472
      %1015 = vmatmul.mubr.bf16.gmra.mrb[0].mxu0 %v471
      %v1016 = vpop.f32.mrb[0].mxu0
      %v1017 = vadd.f32 %v952, %v1016
      %v1018 = vpop.f32.mrb[0].mxu0
      %v1019 = vpop.f32.mrb[0].mxu0
      %v1020 = vadd.f32 %v955, %v1019
      %v1021 = vpop.f32.mrb[0].mxu0
      %1022 = vdwg.mxu0
      %1023 = vmatprep.subr.bf16.mxu0 0
      %1024 = vmatpush1.bf16.msra.mxu0 %v797
      %1025 = vmatprep.subr.bf16.mxu0 0
      %1026 = vmatpush1.bf16.msra.mxu0 %v798
      %1027 = vmatprep.subr.bf16.mxu0 0
      %1028 = vmatpush1.bf16.msra.mxu0 %v799
      %1029 = vmatprep.subr.bf16.mxu0 0
      %1030 = vmatpush1.bf16.msra.mxu0 %v800
      %1031 = vmatprep.subr.bf16.mxu0 0
      %1032 = vmatpush1.bf16.msra.mxu0 %v801
      %1033 = vmatprep.subr.bf16.mxu0 0
      %1034 = vmatpush1.bf16.msra.mxu0 %v802
      %1035 = vmatprep.subr.bf16.mxu0 0
      %1036 = vmatpush1.bf16.msra.mxu0 %v803
      %1037 = vmatprep.subr.bf16.mxu0 0
      %1038 = vmatpush1.bf16.msra.mxu0 %v804
      %1039 = vmatprep.subr.bf16.mxu0 0
      %1040 = vmatpush1.bf16.msra.mxu0 %v805
      %1041 = vmatprep.subr.bf16.mxu0 0
      %1042 = vmatpush1.bf16.msra.mxu0 %v806
      %1043 = vmatprep.subr.bf16.mxu0 0
      %1044 = vmatpush1.bf16.msra.mxu0 %v807
      %1045 = vmatprep.subr.bf16.mxu0 0
      %1046 = vmatpush1.bf16.msra.mxu0 %v808
      %1047 = vmatprep.subr.bf16.mxu0 0
      %1048 = vmatpush1.bf16.msra.mxu0 %v809
      %1049 = vmatprep.subr.bf16.mxu0 0
      %1050 = vmatpush1.bf16.msra.mxu0 %v810
      %1051 = vmatprep.subr.bf16.mxu0 0
      %1052 = vmatpush1.bf16.msra.mxu0 %v811
      %1053 = vmatprep.subr.bf16.mxu0 0
      %1054 = vmatpush1.bf16.msra.mxu0 %v812
      %1055 = vmatprep.mubr.bf16.mxu0 %v450
      %1056 = vmatmul.mubr.bf16.gmra.mrb[0].mxu0 %v449
      %v1057 = vpop.f32.mrb[0].mxu0
      %v1058 = vadd.f32 %v993, %v1057
      %v1059 = vpop.f32.mrb[0].mxu0
      %v1060 = vpop.f32.mrb[0].mxu0
      %v1061 = vadd.f32 %v996, %v1060
      %v1062 = vpop.f32.mrb[0].mxu0
      %1063 = vmatprep.mubr.bf16.mxu0 %v458
      %1064 = vmatmul.mubr.bf16.gmra.mrb[0].mxu0 %v457
      %v1065 = vpop.f32.mrb[0].mxu0
      %v1066 = vadd.f32 %v1001, %v1065
      %v1067 = vpop.f32.mrb[0].mxu0
      %v1068 = vpop.f32.mrb[0].mxu0
      %v1069 = vadd.f32 %v1004, %v1068
      %v1070 = vpop.f32.mrb[0].mxu0
      %1071 = vmatprep.mubr.bf16.mxu0 %v466
      %1072 = vmatmul.mubr.bf16.gmra.mrb[0].mxu0 %v465
      %v1073 = vpop.f32.mrb[0].mxu0
      %v1074 = vadd.f32 %v1009, %v1073
      %v1075 = vpop.f32.mrb[0].mxu0
      %v1076 = vpop.f32.mrb[0].mxu0
      %v1077 = vadd.f32 %v1012, %v1076
      %v1078 = vpop.f32.mrb[0].mxu0
      %1079 = vmatprep.mubr.bf16.mxu0 %v474
      %1080 = vmatmul.mubr.bf16.gmra.mrb[0].mxu0 %v473
      %v1081 = vpop.f32.mrb[0].mxu0
      %v1082 = vadd.f32 %v1017, %v1081
      %v1083 = vpop.f32.mrb[0].mxu0
      %v1084 = vpop.f32.mrb[0].mxu0
      %v1085 = vadd.f32 %v1020, %v1084
      %v1086 = vpop.f32.mrb[0].mxu0
      %1087 = vdwg.mxu0
      %1088 = vmatprep.subr.bf16.mxu0 0
      %1089 = vmatpush1.bf16.msra.mxu0 %v813
      %1090 = vmatprep.subr.bf16.mxu0 0
      %1091 = vmatpush1.bf16.msra.mxu0 %v814
      %1092 = vmatprep.subr.bf16.mxu0 0
      %1093 = vmatpush1.bf16.msra.mxu0 %v815
      %1094 = vmatprep.subr.bf16.mxu0 0
      %1095 = vmatpush1.bf16.msra.mxu0 %v816
      %1096 = vmatprep.subr.bf16.mxu0 0
      %1097 = vmatpush1.bf16.msra.mxu0 %v817
      %1098 = vmatprep.subr.bf16.mxu0 0
      %1099 = vmatpush1.bf16.msra.mxu0 %v818
      %1100 = vmatprep.subr.bf16.mxu0 0
      %1101 = vmatpush1.bf16.msra.mxu0 %v819
      %1102 = vmatprep.subr.bf16.mxu0 0
      %1103 = vmatpush1.bf16.msra.mxu0 %v820
      %1104 = vmatprep.subr.bf16.mxu0 0
      %1105 = vmatpush1.bf16.msra.mxu0 %v821
      %1106 = vmatprep.subr.bf16.mxu0 0
      %1107 = vmatpush1.bf16.msra.mxu0 %v822
      %1108 = vmatprep.subr.bf16.mxu0 0
      %1109 = vmatpush1.bf16.msra.mxu0 %v823
      %1110 = vmatprep.subr.bf16.mxu0 0
      %1111 = vmatpush1.bf16.msra.mxu0 %v824
      %1112 = vmatprep.subr.bf16.mxu0 0
      %1113 = vmatpush1.bf16.msra.mxu0 %v825
      %1114 = vmatprep.subr.bf16.mxu0 0
      %1115 = vmatpush1.bf16.msra.mxu0 %v826
      %1116 = vmatprep.subr.bf16.mxu0 0
      %1117 = vmatpush1.bf16.msra.mxu0 %v827
      %1118 = vmatprep.subr.bf16.mxu0 0
      %1119 = vmatpush1.bf16.msra.mxu0 %v828
      %1120 = vmatprep.mubr.bf16.mxu0 %v452
      %1121 = vmatmul.mubr.bf16.gmra.mrb[0].mxu0 %v451
      %v1122 = vpop.f32.mrb[0].mxu0
      %v1123 = vadd.f32 %v1058, %v1122
      %v1124 = vpop.f32.mrb[0].mxu0
      %v1125 = vpop.f32.mrb[0].mxu0
      %v1126 = vadd.f32 %v1061, %v1125
      %v1127 = vpop.f32.mrb[0].mxu0
      %1128 = vmatprep.mubr.bf16.mxu0 %v460
      %1129 = vmatmul.mubr.bf16.gmra.mrb[0].mxu0 %v459
      %v1130 = vpop.f32.mrb[0].mxu0
      %v1131 = vadd.f32 %v1066, %v1130
      %v1132 = vpop.f32.mrb[0].mxu0
      %v1133 = vpop.f32.mrb[0].mxu0
      %v1134 = vadd.f32 %v1069, %v1133
      %v1135 = vpop.f32.mrb[0].mxu0
      %1136 = vmatprep.mubr.bf16.mxu0 %v468
      %1137 = vmatmul.mubr.bf16.gmra.mrb[0].mxu0 %v467
      %v1138 = vpop.f32.mrb[0].mxu0
      %v1139 = vadd.f32 %v1074, %v1138
      %v1140 = vpop.f32.mrb[0].mxu0
      %v1141 = vpop.f32.mrb[0].mxu0
      %v1142 = vadd.f32 %v1077, %v1141
      %v1143 = vpop.f32.mrb[0].mxu0
      %1144 = vmatprep.mubr.bf16.mxu0 %v476
      %1145 = vmatmul.mubr.bf16.gmra.mrb[0].mxu0 %v475
      %v1146 = vpop.f32.mrb[0].mxu0
      %v1147 = vadd.f32 %v1082, %v1146
      %v1148 = vpop.f32.mrb[0].mxu0
      %v1149 = vpop.f32.mrb[0].mxu0
      %v1150 = vadd.f32 %v1085, %v1149
      %v1151 = vpop.f32.mrb[0].mxu0
      %1152 = vdwg.mxu0
      %v1153 = vadd.f32 %v1123, %v1126
      %v1154 = vadd.f32 %v1153, %v1131
      %v1155 = vadd.f32 %v1154, %v1134
      %v1156 = vadd.f32 %v1155, %v1139
      %v1157 = vadd.f32 %v1156, %v1142
      %v1158 = vadd.f32 %v1157, %v1147
      %v1159 = vadd.f32 %v1158, %v1150
      %v1160 = vrot.slane %v1159, 4
      %v1161 = vadd.f32 %v1159, %v1160
      %v1162 = vrot.slane %v1161, 2
      %v1163 = vadd.f32 %v1161, %v1162
      %v1164 = vrot.slane %v1163, 1
      %v1165 = vadd.f32 %v1163, %v1164
      %v1166 = vmul.f32 %v1123, %v1123
      %v1167 = vmul.f32 %v1126, %v1126
      %v1168 = vmul.f32 %v1131, %v1131
      %v1169 = vmul.f32 %v1134, %v1134
      %v1170 = vmul.f32 %v1139, %v1139
      %v1171 = vmul.f32 %v1142, %v1142
      %v1172 = vmul.f32 %v1147, %v1147
      %v1173 = vmul.f32 %v1150, %v1150
      %v1174 = vadd.f32 %v1166, %v1167
      %v1175 = vadd.f32 %v1174, %v1168
      %v1176 = vadd.f32 %v1175, %v1169
      %v1177 = vadd.f32 %v1176, %v1170
      %v1178 = vadd.f32 %v1177, %v1171
      %v1179 = vadd.f32 %v1178, %v1172
      %v1180 = vadd.f32 %v1179, %v1173
      %v1181 = vrot.slane %v1180, 4
      %v1182 = vadd.f32 %v1180, %v1181
      %v1183 = vrot.slane %v1182, 2
      %v1184 = vadd.f32 %v1182, %v1183
      %v1185 = vrot.slane %v1184, 1
      %v1186 = vadd.f32 %v1184, %v1185
      %v1187 = vlaneseq
      %v1188 = vshrl.u32 %v1187, 7
      %vm1189 = vcmp.eq.s32.totalorder %v1188, 0
      %v1190 = vsel %vm1189, %v1165, 0.0
      %vm1191 = vcmp.eq.s32.totalorder %v1188, 1
      %v1192 = vsel %vm1191, %v1186, 0.0
      %v1193 = vadd.f32 %v1190, %v1192
      %1194 = vst [vmem:[%s187] sm:$0xff] %v1193
      %v1195 = vpack.c.bf16 %v1126, %v1123
      %v1196 = vpack.c.bf16 %v1134, %v1131
      %v1197 = vpack.c.bf16 %v1142, %v1139
      %v1198 = vpack.c.bf16 %v1150, %v1147
      %v1203 = vunpack.c.l.b16 %v1195
      %v1204 = vunpack.c.h.b16 %v1195
      %v1205 = vunpack.c.l.b16 %v1196
      %v1206 = vunpack.c.h.b16 %v1196
      %v1207 = vunpack.c.l.b16 %v1197
      %v1208 = vunpack.c.h.b16 %v1197
      %v1209 = vunpack.c.l.b16 %v1198
      %v1210 = vunpack.c.h.b16 %v1198
      %v1211 = vpack.c.b16 %v1203, %v1203
      %v1212 = vpack.c.b16 %v1204, %v1204
      %v1213 = vpack.c.b16 %v1205, %v1205
      %v1214 = vpack.c.b16 %v1206, %v1206
      %v1215 = vpack.c.b16 %v1207, %v1207
      %v1216 = vpack.c.b16 %v1208, %v1208
      %v1217 = vpack.c.b16 %v1209, %v1209
      %v1218 = vpack.c.b16 %v1210, %v1210
      %1227 = vst [vmem:[%s182] sm:$0xf] %v1211
      %1228 = vst [vmem:[%s182 + $0x4] sm:$0xf] %v1212
      %1229 = vst [vmem:[%s182 + $0x8] sm:$0xf] %v1213
      %1230 = vst [vmem:[%s182 + $0xc] sm:$0xf] %v1214
      %1231 = vst [vmem:[%s182 + $0x10] sm:$0xf] %v1215
      %1232 = vst [vmem:[%s182 + $0x14] sm:$0xf] %v1216
      %1233 = vst [vmem:[%s182 + $0x18] sm:$0xf] %v1217
      %1234 = vst [vmem:[%s182 + $0x1c] sm:$0xf] %v1218
      %s1235 = smul.u32 8, %s15
      %p1236 = scmp.lt.s32.totalorder %s1235, 15
      %s1237 = scalar_select %p1236, %s1235, 15
      %s1238 = smul.addr %s1237, 4
      %s1239 = scalar_lea.vmem %s2, %s1238
      %p1240 = scmp.lt.s32.totalorder %s15, 1
      %s1241 = scalar_select %p1240, %s15, 1
      %s1242 = smul.addr %s1241, 8
      %s1243 = scalar_lea.vmem %s3, %s1242
      // Predicated region
      $region29: #{encoder_forward.6} parent=27 // pred_check
        %p1244 = pneg %p80
      $region30: #{encoder_forward.6} parent=27 // pred_check_branch
        %1246 = sbr.rel (%p1244) target = $region32
      $region31: #{encoder_forward.6} parent=27 // pred_region
        %s1247 = smul.u32 8, %s15
      $region32: #{encoder_forward.6} parent=27 // pred_fallthru
        _
      // Predicated region
      $region33: #{encoder_forward.6} parent=27 // pred_check
        %p1248 = pneg %p106
      $region34: #{encoder_forward.6} parent=27 // pred_check_branch
        %1250 = sbr.rel (%p1248) target = $region36
      $region35: #{encoder_forward.6} parent=27 // pred_region
        _
      $region36: #{encoder_forward.6} parent=27 // pred_fallthru
        _
    $region28: #{encoder_forward.6} parent=5 // pred_fallthru
      _
    %p1251 = scmp.le.s32.totalorder 2, %s10
    // Predicated region
    $region37: #{encoder_forward.6} parent=5 // pred_check
      %p1252 = pneg %p1251
    $region38: #{encoder_forward.6} parent=5 // pred_check_branch
      %1254 = sbr.rel (%p1252) target = $region40
    $region39: #{encoder_forward.6} parent=5 // pred_region
      %s1255 = ssub.s32 %s10, 2
      // Predicated region
      $region41: #{encoder_forward.6} parent=39 // pred_check
        %p1256 = pneg %p86
      $region42: #{encoder_forward.6} parent=39 // pred_check_branch
        %1258 = sbr.rel (%p1256) target = $region44
      $region43: #{encoder_forward.6} parent=39 // pred_region
        %s1259 = smul.u32 8, %s16
        %p1260 = scmp.lt.s32.totalorder %s1259, 15
        %s1261 = scalar_select %p1260, %s1259, 15
        %s1262 = smul.addr %s1261, 4
        %s1263 = scalar_lea.vmem %s2, %s1262
      $region44: #{encoder_forward.6} parent=39 // pred_fallthru
        _
      // Predicated region
      $region45: #{encoder_forward.6} parent=39 // pred_check
        %p1264 = pneg %p112
      $region46: #{encoder_forward.6} parent=39 // pred_check_branch
        %1266 = sbr.rel (%p1264) target = $region48
      $region47: #{encoder_forward.6} parent=39 // pred_region
        %p1267 = scmp.lt.s32.totalorder %s16, 1
        %s1268 = scalar_select %p1267, %s16, 1
        %s1269 = smul.addr %s1268, 8
        %s1270 = scalar_lea.vmem %s3, %s1269
      $region48: #{encoder_forward.6} parent=39 // pred_fallthru
        _
    $region40: #{encoder_forward.6} parent=5 // pred_fallthru
      _
  $region6: #{encoder_forward.6} parent=0 // loop_footer
    %s14 = sadd.s32 1, %s10
  $region7: #{encoder_forward.6} parent=0 // loop_footer_branch
    %9 = sbr.rel target = $region3
  $region8: #{encoder_forward.6} parent=0 // loop_exit
    _

// kernel: encoder_forward.7
$region0: #{encoder_forward.7}
  #allocation0 [shape = 'u32[]', space=smem, size = 0x4, offset = 0x4, fixed_abs, tag = 'smem constant byte address 0x4 - core index']
  #allocation1 [shape = 'u32[144,128]{1,0:T(1,128)}', space=vmem, size = 0x12000, scoped, tag = 'internal scratch']
  %s0 = inlined_call_operand.vmem [shape: bf16[128,128], index: 0, kind: input, shape index: {}]
  %s1 = inlined_call_operand.vmem [shape: f32[1,128], index: 1, kind: input, shape index: {}]
  %s2 = inlined_call_operand.vmem [shape: f32[1,128], index: 2, kind: input, shape index: {}]
  %s3 = inlined_call_operand.vmem [shape: bf16[128,128], index: 3, kind: output, shape index: {}]
  %s4 = sld [smem:[#allocation0]]
  $region45: #{encoder_forward.7} parent=0
    _
  %s6 = ssub.s32 1, %s4
  %s7 = scalar_select 0, %s6, %s4
  loop: start=0, step=1, limit=4
  $region2: #{encoder_forward.7} parent=0 // loop_pre_header
    _
  $region3: #{encoder_forward.7} parent=0 // loop_header
    %s9 = sphi 0, %s13
    %p10 = scmp.ge.s32.totalorder %s9, 4
    %s19 = sphi 0, %s21
    %s22 = sphi 0, %s19
    %s23 = sphi 0, %s22
    %s39 = sphi 0, %s23
    %s43 = sphi 0, %s43
    %s45 = sphi 0, %s43
    %s46 = sphi 0, %s45
    %s60 = sphi 0, %s46
    %s64 = sphi 0, %s64
    %s66 = sphi 0, %s64
    %s67 = sphi 0, %s66
    %s81 = sphi 0, %s67
    %s87 = sphi 0, %s89
    %s90 = sphi 0, %s87
    %s91 = sphi 0, %s90
    %s107 = sphi 0, %s91
  $region4: #{encoder_forward.7} parent=0 // loop_header_branch
    %12 = sbr.rel (%p10) target = $region8
  $region5: #{encoder_forward.7} parent=0 // loop_body
    %s14 = ssub.s32 %s9, 1
    %s15 = ssub.s32 %s9, 2
    %s16 = sadd.s32 %s9, 1
    %s17 = ssub.s32 %s9, %s16
    %p18 = scmp.eq.s32.totalorder %s17, 0
    %s20 = sadd.s32 %s19, 1
    %s21 = scalar_select %p18, %s19, %s20
    %p24 = pneg %p18
    %p25 = scmp.eq.s32.totalorder %s9, 1
    %p26 = por %p24, %p25
    %p27 = scmp.ne.s32.totalorder %s19, %s22
    %p28 = scmp.eq.s32.totalorder %s9, 0
    %p29 = por %p27, %p28
    %p30 = scmp.ne.s32.totalorder %s19, %s22
    %p31 = scmp.eq.s32.totalorder %s14, 1
    %p32 = por %p30, %p31
    %p33 = scmp.ne.s32.totalorder %s22, %s23
    %p34 = scmp.eq.s32.totalorder %s14, 0
    %p35 = por %p33, %p34
    %p36 = scmp.ne.s32.totalorder %s22, %s23
    %p37 = scmp.eq.s32.totalorder %s15, 1
    %p38 = por %p36, %p37
    %p40 = scmp.ne.s32.totalorder %s23, %s39
    %p41 = scmp.eq.s32.totalorder %s15, 0
    %p42 = por %p40, %p41
    %s44 = sadd.s32 %s43, 1
    %p47 = scmp.eq.s32.totalorder %s9, 1
    %p48 = scmp.ne.s32.totalorder %s43, %s45
    %p49 = scmp.eq.s32.totalorder %s9, 0
    %p50 = por %p48, %p49
    %p51 = scmp.ne.s32.totalorder %s43, %s45
    %p52 = scmp.eq.s32.totalorder %s14, 1
    %p53 = por %p51, %p52
    %p54 = scmp.ne.s32.totalorder %s45, %s46
    %p55 = scmp.eq.s32.totalorder %s14, 0
    %p56 = por %p54, %p55
    %p57 = scmp.ne.s32.totalorder %s45, %s46
    %p58 = scmp.eq.s32.totalorder %s15, 1
    %p59 = por %p57, %p58
    %p61 = scmp.ne.s32.totalorder %s46, %s60
    %p62 = scmp.eq.s32.totalorder %s15, 0
    %p63 = por %p61, %p62
    %s65 = sadd.s32 %s64, 1
    %p68 = scmp.eq.s32.totalorder %s9, 1
    %p69 = scmp.ne.s32.totalorder %s64, %s66
    %p70 = scmp.eq.s32.totalorder %s9, 0
    %p71 = por %p69, %p70
    %p72 = scmp.ne.s32.totalorder %s64, %s66
    %p73 = scmp.eq.s32.totalorder %s14, 1
    %p74 = por %p72, %p73
    %p75 = scmp.ne.s32.totalorder %s66, %s67
    %p76 = scmp.eq.s32.totalorder %s14, 0
    %p77 = por %p75, %p76
    %p78 = scmp.ne.s32.totalorder %s66, %s67
    %p79 = scmp.eq.s32.totalorder %s15, 1
    %p80 = por %p78, %p79
    %p82 = scmp.ne.s32.totalorder %s67, %s81
    %p83 = scmp.eq.s32.totalorder %s15, 0
    %p84 = por %p82, %p83
    %s85 = ssub.s32 %s9, %s16
    %p86 = scmp.eq.s32.totalorder %s85, 0
    %s88 = sadd.s32 %s87, 1
    %s89 = scalar_select %p86, %s87, %s88
    %p92 = pneg %p86
    %p93 = scmp.eq.s32.totalorder %s9, 1
    %p94 = por %p92, %p93
    %p95 = scmp.ne.s32.totalorder %s87, %s90
    %p96 = scmp.eq.s32.totalorder %s9, 0
    %p97 = por %p95, %p96
    %p98 = scmp.ne.s32.totalorder %s87, %s90
    %p99 = scmp.eq.s32.totalorder %s14, 1
    %p100 = por %p98, %p99
    %p101 = scmp.ne.s32.totalorder %s90, %s91
    %p102 = scmp.eq.s32.totalorder %s14, 0
    %p103 = por %p101, %p102
    %p104 = scmp.ne.s32.totalorder %s90, %s91
    %p105 = scmp.eq.s32.totalorder %s15, 1
    %p106 = por %p104, %p105
    %p108 = scmp.ne.s32.totalorder %s91, %s107
    %p109 = scmp.eq.s32.totalorder %s15, 0
    %p110 = por %p108, %p109
    %p111 = scmp.le.s32.totalorder 1, %s9
    %p112 = scmp.lt.s32.totalorder %s9, 3
    %p113 = pnand %p111, %p112
    %p114 = pneg %p113
    // Predicated region
    $region9: #{encoder_forward.7} parent=5 // pred_check
      _
    $region10: #{encoder_forward.7} parent=5 // pred_check_branch
      %116 = sbr.rel (%p113) target = $region12
    $region11: #{encoder_forward.7} parent=5 // pred_region
      %s117 = ssub.s32 %s9, 1
      // Predicated region
      $region13: #{encoder_forward.7} parent=11 // pred_check
        %p118 = pneg %p56
      $region14: #{encoder_forward.7} parent=11 // pred_check_branch
        %120 = sbr.rel (%p118) target = $region16
      $region15: #{encoder_forward.7} parent=11 // pred_region
        _
      $region16: #{encoder_forward.7} parent=11 // pred_fallthru
        _
      // Predicated region
      $region17: #{encoder_forward.7} parent=11 // pred_check
        %p121 = pneg %p77
      $region18: #{encoder_forward.7} parent=11 // pred_check_branch
        %123 = sbr.rel (%p121) target = $region20
      $region19: #{encoder_forward.7} parent=11 // pred_region
        _
      $region20: #{encoder_forward.7} parent=11 // pred_fallthru
        _
    $region12: #{encoder_forward.7} parent=5 // pred_fallthru
      _
    %p124 = scmp.lt.s32.totalorder %s9, 2
    // Predicated region
    $region21: #{encoder_forward.7} parent=5 // pred_check
      %p125 = pneg %p124
    $region22: #{encoder_forward.7} parent=5 // pred_check_branch
      %127 = sbr.rel (%p125) target = $region24
    $region23: #{encoder_forward.7} parent=5 // pred_region
      // Predicated region
      $region25: #{encoder_forward.7} parent=23 // pred_check
        %p128 = pneg %p29
      $region26: #{encoder_forward.7} parent=23 // pred_check_branch
        %130 = sbr.rel (%p128) target = $region28
      $region27: #{encoder_forward.7} parent=23 // pred_region
        %s131 = smul.u32 8, %s9
        %p132 = scmp.lt.s32.totalorder %s131, 15
        %s133 = scalar_select %p132, %s131, 15
        %s134 = smul.addr %s133, 4
        %s135 = scalar_lea.vmem %s0, %s134
        %s136 = smul.u32 8, %s9
      $region28: #{encoder_forward.7} parent=23 // pred_fallthru
        _
    $region24: #{encoder_forward.7} parent=5 // pred_fallthru
      _
    %p137 = scmp.le.s32.totalorder 1, %s9
    %p138 = scmp.lt.s32.totalorder %s9, 3
    %p139 = pnand %p137, %p138
    %p140 = pneg %p139
    // Predicated region
    $region29: #{encoder_forward.7} parent=5 // pred_check
      _
    $region30: #{encoder_forward.7} parent=5 // pred_check_branch
      %142 = sbr.rel (%p139) target = $region32
    $region31: #{encoder_forward.7} parent=5 // pred_region
      %s143 = ssub.s32 %s9, 1
      %s144 = smul.u32 8, %s14
      %p145 = scmp.lt.s32.totalorder %s144, 15
      %s146 = scalar_select %p145, %s144, 15
      %s147 = smul.addr %s146, 4
      %s148 = scalar_lea.vmem %s0, %s147
      %p149 = pneg %p35
      %p150 = pneg %p32
      %p151 = pneg %p56
      %p152 = pneg %p53
      %p153 = pneg %p77
      %p154 = pneg %p74
      %p155 = pneg %p103
      %p156 = pneg %p100
      %s157 = smul.u32 8, %s14
      %p158 = scmp.lt.s32.totalorder %s157, 15
      %s159 = scalar_select %p158, %s157, 15
      %s160 = smul.addr %s159, 4
      %s161 = scalar_lea.vmem %s3, %s160
      %s162 = smul.u32 8, %s14
      %p163 = scmp.lt.s32.totalorder %s162, 15
      %s164 = scalar_select %p163, %s162, 15
      %s165 = smul.addr %s164, 4
      %s166 = scalar_lea.vmem %s0, %s165
      %s167 = smul.u32 8, %s14
      %s168 = smul.u32 8, %s14
      %p169 = scmp.lt.s32.totalorder %s168, 15
      %s170 = scalar_select %p169, %s168, 15
      %s171 = smul.addr %s170, 4
      %s172 = scalar_lea.vmem %s3, %s171
      %s173 = smul.u32 8, %s14
      %v174 = vld [vmem:[%s166] sm:$0xf]
      %v175 = vld [vmem:[%s166 + $0x4] sm:$0xf]
      %v176 = vld [vmem:[%s166 + $0x8] sm:$0xf]
      %v177 = vld [vmem:[%s166 + $0xc] sm:$0xf]
      %v178 = vld [vmem:[%s166 + $0x10] sm:$0xf]
      %v179 = vld [vmem:[%s166 + $0x14] sm:$0xf]
      %v180 = vld [vmem:[%s166 + $0x18] sm:$0xf]
      %v181 = vld [vmem:[%s166 + $0x1c] sm:$0xf]
      %v182 = vunpack.c.l.bf16 %v174
      %v183 = vunpack.c.l.bf16 %v175
      %v184 = vunpack.c.l.bf16 %v176
      %v185 = vunpack.c.l.bf16 %v177
      %v186 = vunpack.c.l.bf16 %v178
      %v187 = vunpack.c.l.bf16 %v179
      %v188 = vunpack.c.l.bf16 %v180
      %v189 = vunpack.c.l.bf16 %v181
      %v190 = vld [vmem:[%s1] sm:$0x1]
      %v192 = vlaneseq
      %v193 = vshrl.u32 %v192, 7
      %v194 = vsub.s32 0, %v193
      %v195 = vrot.slane %v190, %v194
      %v197 = vmul.f32 %v182, %v195
      %v198 = vmul.f32 %v183, %v195
      %v199 = vmul.f32 %v184, %v195
      %v200 = vmul.f32 %v185, %v195
      %v201 = vmul.f32 %v186, %v195
      %v202 = vmul.f32 %v187, %v195
      %v203 = vmul.f32 %v188, %v195
      %v204 = vmul.f32 %v189, %v195
      %v205 = vld [vmem:[%s2] sm:$0x1]
      %v207 = vlaneseq
      %v208 = vshrl.u32 %v207, 7
      %v209 = vsub.s32 0, %v208
      %v210 = vrot.slane %v205, %v209
      %v212 = vadd.f32 %v197, %v210
      %v213 = vadd.f32 %v198, %v210
      %v214 = vadd.f32 %v199, %v210
      %v215 = vadd.f32 %v200, %v210
      %v216 = vadd.f32 %v201, %v210
      %v217 = vadd.f32 %v202, %v210
      %v218 = vadd.f32 %v203, %v210
      %v219 = vadd.f32 %v204, %v210
      %vm220 = vcmp.ge.f32.partialorder %v212, 0.0
      %vm221 = vcmp.ge.f32.partialorder %v213, 0.0
      %vm222 = vcmp.ge.f32.partialorder %v214, 0.0
      %vm223 = vcmp.ge.f32.partialorder %v215, 0.0
      %vm224 = vcmp.ge.f32.partialorder %v216, 0.0
      %vm225 = vcmp.ge.f32.partialorder %v217, 0.0
      %vm226 = vcmp.ge.f32.partialorder %v218, 0.0
      %vm227 = vcmp.ge.f32.partialorder %v219, 0.0
      %v228 = vmul.f32 %v212, 0.2
      %v229 = vmul.f32 %v213, 0.2
      %v230 = vmul.f32 %v214, 0.2
      %v231 = vmul.f32 %v215, 0.2
      %v232 = vmul.f32 %v216, 0.2
      %v233 = vmul.f32 %v217, 0.2
      %v234 = vmul.f32 %v218, 0.2
      %v235 = vmul.f32 %v219, 0.2
      %v236 = vsel %vm220, %v212, %v228
      %v237 = vsel %vm221, %v213, %v229
      %v238 = vsel %vm222, %v214, %v230
      %v239 = vsel %vm223, %v215, %v231
      %v240 = vsel %vm224, %v216, %v232
      %v241 = vsel %vm225, %v217, %v233
      %v242 = vsel %vm226, %v218, %v234
      %v243 = vsel %vm227, %v219, %v235
      %v244 = vpack.c.bf16 %v237, %v236
      %v245 = vpack.c.bf16 %v239, %v238
      %v246 = vpack.c.bf16 %v241, %v240
      %v247 = vpack.c.bf16 %v243, %v242
      %v252 = vunpack.c.l.b16 %v244
      %v253 = vunpack.c.h.b16 %v244
      %v254 = vunpack.c.l.b16 %v245
      %v255 = vunpack.c.h.b16 %v245
      %v256 = vunpack.c.l.b16 %v246
      %v257 = vunpack.c.h.b16 %v246
      %v258 = vunpack.c.l.b16 %v247
      %v259 = vunpack.c.h.b16 %v247
      %v260 = vpack.c.b16 %v252, %v252
      %v261 = vpack.c.b16 %v253, %v253
      %v262 = vpack.c.b16 %v254, %v254
      %v263 = vpack.c.b16 %v255, %v255
      %v264 = vpack.c.b16 %v256, %v256
      %v265 = vpack.c.b16 %v257, %v257
      %v266 = vpack.c.b16 %v258, %v258
      %v267 = vpack.c.b16 %v259, %v259
      %276 = vst [vmem:[%s172] sm:$0xf] %v260
      %277 = vst [vmem:[%s172 + $0x4] sm:$0xf] %v261
      %278 = vst [vmem:[%s172 + $0x8] sm:$0xf] %v262
      %279 = vst [vmem:[%s172 + $0xc] sm:$0xf] %v263
      %280 = vst [vmem:[%s172 + $0x10] sm:$0xf] %v264
      %281 = vst [vmem:[%s172 + $0x14] sm:$0xf] %v265
      %282 = vst [vmem:[%s172 + $0x18] sm:$0xf] %v266
      %283 = vst [vmem:[%s172 + $0x1c] sm:$0xf] %v267
      %s284 = smul.u32 8, %s14
      %p285 = scmp.lt.s32.totalorder %s284, 15
      %s286 = scalar_select %p285, %s284, 15
      %s287 = smul.addr %s286, 4
      %s288 = scalar_lea.vmem %s3, %s287
      // Predicated region
      $region33: #{encoder_forward.7} parent=31 // pred_check
        %p289 = pneg %p100
      $region34: #{encoder_forward.7} parent=31 // pred_check_branch
        %291 = sbr.rel (%p289) target = $region36
      $region35: #{encoder_forward.7} parent=31 // pred_region
        %s292 = smul.u32 8, %s14
      $region36: #{encoder_forward.7} parent=31 // pred_fallthru
        _
    $region32: #{encoder_forward.7} parent=5 // pred_fallthru
      _
    %p293 = scmp.le.s32.totalorder 2, %s9
    // Predicated region
    $region37: #{encoder_forward.7} parent=5 // pred_check
      %p294 = pneg %p293
    $region38: #{encoder_forward.7} parent=5 // pred_check_branch
      %296 = sbr.rel (%p294) target = $region40
    $region39: #{encoder_forward.7} parent=5 // pred_region
      %s297 = ssub.s32 %s9, 2
      // Predicated region
      $region41: #{encoder_forward.7} parent=39 // pred_check
        %p298 = pneg %p106
      $region42: #{encoder_forward.7} parent=39 // pred_check_branch
        %300 = sbr.rel (%p298) target = $region44
      $region43: #{encoder_forward.7} parent=39 // pred_region
        %s301 = smul.u32 8, %s15
        %p302 = scmp.lt.s32.totalorder %s301, 15
        %s303 = scalar_select %p302, %s301, 15
        %s304 = smul.addr %s303, 4
        %s305 = scalar_lea.vmem %s3, %s304
      $region44: #{encoder_forward.7} parent=39 // pred_fallthru
        _
    $region40: #{encoder_forward.7} parent=5 // pred_fallthru
      _
  $region6: #{encoder_forward.7} parent=0 // loop_footer
    %s13 = sadd.s32 1, %s9
  $region7: #{encoder_forward.7} parent=0 // loop_footer_branch
    %8 = sbr.rel target = $region3
  $region8: #{encoder_forward.7} parent=0 // loop_exit
    _

// kernel: encoder_forward.8
$region0: #{encoder_forward.8}
  #allocation0 [shape = 'u32[]', space=smem, size = 0x4, offset = 0x4, fixed_abs, tag = 'smem constant byte address 0x4 - core index']
  #allocation1 [shape = 'u32[144,128]{1,0:T(1,128)}', space=vmem, size = 0x12000, scoped, tag = 'internal scratch']
  %s0 = inlined_call_operand.vmem [shape: bf16[32,2048], index: 0, kind: input, shape index: {}]
  %s1 = inlined_call_operand.vmem [shape: bf16[2048,256], index: 1, kind: input, shape index: {}]
  %s2 = inlined_call_operand.vmem [shape: bf16[32,256], index: 2, kind: output, shape index: {0}]
  %s3 = inlined_call_operand.vmem [shape: f32[2,8,256], index: 3, kind: output, shape index: {1}]
  %4 = xla_tuple %s2, %s3
  %s5 = sld [smem:[#allocation0]]
  $region49: #{encoder_forward.8} parent=0
    _
  %s7 = ssub.s32 1, %s5
  %s8 = scalar_select 0, %s7, %s5
  loop: start=0, step=1, limit=4
  $region2: #{encoder_forward.8} parent=0 // loop_pre_header
    _
  $region3: #{encoder_forward.8} parent=0 // loop_header
    %s10 = sphi 0, %s14
    %p11 = scmp.ge.s32.totalorder %s10, 4
    %s20 = sphi 0, %s22
    %s23 = sphi 0, %s20
    %s24 = sphi 0, %s23
    %s40 = sphi 0, %s24
    %s44 = sphi 0, %s44
    %s46 = sphi 0, %s44
    %s47 = sphi 0, %s46
    %s61 = sphi 0, %s47
    %s67 = sphi 0, %s69
    %s70 = sphi 0, %s67
    %s71 = sphi 0, %s70
    %s87 = sphi 0, %s71
    %s93 = sphi 0, %s95
    %s96 = sphi 0, %s93
    %s97 = sphi 0, %s96
    %s113 = sphi 0, %s97
  $region4: #{encoder_forward.8} parent=0 // loop_header_branch
    %13 = sbr.rel (%p11) target = $region8
  $region5: #{encoder_forward.8} parent=0 // loop_body
    %s15 = ssub.s32 %s10, 1
    %s16 = ssub.s32 %s10, 2
    %s17 = sadd.s32 %s10, 1
    %s18 = ssub.s32 %s10, %s17
    %p19 = scmp.eq.s32.totalorder %s18, 0
    %s21 = sadd.s32 %s20, 1
    %s22 = scalar_select %p19, %s20, %s21
    %p25 = pneg %p19
    %p26 = scmp.eq.s32.totalorder %s10, 1
    %p27 = por %p25, %p26
    %p28 = scmp.ne.s32.totalorder %s20, %s23
    %p29 = scmp.eq.s32.totalorder %s10, 0
    %p30 = por %p28, %p29
    %p31 = scmp.ne.s32.totalorder %s20, %s23
    %p32 = scmp.eq.s32.totalorder %s15, 1
    %p33 = por %p31, %p32
    %p34 = scmp.ne.s32.totalorder %s23, %s24
    %p35 = scmp.eq.s32.totalorder %s15, 0
    %p36 = por %p34, %p35
    %p37 = scmp.ne.s32.totalorder %s23, %s24
    %p38 = scmp.eq.s32.totalorder %s16, 1
    %p39 = por %p37, %p38
    %p41 = scmp.ne.s32.totalorder %s24, %s40
    %p42 = scmp.eq.s32.totalorder %s16, 0
    %p43 = por %p41, %p42
    %s45 = sadd.s32 %s44, 1
    %p48 = scmp.eq.s32.totalorder %s10, 1
    %p49 = scmp.ne.s32.totalorder %s44, %s46
    %p50 = scmp.eq.s32.totalorder %s10, 0
    %p51 = por %p49, %p50
    %p52 = scmp.ne.s32.totalorder %s44, %s46
    %p53 = scmp.eq.s32.totalorder %s15, 1
    %p54 = por %p52, %p53
    %p55 = scmp.ne.s32.totalorder %s46, %s47
    %p56 = scmp.eq.s32.totalorder %s15, 0
    %p57 = por %p55, %p56
    %p58 = scmp.ne.s32.totalorder %s46, %s47
    %p59 = scmp.eq.s32.totalorder %s16, 1
    %p60 = por %p58, %p59
    %p62 = scmp.ne.s32.totalorder %s47, %s61
    %p63 = scmp.eq.s32.totalorder %s16, 0
    %p64 = por %p62, %p63
    %s65 = ssub.s32 %s10, %s17
    %p66 = scmp.eq.s32.totalorder %s65, 0
    %s68 = sadd.s32 %s67, 1
    %s69 = scalar_select %p66, %s67, %s68
    %p72 = pneg %p66
    %p73 = scmp.eq.s32.totalorder %s10, 1
    %p74 = por %p72, %p73
    %p75 = scmp.ne.s32.totalorder %s67, %s70
    %p76 = scmp.eq.s32.totalorder %s10, 0
    %p77 = por %p75, %p76
    %p78 = scmp.ne.s32.totalorder %s67, %s70
    %p79 = scmp.eq.s32.totalorder %s15, 1
    %p80 = por %p78, %p79
    %p81 = scmp.ne.s32.totalorder %s70, %s71
    %p82 = scmp.eq.s32.totalorder %s15, 0
    %p83 = por %p81, %p82
    %p84 = scmp.ne.s32.totalorder %s70, %s71
    %p85 = scmp.eq.s32.totalorder %s16, 1
    %p86 = por %p84, %p85
    %p88 = scmp.ne.s32.totalorder %s71, %s87
    %p89 = scmp.eq.s32.totalorder %s16, 0
    %p90 = por %p88, %p89
    %s91 = ssub.s32 %s10, %s17
    %p92 = scmp.eq.s32.totalorder %s91, 0
    %s94 = sadd.s32 %s93, 1
    %s95 = scalar_select %p92, %s93, %s94
    %p98 = pneg %p92
    %p99 = scmp.eq.s32.totalorder %s10, 1
    %p100 = por %p98, %p99
    %p101 = scmp.ne.s32.totalorder %s93, %s96
    %p102 = scmp.eq.s32.totalorder %s10, 0
    %p103 = por %p101, %p102
    %p104 = scmp.ne.s32.totalorder %s93, %s96
    %p105 = scmp.eq.s32.totalorder %s15, 1
    %p106 = por %p104, %p105
    %p107 = scmp.ne.s32.totalorder %s96, %s97
    %p108 = scmp.eq.s32.totalorder %s15, 0
    %p109 = por %p107, %p108
    %p110 = scmp.ne.s32.totalorder %s96, %s97
    %p111 = scmp.eq.s32.totalorder %s16, 1
    %p112 = por %p110, %p111
    %p114 = scmp.ne.s32.totalorder %s97, %s113
    %p115 = scmp.eq.s32.totalorder %s16, 0
    %p116 = por %p114, %p115
    %p117 = scmp.le.s32.totalorder 1, %s10
    %p118 = scmp.lt.s32.totalorder %s10, 3
    %p119 = pnand %p117, %p118
    %p120 = pneg %p119
    // Predicated region
    $region9: #{encoder_forward.8} parent=5 // pred_check
      _
    $region10: #{encoder_forward.8} parent=5 // pred_check_branch
      %122 = sbr.rel (%p119) target = $region12
    $region11: #{encoder_forward.8} parent=5 // pred_region
      %s123 = ssub.s32 %s10, 1
      // Predicated region
      $region13: #{encoder_forward.8} parent=11 // pred_check
        %p124 = pneg %p57
      $region14: #{encoder_forward.8} parent=11 // pred_check_branch
        %126 = sbr.rel (%p124) target = $region16
      $region15: #{encoder_forward.8} parent=11 // pred_region
        _
      $region16: #{encoder_forward.8} parent=11 // pred_fallthru
        _
    $region12: #{encoder_forward.8} parent=5 // pred_fallthru
      _
    %p127 = scmp.lt.s32.totalorder %s10, 2
    // Predicated region
    $region17: #{encoder_forward.8} parent=5 // pred_check
      %p128 = pneg %p127
    $region18: #{encoder_forward.8} parent=5 // pred_check_branch
      %130 = sbr.rel (%p128) target = $region20
    $region19: #{encoder_forward.8} parent=5 // pred_region
      // Predicated region
      $region21: #{encoder_forward.8} parent=19 // pred_check
        %p131 = pneg %p30
      $region22: #{encoder_forward.8} parent=19 // pred_check_branch
        %133 = sbr.rel (%p131) target = $region24
      $region23: #{encoder_forward.8} parent=19 // pred_region
        %s134 = smul.u32 2, %s10
        %p135 = scmp.lt.s32.totalorder %s134, 3
        %s136 = scalar_select %p135, %s134, 3
        %s137 = smul.addr %s136, 16
        %s138 = smul.addr %s137, 4
        %s139 = scalar_lea.vmem %s0, %s138
        %s140 = smul.u32 2, %s10
      $region24: #{encoder_forward.8} parent=19 // pred_fallthru
        _
    $region20: #{encoder_forward.8} parent=5 // pred_fallthru
      _
    %p141 = scmp.le.s32.totalorder 1, %s10
    %p142 = scmp.lt.s32.totalorder %s10, 3
    %p143 = pnand %p141, %p142
    %p144 = pneg %p143
    // Predicated region
    $region25: #{encoder_forward.8} parent=5 // pred_check
      _
    $region26: #{encoder_forward.8} parent=5 // pred_check_branch
      %146 = sbr.rel (%p143) target = $region28
    $region27: #{encoder_forward.8} parent=5 // pred_region
      %s147 = ssub.s32 %s10, 1
      %s148 = smul.u32 2, %s15
      %p149 = scmp.lt.s32.totalorder %s148, 3
      %s150 = scalar_select %p149, %s148, 3
      %s151 = smul.addr %s150, 16
      %s152 = smul.addr %s151, 4
      %s153 = scalar_lea.vmem %s0, %s152
      %p154 = pneg %p36
      %p155 = pneg %p33
      %p156 = pneg %p57
      %p157 = pneg %p54
      %p158 = pneg %p83
      %p159 = pneg %p80
      %s160 = smul.u32 2, %s15
      %p161 = scmp.lt.s32.totalorder %s160, 3
      %s162 = scalar_select %p161, %s160, 3
      %s163 = smul.addr %s162, 2
      %s164 = smul.addr %s163, 4
      %s165 = scalar_lea.vmem %s2, %s164
      %p166 = pneg %p109
      %p167 = pneg %p106
      %p168 = scmp.lt.s32.totalorder %s15, 1
      %s169 = scalar_select %p168, %s15, 1
      %s170 = smul.addr %s169, 2
      %s171 = smul.addr %s170, 8
      %s172 = scalar_lea.vmem %s3, %s171
      %s173 = smul.u32 2, %s15
      %p174 = scmp.lt.s32.totalorder %s173, 3
      %s175 = scalar_select %p174, %s173, 3
      %s176 = smul.addr %s175, 16
      %s177 = smul.addr %s176, 4
      %s178 = scalar_lea.vmem %s0, %s177
      %s179 = smul.u32 2, %s15
      %s180 = smul.u32 2, %s15
      %p181 = scmp.lt.s32.totalorder %s180, 3
      %s182 = scalar_select %p181, %s180, 3
      %s183 = smul.addr %s182, 2
      %s184 = smul.addr %s183, 4
      %s185 = scalar_lea.vmem %s2, %s184
      %s186 = smul.u32 2, %s15
      %p187 = scmp.lt.s32.totalorder %s15, 1
      %s188 = scalar_select %p187, %s15, 1
      %s189 = smul.addr %s188, 2
      %s190 = smul.addr %s189, 8
      %s191 = scalar_lea.vmem %s3, %s190
      %v192 = vld [vmem:[%s178] sm:$0xff]
      %v193 = vld [vmem:[%s178 + $0x8] sm:$0xff]
      %v194 = vld [vmem:[%s178 + $0x10] sm:$0xff]
      %v195 = vld [vmem:[%s178 + $0x18] sm:$0xff]
      %v196 = vld [vmem:[%s178 + $0x20] sm:$0xff]
      %v197 = vld [vmem:[%s178 + $0x28] sm:$0xff]
      %v198 = vld [vmem:[%s178 + $0x30] sm:$0xff]
      %v199 = vld [vmem:[%s178 + $0x38] sm:$0xff]
      %v200 = vld [vmem:[%s178 + $0x40] sm:$0xff]
      %v201 = vld [vmem:[%s178 + $0x48] sm:$0xff]
      %v202 = vld [vmem:[%s178 + $0x50] sm:$0xff]
      %v203 = vld [vmem:[%s178 + $0x58] sm:$0xff]
      %v204 = vld [vmem:[%s178 + $0x60] sm:$0xff]
      %v205 = vld [vmem:[%s178 + $0x68] sm:$0xff]
      %v206 = vld [vmem:[%s178 + $0x70] sm:$0xff]
      %v207 = vld [vmem:[%s178 + $0x78] sm:$0xff]
      %v208 = vld [vmem:[%s1] sm:$0xff]
      %v209 = vld [vmem:[%s1 + $0x8] sm:$0xff]
      %v210 = vld [vmem:[%s1 + $0x10] sm:$0xff]
      %v211 = vld [vmem:[%s1 + $0x18] sm:$0xff]
      %v212 = vld [vmem:[%s1 + $0x20] sm:$0xff]
      %v213 = vld [vmem:[%s1 + $0x28] sm:$0xff]
      %v214 = vld [vmem:[%s1 + $0x30] sm:$0xff]
      %v215 = vld [vmem:[%s1 + $0x38] sm:$0xff]
      %v216 = vld [vmem:[%s1 + $0x40] sm:$0xff]
      %v217 = vld [vmem:[%s1 + $0x48] sm:$0xff]
      %v218 = vld [vmem:[%s1 + $0x50] sm:$0xff]
      %v219 = vld [vmem:[%s1 + $0x58] sm:$0xff]
      %v220 = vld [vmem:[%s1 + $0x60] sm:$0xff]
      %v221 = vld [vmem:[%s1 + $0x68] sm:$0xff]
      %v222 = vld [vmem:[%s1 + $0x70] sm:$0xff]
      %v223 = vld [vmem:[%s1 + $0x78] sm:$0xff]
      %v224 = vld [vmem:[%s1 + $0x80] sm:$0xff]
      %v225 = vld [vmem:[%s1 + $0x88] sm:$0xff]
      %v226 = vld [vmem:[%s1 + $0x90] sm:$0xff]
      %v227 = vld [vmem:[%s1 + $0x98] sm:$0xff]
      %v228 = vld [vmem:[%s1 + $0xa0] sm:$0xff]
      %v229 = vld [vmem:[%s1 + $0xa8] sm:$0xff]
      %v230 = vld [vmem:[%s1 + $0xb0] sm:$0xff]
      %v231 = vld [vmem:[%s1 + $0xb8] sm:$0xff]
      %v232 = vld [vmem:[%s1 + $0xc0] sm:$0xff]
      %v233 = vld [vmem:[%s1 + $0xc8] sm:$0xff]
      %v234 = vld [vmem:[%s1 + $0xd0] sm:$0xff]
      %v235 = vld [vmem:[%s1 + $0xd8] sm:$0xff]
      %v236 = vld [vmem:[%s1 + $0xe0] sm:$0xff]
      %v237 = vld [vmem:[%s1 + $0xe8] sm:$0xff]
      %v238 = vld [vmem:[%s1 + $0xf0] sm:$0xff]
      %v239 = vld [vmem:[%s1 + $0xf8] sm:$0xff]
      %v240 = vld [vmem:[%s1 + $0x100] sm:$0xff]
      %v241 = vld [vmem:[%s1 + $0x108] sm:$0xff]
      %v242 = vld [vmem:[%s1 + $0x110] sm:$0xff]
      %v243 = vld [vmem:[%s1 + $0x118] sm:$0xff]
      %v244 = vld [vmem:[%s1 + $0x120] sm:$0xff]
      %v245 = vld [vmem:[%s1 + $0x128] sm:$0xff]
      %v246 = vld [vmem:[%s1 + $0x130] sm:$0xff]
      %v247 = vld [vmem:[%s1 + $0x138] sm:$0xff]
      %v248 = vld [vmem:[%s1 + $0x140] sm:$0xff]
      %v249 = vld [vmem:[%s1 + $0x148] sm:$0xff]
      %v250 = vld [vmem:[%s1 + $0x150] sm:$0xff]
      %v251 = vld [vmem:[%s1 + $0x158] sm:$0xff]
      %v252 = vld [vmem:[%s1 + $0x160] sm:$0xff]
      %v253 = vld [vmem:[%s1 + $0x168] sm:$0xff]
      %v254 = vld [vmem:[%s1 + $0x170] sm:$0xff]
      %v255 = vld [vmem:[%s1 + $0x178] sm:$0xff]
      %v256 = vld [vmem:[%s1 + $0x180] sm:$0xff]
      %v257 = vld [vmem:[%s1 + $0x188] sm:$0xff]
      %v258 = vld [vmem:[%s1 + $0x190] sm:$0xff]
      %v259 = vld [vmem:[%s1 + $0x198] sm:$0xff]
      %v260 = vld [vmem:[%s1 + $0x1a0] sm:$0xff]
      %v261 = vld [vmem:[%s1 + $0x1a8] sm:$0xff]
      %v262 = vld [vmem:[%s1 + $0x1b0] sm:$0xff]
      %v263 = vld [vmem:[%s1 + $0x1b8] sm:$0xff]
      %v264 = vld [vmem:[%s1 + $0x1c0] sm:$0xff]
      %v265 = vld [vmem:[%s1 + $0x1c8] sm:$0xff]
      %v266 = vld [vmem:[%s1 + $0x1d0] sm:$0xff]
      %v267 = vld [vmem:[%s1 + $0x1d8] sm:$0xff]
      %v268 = vld [vmem:[%s1 + $0x1e0] sm:$0xff]
      %v269 = vld [vmem:[%s1 + $0x1e8] sm:$0xff]
      %v270 = vld [vmem:[%s1 + $0x1f0] sm:$0xff]
      %v271 = vld [vmem:[%s1 + $0x1f8] sm:$0xff]
      %v272 = vld [vmem:[%s1 + $0x200] sm:$0xff]
      %v273 = vld [vmem:[%s1 + $0x208] sm:$0xff]
      %v274 = vld [vmem:[%s1 + $0x210] sm:$0xff]
      %v275 = vld [vmem:[%s1 + $0x218] sm:$0xff]
      %v276 = vld [vmem:[%s1 + $0x220] sm:$0xff]
      %v277 = vld [vmem:[%s1 + $0x228] sm:$0xff]
      %v278 = vld [vmem:[%s1 + $0x230] sm:$0xff]
      %v279 = vld [vmem:[%s1 + $0x238] sm:$0xff]
      %v280 = vld [vmem:[%s1 + $0x240] sm:$0xff]
      %v281 = vld [vmem:[%s1 + $0x248] sm:$0xff]
      %v282 = vld [vmem:[%s1 + $0x250] sm:$0xff]
      %v283 = vld [vmem:[%s1 + $0x258] sm:$0xff]
      %v284 = vld [vmem:[%s1 + $0x260] sm:$0xff]
      %v285 = vld [vmem:[%s1 + $0x268] sm:$0xff]
      %v286 = vld [vmem:[%s1 + $0x270] sm:$0xff]
      %v287 = vld [vmem:[%s1 + $0x278] sm:$0xff]
      %v288 = vld [vmem:[%s1 + $0x280] sm:$0xff]
      %v289 = vld [vmem:[%s1 + $0x288] sm:$0xff]
      %v290 = vld [vmem:[%s1 + $0x290] sm:$0xff]
      %v291 = vld [vmem:[%s1 + $0x298] sm:$0xff]
      %v292 = vld [vmem:[%s1 + $0x2a0] sm:$0xff]
      %v293 = vld [vmem:[%s1 + $0x2a8] sm:$0xff]
      %v294 = vld [vmem:[%s1 + $0x2b0] sm:$0xff]
      %v295 = vld [vmem:[%s1 + $0x2b8] sm:$0xff]
      %v296 = vld [vmem:[%s1 + $0x2c0] sm:$0xff]
      %v297 = vld [vmem:[%s1 + $0x2c8] sm:$0xff]
      %v298 = vld [vmem:[%s1 + $0x2d0] sm:$0xff]
      %v299 = vld [vmem:[%s1 + $0x2d8] sm:$0xff]
      %v300 = vld [vmem:[%s1 + $0x2e0] sm:$0xff]
      %v301 = vld [vmem:[%s1 + $0x2e8] sm:$0xff]
      %v302 = vld [vmem:[%s1 + $0x2f0] sm:$0xff]
      %v303 = vld [vmem:[%s1 + $0x2f8] sm:$0xff]
      %v304 = vld [vmem:[%s1 + $0x300] sm:$0xff]
      %v305 = vld [vmem:[%s1 + $0x308] sm:$0xff]
      %v306 = vld [vmem:[%s1 + $0x310] sm:$0xff]
      %v307 = vld [vmem:[%s1 + $0x318] sm:$0xff]
      %v308 = vld [vmem:[%s1 + $0x320] sm:$0xff]
      %v309 = vld [vmem:[%s1 + $0x328] sm:$0xff]
      %v310 = vld [vmem:[%s1 + $0x330] sm:$0xff]
      %v311 = vld [vmem:[%s1 + $0x338] sm:$0xff]
      %v312 = vld [vmem:[%s1 + $0x340] sm:$0xff]
      %v313 = vld [vmem:[%s1 + $0x348] sm:$0xff]
      %v314 = vld [vmem:[%s1 + $0x350] sm:$0xff]
      %v315 = vld [vmem:[%s1 + $0x358] sm:$0xff]
      %v316 = vld [vmem:[%s1 + $0x360] sm:$0xff]
      %v317 = vld [vmem:[%s1 + $0x368] sm:$0xff]
      %v318 = vld [vmem:[%s1 + $0x370] sm:$0xff]
      %v319 = vld [vmem:[%s1 + $0x378] sm:$0xff]
      %v320 = vld [vmem:[%s1 + $0x380] sm:$0xff]
      %v321 = vld [vmem:[%s1 + $0x388] sm:$0xff]
      %v322 = vld [vmem:[%s1 + $0x390] sm:$0xff]
      %v323 = vld [vmem:[%s1 + $0x398] sm:$0xff]
      %v324 = vld [vmem:[%s1 + $0x3a0] sm:$0xff]
      %v325 = vld [vmem:[%s1 + $0x3a8] sm:$0xff]
      %v326 = vld [vmem:[%s1 + $0x3b0] sm:$0xff]
      %v327 = vld [vmem:[%s1 + $0x3b8] sm:$0xff]
      %v328 = vld [vmem:[%s1 + $0x3c0] sm:$0xff]
      %v329 = vld [vmem:[%s1 + $0x3c8] sm:$0xff]
      %v330 = vld [vmem:[%s1 + $0x3d0] sm:$0xff]
      %v331 = vld [vmem:[%s1 + $0x3d8] sm:$0xff]
      %v332 = vld [vmem:[%s1 + $0x3e0] sm:$0xff]
      %v333 = vld [vmem:[%s1 + $0x3e8] sm:$0xff]
      %v334 = vld [vmem:[%s1 + $0x3f0] sm:$0xff]
      %v335 = vld [vmem:[%s1 + $0x3f8] sm:$0xff]
      %v336 = vld [vmem:[%s1 + $0x400] sm:$0xff]
      %v337 = vld [vmem:[%s1 + $0x408] sm:$0xff]
      %v338 = vld [vmem:[%s1 + $0x410] sm:$0xff]
      %v339 = vld [vmem:[%s1 + $0x418] sm:$0xff]
      %v340 = vld [vmem:[%s1 + $0x420] sm:$0xff]
      %v341 = vld [vmem:[%s1 + $0x428] sm:$0xff]
      %v342 = vld [vmem:[%s1 + $0x430] sm:$0xff]
      %v343 = vld [vmem:[%s1 + $0x438] sm:$0xff]
      %v344 = vld [vmem:[%s1 + $0x440] sm:$0xff]
      %v345 = vld [vmem:[%s1 + $0x448] sm:$0xff]
      %v346 = vld [vmem:[%s1 + $0x450] sm:$0xff]
      %v347 = vld [vmem:[%s1 + $0x458] sm:$0xff]
      %v348 = vld [vmem:[%s1 + $0x460] sm:$0xff]
      %v349 = vld [vmem:[%s1 + $0x468] sm:$0xff]
      %v350 = vld [vmem:[%s1 + $0x470] sm:$0xff]
      %v351 = vld [vmem:[%s1 + $0x478] sm:$0xff]
      %v352 = vld [vmem:[%s1 + $0x480] sm:$0xff]
      %v353 = vld [vmem:[%s1 + $0x488] sm:$0xff]
      %v354 = vld [vmem:[%s1 + $0x490] sm:$0xff]
      %v355 = vld [vmem:[%s1 + $0x498] sm:$0xff]
      %v356 = vld [vmem:[%s1 + $0x4a0] sm:$0xff]
      %v357 = vld [vmem:[%s1 + $0x4a8] sm:$0xff]
      %v358 = vld [vmem:[%s1 + $0x4b0] sm:$0xff]
      %v359 = vld [vmem:[%s1 + $0x4b8] sm:$0xff]
      %v360 = vld [vmem:[%s1 + $0x4c0] sm:$0xff]
      %v361 = vld [vmem:[%s1 + $0x4c8] sm:$0xff]
      %v362 = vld [vmem:[%s1 + $0x4d0] sm:$0xff]
      %v363 = vld [vmem:[%s1 + $0x4d8] sm:$0xff]
      %v364 = vld [vmem:[%s1 + $0x4e0] sm:$0xff]
      %v365 = vld [vmem:[%s1 + $0x4e8] sm:$0xff]
      %v366 = vld [vmem:[%s1 + $0x4f0] sm:$0xff]
      %v367 = vld [vmem:[%s1 + $0x4f8] sm:$0xff]
      %v368 = vld [vmem:[%s1 + $0x500] sm:$0xff]
      %v369 = vld [vmem:[%s1 + $0x508] sm:$0xff]
      %v370 = vld [vmem:[%s1 + $0x510] sm:$0xff]
      %v371 = vld [vmem:[%s1 + $0x518] sm:$0xff]
      %v372 = vld [vmem:[%s1 + $0x520] sm:$0xff]
      %v373 = vld [vmem:[%s1 + $0x528] sm:$0xff]
      %v374 = vld [vmem:[%s1 + $0x530] sm:$0xff]
      %v375 = vld [vmem:[%s1 + $0x538] sm:$0xff]
      %v376 = vld [vmem:[%s1 + $0x540] sm:$0xff]
      %v377 = vld [vmem:[%s1 + $0x548] sm:$0xff]
      %v378 = vld [vmem:[%s1 + $0x550] sm:$0xff]
      %v379 = vld [vmem:[%s1 + $0x558] sm:$0xff]
      %v380 = vld [vmem:[%s1 + $0x560] sm:$0xff]
      %v381 = vld [vmem:[%s1 + $0x568] sm:$0xff]
      %v382 = vld [vmem:[%s1 + $0x570] sm:$0xff]
      %v383 = vld [vmem:[%s1 + $0x578] sm:$0xff]
      %v384 = vld [vmem:[%s1 + $0x580] sm:$0xff]
      %v385 = vld [vmem:[%s1 + $0x588] sm:$0xff]
      %v386 = vld [vmem:[%s1 + $0x590] sm:$0xff]
      %v387 = vld [vmem:[%s1 + $0x598] sm:$0xff]
      %v388 = vld [vmem:[%s1 + $0x5a0] sm:$0xff]
      %v389 = vld [vmem:[%s1 + $0x5a8] sm:$0xff]
      %v390 = vld [vmem:[%s1 + $0x5b0] sm:$0xff]
      %v391 = vld [vmem:[%s1 + $0x5b8] sm:$0xff]
      %v392 = vld [vmem:[%s1 + $0x5c0] sm:$0xff]
      %v393 = vld [vmem:[%s1 + $0x5c8] sm:$0xff]
      %v394 = vld [vmem:[%s1 + $0x5d0] sm:$0xff]
      %v395 = vld [vmem:[%s1 + $0x5d8] sm:$0xff]
      %v396 = vld [vmem:[%s1 + $0x5e0] sm:$0xff]
      %v397 = vld [vmem:[%s1 + $0x5e8] sm:$0xff]
      %v398 = vld [vmem:[%s1 + $0x5f0] sm:$0xff]
      %v399 = vld [vmem:[%s1 + $0x5f8] sm:$0xff]
      %v400 = vld [vmem:[%s1 + $0x600] sm:$0xff]
      %v401 = vld [vmem:[%s1 + $0x608] sm:$0xff]
      %v402 = vld [vmem:[%s1 + $0x610] sm:$0xff]
      %v403 = vld [vmem:[%s1 + $0x618] sm:$0xff]
      %v404 = vld [vmem:[%s1 + $0x620] sm:$0xff]
      %v405 = vld [vmem:[%s1 + $0x628] sm:$0xff]
      %v406 = vld [vmem:[%s1 + $0x630] sm:$0xff]
      %v407 = vld [vmem:[%s1 + $0x638] sm:$0xff]
      %v408 = vld [vmem:[%s1 + $0x640] sm:$0xff]
      %v409 = vld [vmem:[%s1 + $0x648] sm:$0xff]
      %v410 = vld [vmem:[%s1 + $0x650] sm:$0xff]
      %v411 = vld [vmem:[%s1 + $0x658] sm:$0xff]
      %v412 = vld [vmem:[%s1 + $0x660] sm:$0xff]
      %v413 = vld [vmem:[%s1 + $0x668] sm:$0xff]
      %v414 = vld [vmem:[%s1 + $0x670] sm:$0xff]
      %v415 = vld [vmem:[%s1 + $0x678] sm:$0xff]
      %v416 = vld [vmem:[%s1 + $0x680] sm:$0xff]
      %v417 = vld [vmem:[%s1 + $0x688] sm:$0xff]
      %v418 = vld [vmem:[%s1 + $0x690] sm:$0xff]
      %v419 = vld [vmem:[%s1 + $0x698] sm:$0xff]
      %v420 = vld [vmem:[%s1 + $0x6a0] sm:$0xff]
      %v421 = vld [vmem:[%s1 + $0x6a8] sm:$0xff]
      %v422 = vld [vmem:[%s1 + $0x6b0] sm:$0xff]
      %v423 = vld [vmem:[%s1 + $0x6b8] sm:$0xff]
      %v424 = vld [vmem:[%s1 + $0x6c0] sm:$0xff]
      %v425 = vld [vmem:[%s1 + $0x6c8] sm:$0xff]
      %v426 = vld [vmem:[%s1 + $0x6d0] sm:$0xff]
      %v427 = vld [vmem:[%s1 + $0x6d8] sm:$0xff]
      %v428 = vld [vmem:[%s1 + $0x6e0] sm:$0xff]
      %v429 = vld [vmem:[%s1 + $0x6e8] sm:$0xff]
      %v430 = vld [vmem:[%s1 + $0x6f0] sm:$0xff]
      %v431 = vld [vmem:[%s1 + $0x6f8] sm:$0xff]
      %v432 = vld [vmem:[%s1 + $0x700] sm:$0xff]
      %v433 = vld [vmem:[%s1 + $0x708] sm:$0xff]
      %v434 = vld [vmem:[%s1 + $0x710] sm:$0xff]
      %v435 = vld [vmem:[%s1 + $0x718] sm:$0xff]
      %v436 = vld [vmem:[%s1 + $0x720] sm:$0xff]
      %v437 = vld [vmem:[%s1 + $0x728] sm:$0xff]
      %v438 = vld [vmem:[%s1 + $0x730] sm:$0xff]
      %v439 = vld [vmem:[%s1 + $0x738] sm:$0xff]
      %v440 = vld [vmem:[%s1 + $0x740] sm:$0xff]
      %v441 = vld [vmem:[%s1 + $0x748] sm:$0xff]
      %v442 = vld [vmem:[%s1 + $0x750] sm:$0xff]
      %v443 = vld [vmem:[%s1 + $0x758] sm:$0xff]
      %v444 = vld [vmem:[%s1 + $0x760] sm:$0xff]
      %v445 = vld [vmem:[%s1 + $0x768] sm:$0xff]
      %v446 = vld [vmem:[%s1 + $0x770] sm:$0xff]
      %v447 = vld [vmem:[%s1 + $0x778] sm:$0xff]
      %v448 = vld [vmem:[%s1 + $0x780] sm:$0xff]
      %v449 = vld [vmem:[%s1 + $0x788] sm:$0xff]
      %v450 = vld [vmem:[%s1 + $0x790] sm:$0xff]
      %v451 = vld [vmem:[%s1 + $0x798] sm:$0xff]
      %v452 = vld [vmem:[%s1 + $0x7a0] sm:$0xff]
      %v453 = vld [vmem:[%s1 + $0x7a8] sm:$0xff]
      %v454 = vld [vmem:[%s1 + $0x7b0] sm:$0xff]
      %v455 = vld [vmem:[%s1 + $0x7b8] sm:$0xff]
      %v456 = vld [vmem:[%s1 + $0x7c0] sm:$0xff]
      %v457 = vld [vmem:[%s1 + $0x7c8] sm:$0xff]
      %v458 = vld [vmem:[%s1 + $0x7d0] sm:$0xff]
      %v459 = vld [vmem:[%s1 + $0x7d8] sm:$0xff]
      %v460 = vld [vmem:[%s1 + $0x7e0] sm:$0xff]
      %v461 = vld [vmem:[%s1 + $0x7e8] sm:$0xff]
      %v462 = vld [vmem:[%s1 + $0x7f0] sm:$0xff]
      %v463 = vld [vmem:[%s1 + $0x7f8] sm:$0xff]
      %v480 = vunpack.c.l.b16 %v192
      %v481 = vunpack.c.h.b16 %v192
      %v482 = vunpack.c.l.b16 %v193
      %v483 = vunpack.c.h.b16 %v193
      %v484 = vunpack.c.l.b16 %v194
      %v485 = vunpack.c.h.b16 %v194
      %v486 = vunpack.c.l.b16 %v195
      %v487 = vunpack.c.h.b16 %v195
      %v488 = vunpack.c.l.b16 %v196
      %v489 = vunpack.c.h.b16 %v196
      %v490 = vunpack.c.l.b16 %v197
      %v491 = vunpack.c.h.b16 %v197
      %v492 = vunpack.c.l.b16 %v198
      %v493 = vunpack.c.h.b16 %v198
      %v494 = vunpack.c.l.b16 %v199
      %v495 = vunpack.c.h.b16 %v199
      %v496 = vunpack.c.l.b16 %v200
      %v497 = vunpack.c.h.b16 %v200
      %v498 = vunpack.c.l.b16 %v201
      %v499 = vunpack.c.h.b16 %v201
      %v500 = vunpack.c.l.b16 %v202
      %v501 = vunpack.c.h.b16 %v202
      %v502 = vunpack.c.l.b16 %v203
      %v503 = vunpack.c.h.b16 %v203
      %v504 = vunpack.c.l.b16 %v204
      %v505 = vunpack.c.h.b16 %v204
      %v506 = vunpack.c.l.b16 %v205
      %v507 = vunpack.c.h.b16 %v205
      %v508 = vunpack.c.l.b16 %v206
      %v509 = vunpack.c.h.b16 %v206
      %v510 = vunpack.c.l.b16 %v207
      %v511 = vunpack.c.h.b16 %v207
      %v512 = vpack.c.b16 %v496, %v480
      %v513 = vpack.c.b16 %v497, %v481
      %v514 = vpack.c.b16 %v498, %v482
      %v515 = vpack.c.b16 %v499, %v483
      %v516 = vpack.c.b16 %v500, %v484
      %v517 = vpack.c.b16 %v501, %v485
      %v518 = vpack.c.b16 %v502, %v486
      %v519 = vpack.c.b16 %v503, %v487
      %v520 = vpack.c.b16 %v504, %v488
      %v521 = vpack.c.b16 %v505, %v489
      %v522 = vpack.c.b16 %v506, %v490
      %v523 = vpack.c.b16 %v507, %v491
      %v524 = vpack.c.b16 %v508, %v492
      %v525 = vpack.c.b16 %v509, %v493
      %v526 = vpack.c.b16 %v510, %v494
      %v527 = vpack.c.b16 %v511, %v495
      %v800 = vunpack.c.l.b16 %v208
      %v801 = vunpack.c.h.b16 %v208
      %v802 = vunpack.c.l.b16 %v209
      %v803 = vunpack.c.h.b16 %v209
      %v804 = vunpack.c.l.b16 %v210
      %v805 = vunpack.c.h.b16 %v210
      %v806 = vunpack.c.l.b16 %v211
      %v807 = vunpack.c.h.b16 %v211
      %v808 = vunpack.c.l.b16 %v212
      %v809 = vunpack.c.h.b16 %v212
      %v810 = vunpack.c.l.b16 %v213
      %v811 = vunpack.c.h.b16 %v213
      %v812 = vunpack.c.l.b16 %v214
      %v813 = vunpack.c.h.b16 %v214
      %v814 = vunpack.c.l.b16 %v215
      %v815 = vunpack.c.h.b16 %v215
      %v816 = vunpack.c.l.b16 %v216
      %v817 = vunpack.c.h.b16 %v216
      %v818 = vunpack.c.l.b16 %v217
      %v819 = vunpack.c.h.b16 %v217
      %v820 = vunpack.c.l.b16 %v218
      %v821 = vunpack.c.h.b16 %v218
      %v822 = vunpack.c.l.b16 %v219
      %v823 = vunpack.c.h.b16 %v219
      %v824 = vunpack.c.l.b16 %v220
      %v825 = vunpack.c.h.b16 %v220
      %v826 = vunpack.c.l.b16 %v221
      %v827 = vunpack.c.h.b16 %v221
      %v828 = vunpack.c.l.b16 %v222
      %v829 = vunpack.c.h.b16 %v222
      %v830 = vunpack.c.l.b16 %v223
      %v831 = vunpack.c.h.b16 %v223
      %v832 = vunpack.c.l.b16 %v224
      %v833 = vunpack.c.h.b16 %v224
      %v834 = vunpack.c.l.b16 %v225
      %v835 = vunpack.c.h.b16 %v225
      %v836 = vunpack.c.l.b16 %v226
      %v837 = vunpack.c.h.b16 %v226
      %v838 = vunpack.c.l.b16 %v227
      %v839 = vunpack.c.h.b16 %v227
      %v840 = vunpack.c.l.b16 %v228
      %v841 = vunpack.c.h.b16 %v228
      %v842 = vunpack.c.l.b16 %v229
      %v843 = vunpack.c.h.b16 %v229
      %v844 = vunpack.c.l.b16 %v230
      %v845 = vunpack.c.h.b16 %v230
      %v846 = vunpack.c.l.b16 %v231
      %v847 = vunpack.c.h.b16 %v231
      %v848 = vunpack.c.l.b16 %v232
      %v849 = vunpack.c.h.b16 %v232
      %v850 = vunpack.c.l.b16 %v233
      %v851 = vunpack.c.h.b16 %v233
      %v852 = vunpack.c.l.b16 %v234
      %v853 = vunpack.c.h.b16 %v234
      %v854 = vunpack.c.l.b16 %v235
      %v855 = vunpack.c.h.b16 %v235
      %v856 = vunpack.c.l.b16 %v236
      %v857 = vunpack.c.h.b16 %v236
      %v858 = vunpack.c.l.b16 %v237
      %v859 = vunpack.c.h.b16 %v237
      %v860 = vunpack.c.l.b16 %v238
      %v861 = vunpack.c.h.b16 %v238
      %v862 = vunpack.c.l.b16 %v239
      %v863 = vunpack.c.h.b16 %v239
      %v864 = vunpack.c.l.b16 %v240
      %v865 = vunpack.c.h.b16 %v240
      %v866 = vunpack.c.l.b16 %v241
      %v867 = vunpack.c.h.b16 %v241
      %v868 = vunpack.c.l.b16 %v242
      %v869 = vunpack.c.h.b16 %v242
      %v870 = vunpack.c.l.b16 %v243
      %v871 = vunpack.c.h.b16 %v243
      %v872 = vunpack.c.l.b16 %v244
      %v873 = vunpack.c.h.b16 %v244
      %v874 = vunpack.c.l.b16 %v245
      %v875 = vunpack.c.h.b16 %v245
      %v876 = vunpack.c.l.b16 %v246
      %v877 = vunpack.c.h.b16 %v246
      %v878 = vunpack.c.l.b16 %v247
      %v879 = vunpack.c.h.b16 %v247
      %v880 = vunpack.c.l.b16 %v248
      %v881 = vunpack.c.h.b16 %v248
      %v882 = vunpack.c.l.b16 %v249
      %v883 = vunpack.c.h.b16 %v249
      %v884 = vunpack.c.l.b16 %v250
      %v885 = vunpack.c.h.b16 %v250
      %v886 = vunpack.c.l.b16 %v251
      %v887 = vunpack.c.h.b16 %v251
      %v888 = vunpack.c.l.b16 %v252
      %v889 = vunpack.c.h.b16 %v252
      %v890 = vunpack.c.l.b16 %v253
      %v891 = vunpack.c.h.b16 %v253
      %v892 = vunpack.c.l.b16 %v254
      %v893 = vunpack.c.h.b16 %v254
      %v894 = vunpack.c.l.b16 %v255
      %v895 = vunpack.c.h.b16 %v255
      %v896 = vunpack.c.l.b16 %v256
      %v897 = vunpack.c.h.b16 %v256
      %v898 = vunpack.c.l.b16 %v257
      %v899 = vunpack.c.h.b16 %v257
      %v900 = vunpack.c.l.b16 %v258
      %v901 = vunpack.c.h.b16 %v258
      %v902 = vunpack.c.l.b16 %v259
      %v903 = vunpack.c.h.b16 %v259
      %v904 = vunpack.c.l.b16 %v260
      %v905 = vunpack.c.h.b16 %v260
      %v906 = vunpack.c.l.b16 %v261
      %v907 = vunpack.c.h.b16 %v261
      %v908 = vunpack.c.l.b16 %v262
      %v909 = vunpack.c.h.b16 %v262
      %v910 = vunpack.c.l.b16 %v263
      %v911 = vunpack.c.h.b16 %v263
      %v912 = vunpack.c.l.b16 %v264
      %v913 = vunpack.c.h.b16 %v264
      %v914 = vunpack.c.l.b16 %v265
      %v915 = vunpack.c.h.b16 %v265
      %v916 = vunpack.c.l.b16 %v266
      %v917 = vunpack.c.h.b16 %v266
      %v918 = vunpack.c.l.b16 %v267
      %v919 = vunpack.c.h.b16 %v267
      %v920 = vunpack.c.l.b16 %v268
      %v921 = vunpack.c.h.b16 %v268
      %v922 = vunpack.c.l.b16 %v269
      %v923 = vunpack.c.h.b16 %v269
      %v924 = vunpack.c.l.b16 %v270
      %v925 = vunpack.c.h.b16 %v270
      %v926 = vunpack.c.l.b16 %v271
      %v927 = vunpack.c.h.b16 %v271
      %v928 = vunpack.c.l.b16 %v272
      %v929 = vunpack.c.h.b16 %v272
      %v930 = vunpack.c.l.b16 %v273
      %v931 = vunpack.c.h.b16 %v273
      %v932 = vunpack.c.l.b16 %v274
      %v933 = vunpack.c.h.b16 %v274
      %v934 = vunpack.c.l.b16 %v275
      %v935 = vunpack.c.h.b16 %v275
      %v936 = vunpack.c.l.b16 %v276
      %v937 = vunpack.c.h.b16 %v276
      %v938 = vunpack.c.l.b16 %v277
      %v939 = vunpack.c.h.b16 %v277
      %v940 = vunpack.c.l.b16 %v278
      %v941 = vunpack.c.h.b16 %v278
      %v942 = vunpack.c.l.b16 %v279
      %v943 = vunpack.c.h.b16 %v279
      %v944 = vunpack.c.l.b16 %v280
      %v945 = vunpack.c.h.b16 %v280
      %v946 = vunpack.c.l.b16 %v281
      %v947 = vunpack.c.h.b16 %v281
      %v948 = vunpack.c.l.b16 %v282
      %v949 = vunpack.c.h.b16 %v282
      %v950 = vunpack.c.l.b16 %v283
      %v951 = vunpack.c.h.b16 %v283
      %v952 = vunpack.c.l.b16 %v284
      %v953 = vunpack.c.h.b16 %v284
      %v954 = vunpack.c.l.b16 %v285
      %v955 = vunpack.c.h.b16 %v285
      %v956 = vunpack.c.l.b16 %v286
      %v957 = vunpack.c.h.b16 %v286
      %v958 = vunpack.c.l.b16 %v287
      %v959 = vunpack.c.h.b16 %v287
      %v960 = vunpack.c.l.b16 %v288
      %v961 = vunpack.c.h.b16 %v288
      %v962 = vunpack.c.l.b16 %v289
      %v963 = vunpack.c.h.b16 %v289
      %v964 = vunpack.c.l.b16 %v290
      %v965 = vunpack.c.h.b16 %v290
      %v966 = vunpack.c.l.b16 %v291
      %v967 = vunpack.c.h.b16 %v291
      %v968 = vunpack.c.l.b16 %v292
      %v969 = vunpack.c.h.b16 %v292
      %v970 = vunpack.c.l.b16 %v293
      %v971 = vunpack.c.h.b16 %v293
      %v972 = vunpack.c.l.b16 %v294
      %v973 = vunpack.c.h.b16 %v294
      %v974 = vunpack.c.l.b16 %v295
      %v975 = vunpack.c.h.b16 %v295
      %v976 = vunpack.c.l.b16 %v296
      %v977 = vunpack.c.h.b16 %v296
      %v978 = vunpack.c.l.b16 %v297
      %v979 = vunpack.c.h.b16 %v297
      %v980 = vunpack.c.l.b16 %v298
      %v981 = vunpack.c.h.b16 %v298
      %v982 = vunpack.c.l.b16 %v299
      %v983 = vunpack.c.h.b16 %v299
      %v984 = vunpack.c.l.b16 %v300
      %v985 = vunpack.c.h.b16 %v300
      %v986 = vunpack.c.l.b16 %v301
      %v987 = vunpack.c.h.b16 %v301
      %v988 = vunpack.c.l.b16 %v302
      %v989 = vunpack.c.h.b16 %v302
      %v990 = vunpack.c.l.b16 %v303
      %v991 = vunpack.c.h.b16 %v303
      %v992 = vunpack.c.l.b16 %v304
      %v993 = vunpack.c.h.b16 %v304
      %v994 = vunpack.c.l.b16 %v305
      %v995 = vunpack.c.h.b16 %v305
      %v996 = vunpack.c.l.b16 %v306
      %v997 = vunpack.c.h.b16 %v306
      %v998 = vunpack.c.l.b16 %v307
      %v999 = vunpack.c.h.b16 %v307
      %v1000 = vunpack.c.l.b16 %v308
      %v1001 = vunpack.c.h.b16 %v308
      %v1002 = vunpack.c.l.b16 %v309
      %v1003 = vunpack.c.h.b16 %v309
      %v1004 = vunpack.c.l.b16 %v310
      %v1005 = vunpack.c.h.b16 %v310
      %v1006 = vunpack.c.l.b16 %v311
      %v1007 = vunpack.c.h.b16 %v311
      %v1008 = vunpack.c.l.b16 %v312
      %v1009 = vunpack.c.h.b16 %v312
      %v1010 = vunpack.c.l.b16 %v313
      %v1011 = vunpack.c.h.b16 %v313
      %v1012 = vunpack.c.l.b16 %v314
      %v1013 = vunpack.c.h.b16 %v314
      %v1014 = vunpack.c.l.b16 %v315
      %v1015 = vunpack.c.h.b16 %v315
      %v1016 = vunpack.c.l.b16 %v316
      %v1017 = vunpack.c.h.b16 %v316
      %v1018 = vunpack.c.l.b16 %v317
      %v1019 = vunpack.c.h.b16 %v317
      %v1020 = vunpack.c.l.b16 %v318
      %v1021 = vunpack.c.h.b16 %v318
      %v1022 = vunpack.c.l.b16 %v319
      %v1023 = vunpack.c.h.b16 %v319
      %v1024 = vunpack.c.l.b16 %v320
      %v1025 = vunpack.c.h.b16 %v320
      %v1026 = vunpack.c.l.b16 %v321
      %v1027 = vunpack.c.h.b16 %v321
      %v1028 = vunpack.c.l.b16 %v322
      %v1029 = vunpack.c.h.b16 %v322
      %v1030 = vunpack.c.l.b16 %v323
      %v1031 = vunpack.c.h.b16 %v323
      %v1032 = vunpack.c.l.b16 %v324
      %v1033 = vunpack.c.h.b16 %v324
      %v1034 = vunpack.c.l.b16 %v325
      %v1035 = vunpack.c.h.b16 %v325
      %v1036 = vunpack.c.l.b16 %v326
      %v1037 = vunpack.c.h.b16 %v326
      %v1038 = vunpack.c.l.b16 %v327
      %v1039 = vunpack.c.h.b16 %v327
      %v1040 = vunpack.c.l.b16 %v328
      %v1041 = vunpack.c.h.b16 %v328
      %v1042 = vunpack.c.l.b16 %v329
      %v1043 = vunpack.c.h.b16 %v329
      %v1044 = vunpack.c.l.b16 %v330
      %v1045 = vunpack.c.h.b16 %v330
      %v1046 = vunpack.c.l.b16 %v331
      %v1047 = vunpack.c.h.b16 %v331
      %v1048 = vunpack.c.l.b16 %v332
      %v1049 = vunpack.c.h.b16 %v332
      %v1050 = vunpack.c.l.b16 %v333
      %v1051 = vunpack.c.h.b16 %v333
      %v1052 = vunpack.c.l.b16 %v334
      %v1053 = vunpack.c.h.b16 %v334
      %v1054 = vunpack.c.l.b16 %v335
      %v1055 = vunpack.c.h.b16 %v335
      %v1056 = vunpack.c.l.b16 %v336
      %v1057 = vunpack.c.h.b16 %v336
      %v1058 = vunpack.c.l.b16 %v337
      %v1059 = vunpack.c.h.b16 %v337
      %v1060 = vunpack.c.l.b16 %v338
      %v1061 = vunpack.c.h.b16 %v338
      %v1062 = vunpack.c.l.b16 %v339
      %v1063 = vunpack.c.h.b16 %v339
      %v1064 = vunpack.c.l.b16 %v340
      %v1065 = vunpack.c.h.b16 %v340
      %v1066 = vunpack.c.l.b16 %v341
      %v1067 = vunpack.c.h.b16 %v341
      %v1068 = vunpack.c.l.b16 %v342
      %v1069 = vunpack.c.h.b16 %v342
      %v1070 = vunpack.c.l.b16 %v343
      %v1071 = vunpack.c.h.b16 %v343
      %v1072 = vunpack.c.l.b16 %v344
      %v1073 = vunpack.c.h.b16 %v344
      %v1074 = vunpack.c.l.b16 %v345
      %v1075 = vunpack.c.h.b16 %v345
      %v1076 = vunpack.c.l.b16 %v346
      %v1077 = vunpack.c.h.b16 %v346
      %v1078 = vunpack.c.l.b16 %v347
      %v1079 = vunpack.c.h.b16 %v347
      %v1080 = vunpack.c.l.b16 %v348
      %v1081 = vunpack.c.h.b16 %v348
      %v1082 = vunpack.c.l.b16 %v349
      %v1083 = vunpack.c.h.b16 %v349
      %v1084 = vunpack.c.l.b16 %v350
      %v1085 = vunpack.c.h.b16 %v350
      %v1086 = vunpack.c.l.b16 %v351
      %v1087 = vunpack.c.h.b16 %v351
      %v1088 = vunpack.c.l.b16 %v352
      %v1089 = vunpack.c.h.b16 %v352
      %v1090 = vunpack.c.l.b16 %v353
      %v1091 = vunpack.c.h.b16 %v353
      %v1092 = vunpack.c.l.b16 %v354
      %v1093 = vunpack.c.h.b16 %v354
      %v1094 = vunpack.c.l.b16 %v355
      %v1095 = vunpack.c.h.b16 %v355
      %v1096 = vunpack.c.l.b16 %v356
      %v1097 = vunpack.c.h.b16 %v356
      %v1098 = vunpack.c.l.b16 %v357
      %v1099 = vunpack.c.h.b16 %v357
      %v1100 = vunpack.c.l.b16 %v358
      %v1101 = vunpack.c.h.b16 %v358
      %v1102 = vunpack.c.l.b16 %v359
      %v1103 = vunpack.c.h.b16 %v359
      %v1104 = vunpack.c.l.b16 %v360
      %v1105 = vunpack.c.h.b16 %v360
      %v1106 = vunpack.c.l.b16 %v361
      %v1107 = vunpack.c.h.b16 %v361
      %v1108 = vunpack.c.l.b16 %v362
      %v1109 = vunpack.c.h.b16 %v362
      %v1110 = vunpack.c.l.b16 %v363
      %v1111 = vunpack.c.h.b16 %v363
      %v1112 = vunpack.c.l.b16 %v364
      %v1113 = vunpack.c.h.b16 %v364
      %v1114 = vunpack.c.l.b16 %v365
      %v1115 = vunpack.c.h.b16 %v365
      %v1116 = vunpack.c.l.b16 %v366
      %v1117 = vunpack.c.h.b16 %v366
      %v1118 = vunpack.c.l.b16 %v367
      %v1119 = vunpack.c.h.b16 %v367
      %v1120 = vunpack.c.l.b16 %v368
      %v1121 = vunpack.c.h.b16 %v368
      %v1122 = vunpack.c.l.b16 %v369
      %v1123 = vunpack.c.h.b16 %v369
      %v1124 = vunpack.c.l.b16 %v370
      %v1125 = vunpack.c.h.b16 %v370
      %v1126 = vunpack.c.l.b16 %v371
      %v1127 = vunpack.c.h.b16 %v371
      %v1128 = vunpack.c.l.b16 %v372
      %v1129 = vunpack.c.h.b16 %v372
      %v1130 = vunpack.c.l.b16 %v373
      %v1131 = vunpack.c.h.b16 %v373
      %v1132 = vunpack.c.l.b16 %v374
      %v1133 = vunpack.c.h.b16 %v374
      %v1134 = vunpack.c.l.b16 %v375
      %v1135 = vunpack.c.h.b16 %v375
      %v1136 = vunpack.c.l.b16 %v376
      %v1137 = vunpack.c.h.b16 %v376
      %v1138 = vunpack.c.l.b16 %v377
      %v1139 = vunpack.c.h.b16 %v377
      %v1140 = vunpack.c.l.b16 %v378
      %v1141 = vunpack.c.h.b16 %v378
      %v1142 = vunpack.c.l.b16 %v379
      %v1143 = vunpack.c.h.b16 %v379
      %v1144 = vunpack.c.l.b16 %v380
      %v1145 = vunpack.c.h.b16 %v380
      %v1146 = vunpack.c.l.b16 %v381
      %v1147 = vunpack.c.h.b16 %v381
      %v1148 = vunpack.c.l.b16 %v382
      %v1149 = vunpack.c.h.b16 %v382
      %v1150 = vunpack.c.l.b16 %v383
      %v1151 = vunpack.c.h.b16 %v383
      %v1152 = vunpack.c.l.b16 %v384
      %v1153 = vunpack.c.h.b16 %v384
      %v1154 = vunpack.c.l.b16 %v385
      %v1155 = vunpack.c.h.b16 %v385
      %v1156 = vunpack.c.l.b16 %v386
      %v1157 = vunpack.c.h.b16 %v386
      %v1158 = vunpack.c.l.b16 %v387
      %v1159 = vunpack.c.h.b16 %v387
      %v1160 = vunpack.c.l.b16 %v388
      %v1161 = vunpack.c.h.b16 %v388
      %v1162 = vunpack.c.l.b16 %v389
      %v1163 = vunpack.c.h.b16 %v389
      %v1164 = vunpack.c.l.b16 %v390
      %v1165 = vunpack.c.h.b16 %v390
      %v1166 = vunpack.c.l.b16 %v391
      %v1167 = vunpack.c.h.b16 %v391
      %v1168 = vunpack.c.l.b16 %v392
      %v1169 = vunpack.c.h.b16 %v392
      %v1170 = vunpack.c.l.b16 %v393
      %v1171 = vunpack.c.h.b16 %v393
      %v1172 = vunpack.c.l.b16 %v394
      %v1173 = vunpack.c.h.b16 %v394
      %v1174 = vunpack.c.l.b16 %v395
      %v1175 = vunpack.c.h.b16 %v395
      %v1176 = vunpack.c.l.b16 %v396
      %v1177 = vunpack.c.h.b16 %v396
      %v1178 = vunpack.c.l.b16 %v397
      %v1179 = vunpack.c.h.b16 %v397
      %v1180 = vunpack.c.l.b16 %v398
      %v1181 = vunpack.c.h.b16 %v398
      %v1182 = vunpack.c.l.b16 %v399
      %v1183 = vunpack.c.h.b16 %v399
      %v1184 = vunpack.c.l.b16 %v400
      %v1185 = vunpack.c.h.b16 %v400
      %v1186 = vunpack.c.l.b16 %v401
      %v1187 = vunpack.c.h.b16 %v401
      %v1188 = vunpack.c.l.b16 %v402
      %v1189 = vunpack.c.h.b16 %v402
      %v1190 = vunpack.c.l.b16 %v403
      %v1191 = vunpack.c.h.b16 %v403
      %v1192 = vunpack.c.l.b16 %v404
      %v1193 = vunpack.c.h.b16 %v404
      %v1194 = vunpack.c.l.b16 %v405
      %v1195 = vunpack.c.h.b16 %v405
      %v1196 = vunpack.c.l.b16 %v406
      %v1197 = vunpack.c.h.b16 %v406
      %v1198 = vunpack.c.l.b16 %v407
      %v1199 = vunpack.c.h.b16 %v407
      %v1200 = vunpack.c.l.b16 %v408
      %v1201 = vunpack.c.h.b16 %v408
      %v1202 = vunpack.c.l.b16 %v409
      %v1203 = vunpack.c.h.b16 %v409
      %v1204 = vunpack.c.l.b16 %v410
      %v1205 = vunpack.c.h.b16 %v410
      %v1206 = vunpack.c.l.b16 %v411
      %v1207 = vunpack.c.h.b16 %v411
      %v1208 = vunpack.c.l.b16 %v412
      %v1209 = vunpack.c.h.b16 %v412
      %v1210 = vunpack.c.l.b16 %v413
      %v1211 = vunpack.c.h.b16 %v413
      %v1212 = vunpack.c.l.b16 %v414
      %v1213 = vunpack.c.h.b16 %v414
      %v1214 = vunpack.c.l.b16 %v415
      %v1215 = vunpack.c.h.b16 %v415
      %v1216 = vunpack.c.l.b16 %v416
      %v1217 = vunpack.c.h.b16 %v416
      %v1218 = vunpack.c.l.b16 %v417
      %v1219 = vunpack.c.h.b16 %v417
      %v1220 = vunpack.c.l.b16 %v418
      %v1221 = vunpack.c.h.b16 %v418
      %v1222 = vunpack.c.l.b16 %v419
      %v1223 = vunpack.c.h.b16 %v419
      %v1224 = vunpack.c.l.b16 %v420
      %v1225 = vunpack.c.h.b16 %v420
      %v1226 = vunpack.c.l.b16 %v421
      %v1227 = vunpack.c.h.b16 %v421
      %v1228 = vunpack.c.l.b16 %v422
      %v1229 = vunpack.c.h.b16 %v422
      %v1230 = vunpack.c.l.b16 %v423
      %v1231 = vunpack.c.h.b16 %v423
      %v1232 = vunpack.c.l.b16 %v424
      %v1233 = vunpack.c.h.b16 %v424
      %v1234 = vunpack.c.l.b16 %v425
      %v1235 = vunpack.c.h.b16 %v425
      %v1236 = vunpack.c.l.b16 %v426
      %v1237 = vunpack.c.h.b16 %v426
      %v1238 = vunpack.c.l.b16 %v427
      %v1239 = vunpack.c.h.b16 %v427
      %v1240 = vunpack.c.l.b16 %v428
      %v1241 = vunpack.c.h.b16 %v428
      %v1242 = vunpack.c.l.b16 %v429
      %v1243 = vunpack.c.h.b16 %v429
      %v1244 = vunpack.c.l.b16 %v430
      %v1245 = vunpack.c.h.b16 %v430
      %v1246 = vunpack.c.l.b16 %v431
      %v1247 = vunpack.c.h.b16 %v431
      %v1248 = vunpack.c.l.b16 %v432
      %v1249 = vunpack.c.h.b16 %v432
      %v1250 = vunpack.c.l.b16 %v433
      %v1251 = vunpack.c.h.b16 %v433
      %v1252 = vunpack.c.l.b16 %v434
      %v1253 = vunpack.c.h.b16 %v434
      %v1254 = vunpack.c.l.b16 %v435
      %v1255 = vunpack.c.h.b16 %v435
      %v1256 = vunpack.c.l.b16 %v436
      %v1257 = vunpack.c.h.b16 %v436
      %v1258 = vunpack.c.l.b16 %v437
      %v1259 = vunpack.c.h.b16 %v437
      %v1260 = vunpack.c.l.b16 %v438
      %v1261 = vunpack.c.h.b16 %v438
      %v1262 = vunpack.c.l.b16 %v439
      %v1263 = vunpack.c.h.b16 %v439
      %v1264 = vunpack.c.l.b16 %v440
      %v1265 = vunpack.c.h.b16 %v440
      %v1266 = vunpack.c.l.b16 %v441
      %v1267 = vunpack.c.h.b16 %v441
      %v1268 = vunpack.c.l.b16 %v442
      %v1269 = vunpack.c.h.b16 %v442
      %v1270 = vunpack.c.l.b16 %v443
      %v1271 = vunpack.c.h.b16 %v443
      %v1272 = vunpack.c.l.b16 %v444
      %v1273 = vunpack.c.h.b16 %v444
      %v1274 = vunpack.c.l.b16 %v445
      %v1275 = vunpack.c.h.b16 %v445
      %v1276 = vunpack.c.l.b16 %v446
      %v1277 = vunpack.c.h.b16 %v446
      %v1278 = vunpack.c.l.b16 %v447
      %v1279 = vunpack.c.h.b16 %v447
      %v1280 = vunpack.c.l.b16 %v448
      %v1281 = vunpack.c.h.b16 %v448
      %v1282 = vunpack.c.l.b16 %v449
      %v1283 = vunpack.c.h.b16 %v449
      %v1284 = vunpack.c.l.b16 %v450
      %v1285 = vunpack.c.h.b16 %v450
      %v1286 = vunpack.c.l.b16 %v451
      %v1287 = vunpack.c.h.b16 %v451
      %v1288 = vunpack.c.l.b16 %v452
      %v1289 = vunpack.c.h.b16 %v452
      %v1290 = vunpack.c.l.b16 %v453
      %v1291 = vunpack.c.h.b16 %v453
      %v1292 = vunpack.c.l.b16 %v454
      %v1293 = vunpack.c.h.b16 %v454
      %v1294 = vunpack.c.l.b16 %v455
      %v1295 = vunpack.c.h.b16 %v455
      %v1296 = vunpack.c.l.b16 %v456
      %v1297 = vunpack.c.h.b16 %v456
      %v1298 = vunpack.c.l.b16 %v457
      %v1299 = vunpack.c.h.b16 %v457
      %v1300 = vunpack.c.l.b16 %v458
      %v1301 = vunpack.c.h.b16 %v458
      %v1302 = vunpack.c.l.b16 %v459
      %v1303 = vunpack.c.h.b16 %v459
      %v1304 = vunpack.c.l.b16 %v460
      %v1305 = vunpack.c.h.b16 %v460
      %v1306 = vunpack.c.l.b16 %v461
      %v1307 = vunpack.c.h.b16 %v461
      %v1308 = vunpack.c.l.b16 %v462
      %v1309 = vunpack.c.h.b16 %v462
      %v1310 = vunpack.c.l.b16 %v463
      %v1311 = vunpack.c.h.b16 %v463
      %v1312 = vpack.c.b16 %v802, %v800
      %v1313 = vpack.c.b16 %v803, %v801
      %v1314 = vpack.c.b16 %v806, %v804
      %v1315 = vpack.c.b16 %v807, %v805
      %v1316 = vpack.c.b16 %v810, %v808
      %v1317 = vpack.c.b16 %v811, %v809
      %v1318 = vpack.c.b16 %v814, %v812
      %v1319 = vpack.c.b16 %v815, %v813
      %v1320 = vpack.c.b16 %v818, %v816
      %v1321 = vpack.c.b16 %v819, %v817
      %v1322 = vpack.c.b16 %v822, %v820
      %v1323 = vpack.c.b16 %v823, %v821
      %v1324 = vpack.c.b16 %v826, %v824
      %v1325 = vpack.c.b16 %v827, %v825
      %v1326 = vpack.c.b16 %v830, %v828
      %v1327 = vpack.c.b16 %v831, %v829
      %v1328 = vpack.c.b16 %v834, %v832
      %v1329 = vpack.c.b16 %v835, %v833
      %v1330 = vpack.c.b16 %v838, %v836
      %v1331 = vpack.c.b16 %v839, %v837
      %v1332 = vpack.c.b16 %v842, %v840
      %v1333 = vpack.c.b16 %v843, %v841
      %v1334 = vpack.c.b16 %v846, %v844
      %v1335 = vpack.c.b16 %v847, %v845
      %v1336 = vpack.c.b16 %v850, %v848
      %v1337 = vpack.c.b16 %v851, %v849
      %v1338 = vpack.c.b16 %v854, %v852
      %v1339 = vpack.c.b16 %v855, %v853
      %v1340 = vpack.c.b16 %v858, %v856
      %v1341 = vpack.c.b16 %v859, %v857
      %v1342 = vpack.c.b16 %v862, %v860
      %v1343 = vpack.c.b16 %v863, %v861
      %v1344 = vpack.c.b16 %v866, %v864
      %v1345 = vpack.c.b16 %v867, %v865
      %v1346 = vpack.c.b16 %v870, %v868
      %v1347 = vpack.c.b16 %v871, %v869
      %v1348 = vpack.c.b16 %v874, %v872
      %v1349 = vpack.c.b16 %v875, %v873
      %v1350 = vpack.c.b16 %v878, %v876
      %v1351 = vpack.c.b16 %v879, %v877
      %v1352 = vpack.c.b16 %v882, %v880
      %v1353 = vpack.c.b16 %v883, %v881
      %v1354 = vpack.c.b16 %v886, %v884
      %v1355 = vpack.c.b16 %v887, %v885
      %v1356 = vpack.c.b16 %v890, %v888
      %v1357 = vpack.c.b16 %v891, %v889
      %v1358 = vpack.c.b16 %v894, %v892
      %v1359 = vpack.c.b16 %v895, %v893
      %v1360 = vpack.c.b16 %v898, %v896
      %v1361 = vpack.c.b16 %v899, %v897
      %v1362 = vpack.c.b16 %v902, %v900
      %v1363 = vpack.c.b16 %v903, %v901
      %v1364 = vpack.c.b16 %v906, %v904
      %v1365 = vpack.c.b16 %v907, %v905
      %v1366 = vpack.c.b16 %v910, %v908
      %v1367 = vpack.c.b16 %v911, %v909
      %v1368 = vpack.c.b16 %v914, %v912
      %v1369 = vpack.c.b16 %v915, %v913
      %v1370 = vpack.c.b16 %v918, %v916
      %v1371 = vpack.c.b16 %v919, %v917
      %v1372 = vpack.c.b16 %v922, %v920
      %v1373 = vpack.c.b16 %v923, %v921
      %v1374 = vpack.c.b16 %v926, %v924
      %v1375 = vpack.c.b16 %v927, %v925
      %v1376 = vpack.c.b16 %v930, %v928
      %v1377 = vpack.c.b16 %v931, %v929
      %v1378 = vpack.c.b16 %v934, %v932
      %v1379 = vpack.c.b16 %v935, %v933
      %v1380 = vpack.c.b16 %v938, %v936
      %v1381 = vpack.c.b16 %v939, %v937
      %v1382 = vpack.c.b16 %v942, %v940
      %v1383 = vpack.c.b16 %v943, %v941
      %v1384 = vpack.c.b16 %v946, %v944
      %v1385 = vpack.c.b16 %v947, %v945
      %v1386 = vpack.c.b16 %v950, %v948
      %v1387 = vpack.c.b16 %v951, %v949
      %v1388 = vpack.c.b16 %v954, %v952
      %v1389 = vpack.c.b16 %v955, %v953
      %v1390 = vpack.c.b16 %v958, %v956
      %v1391 = vpack.c.b16 %v959, %v957
      %v1392 = vpack.c.b16 %v962, %v960
      %v1393 = vpack.c.b16 %v963, %v961
      %v1394 = vpack.c.b16 %v966, %v964
      %v1395 = vpack.c.b16 %v967, %v965
      %v1396 = vpack.c.b16 %v970, %v968
      %v1397 = vpack.c.b16 %v971, %v969
      %v1398 = vpack.c.b16 %v974, %v972
      %v1399 = vpack.c.b16 %v975, %v973
      %v1400 = vpack.c.b16 %v978, %v976
      %v1401 = vpack.c.b16 %v979, %v977
      %v1402 = vpack.c.b16 %v982, %v980
      %v1403 = vpack.c.b16 %v983, %v981
      %v1404 = vpack.c.b16 %v986, %v984
      %v1405 = vpack.c.b16 %v987, %v985
      %v1406 = vpack.c.b16 %v990, %v988
      %v1407 = vpack.c.b16 %v991, %v989
      %v1408 = vpack.c.b16 %v994, %v992
      %v1409 = vpack.c.b16 %v995, %v993
      %v1410 = vpack.c.b16 %v998, %v996
      %v1411 = vpack.c.b16 %v999, %v997
      %v1412 = vpack.c.b16 %v1002, %v1000
      %v1413 = vpack.c.b16 %v1003, %v1001
      %v1414 = vpack.c.b16 %v1006, %v1004
      %v1415 = vpack.c.b16 %v1007, %v1005
      %v1416 = vpack.c.b16 %v1010, %v1008
      %v1417 = vpack.c.b16 %v1011, %v1009
      %v1418 = vpack.c.b16 %v1014, %v1012
      %v1419 = vpack.c.b16 %v1015, %v1013
      %v1420 = vpack.c.b16 %v1018, %v1016
      %v1421 = vpack.c.b16 %v1019, %v1017
      %v1422 = vpack.c.b16 %v1022, %v1020
      %v1423 = vpack.c.b16 %v1023, %v1021
      %v1424 = vpack.c.b16 %v1026, %v1024
      %v1425 = vpack.c.b16 %v1027, %v1025
      %v1426 = vpack.c.b16 %v1030, %v1028
      %v1427 = vpack.c.b16 %v1031, %v1029
      %v1428 = vpack.c.b16 %v1034, %v1032
      %v1429 = vpack.c.b16 %v1035, %v1033
      %v1430 = vpack.c.b16 %v1038, %v1036
      %v1431 = vpack.c.b16 %v1039, %v1037
      %v1432 = vpack.c.b16 %v1042, %v1040
      %v1433 = vpack.c.b16 %v1043, %v1041
      %v1434 = vpack.c.b16 %v1046, %v1044
      %v1435 = vpack.c.b16 %v1047, %v1045
      %v1436 = vpack.c.b16 %v1050, %v1048
      %v1437 = vpack.c.b16 %v1051, %v1049
      %v1438 = vpack.c.b16 %v1054, %v1052
      %v1439 = vpack.c.b16 %v1055, %v1053
      %v1440 = vpack.c.b16 %v1058, %v1056
      %v1441 = vpack.c.b16 %v1059, %v1057
      %v1442 = vpack.c.b16 %v1062, %v1060
      %v1443 = vpack.c.b16 %v1063, %v1061
      %v1444 = vpack.c.b16 %v1066, %v1064
      %v1445 = vpack.c.b16 %v1067, %v1065
      %v1446 = vpack.c.b16 %v1070, %v1068
      %v1447 = vpack.c.b16 %v1071, %v1069
      %v1448 = vpack.c.b16 %v1074, %v1072
      %v1449 = vpack.c.b16 %v1075, %v1073
      %v1450 = vpack.c.b16 %v1078, %v1076
      %v1451 = vpack.c.b16 %v1079, %v1077
      %v1452 = vpack.c.b16 %v1082, %v1080
      %v1453 = vpack.c.b16 %v1083, %v1081
      %v1454 = vpack.c.b16 %v1086, %v1084
      %v1455 = vpack.c.b16 %v1087, %v1085
      %v1456 = vpack.c.b16 %v1090, %v1088
      %v1457 = vpack.c.b16 %v1091, %v1089
      %v1458 = vpack.c.b16 %v1094, %v1092
      %v1459 = vpack.c.b16 %v1095, %v1093
      %v1460 = vpack.c.b16 %v1098, %v1096
      %v1461 = vpack.c.b16 %v1099, %v1097
      %v1462 = vpack.c.b16 %v1102, %v1100
      %v1463 = vpack.c.b16 %v1103, %v1101
      %v1464 = vpack.c.b16 %v1106, %v1104
      %v1465 = vpack.c.b16 %v1107, %v1105
      %v1466 = vpack.c.b16 %v1110, %v1108
      %v1467 = vpack.c.b16 %v1111, %v1109
      %v1468 = vpack.c.b16 %v1114, %v1112
      %v1469 = vpack.c.b16 %v1115, %v1113
      %v1470 = vpack.c.b16 %v1118, %v1116
      %v1471 = vpack.c.b16 %v1119, %v1117
      %v1472 = vpack.c.b16 %v1122, %v1120
      %v1473 = vpack.c.b16 %v1123, %v1121
      %v1474 = vpack.c.b16 %v1126, %v1124
      %v1475 = vpack.c.b16 %v1127, %v1125
      %v1476 = vpack.c.b16 %v1130, %v1128
      %v1477 = vpack.c.b16 %v1131, %v1129
      %v1478 = vpack.c.b16 %v1134, %v1132
      %v1479 = vpack.c.b16 %v1135, %v1133
      %v1480 = vpack.c.b16 %v1138, %v1136
      %v1481 = vpack.c.b16 %v1139, %v1137
      %v1482 = vpack.c.b16 %v1142, %v1140
      %v1483 = vpack.c.b16 %v1143, %v1141
      %v1484 = vpack.c.b16 %v1146, %v1144
      %v1485 = vpack.c.b16 %v1147, %v1145
      %v1486 = vpack.c.b16 %v1150, %v1148
      %v1487 = vpack.c.b16 %v1151, %v1149
      %v1488 = vpack.c.b16 %v1154, %v1152
      %v1489 = vpack.c.b16 %v1155, %v1153
      %v1490 = vpack.c.b16 %v1158, %v1156
      %v1491 = vpack.c.b16 %v1159, %v1157
      %v1492 = vpack.c.b16 %v1162, %v1160
      %v1493 = vpack.c.b16 %v1163, %v1161
      %v1494 = vpack.c.b16 %v1166, %v1164
      %v1495 = vpack.c.b16 %v1167, %v1165
      %v1496 = vpack.c.b16 %v1170, %v1168
      %v1497 = vpack.c.b16 %v1171, %v1169
      %v1498 = vpack.c.b16 %v1174, %v1172
      %v1499 = vpack.c.b16 %v1175, %v1173
      %v1500 = vpack.c.b16 %v1178, %v1176
      %v1501 = vpack.c.b16 %v1179, %v1177
      %v1502 = vpack.c.b16 %v1182, %v1180
      %v1503 = vpack.c.b16 %v1183, %v1181
      %v1504 = vpack.c.b16 %v1186, %v1184
      %v1505 = vpack.c.b16 %v1187, %v1185
      %v1506 = vpack.c.b16 %v1190, %v1188
      %v1507 = vpack.c.b16 %v1191, %v1189
      %v1508 = vpack.c.b16 %v1194, %v1192
      %v1509 = vpack.c.b16 %v1195, %v1193
      %v1510 = vpack.c.b16 %v1198, %v1196
      %v1511 = vpack.c.b16 %v1199, %v1197
      %v1512 = vpack.c.b16 %v1202, %v1200
      %v1513 = vpack.c.b16 %v1203, %v1201
      %v1514 = vpack.c.b16 %v1206, %v1204
      %v1515 = vpack.c.b16 %v1207, %v1205
      %v1516 = vpack.c.b16 %v1210, %v1208
      %v1517 = vpack.c.b16 %v1211, %v1209
      %v1518 = vpack.c.b16 %v1214, %v1212
      %v1519 = vpack.c.b16 %v1215, %v1213
      %v1520 = vpack.c.b16 %v1218, %v1216
      %v1521 = vpack.c.b16 %v1219, %v1217
      %v1522 = vpack.c.b16 %v1222, %v1220
      %v1523 = vpack.c.b16 %v1223, %v1221
      %v1524 = vpack.c.b16 %v1226, %v1224
      %v1525 = vpack.c.b16 %v1227, %v1225
      %v1526 = vpack.c.b16 %v1230, %v1228
      %v1527 = vpack.c.b16 %v1231, %v1229
      %v1528 = vpack.c.b16 %v1234, %v1232
      %v1529 = vpack.c.b16 %v1235, %v1233
      %v1530 = vpack.c.b16 %v1238, %v1236
      %v1531 = vpack.c.b16 %v1239, %v1237
      %v1532 = vpack.c.b16 %v1242, %v1240
      %v1533 = vpack.c.b16 %v1243, %v1241
      %v1534 = vpack.c.b16 %v1246, %v1244
      %v1535 = vpack.c.b16 %v1247, %v1245
      %v1536 = vpack.c.b16 %v1250, %v1248
      %v1537 = vpack.c.b16 %v1251, %v1249
      %v1538 = vpack.c.b16 %v1254, %v1252
      %v1539 = vpack.c.b16 %v1255, %v1253
      %v1540 = vpack.c.b16 %v1258, %v1256
      %v1541 = vpack.c.b16 %v1259, %v1257
      %v1542 = vpack.c.b16 %v1262, %v1260
      %v1543 = vpack.c.b16 %v1263, %v1261
      %v1544 = vpack.c.b16 %v1266, %v1264
      %v1545 = vpack.c.b16 %v1267, %v1265
      %v1546 = vpack.c.b16 %v1270, %v1268
      %v1547 = vpack.c.b16 %v1271, %v1269
      %v1548 = vpack.c.b16 %v1274, %v1272
      %v1549 = vpack.c.b16 %v1275, %v1273
      %v1550 = vpack.c.b16 %v1278, %v1276
      %v1551 = vpack.c.b16 %v1279, %v1277
      %v1552 = vpack.c.b16 %v1282, %v1280
      %v1553 = vpack.c.b16 %v1283, %v1281
      %v1554 = vpack.c.b16 %v1286, %v1284
      %v1555 = vpack.c.b16 %v1287, %v1285
      %v1556 = vpack.c.b16 %v1290, %v1288
      %v1557 = vpack.c.b16 %v1291, %v1289
      %v1558 = vpack.c.b16 %v1294, %v1292
      %v1559 = vpack.c.b16 %v1295, %v1293
      %v1560 = vpack.c.b16 %v1298, %v1296
      %v1561 = vpack.c.b16 %v1299, %v1297
      %v1562 = vpack.c.b16 %v1302, %v1300
      %v1563 = vpack.c.b16 %v1303, %v1301
      %v1564 = vpack.c.b16 %v1306, %v1304
      %v1565 = vpack.c.b16 %v1307, %v1305
      %v1566 = vpack.c.b16 %v1310, %v1308
      %v1567 = vpack.c.b16 %v1311, %v1309
      %1824 = vmatprep.subr.bf16.mxu0 %v1313
      %1825 = vmatpush1.bf16.msra.mxu0 %v1312
      %1826 = vmatprep.subr.bf16.mxu0 %v1315
      %1827 = vmatpush1.bf16.msra.mxu0 %v1314
      %1828 = vmatprep.subr.bf16.mxu0 %v1317
      %1829 = vmatpush1.bf16.msra.mxu0 %v1316
      %1830 = vmatprep.subr.bf16.mxu0 %v1319
      %1831 = vmatpush1.bf16.msra.mxu0 %v1318
      %1832 = vmatprep.subr.bf16.mxu0 %v1321
      %1833 = vmatpush1.bf16.msra.mxu0 %v1320
      %1834 = vmatprep.subr.bf16.mxu0 %v1323
      %1835 = vmatpush1.bf16.msra.mxu0 %v1322
      %1836 = vmatprep.subr.bf16.mxu0 %v1325
      %1837 = vmatpush1.bf16.msra.mxu0 %v1324
      %1838 = vmatprep.subr.bf16.mxu0 %v1327
      %1839 = vmatpush1.bf16.msra.mxu0 %v1326
      %1840 = vmatprep.subr.bf16.mxu0 %v1329
      %1841 = vmatpush1.bf16.msra.mxu0 %v1328
      %1842 = vmatprep.subr.bf16.mxu0 %v1331
      %1843 = vmatpush1.bf16.msra.mxu0 %v1330
      %1844 = vmatprep.subr.bf16.mxu0 %v1333
      %1845 = vmatpush1.bf16.msra.mxu0 %v1332
      %1846 = vmatprep.subr.bf16.mxu0 %v1335
      %1847 = vmatpush1.bf16.msra.mxu0 %v1334
      %1848 = vmatprep.subr.bf16.mxu0 %v1337
      %1849 = vmatpush1.bf16.msra.mxu0 %v1336
      %1850 = vmatprep.subr.bf16.mxu0 %v1339
      %1851 = vmatpush1.bf16.msra.mxu0 %v1338
      %1852 = vmatprep.subr.bf16.mxu0 %v1341
      %1853 = vmatpush1.bf16.msra.mxu0 %v1340
      %1854 = vmatprep.subr.bf16.mxu0 %v1343
      %1855 = vmatpush1.bf16.msra.mxu0 %v1342
      %1856 = vmatprep.mubr.bf16.mxu0 %v513
      %1857 = vmatmul.mubr.bf16.gmra.mrb[0].mxu0 %v512
      %v1858 = vpop.f32.mrb[0].mxu0
      %v1859 = vadd.f32 0.0, %v1858
      %v1860 = vpop.f32.mrb[0].mxu0
      %v1861 = vadd.f32 0.0, %v1860
      %v1862 = vpop.f32.mrb[0].mxu0
      %v1863 = vadd.f32 0.0, %v1862
      %v1864 = vpop.f32.mrb[0].mxu0
      %v1865 = vadd.f32 0.0, %v1864
      %1866 = vdwg.mxu0
      %1867 = vmatprep.subr.bf16.mxu0 %v1345
      %1868 = vmatpush1.bf16.msra.mxu0 %v1344
      %1869 = vmatprep.subr.bf16.mxu0 %v1347
      %1870 = vmatpush1.bf16.msra.mxu0 %v1346
      %1871 = vmatprep.subr.bf16.mxu0 %v1349
      %1872 = vmatpush1.bf16.msra.mxu0 %v1348
      %1873 = vmatprep.subr.bf16.mxu0 %v1351
      %1874 = vmatpush1.bf16.msra.mxu0 %v1350
      %1875 = vmatprep.subr.bf16.mxu0 %v1353
      %1876 = vmatpush1.bf16.msra.mxu0 %v1352
      %1877 = vmatprep.subr.bf16.mxu0 %v1355
      %1878 = vmatpush1.bf16.msra.mxu0 %v1354
      %1879 = vmatprep.subr.bf16.mxu0 %v1357
      %1880 = vmatpush1.bf16.msra.mxu0 %v1356
      %1881 = vmatprep.subr.bf16.mxu0 %v1359
      %1882 = vmatpush1.bf16.msra.mxu0 %v1358
      %1883 = vmatprep.subr.bf16.mxu0 %v1361
      %1884 = vmatpush1.bf16.msra.mxu0 %v1360
      %1885 = vmatprep.subr.bf16.mxu0 %v1363
      %1886 = vmatpush1.bf16.msra.mxu0 %v1362
      %1887 = vmatprep.subr.bf16.mxu0 %v1365
      %1888 = vmatpush1.bf16.msra.mxu0 %v1364
      %1889 = vmatprep.subr.bf16.mxu0 %v1367
      %1890 = vmatpush1.bf16.msra.mxu0 %v1366
      %1891 = vmatprep.subr.bf16.mxu0 %v1369
      %1892 = vmatpush1.bf16.msra.mxu0 %v1368
      %1893 = vmatprep.subr.bf16.mxu0 %v1371
      %1894 = vmatpush1.bf16.msra.mxu0 %v1370
      %1895 = vmatprep.subr.bf16.mxu0 %v1373
      %1896 = vmatpush1.bf16.msra.mxu0 %v1372
      %1897 = vmatprep.subr.bf16.mxu0 %v1375
      %1898 = vmatpush1.bf16.msra.mxu0 %v1374
      %1899 = vmatprep.mubr.bf16.mxu0 %v515
      %1900 = vmatmul.mubr.bf16.gmra.mrb[0].mxu0 %v514
      %v1901 = vpop.f32.mrb[0].mxu0
      %v1902 = vadd.f32 %v1859, %v1901
      %v1903 = vpop.f32.mrb[0].mxu0
      %v1904 = vadd.f32 %v1861, %v1903
      %v1905 = vpop.f32.mrb[0].mxu0
      %v1906 = vadd.f32 %v1863, %v1905
      %v1907 = vpop.f32.mrb[0].mxu0
      %v1908 = vadd.f32 %v1865, %v1907
      %1909 = vdwg.mxu0
      %1910 = vmatprep.subr.bf16.mxu0 %v1377
      %1911 = vmatpush1.bf16.msra.mxu0 %v1376
      %1912 = vmatprep.subr.bf16.mxu0 %v1379
      %1913 = vmatpush1.bf16.msra.mxu0 %v1378
      %1914 = vmatprep.subr.bf16.mxu0 %v1381
      %1915 = vmatpush1.bf16.msra.mxu0 %v1380
      %1916 = vmatprep.subr.bf16.mxu0 %v1383
      %1917 = vmatpush1.bf16.msra.mxu0 %v1382
      %1918 = vmatprep.subr.bf16.mxu0 %v1385
      %1919 = vmatpush1.bf16.msra.mxu0 %v1384
      %1920 = vmatprep.subr.bf16.mxu0 %v1387
      %1921 = vmatpush1.bf16.msra.mxu0 %v1386
      %1922 = vmatprep.subr.bf16.mxu0 %v1389
      %1923 = vmatpush1.bf16.msra.mxu0 %v1388
      %1924 = vmatprep.subr.bf16.mxu0 %v1391
      %1925 = vmatpush1.bf16.msra.mxu0 %v1390
      %1926 = vmatprep.subr.bf16.mxu0 %v1393
      %1927 = vmatpush1.bf16.msra.mxu0 %v1392
      %1928 = vmatprep.subr.bf16.mxu0 %v1395
      %1929 = vmatpush1.bf16.msra.mxu0 %v1394
      %1930 = vmatprep.subr.bf16.mxu0 %v1397
      %1931 = vmatpush1.bf16.msra.mxu0 %v1396
      %1932 = vmatprep.subr.bf16.mxu0 %v1399
      %1933 = vmatpush1.bf16.msra.mxu0 %v1398
      %1934 = vmatprep.subr.bf16.mxu0 %v1401
      %1935 = vmatpush1.bf16.msra.mxu0 %v1400
      %1936 = vmatprep.subr.bf16.mxu0 %v1403
      %1937 = vmatpush1.bf16.msra.mxu0 %v1402
      %1938 = vmatprep.subr.bf16.mxu0 %v1405
      %1939 = vmatpush1.bf16.msra.mxu0 %v1404
      %1940 = vmatprep.subr.bf16.mxu0 %v1407
      %1941 = vmatpush1.bf16.msra.mxu0 %v1406
      %1942 = vmatprep.mubr.bf16.mxu0 %v517
      %1943 = vmatmul.mubr.bf16.gmra.mrb[0].mxu0 %v516
      %v1944 = vpop.f32.mrb[0].mxu0
      %v1945 = vadd.f32 %v1902, %v1944
      %v1946 = vpop.f32.mrb[0].mxu0
      %v1947 = vadd.f32 %v1904, %v1946
      %v1948 = vpop.f32.mrb[0].mxu0
      %v1949 = vadd.f32 %v1906, %v1948
      %v1950 = vpop.f32.mrb[0].mxu0
      %v1951 = vadd.f32 %v1908, %v1950
      %1952 = vdwg.mxu0
      %1953 = vmatprep.subr.bf16.mxu0 %v1409
      %1954 = vmatpush1.bf16.msra.mxu0 %v1408
      %1955 = vmatprep.subr.bf16.mxu0 %v1411
      %1956 = vmatpush1.bf16.msra.mxu0 %v1410
      %1957 = vmatprep.subr.bf16.mxu0 %v1413
      %1958 = vmatpush1.bf16.msra.mxu0 %v1412
      %1959 = vmatprep.subr.bf16.mxu0 %v1415
      %1960 = vmatpush1.bf16.msra.mxu0 %v1414
      %1961 = vmatprep.subr.bf16.mxu0 %v1417
      %1962 = vmatpush1.bf16.msra.mxu0 %v1416
      %1963 = vmatprep.subr.bf16.mxu0 %v1419
      %1964 = vmatpush1.bf16.msra.mxu0 %v1418
      %1965 = vmatprep.subr.bf16.mxu0 %v1421
      %1966 = vmatpush1.bf16.msra.mxu0 %v1420
      %1967 = vmatprep.subr.bf16.mxu0 %v1423
      %1968 = vmatpush1.bf16.msra.mxu0 %v1422
      %1969 = vmatprep.subr.bf16.mxu0 %v1425
      %1970 = vmatpush1.bf16.msra.mxu0 %v1424
      %1971 = vmatprep.subr.bf16.mxu0 %v1427
      %1972 = vmatpush1.bf16.msra.mxu0 %v1426
      %1973 = vmatprep.subr.bf16.mxu0 %v1429
      %1974 = vmatpush1.bf16.msra.mxu0 %v1428
      %1975 = vmatprep.subr.bf16.mxu0 %v1431
      %1976 = vmatpush1.bf16.msra.mxu0 %v1430
      %1977 = vmatprep.subr.bf16.mxu0 %v1433
      %1978 = vmatpush1.bf16.msra.mxu0 %v1432
      %1979 = vmatprep.subr.bf16.mxu0 %v1435
      %1980 = vmatpush1.bf16.msra.mxu0 %v1434
      %1981 = vmatprep.subr.bf16.mxu0 %v1437
      %1982 = vmatpush1.bf16.msra.mxu0 %v1436
      %1983 = vmatprep.subr.bf16.mxu0 %v1439
      %1984 = vmatpush1.bf16.msra.mxu0 %v1438
      %1985 = vmatprep.mubr.bf16.mxu0 %v519
      %1986 = vmatmul.mubr.bf16.gmra.mrb[0].mxu0 %v518
      %v1987 = vpop.f32.mrb[0].mxu0
      %v1988 = vadd.f32 %v1945, %v1987
      %v1989 = vpop.f32.mrb[0].mxu0
      %v1990 = vadd.f32 %v1947, %v1989
      %v1991 = vpop.f32.mrb[0].mxu0
      %v1992 = vadd.f32 %v1949, %v1991
      %v1993 = vpop.f32.mrb[0].mxu0
      %v1994 = vadd.f32 %v1951, %v1993
      %1995 = vdwg.mxu0
      %1996 = vmatprep.subr.bf16.mxu0 %v1441
      %1997 = vmatpush1.bf16.msra.mxu0 %v1440
      %1998 = vmatprep.subr.bf16.mxu0 %v1443
      %1999 = vmatpush1.bf16.msra.mxu0 %v1442
      %2000 = vmatprep.subr.bf16.mxu0 %v1445
      %2001 = vmatpush1.bf16.msra.mxu0 %v1444
      %2002 = vmatprep.subr.bf16.mxu0 %v1447
      %2003 = vmatpush1.bf16.msra.mxu0 %v1446
      %2004 = vmatprep.subr.bf16.mxu0 %v1449
      %2005 = vmatpush1.bf16.msra.mxu0 %v1448
      %2006 = vmatprep.subr.bf16.mxu0 %v1451
      %2007 = vmatpush1.bf16.msra.mxu0 %v1450
      %2008 = vmatprep.subr.bf16.mxu0 %v1453
      %2009 = vmatpush1.bf16.msra.mxu0 %v1452
      %2010 = vmatprep.subr.bf16.mxu0 %v1455
      %2011 = vmatpush1.bf16.msra.mxu0 %v1454
      %2012 = vmatprep.subr.bf16.mxu0 %v1457
      %2013 = vmatpush1.bf16.msra.mxu0 %v1456
      %2014 = vmatprep.subr.bf16.mxu0 %v1459
      %2015 = vmatpush1.bf16.msra.mxu0 %v1458
      %2016 = vmatprep.subr.bf16.mxu0 %v1461
      %2017 = vmatpush1.bf16.msra.mxu0 %v1460
      %2018 = vmatprep.subr.bf16.mxu0 %v1463
      %2019 = vmatpush1.bf16.msra.mxu0 %v1462
      %2020 = vmatprep.subr.bf16.mxu0 %v1465
      %2021 = vmatpush1.bf16.msra.mxu0 %v1464
      %2022 = vmatprep.subr.bf16.mxu0 %v1467
      %2023 = vmatpush1.bf16.msra.mxu0 %v1466
      %2024 = vmatprep.subr.bf16.mxu0 %v1469
      %2025 = vmatpush1.bf16.msra.mxu0 %v1468
      %2026 = vmatprep.subr.bf16.mxu0 %v1471
      %2027 = vmatpush1.bf16.msra.mxu0 %v1470
      %2028 = vmatprep.mubr.bf16.mxu0 %v521
      %2029 = vmatmul.mubr.bf16.gmra.mrb[0].mxu0 %v520
      %v2030 = vpop.f32.mrb[0].mxu0
      %v2031 = vadd.f32 %v1988, %v2030
      %v2032 = vpop.f32.mrb[0].mxu0
      %v2033 = vadd.f32 %v1990, %v2032
      %v2034 = vpop.f32.mrb[0].mxu0
      %v2035 = vadd.f32 %v1992, %v2034
      %v2036 = vpop.f32.mrb[0].mxu0
      %v2037 = vadd.f32 %v1994, %v2036
      %2038 = vdwg.mxu0
      %2039 = vmatprep.subr.bf16.mxu0 %v1473
      %2040 = vmatpush1.bf16.msra.mxu0 %v1472
      %2041 = vmatprep.subr.bf16.mxu0 %v1475
      %2042 = vmatpush1.bf16.msra.mxu0 %v1474
      %2043 = vmatprep.subr.bf16.mxu0 %v1477
      %2044 = vmatpush1.bf16.msra.mxu0 %v1476
      %2045 = vmatprep.subr.bf16.mxu0 %v1479
      %2046 = vmatpush1.bf16.msra.mxu0 %v1478
      %2047 = vmatprep.subr.bf16.mxu0 %v1481
      %2048 = vmatpush1.bf16.msra.mxu0 %v1480
      %2049 = vmatprep.subr.bf16.mxu0 %v1483
      %2050 = vmatpush1.bf16.msra.mxu0 %v1482
      %2051 = vmatprep.subr.bf16.mxu0 %v1485
      %2052 = vmatpush1.bf16.msra.mxu0 %v1484
      %2053 = vmatprep.subr.bf16.mxu0 %v1487
      %2054 = vmatpush1.bf16.msra.mxu0 %v1486
      %2055 = vmatprep.subr.bf16.mxu0 %v1489
      %2056 = vmatpush1.bf16.msra.mxu0 %v1488
      %2057 = vmatprep.subr.bf16.mxu0 %v1491
      %2058 = vmatpush1.bf16.msra.mxu0 %v1490
      %2059 = vmatprep.subr.bf16.mxu0 %v1493
      %2060 = vmatpush1.bf16.msra.mxu0 %v1492
      %2061 = vmatprep.subr.bf16.mxu0 %v1495
      %2062 = vmatpush1.bf16.msra.mxu0 %v1494
      %2063 = vmatprep.subr.bf16.mxu0 %v1497
      %2064 = vmatpush1.bf16.msra.mxu0 %v1496
      %2065 = vmatprep.subr.bf16.mxu0 %v1499
      %2066 = vmatpush1.bf16.msra.mxu0 %v1498
      %2067 = vmatprep.subr.bf16.mxu0 %v1501
      %2068 = vmatpush1.bf16.msra.mxu0 %v1500
      %2069 = vmatprep.subr.bf16.mxu0 %v1503
      %2070 = vmatpush1.bf16.msra.mxu0 %v1502
      %2071 = vmatprep.mubr.bf16.mxu0 %v523
      %2072 = vmatmul.mubr.bf16.gmra.mrb[0].mxu0 %v522
      %v2073 = vpop.f32.mrb[0].mxu0
      %v2074 = vadd.f32 %v2031, %v2073
      %v2075 = vpop.f32.mrb[0].mxu0
      %v2076 = vadd.f32 %v2033, %v2075
      %v2077 = vpop.f32.mrb[0].mxu0
      %v2078 = vadd.f32 %v2035, %v2077
      %v2079 = vpop.f32.mrb[0].mxu0
      %v2080 = vadd.f32 %v2037, %v2079
      %2081 = vdwg.mxu0
      %2082 = vmatprep.subr.bf16.mxu0 %v1505
      %2083 = vmatpush1.bf16.msra.mxu0 %v1504
      %2084 = vmatprep.subr.bf16.mxu0 %v1507
      %2085 = vmatpush1.bf16.msra.mxu0 %v1506
      %2086 = vmatprep.subr.bf16.mxu0 %v1509
      %2087 = vmatpush1.bf16.msra.mxu0 %v1508
      %2088 = vmatprep.subr.bf16.mxu0 %v1511
      %2089 = vmatpush1.bf16.msra.mxu0 %v1510
      %2090 = vmatprep.subr.bf16.mxu0 %v1513
      %2091 = vmatpush1.bf16.msra.mxu0 %v1512
      %2092 = vmatprep.subr.bf16.mxu0 %v1515
      %2093 = vmatpush1.bf16.msra.mxu0 %v1514
      %2094 = vmatprep.subr.bf16.mxu0 %v1517
      %2095 = vmatpush1.bf16.msra.mxu0 %v1516
      %2096 = vmatprep.subr.bf16.mxu0 %v1519
      %2097 = vmatpush1.bf16.msra.mxu0 %v1518
      %2098 = vmatprep.subr.bf16.mxu0 %v1521
      %2099 = vmatpush1.bf16.msra.mxu0 %v1520
      %2100 = vmatprep.subr.bf16.mxu0 %v1523
      %2101 = vmatpush1.bf16.msra.mxu0 %v1522
      %2102 = vmatprep.subr.bf16.mxu0 %v1525
      %2103 = vmatpush1.bf16.msra.mxu0 %v1524
      %2104 = vmatprep.subr.bf16.mxu0 %v1527
      %2105 = vmatpush1.bf16.msra.mxu0 %v1526
      %2106 = vmatprep.subr.bf16.mxu0 %v1529
      %2107 = vmatpush1.bf16.msra.mxu0 %v1528
      %2108 = vmatprep.subr.bf16.mxu0 %v1531
      %2109 = vmatpush1.bf16.msra.mxu0 %v1530
      %2110 = vmatprep.subr.bf16.mxu0 %v1533
      %2111 = vmatpush1.bf16.msra.mxu0 %v1532
      %2112 = vmatprep.subr.bf16.mxu0 %v1535
      %2113 = vmatpush1.bf16.msra.mxu0 %v1534
      %2114 = vmatprep.mubr.bf16.mxu0 %v525
      %2115 = vmatmul.mubr.bf16.gmra.mrb[0].mxu0 %v524
      %v2116 = vpop.f32.mrb[0].mxu0
      %v2117 = vadd.f32 %v2074, %v2116
      %v2118 = vpop.f32.mrb[0].mxu0
      %v2119 = vadd.f32 %v2076, %v2118
      %v2120 = vpop.f32.mrb[0].mxu0
      %v2121 = vadd.f32 %v2078, %v2120
      %v2122 = vpop.f32.mrb[0].mxu0
      %v2123 = vadd.f32 %v2080, %v2122
      %2124 = vdwg.mxu0
      %2125 = vmatprep.subr.bf16.mxu0 %v1537
      %2126 = vmatpush1.bf16.msra.mxu0 %v1536
      %2127 = vmatprep.subr.bf16.mxu0 %v1539
      %2128 = vmatpush1.bf16.msra.mxu0 %v1538
      %2129 = vmatprep.subr.bf16.mxu0 %v1541
      %2130 = vmatpush1.bf16.msra.mxu0 %v1540
      %2131 = vmatprep.subr.bf16.mxu0 %v1543
      %2132 = vmatpush1.bf16.msra.mxu0 %v1542
      %2133 = vmatprep.subr.bf16.mxu0 %v1545
      %2134 = vmatpush1.bf16.msra.mxu0 %v1544
      %2135 = vmatprep.subr.bf16.mxu0 %v1547
      %2136 = vmatpush1.bf16.msra.mxu0 %v1546
      %2137 = vmatprep.subr.bf16.mxu0 %v1549
      %2138 = vmatpush1.bf16.msra.mxu0 %v1548
      %2139 = vmatprep.subr.bf16.mxu0 %v1551
      %2140 = vmatpush1.bf16.msra.mxu0 %v1550
      %2141 = vmatprep.subr.bf16.mxu0 %v1553
      %2142 = vmatpush1.bf16.msra.mxu0 %v1552
      %2143 = vmatprep.subr.bf16.mxu0 %v1555
      %2144 = vmatpush1.bf16.msra.mxu0 %v1554
      %2145 = vmatprep.subr.bf16.mxu0 %v1557
      %2146 = vmatpush1.bf16.msra.mxu0 %v1556
      %2147 = vmatprep.subr.bf16.mxu0 %v1559
      %2148 = vmatpush1.bf16.msra.mxu0 %v1558
      %2149 = vmatprep.subr.bf16.mxu0 %v1561
      %2150 = vmatpush1.bf16.msra.mxu0 %v1560
      %2151 = vmatprep.subr.bf16.mxu0 %v1563
      %2152 = vmatpush1.bf16.msra.mxu0 %v1562
      %2153 = vmatprep.subr.bf16.mxu0 %v1565
      %2154 = vmatpush1.bf16.msra.mxu0 %v1564
      %2155 = vmatprep.subr.bf16.mxu0 %v1567
      %2156 = vmatpush1.bf16.msra.mxu0 %v1566
      %2157 = vmatprep.mubr.bf16.mxu0 %v527
      %2158 = vmatmul.mubr.bf16.gmra.mrb[0].mxu0 %v526
      %v2159 = vpop.f32.mrb[0].mxu0
      %v2160 = vadd.f32 %v2117, %v2159
      %v2161 = vpop.f32.mrb[0].mxu0
      %v2162 = vadd.f32 %v2119, %v2161
      %v2163 = vpop.f32.mrb[0].mxu0
      %v2164 = vadd.f32 %v2121, %v2163
      %v2165 = vpop.f32.mrb[0].mxu0
      %v2166 = vadd.f32 %v2123, %v2165
      %2167 = vdwg.mxu0
      %v2168 = vadd.f32 %v2160, %v2164
      %v2169 = vrot.slane %v2168, 4
      %v2170 = vadd.f32 %v2168, %v2169
      %v2171 = vrot.slane %v2170, 2
      %v2172 = vadd.f32 %v2170, %v2171
      %v2173 = vrot.slane %v2172, 1
      %v2174 = vadd.f32 %v2172, %v2173
      %v2175 = vadd.f32 %v2162, %v2166
      %v2176 = vrot.slane %v2175, 4
      %v2177 = vadd.f32 %v2175, %v2176
      %v2178 = vrot.slane %v2177, 2
      %v2179 = vadd.f32 %v2177, %v2178
      %v2180 = vrot.slane %v2179, 1
      %v2181 = vadd.f32 %v2179, %v2180
      %v2182 = vmul.f32 %v2160, %v2160
      %v2183 = vmul.f32 %v2162, %v2162
      %v2184 = vmul.f32 %v2164, %v2164
      %v2185 = vmul.f32 %v2166, %v2166
      %v2186 = vadd.f32 %v2182, %v2184
      %v2187 = vrot.slane %v2186, 4
      %v2188 = vadd.f32 %v2186, %v2187
      %v2189 = vrot.slane %v2188, 2
      %v2190 = vadd.f32 %v2188, %v2189
      %v2191 = vrot.slane %v2190, 1
      %v2192 = vadd.f32 %v2190, %v2191
      %v2193 = vadd.f32 %v2183, %v2185
      %v2194 = vrot.slane %v2193, 4
      %v2195 = vadd.f32 %v2193, %v2194
      %v2196 = vrot.slane %v2195, 2
      %v2197 = vadd.f32 %v2195, %v2196
      %v2198 = vrot.slane %v2197, 1
      %v2199 = vadd.f32 %v2197, %v2198
      %v2200 = vlaneseq
      %v2201 = vshrl.u32 %v2200, 7
      %vm2202 = vcmp.eq.s32.totalorder %v2201, 0
      %v2203 = vsel %vm2202, %v2174, 0.0
      %v2204 = vsel %vm2202, %v2181, 0.0
      %vm2205 = vcmp.eq.s32.totalorder %v2201, 1
      %v2206 = vsel %vm2205, %v2192, 0.0
      %v2207 = vsel %vm2205, %v2199, 0.0
      %v2208 = vadd.f32 %v2203, %v2206
      %v2209 = vadd.f32 %v2204, %v2207
      %2210 = vst [vmem:[%s191] sm:$0xff] %v2208
      %2211 = vst [vmem:[%s191 + $0x8] sm:$0xff] %v2209
      %v2212 = vpack.c.bf16 %v2164, %v2160
      %v2213 = vpack.c.bf16 %v2166, %v2162
      %v2216 = vunpack.c.l.b16 %v2212
      %v2217 = vunpack.c.l.b16 %v2213
      %v2218 = vunpack.c.h.b16 %v2212
      %v2219 = vunpack.c.h.b16 %v2213
      %v2220 = vpack.c.b16 %v2217, %v2216
      %v2221 = vpack.c.b16 %v2219, %v2218
      %2224 = vst [vmem:[%s185] sm:$0xff] %v2220
      %2225 = vst [vmem:[%s185 + $0x8] sm:$0xff] %v2221
      %s2226 = smul.u32 2, %s15
      %p2227 = scmp.lt.s32.totalorder %s2226, 3
      %s2228 = scalar_select %p2227, %s2226, 3
      %s2229 = smul.addr %s2228, 2
      %s2230 = smul.addr %s2229, 4
      %s2231 = scalar_lea.vmem %s2, %s2230
      %p2232 = scmp.lt.s32.totalorder %s15, 1
      %s2233 = scalar_select %p2232, %s15, 1
      %s2234 = smul.addr %s2233, 2
      %s2235 = smul.addr %s2234, 8
      %s2236 = scalar_lea.vmem %s3, %s2235
      // Predicated region
      $region29: #{encoder_forward.8} parent=27 // pred_check
        %p2237 = pneg %p80
      $region30: #{encoder_forward.8} parent=27 // pred_check_branch
        %2239 = sbr.rel (%p2237) target = $region32
      $region31: #{encoder_forward.8} parent=27 // pred_region
        %s2240 = smul.u32 2, %s15
      $region32: #{encoder_forward.8} parent=27 // pred_fallthru
        _
      // Predicated region
      $region33: #{encoder_forward.8} parent=27 // pred_check
        %p2241 = pneg %p106
      $region34: #{encoder_forward.8} parent=27 // pred_check_branch
        %2243 = sbr.rel (%p2241) target = $region36
      $region35: #{encoder_forward.8} parent=27 // pred_region
        _
      $region36: #{encoder_forward.8} parent=27 // pred_fallthru
        _
    $region28: #{encoder_forward.8} parent=5 // pred_fallthru
      _
    %p2244 = scmp.le.s32.totalorder 2, %s10
    // Predicated region
    $region37: #{encoder_forward.8} parent=5 // pred_check
      %p2245 = pneg %p2244
    $region38: #{encoder_forward.8} parent=5 // pred_check_branch
      %2247 = sbr.rel (%p2245) target = $region40
    $region39: #{encoder_forward.8} parent=5 // pred_region
      %s2248 = ssub.s32 %s10, 2
      // Predicated region
      $region41: #{encoder_forward.8} parent=39 // pred_check
        %p2249 = pneg %p86
      $region42: #{encoder_forward.8} parent=39 // pred_check_branch
        %2251 = sbr.rel (%p2249) target = $region44
      $region43: #{encoder_forward.8} parent=39 // pred_region
        %s2252 = smul.u32 2, %s16
        %p2253 = scmp.lt.s32.totalorder %s2252, 3
        %s2254 = scalar_select %p2253, %s2252, 3
        %s2255 = smul.addr %s2254, 2
        %s2256 = smul.addr %s2255, 4
        %s2257 = scalar_lea.vmem %s2, %s2256
      $region44: #{encoder_forward.8} parent=39 // pred_fallthru
        _
      // Predicated region
      $region45: #{encoder_forward.8} parent=39 // pred_check
        %p2258 = pneg %p112
      $region46: #{encoder_forward.8} parent=39 // pred_check_branch
        %2260 = sbr.rel (%p2258) target = $region48
      $region47: #{encoder_forward.8} parent=39 // pred_region
        %p2261 = scmp.lt.s32.totalorder %s16, 1
        %s2262 = scalar_select %p2261, %s16, 1
        %s2263 = smul.addr %s2262, 2
        %s2264 = smul.addr %s2263, 8
        %s2265 = scalar_lea.vmem %s3, %s2264
      $region48: #{encoder_forward.8} parent=39 // pred_fallthru
        _
    $region40: #{encoder_forward.8} parent=5 // pred_fallthru
      _
  $region6: #{encoder_forward.8} parent=0 // loop_footer
    %s14 = sadd.s32 1, %s10
  $region7: #{encoder_forward.8} parent=0 // loop_footer_branch
    %9 = sbr.rel target = $region3
  $region8: #{encoder_forward.8} parent=0 // loop_exit
    _

// kernel: encoder_forward.9
$region0: #{encoder_forward.9}
  #allocation0 [shape = 'u32[]', space=smem, size = 0x4, offset = 0x4, fixed_abs, tag = 'smem constant byte address 0x4 - core index']
  #allocation1 [shape = 'u32[144,128]{1,0:T(1,128)}', space=vmem, size = 0x12000, scoped, tag = 'internal scratch']
  %s0 = inlined_call_operand.vmem [shape: bf16[8,4096], index: 0, kind: input, shape index: {}]
  %s1 = inlined_call_operand.vmem [shape: f32[1,4096], index: 1, kind: input, shape index: {}]
  %s2 = inlined_call_operand.vmem [shape: f32[1,4096], index: 2, kind: input, shape index: {}]
  %s3 = inlined_call_operand.vmem [shape: bf16[4096,128], index: 3, kind: input, shape index: {}]
  %s4 = inlined_call_operand.vmem [shape: f32[8,128], index: 4, kind: output, shape index: {}]
  %s5 = sld [smem:[#allocation0]]
  $region26: #{encoder_forward.9} parent=0
    _
  %s7 = ssub.s32 1, %s5
  %s8 = scalar_select 0, %s7, %s5
  // Predicated region
  $region2: #{encoder_forward.9} parent=0 // pred_check
    _
  $region3: #{encoder_forward.9} parent=0 // pred_check_branch
    %10 = sbr.rel (0) target = $region5
  $region4: #{encoder_forward.9} parent=0 // pred_region
    _
  $region5: #{encoder_forward.9} parent=0 // pred_fallthru
    _
  // Predicated region
  $region6: #{encoder_forward.9} parent=0 // pred_check
    _
  $region7: #{encoder_forward.9} parent=0 // pred_check_branch
    %12 = sbr.rel (0) target = $region9
  $region8: #{encoder_forward.9} parent=0 // pred_region
    _
  $region9: #{encoder_forward.9} parent=0 // pred_fallthru
    _
  // Predicated region
  $region10: #{encoder_forward.9} parent=0 // pred_check
    _
  $region11: #{encoder_forward.9} parent=0 // pred_check_branch
    %14 = sbr.rel (0) target = $region13
  $region12: #{encoder_forward.9} parent=0 // pred_region
    _
  $region13: #{encoder_forward.9} parent=0 // pred_fallthru
    _
  // Predicated region
  $region14: #{encoder_forward.9} parent=0 // pred_check
    _
  $region15: #{encoder_forward.9} parent=0 // pred_check_branch
    %16 = sbr.rel (0) target = $region17
  $region16: #{encoder_forward.9} parent=0 // pred_region
    _
  $region17: #{encoder_forward.9} parent=0 // pred_fallthru
    _
  %v18 = vld [vmem:[%s0] sm:$0xff]
  %v19 = vld [vmem:[%s0 + $0x8] sm:$0xff]
  %v20 = vld [vmem:[%s0 + $0x10] sm:$0xff]
  %v21 = vld [vmem:[%s0 + $0x18] sm:$0xff]
  %v22 = vld [vmem:[%s0 + $0x20] sm:$0xff]
  %v23 = vld [vmem:[%s0 + $0x28] sm:$0xff]
  %v24 = vld [vmem:[%s0 + $0x30] sm:$0xff]
  %v25 = vld [vmem:[%s0 + $0x38] sm:$0xff]
  %v26 = vld [vmem:[%s0 + $0x40] sm:$0xff]
  %v27 = vld [vmem:[%s0 + $0x48] sm:$0xff]
  %v28 = vld [vmem:[%s0 + $0x50] sm:$0xff]
  %v29 = vld [vmem:[%s0 + $0x58] sm:$0xff]
  %v30 = vld [vmem:[%s0 + $0x60] sm:$0xff]
  %v31 = vld [vmem:[%s0 + $0x68] sm:$0xff]
  %v32 = vld [vmem:[%s0 + $0x70] sm:$0xff]
  %v33 = vld [vmem:[%s0 + $0x78] sm:$0xff]
  %v34 = vunpack.c.l.bf16 %v18
  %v35 = vunpack.c.h.bf16 %v18
  %v36 = vunpack.c.l.bf16 %v19
  %v37 = vunpack.c.h.bf16 %v19
  %v38 = vunpack.c.l.bf16 %v20
  %v39 = vunpack.c.h.bf16 %v20
  %v40 = vunpack.c.l.bf16 %v21
  %v41 = vunpack.c.h.bf16 %v21
  %v42 = vunpack.c.l.bf16 %v22
  %v43 = vunpack.c.h.bf16 %v22
  %v44 = vunpack.c.l.bf16 %v23
  %v45 = vunpack.c.h.bf16 %v23
  %v46 = vunpack.c.l.bf16 %v24
  %v47 = vunpack.c.h.bf16 %v24
  %v48 = vunpack.c.l.bf16 %v25
  %v49 = vunpack.c.h.bf16 %v25
  %v50 = vunpack.c.l.bf16 %v26
  %v51 = vunpack.c.h.bf16 %v26
  %v52 = vunpack.c.l.bf16 %v27
  %v53 = vunpack.c.h.bf16 %v27
  %v54 = vunpack.c.l.bf16 %v28
  %v55 = vunpack.c.h.bf16 %v28
  %v56 = vunpack.c.l.bf16 %v29
  %v57 = vunpack.c.h.bf16 %v29
  %v58 = vunpack.c.l.bf16 %v30
  %v59 = vunpack.c.h.bf16 %v30
  %v60 = vunpack.c.l.bf16 %v31
  %v61 = vunpack.c.h.bf16 %v31
  %v62 = vunpack.c.l.bf16 %v32
  %v63 = vunpack.c.h.bf16 %v32
  %v64 = vunpack.c.l.bf16 %v33
  %v65 = vunpack.c.h.bf16 %v33
  %v66 = vld [vmem:[%s1] sm:$0xff]
  %v67 = vld [vmem:[%s1 + $0x8] sm:$0xff]
  %v68 = vld [vmem:[%s1 + $0x10] sm:$0xff]
  %v69 = vld [vmem:[%s1 + $0x18] sm:$0xff]
  %v74 = vlaneseq
  %v75 = vshrl.u32 %v74, 7
  %v76 = vsub.s32 0, %v75
  %v77 = vrot.slane %v66, %v76
  %v78 = vlaneseq
  %v79 = vshrl.u32 %v78, 7
  %v80 = vsub.s32 1, %v79
  %v81 = vrot.slane %v66, %v80
  %v82 = vlaneseq
  %v83 = vshrl.u32 %v82, 7
  %v84 = vsub.s32 2, %v83
  %v85 = vrot.slane %v66, %v84
  %v86 = vlaneseq
  %v87 = vshrl.u32 %v86, 7
  %v88 = vsub.s32 3, %v87
  %v89 = vrot.slane %v66, %v88
  %v90 = vlaneseq
  %v91 = vshrl.u32 %v90, 7
  %v92 = vsub.s32 4, %v91
  %v93 = vrot.slane %v66, %v92
  %v94 = vlaneseq
  %v95 = vshrl.u32 %v94, 7
  %v96 = vsub.s32 5, %v95
  %v97 = vrot.slane %v66, %v96
  %v98 = vlaneseq
  %v99 = vshrl.u32 %v98, 7
  %v100 = vsub.s32 6, %v99
  %v101 = vrot.slane %v66, %v100
  %v102 = vlaneseq
  %v103 = vshrl.u32 %v102, 7
  %v104 = vsub.s32 7, %v103
  %v105 = vrot.slane %v66, %v104
  %v106 = vlaneseq
  %v107 = vshrl.u32 %v106, 7
  %v108 = vsub.s32 0, %v107
  %v109 = vrot.slane %v67, %v108
  %v110 = vlaneseq
  %v111 = vshrl.u32 %v110, 7
  %v112 = vsub.s32 1, %v111
  %v113 = vrot.slane %v67, %v112
  %v114 = vlaneseq
  %v115 = vshrl.u32 %v114, 7
  %v116 = vsub.s32 2, %v115
  %v117 = vrot.slane %v67, %v116
  %v118 = vlaneseq
  %v119 = vshrl.u32 %v118, 7
  %v120 = vsub.s32 3, %v119
  %v121 = vrot.slane %v67, %v120
  %v122 = vlaneseq
  %v123 = vshrl.u32 %v122, 7
  %v124 = vsub.s32 4, %v123
  %v125 = vrot.slane %v67, %v124
  %v126 = vlaneseq
  %v127 = vshrl.u32 %v126, 7
  %v128 = vsub.s32 5, %v127
  %v129 = vrot.slane %v67, %v128
  %v130 = vlaneseq
  %v131 = vshrl.u32 %v130, 7
  %v132 = vsub.s32 6, %v131
  %v133 = vrot.slane %v67, %v132
  %v134 = vlaneseq
  %v135 = vshrl.u32 %v134, 7
  %v136 = vsub.s32 7, %v135
  %v137 = vrot.slane %v67, %v136
  %v138 = vlaneseq
  %v139 = vshrl.u32 %v138, 7
  %v140 = vsub.s32 0, %v139
  %v141 = vrot.slane %v68, %v140
  %v142 = vlaneseq
  %v143 = vshrl.u32 %v142, 7
  %v144 = vsub.s32 1, %v143
  %v145 = vrot.slane %v68, %v144
  %v146 = vlaneseq
  %v147 = vshrl.u32 %v146, 7
  %v148 = vsub.s32 2, %v147
  %v149 = vrot.slane %v68, %v148
  %v150 = vlaneseq
  %v151 = vshrl.u32 %v150, 7
  %v152 = vsub.s32 3, %v151
  %v153 = vrot.slane %v68, %v152
  %v154 = vlaneseq
  %v155 = vshrl.u32 %v154, 7
  %v156 = vsub.s32 4, %v155
  %v157 = vrot.slane %v68, %v156
  %v158 = vlaneseq
  %v159 = vshrl.u32 %v158, 7
  %v160 = vsub.s32 5, %v159
  %v161 = vrot.slane %v68, %v160
  %v162 = vlaneseq
  %v163 = vshrl.u32 %v162, 7
  %v164 = vsub.s32 6, %v163
  %v165 = vrot.slane %v68, %v164
  %v166 = vlaneseq
  %v167 = vshrl.u32 %v166, 7
  %v168 = vsub.s32 7, %v167
  %v169 = vrot.slane %v68, %v168
  %v170 = vlaneseq
  %v171 = vshrl.u32 %v170, 7
  %v172 = vsub.s32 0, %v171
  %v173 = vrot.slane %v69, %v172
  %v174 = vlaneseq
  %v175 = vshrl.u32 %v174, 7
  %v176 = vsub.s32 1, %v175
  %v177 = vrot.slane %v69, %v176
  %v178 = vlaneseq
  %v179 = vshrl.u32 %v178, 7
  %v180 = vsub.s32 2, %v179
  %v181 = vrot.slane %v69, %v180
  %v182 = vlaneseq
  %v183 = vshrl.u32 %v182, 7
  %v184 = vsub.s32 3, %v183
  %v185 = vrot.slane %v69, %v184
  %v186 = vlaneseq
  %v187 = vshrl.u32 %v186, 7
  %v188 = vsub.s32 4, %v187
  %v189 = vrot.slane %v69, %v188
  %v190 = vlaneseq
  %v191 = vshrl.u32 %v190, 7
  %v192 = vsub.s32 5, %v191
  %v193 = vrot.slane %v69, %v192
  %v194 = vlaneseq
  %v195 = vshrl.u32 %v194, 7
  %v196 = vsub.s32 6, %v195
  %v197 = vrot.slane %v69, %v196
  %v198 = vlaneseq
  %v199 = vshrl.u32 %v198, 7
  %v200 = vsub.s32 7, %v199
  %v201 = vrot.slane %v69, %v200
  %v234 = vmul.f32 %v34, %v77
  %v235 = vmul.f32 %v35, %v81
  %v236 = vmul.f32 %v36, %v85
  %v237 = vmul.f32 %v37, %v89
  %v238 = vmul.f32 %v38, %v93
  %v239 = vmul.f32 %v39, %v97
  %v240 = vmul.f32 %v40, %v101
  %v241 = vmul.f32 %v41, %v105
  %v242 = vmul.f32 %v42, %v109
  %v243 = vmul.f32 %v43, %v113
  %v244 = vmul.f32 %v44, %v117
  %v245 = vmul.f32 %v45, %v121
  %v246 = vmul.f32 %v46, %v125
  %v247 = vmul.f32 %v47, %v129
  %v248 = vmul.f32 %v48, %v133
  %v249 = vmul.f32 %v49, %v137
  %v250 = vmul.f32 %v50, %v141
  %v251 = vmul.f32 %v51, %v145
  %v252 = vmul.f32 %v52, %v149
  %v253 = vmul.f32 %v53, %v153
  %v254 = vmul.f32 %v54, %v157
  %v255 = vmul.f32 %v55, %v161
  %v256 = vmul.f32 %v56, %v165
  %v257 = vmul.f32 %v57, %v169
  %v258 = vmul.f32 %v58, %v173
  %v259 = vmul.f32 %v59, %v177
  %v260 = vmul.f32 %v60, %v181
  %v261 = vmul.f32 %v61, %v185
  %v262 = vmul.f32 %v62, %v189
  %v263 = vmul.f32 %v63, %v193
  %v264 = vmul.f32 %v64, %v197
  %v265 = vmul.f32 %v65, %v201
  %v266 = vld [vmem:[%s2] sm:$0xff]
  %v267 = vld [vmem:[%s2 + $0x8] sm:$0xff]
  %v268 = vld [vmem:[%s2 + $0x10] sm:$0xff]
  %v269 = vld [vmem:[%s2 + $0x18] sm:$0xff]
  %v274 = vlaneseq
  %v275 = vshrl.u32 %v274, 7
  %v276 = vsub.s32 0, %v275
  %v277 = vrot.slane %v266, %v276
  %v278 = vlaneseq
  %v279 = vshrl.u32 %v278, 7
  %v280 = vsub.s32 1, %v279
  %v281 = vrot.slane %v266, %v280
  %v282 = vlaneseq
  %v283 = vshrl.u32 %v282, 7
  %v284 = vsub.s32 2, %v283
  %v285 = vrot.slane %v266, %v284
  %v286 = vlaneseq
  %v287 = vshrl.u32 %v286, 7
  %v288 = vsub.s32 3, %v287
  %v289 = vrot.slane %v266, %v288
  %v290 = vlaneseq
  %v291 = vshrl.u32 %v290, 7
  %v292 = vsub.s32 4, %v291
  %v293 = vrot.slane %v266, %v292
  %v294 = vlaneseq
  %v295 = vshrl.u32 %v294, 7
  %v296 = vsub.s32 5, %v295
  %v297 = vrot.slane %v266, %v296
  %v298 = vlaneseq
  %v299 = vshrl.u32 %v298, 7
  %v300 = vsub.s32 6, %v299
  %v301 = vrot.slane %v266, %v300
  %v302 = vlaneseq
  %v303 = vshrl.u32 %v302, 7
  %v304 = vsub.s32 7, %v303
  %v305 = vrot.slane %v266, %v304
  %v306 = vlaneseq
  %v307 = vshrl.u32 %v306, 7
  %v308 = vsub.s32 0, %v307
  %v309 = vrot.slane %v267, %v308
  %v310 = vlaneseq
  %v311 = vshrl.u32 %v310, 7
  %v312 = vsub.s32 1, %v311
  %v313 = vrot.slane %v267, %v312
  %v314 = vlaneseq
  %v315 = vshrl.u32 %v314, 7
  %v316 = vsub.s32 2, %v315
  %v317 = vrot.slane %v267, %v316
  %v318 = vlaneseq
  %v319 = vshrl.u32 %v318, 7
  %v320 = vsub.s32 3, %v319
  %v321 = vrot.slane %v267, %v320
  %v322 = vlaneseq
  %v323 = vshrl.u32 %v322, 7
  %v324 = vsub.s32 4, %v323
  %v325 = vrot.slane %v267, %v324
  %v326 = vlaneseq
  %v327 = vshrl.u32 %v326, 7
  %v328 = vsub.s32 5, %v327
  %v329 = vrot.slane %v267, %v328
  %v330 = vlaneseq
  %v331 = vshrl.u32 %v330, 7
  %v332 = vsub.s32 6, %v331
  %v333 = vrot.slane %v267, %v332
  %v334 = vlaneseq
  %v335 = vshrl.u32 %v334, 7
  %v336 = vsub.s32 7, %v335
  %v337 = vrot.slane %v267, %v336
  %v338 = vlaneseq
  %v339 = vshrl.u32 %v338, 7
  %v340 = vsub.s32 0, %v339
  %v341 = vrot.slane %v268, %v340
  %v342 = vlaneseq
  %v343 = vshrl.u32 %v342, 7
  %v344 = vsub.s32 1, %v343
  %v345 = vrot.slane %v268, %v344
  %v346 = vlaneseq
  %v347 = vshrl.u32 %v346, 7
  %v348 = vsub.s32 2, %v347
  %v349 = vrot.slane %v268, %v348
  %v350 = vlaneseq
  %v351 = vshrl.u32 %v350, 7
  %v352 = vsub.s32 3, %v351
  %v353 = vrot.slane %v268, %v352
  %v354 = vlaneseq
  %v355 = vshrl.u32 %v354, 7
  %v356 = vsub.s32 4, %v355
  %v357 = vrot.slane %v268, %v356
  %v358 = vlaneseq
  %v359 = vshrl.u32 %v358, 7
  %v360 = vsub.s32 5, %v359
  %v361 = vrot.slane %v268, %v360
  %v362 = vlaneseq
  %v363 = vshrl.u32 %v362, 7
  %v364 = vsub.s32 6, %v363
  %v365 = vrot.slane %v268, %v364
  %v366 = vlaneseq
  %v367 = vshrl.u32 %v366, 7
  %v368 = vsub.s32 7, %v367
  %v369 = vrot.slane %v268, %v368
  %v370 = vlaneseq
  %v371 = vshrl.u32 %v370, 7
  %v372 = vsub.s32 0, %v371
  %v373 = vrot.slane %v269, %v372
  %v374 = vlaneseq
  %v375 = vshrl.u32 %v374, 7
  %v376 = vsub.s32 1, %v375
  %v377 = vrot.slane %v269, %v376
  %v378 = vlaneseq
  %v379 = vshrl.u32 %v378, 7
  %v380 = vsub.s32 2, %v379
  %v381 = vrot.slane %v269, %v380
  %v382 = vlaneseq
  %v383 = vshrl.u32 %v382, 7
  %v384 = vsub.s32 3, %v383
  %v385 = vrot.slane %v269, %v384
  %v386 = vlaneseq
  %v387 = vshrl.u32 %v386, 7
  %v388 = vsub.s32 4, %v387
  %v389 = vrot.slane %v269, %v388
  %v390 = vlaneseq
  %v391 = vshrl.u32 %v390, 7
  %v392 = vsub.s32 5, %v391
  %v393 = vrot.slane %v269, %v392
  %v394 = vlaneseq
  %v395 = vshrl.u32 %v394, 7
  %v396 = vsub.s32 6, %v395
  %v397 = vrot.slane %v269, %v396
  %v398 = vlaneseq
  %v399 = vshrl.u32 %v398, 7
  %v400 = vsub.s32 7, %v399
  %v401 = vrot.slane %v269, %v400
  %v434 = vadd.f32 %v234, %v277
  %v435 = vadd.f32 %v235, %v281
  %v436 = vadd.f32 %v236, %v285
  %v437 = vadd.f32 %v237, %v289
  %v438 = vadd.f32 %v238, %v293
  %v439 = vadd.f32 %v239, %v297
  %v440 = vadd.f32 %v240, %v301
  %v441 = vadd.f32 %v241, %v305
  %v442 = vadd.f32 %v242, %v309
  %v443 = vadd.f32 %v243, %v313
  %v444 = vadd.f32 %v244, %v317
  %v445 = vadd.f32 %v245, %v321
  %v446 = vadd.f32 %v246, %v325
  %v447 = vadd.f32 %v247, %v329
  %v448 = vadd.f32 %v248, %v333
  %v449 = vadd.f32 %v249, %v337
  %v450 = vadd.f32 %v250, %v341
  %v451 = vadd.f32 %v251, %v345
  %v452 = vadd.f32 %v252, %v349
  %v453 = vadd.f32 %v253, %v353
  %v454 = vadd.f32 %v254, %v357
  %v455 = vadd.f32 %v255, %v361
  %v456 = vadd.f32 %v256, %v365
  %v457 = vadd.f32 %v257, %v369
  %v458 = vadd.f32 %v258, %v373
  %v459 = vadd.f32 %v259, %v377
  %v460 = vadd.f32 %v260, %v381
  %v461 = vadd.f32 %v261, %v385
  %v462 = vadd.f32 %v262, %v389
  %v463 = vadd.f32 %v263, %v393
  %v464 = vadd.f32 %v264, %v397
  %v465 = vadd.f32 %v265, %v401
  %vm466 = vcmp.ge.f32.partialorder %v434, 0.0
  %vm467 = vcmp.ge.f32.partialorder %v435, 0.0
  %vm468 = vcmp.ge.f32.partialorder %v436, 0.0
  %vm469 = vcmp.ge.f32.partialorder %v437, 0.0
  %vm470 = vcmp.ge.f32.partialorder %v438, 0.0
  %vm471 = vcmp.ge.f32.partialorder %v439, 0.0
  %vm472 = vcmp.ge.f32.partialorder %v440, 0.0
  %vm473 = vcmp.ge.f32.partialorder %v441, 0.0
  %vm474 = vcmp.ge.f32.partialorder %v442, 0.0
  %vm475 = vcmp.ge.f32.partialorder %v443, 0.0
  %vm476 = vcmp.ge.f32.partialorder %v444, 0.0
  %vm477 = vcmp.ge.f32.partialorder %v445, 0.0
  %vm478 = vcmp.ge.f32.partialorder %v446, 0.0
  %vm479 = vcmp.ge.f32.partialorder %v447, 0.0
  %vm480 = vcmp.ge.f32.partialorder %v448, 0.0
  %vm481 = vcmp.ge.f32.partialorder %v449, 0.0
  %vm482 = vcmp.ge.f32.partialorder %v450, 0.0
  %vm483 = vcmp.ge.f32.partialorder %v451, 0.0
  %vm484 = vcmp.ge.f32.partialorder %v452, 0.0
  %vm485 = vcmp.ge.f32.partialorder %v453, 0.0
  %vm486 = vcmp.ge.f32.partialorder %v454, 0.0
  %vm487 = vcmp.ge.f32.partialorder %v455, 0.0
  %vm488 = vcmp.ge.f32.partialorder %v456, 0.0
  %vm489 = vcmp.ge.f32.partialorder %v457, 0.0
  %vm490 = vcmp.ge.f32.partialorder %v458, 0.0
  %vm491 = vcmp.ge.f32.partialorder %v459, 0.0
  %vm492 = vcmp.ge.f32.partialorder %v460, 0.0
  %vm493 = vcmp.ge.f32.partialorder %v461, 0.0
  %vm494 = vcmp.ge.f32.partialorder %v462, 0.0
  %vm495 = vcmp.ge.f32.partialorder %v463, 0.0
  %vm496 = vcmp.ge.f32.partialorder %v464, 0.0
  %vm497 = vcmp.ge.f32.partialorder %v465, 0.0
  %v498 = vmul.f32 %v434, 0.2
  %v499 = vmul.f32 %v435, 0.2
  %v500 = vmul.f32 %v436, 0.2
  %v501 = vmul.f32 %v437, 0.2
  %v502 = vmul.f32 %v438, 0.2
  %v503 = vmul.f32 %v439, 0.2
  %v504 = vmul.f32 %v440, 0.2
  %v505 = vmul.f32 %v441, 0.2
  %v506 = vmul.f32 %v442, 0.2
  %v507 = vmul.f32 %v443, 0.2
  %v508 = vmul.f32 %v444, 0.2
  %v509 = vmul.f32 %v445, 0.2
  %v510 = vmul.f32 %v446, 0.2
  %v511 = vmul.f32 %v447, 0.2
  %v512 = vmul.f32 %v448, 0.2
  %v513 = vmul.f32 %v449, 0.2
  %v514 = vmul.f32 %v450, 0.2
  %v515 = vmul.f32 %v451, 0.2
  %v516 = vmul.f32 %v452, 0.2
  %v517 = vmul.f32 %v453, 0.2
  %v518 = vmul.f32 %v454, 0.2
  %v519 = vmul.f32 %v455, 0.2
  %v520 = vmul.f32 %v456, 0.2
  %v521 = vmul.f32 %v457, 0.2
  %v522 = vmul.f32 %v458, 0.2
  %v523 = vmul.f32 %v459, 0.2
  %v524 = vmul.f32 %v460, 0.2
  %v525 = vmul.f32 %v461, 0.2
  %v526 = vmul.f32 %v462, 0.2
  %v527 = vmul.f32 %v463, 0.2
  %v528 = vmul.f32 %v464, 0.2
  %v529 = vmul.f32 %v465, 0.2
  %v530 = vsel %vm466, %v434, %v498
  %v531 = vsel %vm467, %v435, %v499
  %v532 = vsel %vm468, %v436, %v500
  %v533 = vsel %vm469, %v437, %v501
  %v534 = vsel %vm470, %v438, %v502
  %v535 = vsel %vm471, %v439, %v503
  %v536 = vsel %vm472, %v440, %v504
  %v537 = vsel %vm473, %v441, %v505
  %v538 = vsel %vm474, %v442, %v506
  %v539 = vsel %vm475, %v443, %v507
  %v540 = vsel %vm476, %v444, %v508
  %v541 = vsel %vm477, %v445, %v509
  %v542 = vsel %vm478, %v446, %v510
  %v543 = vsel %vm479, %v447, %v511
  %v544 = vsel %vm480, %v448, %v512
  %v545 = vsel %vm481, %v449, %v513
  %v546 = vsel %vm482, %v450, %v514
  %v547 = vsel %vm483, %v451, %v515
  %v548 = vsel %vm484, %v452, %v516
  %v549 = vsel %vm485, %v453, %v517
  %v550 = vsel %vm486, %v454, %v518
  %v551 = vsel %vm487, %v455, %v519
  %v552 = vsel %vm488, %v456, %v520
  %v553 = vsel %vm489, %v457, %v521
  %v554 = vsel %vm490, %v458, %v522
  %v555 = vsel %vm491, %v459, %v523
  %v556 = vsel %vm492, %v460, %v524
  %v557 = vsel %vm493, %v461, %v525
  %v558 = vsel %vm494, %v462, %v526
  %v559 = vsel %vm495, %v463, %v527
  %v560 = vsel %vm496, %v464, %v528
  %v561 = vsel %vm497, %v465, %v529
  %v562 = vpack.c.bf16 %v530, %v530
  %v563 = vpack.c.bf16 %v531, %v531
  %v564 = vpack.c.bf16 %v532, %v532
  %v565 = vpack.c.bf16 %v533, %v533
  %v566 = vpack.c.bf16 %v534, %v534
  %v567 = vpack.c.bf16 %v535, %v535
  %v568 = vpack.c.bf16 %v536, %v536
  %v569 = vpack.c.bf16 %v537, %v537
  %v570 = vpack.c.bf16 %v538, %v538
  %v571 = vpack.c.bf16 %v539, %v539
  %v572 = vpack.c.bf16 %v540, %v540
  %v573 = vpack.c.bf16 %v541, %v541
  %v574 = vpack.c.bf16 %v542, %v542
  %v575 = vpack.c.bf16 %v543, %v543
  %v576 = vpack.c.bf16 %v544, %v544
  %v577 = vpack.c.bf16 %v545, %v545
  %v578 = vpack.c.bf16 %v546, %v546
  %v579 = vpack.c.bf16 %v547, %v547
  %v580 = vpack.c.bf16 %v548, %v548
  %v581 = vpack.c.bf16 %v549, %v549
  %v582 = vpack.c.bf16 %v550, %v550
  %v583 = vpack.c.bf16 %v551, %v551
  %v584 = vpack.c.bf16 %v552, %v552
  %v585 = vpack.c.bf16 %v553, %v553
  %v586 = vpack.c.bf16 %v554, %v554
  %v587 = vpack.c.bf16 %v555, %v555
  %v588 = vpack.c.bf16 %v556, %v556
  %v589 = vpack.c.bf16 %v557, %v557
  %v590 = vpack.c.bf16 %v558, %v558
  %v591 = vpack.c.bf16 %v559, %v559
  %v592 = vpack.c.bf16 %v560, %v560
  %v593 = vpack.c.bf16 %v561, %v561
  %v594 = vld [vmem:[%s3] sm:$0xf]
  %v595 = vld [vmem:[%s3 + $0x4] sm:$0xf]
  %v596 = vld [vmem:[%s3 + $0x8] sm:$0xf]
  %v597 = vld [vmem:[%s3 + $0xc] sm:$0xf]
  %v598 = vld [vmem:[%s3 + $0x10] sm:$0xf]
  %v599 = vld [vmem:[%s3 + $0x14] sm:$0xf]
  %v600 = vld [vmem:[%s3 + $0x18] sm:$0xf]
  %v601 = vld [vmem:[%s3 + $0x1c] sm:$0xf]
  %v602 = vld [vmem:[%s3 + $0x20] sm:$0xf]
  %v603 = vld [vmem:[%s3 + $0x24] sm:$0xf]
  %v604 = vld [vmem:[%s3 + $0x28] sm:$0xf]
  %v605 = vld [vmem:[%s3 + $0x2c] sm:$0xf]
  %v606 = vld [vmem:[%s3 + $0x30] sm:$0xf]
  %v607 = vld [vmem:[%s3 + $0x34] sm:$0xf]
  %v608 = vld [vmem:[%s3 + $0x38] sm:$0xf]
  %v609 = vld [vmem:[%s3 + $0x3c] sm:$0xf]
  %v610 = vld [vmem:[%s3 + $0x40] sm:$0xf]
  %v611 = vld [vmem:[%s3 + $0x44] sm:$0xf]
  %v612 = vld [vmem:[%s3 + $0x48] sm:$0xf]
  %v613 = vld [vmem:[%s3 + $0x4c] sm:$0xf]
  %v614 = vld [vmem:[%s3 + $0x50] sm:$0xf]
  %v615 = vld [vmem:[%s3 + $0x54] sm:$0xf]
  %v616 = vld [vmem:[%s3 + $0x58] sm:$0xf]
  %v617 = vld [vmem:[%s3 + $0x5c] sm:$0xf]
  %v618 = vld [vmem:[%s3 + $0x60] sm:$0xf]
  %v619 = vld [vmem:[%s3 + $0x64] sm:$0xf]
  %v620 = vld [vmem:[%s3 + $0x68] sm:$0xf]
  %v621 = vld [vmem:[%s3 + $0x6c] sm:$0xf]
  %v622 = vld [vmem:[%s3 + $0x70] sm:$0xf]
  %v623 = vld [vmem:[%s3 + $0x74] sm:$0xf]
  %v624 = vld [vmem:[%s3 + $0x78] sm:$0xf]
  %v625 = vld [vmem:[%s3 + $0x7c] sm:$0xf]
  %v626 = vld [vmem:[%s3 + $0x80] sm:$0xf]
  %v627 = vld [vmem:[%s3 + $0x84] sm:$0xf]
  %v628 = vld [vmem:[%s3 + $0x88] sm:$0xf]
  %v629 = vld [vmem:[%s3 + $0x8c] sm:$0xf]
  %v630 = vld [vmem:[%s3 + $0x90] sm:$0xf]
  %v631 = vld [vmem:[%s3 + $0x94] sm:$0xf]
  %v632 = vld [vmem:[%s3 + $0x98] sm:$0xf]
  %v633 = vld [vmem:[%s3 + $0x9c] sm:$0xf]
  %v634 = vld [vmem:[%s3 + $0xa0] sm:$0xf]
  %v635 = vld [vmem:[%s3 + $0xa4] sm:$0xf]
  %v636 = vld [vmem:[%s3 + $0xa8] sm:$0xf]
  %v637 = vld [vmem:[%s3 + $0xac] sm:$0xf]
  %v638 = vld [vmem:[%s3 + $0xb0] sm:$0xf]
  %v639 = vld [vmem:[%s3 + $0xb4] sm:$0xf]
  %v640 = vld [vmem:[%s3 + $0xb8] sm:$0xf]
  %v641 = vld [vmem:[%s3 + $0xbc] sm:$0xf]
  %v642 = vld [vmem:[%s3 + $0xc0] sm:$0xf]
  %v643 = vld [vmem:[%s3 + $0xc4] sm:$0xf]
  %v644 = vld [vmem:[%s3 + $0xc8] sm:$0xf]
  %v645 = vld [vmem:[%s3 + $0xcc] sm:$0xf]
  %v646 = vld [vmem:[%s3 + $0xd0] sm:$0xf]
  %v647 = vld [vmem:[%s3 + $0xd4] sm:$0xf]
  %v648 = vld [vmem:[%s3 + $0xd8] sm:$0xf]
  %v649 = vld [vmem:[%s3 + $0xdc] sm:$0xf]
  %v650 = vld [vmem:[%s3 + $0xe0] sm:$0xf]
  %v651 = vld [vmem:[%s3 + $0xe4] sm:$0xf]
  %v652 = vld [vmem:[%s3 + $0xe8] sm:$0xf]
  %v653 = vld [vmem:[%s3 + $0xec] sm:$0xf]
  %v654 = vld [vmem:[%s3 + $0xf0] sm:$0xf]
  %v655 = vld [vmem:[%s3 + $0xf4] sm:$0xf]
  %v656 = vld [vmem:[%s3 + $0xf8] sm:$0xf]
  %v657 = vld [vmem:[%s3 + $0xfc] sm:$0xf]
  %v658 = vld [vmem:[%s3 + $0x100] sm:$0xf]
  %v659 = vld [vmem:[%s3 + $0x104] sm:$0xf]
  %v660 = vld [vmem:[%s3 + $0x108] sm:$0xf]
  %v661 = vld [vmem:[%s3 + $0x10c] sm:$0xf]
  %v662 = vld [vmem:[%s3 + $0x110] sm:$0xf]
  %v663 = vld [vmem:[%s3 + $0x114] sm:$0xf]
  %v664 = vld [vmem:[%s3 + $0x118] sm:$0xf]
  %v665 = vld [vmem:[%s3 + $0x11c] sm:$0xf]
  %v666 = vld [vmem:[%s3 + $0x120] sm:$0xf]
  %v667 = vld [vmem:[%s3 + $0x124] sm:$0xf]
  %v668 = vld [vmem:[%s3 + $0x128] sm:$0xf]
  %v669 = vld [vmem:[%s3 + $0x12c] sm:$0xf]
  %v670 = vld [vmem:[%s3 + $0x130] sm:$0xf]
  %v671 = vld [vmem:[%s3 + $0x134] sm:$0xf]
  %v672 = vld [vmem:[%s3 + $0x138] sm:$0xf]
  %v673 = vld [vmem:[%s3 + $0x13c] sm:$0xf]
  %v674 = vld [vmem:[%s3 + $0x140] sm:$0xf]
  %v675 = vld [vmem:[%s3 + $0x144] sm:$0xf]
  %v676 = vld [vmem:[%s3 + $0x148] sm:$0xf]
  %v677 = vld [vmem:[%s3 + $0x14c] sm:$0xf]
  %v678 = vld [vmem:[%s3 + $0x150] sm:$0xf]
  %v679 = vld [vmem:[%s3 + $0x154] sm:$0xf]
  %v680 = vld [vmem:[%s3 + $0x158] sm:$0xf]
  %v681 = vld [vmem:[%s3 + $0x15c] sm:$0xf]
  %v682 = vld [vmem:[%s3 + $0x160] sm:$0xf]
  %v683 = vld [vmem:[%s3 + $0x164] sm:$0xf]
  %v684 = vld [vmem:[%s3 + $0x168] sm:$0xf]
  %v685 = vld [vmem:[%s3 + $0x16c] sm:$0xf]
  %v686 = vld [vmem:[%s3 + $0x170] sm:$0xf]
  %v687 = vld [vmem:[%s3 + $0x174] sm:$0xf]
  %v688 = vld [vmem:[%s3 + $0x178] sm:$0xf]
  %v689 = vld [vmem:[%s3 + $0x17c] sm:$0xf]
  %v690 = vld [vmem:[%s3 + $0x180] sm:$0xf]
  %v691 = vld [vmem:[%s3 + $0x184] sm:$0xf]
  %v692 = vld [vmem:[%s3 + $0x188] sm:$0xf]
  %v693 = vld [vmem:[%s3 + $0x18c] sm:$0xf]
  %v694 = vld [vmem:[%s3 + $0x190] sm:$0xf]
  %v695 = vld [vmem:[%s3 + $0x194] sm:$0xf]
  %v696 = vld [vmem:[%s3 + $0x198] sm:$0xf]
  %v697 = vld [vmem:[%s3 + $0x19c] sm:$0xf]
  %v698 = vld [vmem:[%s3 + $0x1a0] sm:$0xf]
  %v699 = vld [vmem:[%s3 + $0x1a4] sm:$0xf]
  %v700 = vld [vmem:[%s3 + $0x1a8] sm:$0xf]
  %v701 = vld [vmem:[%s3 + $0x1ac] sm:$0xf]
  %v702 = vld [vmem:[%s3 + $0x1b0] sm:$0xf]
  %v703 = vld [vmem:[%s3 + $0x1b4] sm:$0xf]
  %v704 = vld [vmem:[%s3 + $0x1b8] sm:$0xf]
  %v705 = vld [vmem:[%s3 + $0x1bc] sm:$0xf]
  %v706 = vld [vmem:[%s3 + $0x1c0] sm:$0xf]
  %v707 = vld [vmem:[%s3 + $0x1c4] sm:$0xf]
  %v708 = vld [vmem:[%s3 + $0x1c8] sm:$0xf]
  %v709 = vld [vmem:[%s3 + $0x1cc] sm:$0xf]
  %v710 = vld [vmem:[%s3 + $0x1d0] sm:$0xf]
  %v711 = vld [vmem:[%s3 + $0x1d4] sm:$0xf]
  %v712 = vld [vmem:[%s3 + $0x1d8] sm:$0xf]
  %v713 = vld [vmem:[%s3 + $0x1dc] sm:$0xf]
  %v714 = vld [vmem:[%s3 + $0x1e0] sm:$0xf]
  %v715 = vld [vmem:[%s3 + $0x1e4] sm:$0xf]
  %v716 = vld [vmem:[%s3 + $0x1e8] sm:$0xf]
  %v717 = vld [vmem:[%s3 + $0x1ec] sm:$0xf]
  %v718 = vld [vmem:[%s3 + $0x1f0] sm:$0xf]
  %v719 = vld [vmem:[%s3 + $0x1f4] sm:$0xf]
  %v720 = vld [vmem:[%s3 + $0x1f8] sm:$0xf]
  %v721 = vld [vmem:[%s3 + $0x1fc] sm:$0xf]
  %v722 = vld [vmem:[%s3 + $0x200] sm:$0xf]
  %v723 = vld [vmem:[%s3 + $0x204] sm:$0xf]
  %v724 = vld [vmem:[%s3 + $0x208] sm:$0xf]
  %v725 = vld [vmem:[%s3 + $0x20c] sm:$0xf]
  %v726 = vld [vmem:[%s3 + $0x210] sm:$0xf]
  %v727 = vld [vmem:[%s3 + $0x214] sm:$0xf]
  %v728 = vld [vmem:[%s3 + $0x218] sm:$0xf]
  %v729 = vld [vmem:[%s3 + $0x21c] sm:$0xf]
  %v730 = vld [vmem:[%s3 + $0x220] sm:$0xf]
  %v731 = vld [vmem:[%s3 + $0x224] sm:$0xf]
  %v732 = vld [vmem:[%s3 + $0x228] sm:$0xf]
  %v733 = vld [vmem:[%s3 + $0x22c] sm:$0xf]
  %v734 = vld [vmem:[%s3 + $0x230] sm:$0xf]
  %v735 = vld [vmem:[%s3 + $0x234] sm:$0xf]
  %v736 = vld [vmem:[%s3 + $0x238] sm:$0xf]
  %v737 = vld [vmem:[%s3 + $0x23c] sm:$0xf]
  %v738 = vld [vmem:[%s3 + $0x240] sm:$0xf]
  %v739 = vld [vmem:[%s3 + $0x244] sm:$0xf]
  %v740 = vld [vmem:[%s3 + $0x248] sm:$0xf]
  %v741 = vld [vmem:[%s3 + $0x24c] sm:$0xf]
  %v742 = vld [vmem:[%s3 + $0x250] sm:$0xf]
  %v743 = vld [vmem:[%s3 + $0x254] sm:$0xf]
  %v744 = vld [vmem:[%s3 + $0x258] sm:$0xf]
  %v745 = vld [vmem:[%s3 + $0x25c] sm:$0xf]
  %v746 = vld [vmem:[%s3 + $0x260] sm:$0xf]
  %v747 = vld [vmem:[%s3 + $0x264] sm:$0xf]
  %v748 = vld [vmem:[%s3 + $0x268] sm:$0xf]
  %v749 = vld [vmem:[%s3 + $0x26c] sm:$0xf]
  %v750 = vld [vmem:[%s3 + $0x270] sm:$0xf]
  %v751 = vld [vmem:[%s3 + $0x274] sm:$0xf]
  %v752 = vld [vmem:[%s3 + $0x278] sm:$0xf]
  %v753 = vld [vmem:[%s3 + $0x27c] sm:$0xf]
  %v754 = vld [vmem:[%s3 + $0x280] sm:$0xf]
  %v755 = vld [vmem:[%s3 + $0x284] sm:$0xf]
  %v756 = vld [vmem:[%s3 + $0x288] sm:$0xf]
  %v757 = vld [vmem:[%s3 + $0x28c] sm:$0xf]
  %v758 = vld [vmem:[%s3 + $0x290] sm:$0xf]
  %v759 = vld [vmem:[%s3 + $0x294] sm:$0xf]
  %v760 = vld [vmem:[%s3 + $0x298] sm:$0xf]
  %v761 = vld [vmem:[%s3 + $0x29c] sm:$0xf]
  %v762 = vld [vmem:[%s3 + $0x2a0] sm:$0xf]
  %v763 = vld [vmem:[%s3 + $0x2a4] sm:$0xf]
  %v764 = vld [vmem:[%s3 + $0x2a8] sm:$0xf]
  %v765 = vld [vmem:[%s3 + $0x2ac] sm:$0xf]
  %v766 = vld [vmem:[%s3 + $0x2b0] sm:$0xf]
  %v767 = vld [vmem:[%s3 + $0x2b4] sm:$0xf]
  %v768 = vld [vmem:[%s3 + $0x2b8] sm:$0xf]
  %v769 = vld [vmem:[%s3 + $0x2bc] sm:$0xf]
  %v770 = vld [vmem:[%s3 + $0x2c0] sm:$0xf]
  %v771 = vld [vmem:[%s3 + $0x2c4] sm:$0xf]
  %v772 = vld [vmem:[%s3 + $0x2c8] sm:$0xf]
  %v773 = vld [vmem:[%s3 + $0x2cc] sm:$0xf]
  %v774 = vld [vmem:[%s3 + $0x2d0] sm:$0xf]
  %v775 = vld [vmem:[%s3 + $0x2d4] sm:$0xf]
  %v776 = vld [vmem:[%s3 + $0x2d8] sm:$0xf]
  %v777 = vld [vmem:[%s3 + $0x2dc] sm:$0xf]
  %v778 = vld [vmem:[%s3 + $0x2e0] sm:$0xf]
  %v779 = vld [vmem:[%s3 + $0x2e4] sm:$0xf]
  %v780 = vld [vmem:[%s3 + $0x2e8] sm:$0xf]
  %v781 = vld [vmem:[%s3 + $0x2ec] sm:$0xf]
  %v782 = vld [vmem:[%s3 + $0x2f0] sm:$0xf]
  %v783 = vld [vmem:[%s3 + $0x2f4] sm:$0xf]
  %v784 = vld [vmem:[%s3 + $0x2f8] sm:$0xf]
  %v785 = vld [vmem:[%s3 + $0x2fc] sm:$0xf]
  %v786 = vld [vmem:[%s3 + $0x300] sm:$0xf]
  %v787 = vld [vmem:[%s3 + $0x304] sm:$0xf]
  %v788 = vld [vmem:[%s3 + $0x308] sm:$0xf]
  %v789 = vld [vmem:[%s3 + $0x30c] sm:$0xf]
  %v790 = vld [vmem:[%s3 + $0x310] sm:$0xf]
  %v791 = vld [vmem:[%s3 + $0x314] sm:$0xf]
  %v792 = vld [vmem:[%s3 + $0x318] sm:$0xf]
  %v793 = vld [vmem:[%s3 + $0x31c] sm:$0xf]
  %v794 = vld [vmem:[%s3 + $0x320] sm:$0xf]
  %v795 = vld [vmem:[%s3 + $0x324] sm:$0xf]
  %v796 = vld [vmem:[%s3 + $0x328] sm:$0xf]
  %v797 = vld [vmem:[%s3 + $0x32c] sm:$0xf]
  %v798 = vld [vmem:[%s3 + $0x330] sm:$0xf]
  %v799 = vld [vmem:[%s3 + $0x334] sm:$0xf]
  %v800 = vld [vmem:[%s3 + $0x338] sm:$0xf]
  %v801 = vld [vmem:[%s3 + $0x33c] sm:$0xf]
  %v802 = vld [vmem:[%s3 + $0x340] sm:$0xf]
  %v803 = vld [vmem:[%s3 + $0x344] sm:$0xf]
  %v804 = vld [vmem:[%s3 + $0x348] sm:$0xf]
  %v805 = vld [vmem:[%s3 + $0x34c] sm:$0xf]
  %v806 = vld [vmem:[%s3 + $0x350] sm:$0xf]
  %v807 = vld [vmem:[%s3 + $0x354] sm:$0xf]
  %v808 = vld [vmem:[%s3 + $0x358] sm:$0xf]
  %v809 = vld [vmem:[%s3 + $0x35c] sm:$0xf]
  %v810 = vld [vmem:[%s3 + $0x360] sm:$0xf]
  %v811 = vld [vmem:[%s3 + $0x364] sm:$0xf]
  %v812 = vld [vmem:[%s3 + $0x368] sm:$0xf]
  %v813 = vld [vmem:[%s3 + $0x36c] sm:$0xf]
  %v814 = vld [vmem:[%s3 + $0x370] sm:$0xf]
  %v815 = vld [vmem:[%s3 + $0x374] sm:$0xf]
  %v816 = vld [vmem:[%s3 + $0x378] sm:$0xf]
  %v817 = vld [vmem:[%s3 + $0x37c] sm:$0xf]
  %v818 = vld [vmem:[%s3 + $0x380] sm:$0xf]
  %v819 = vld [vmem:[%s3 + $0x384] sm:$0xf]
  %v820 = vld [vmem:[%s3 + $0x388] sm:$0xf]
  %v821 = vld [vmem:[%s3 + $0x38c] sm:$0xf]
  %v822 = vld [vmem:[%s3 + $0x390] sm:$0xf]
  %v823 = vld [vmem:[%s3 + $0x394] sm:$0xf]
  %v824 = vld [vmem:[%s3 + $0x398] sm:$0xf]
  %v825 = vld [vmem:[%s3 + $0x39c] sm:$0xf]
  %v826 = vld [vmem:[%s3 + $0x3a0] sm:$0xf]
  %v827 = vld [vmem:[%s3 + $0x3a4] sm:$0xf]
  %v828 = vld [vmem:[%s3 + $0x3a8] sm:$0xf]
  %v829 = vld [vmem:[%s3 + $0x3ac] sm:$0xf]
  %v830 = vld [vmem:[%s3 + $0x3b0] sm:$0xf]
  %v831 = vld [vmem:[%s3 + $0x3b4] sm:$0xf]
  %v832 = vld [vmem:[%s3 + $0x3b8] sm:$0xf]
  %v833 = vld [vmem:[%s3 + $0x3bc] sm:$0xf]
  %v834 = vld [vmem:[%s3 + $0x3c0] sm:$0xf]
  %v835 = vld [vmem:[%s3 + $0x3c4] sm:$0xf]
  %v836 = vld [vmem:[%s3 + $0x3c8] sm:$0xf]
  %v837 = vld [vmem:[%s3 + $0x3cc] sm:$0xf]
  %v838 = vld [vmem:[%s3 + $0x3d0] sm:$0xf]
  %v839 = vld [vmem:[%s3 + $0x3d4] sm:$0xf]
  %v840 = vld [vmem:[%s3 + $0x3d8] sm:$0xf]
  %v841 = vld [vmem:[%s3 + $0x3dc] sm:$0xf]
  %v842 = vld [vmem:[%s3 + $0x3e0] sm:$0xf]
  %v843 = vld [vmem:[%s3 + $0x3e4] sm:$0xf]
  %v844 = vld [vmem:[%s3 + $0x3e8] sm:$0xf]
  %v845 = vld [vmem:[%s3 + $0x3ec] sm:$0xf]
  %v846 = vld [vmem:[%s3 + $0x3f0] sm:$0xf]
  %v847 = vld [vmem:[%s3 + $0x3f4] sm:$0xf]
  %v848 = vld [vmem:[%s3 + $0x3f8] sm:$0xf]
  %v849 = vld [vmem:[%s3 + $0x3fc] sm:$0xf]
  %v850 = vld [vmem:[%s3 + $0x400] sm:$0xf]
  %v851 = vld [vmem:[%s3 + $0x404] sm:$0xf]
  %v852 = vld [vmem:[%s3 + $0x408] sm:$0xf]
  %v853 = vld [vmem:[%s3 + $0x40c] sm:$0xf]
  %v854 = vld [vmem:[%s3 + $0x410] sm:$0xf]
  %v855 = vld [vmem:[%s3 + $0x414] sm:$0xf]
  %v856 = vld [vmem:[%s3 + $0x418] sm:$0xf]
  %v857 = vld [vmem:[%s3 + $0x41c] sm:$0xf]
  %v858 = vld [vmem:[%s3 + $0x420] sm:$0xf]
  %v859 = vld [vmem:[%s3 + $0x424] sm:$0xf]
  %v860 = vld [vmem:[%s3 + $0x428] sm:$0xf]
  %v861 = vld [vmem:[%s3 + $0x42c] sm:$0xf]
  %v862 = vld [vmem:[%s3 + $0x430] sm:$0xf]
  %v863 = vld [vmem:[%s3 + $0x434] sm:$0xf]
  %v864 = vld [vmem:[%s3 + $0x438] sm:$0xf]
  %v865 = vld [vmem:[%s3 + $0x43c] sm:$0xf]
  %v866 = vld [vmem:[%s3 + $0x440] sm:$0xf]
  %v867 = vld [vmem:[%s3 + $0x444] sm:$0xf]
  %v868 = vld [vmem:[%s3 + $0x448] sm:$0xf]
  %v869 = vld [vmem:[%s3 + $0x44c] sm:$0xf]
  %v870 = vld [vmem:[%s3 + $0x450] sm:$0xf]
  %v871 = vld [vmem:[%s3 + $0x454] sm:$0xf]
  %v872 = vld [vmem:[%s3 + $0x458] sm:$0xf]
  %v873 = vld [vmem:[%s3 + $0x45c] sm:$0xf]
  %v874 = vld [vmem:[%s3 + $0x460] sm:$0xf]
  %v875 = vld [vmem:[%s3 + $0x464] sm:$0xf]
  %v876 = vld [vmem:[%s3 + $0x468] sm:$0xf]
  %v877 = vld [vmem:[%s3 + $0x46c] sm:$0xf]
  %v878 = vld [vmem:[%s3 + $0x470] sm:$0xf]
  %v879 = vld [vmem:[%s3 + $0x474] sm:$0xf]
  %v880 = vld [vmem:[%s3 + $0x478] sm:$0xf]
  %v881 = vld [vmem:[%s3 + $0x47c] sm:$0xf]
  %v882 = vld [vmem:[%s3 + $0x480] sm:$0xf]
  %v883 = vld [vmem:[%s3 + $0x484] sm:$0xf]
  %v884 = vld [vmem:[%s3 + $0x488] sm:$0xf]
  %v885 = vld [vmem:[%s3 + $0x48c] sm:$0xf]
  %v886 = vld [vmem:[%s3 + $0x490] sm:$0xf]
  %v887 = vld [vmem:[%s3 + $0x494] sm:$0xf]
  %v888 = vld [vmem:[%s3 + $0x498] sm:$0xf]
  %v889 = vld [vmem:[%s3 + $0x49c] sm:$0xf]
  %v890 = vld [vmem:[%s3 + $0x4a0] sm:$0xf]
  %v891 = vld [vmem:[%s3 + $0x4a4] sm:$0xf]
  %v892 = vld [vmem:[%s3 + $0x4a8] sm:$0xf]
  %v893 = vld [vmem:[%s3 + $0x4ac] sm:$0xf]
  %v894 = vld [vmem:[%s3 + $0x4b0] sm:$0xf]
  %v895 = vld [vmem:[%s3 + $0x4b4] sm:$0xf]
  %v896 = vld [vmem:[%s3 + $0x4b8] sm:$0xf]
  %v897 = vld [vmem:[%s3 + $0x4bc] sm:$0xf]
  %v898 = vld [vmem:[%s3 + $0x4c0] sm:$0xf]
  %v899 = vld [vmem:[%s3 + $0x4c4] sm:$0xf]
  %v900 = vld [vmem:[%s3 + $0x4c8] sm:$0xf]
  %v901 = vld [vmem:[%s3 + $0x4cc] sm:$0xf]
  %v902 = vld [vmem:[%s3 + $0x4d0] sm:$0xf]
  %v903 = vld [vmem:[%s3 + $0x4d4] sm:$0xf]
  %v904 = vld [vmem:[%s3 + $0x4d8] sm:$0xf]
  %v905 = vld [vmem:[%s3 + $0x4dc] sm:$0xf]
  %v906 = vld [vmem:[%s3 + $0x4e0] sm:$0xf]
  %v907 = vld [vmem:[%s3 + $0x4e4] sm:$0xf]
  %v908 = vld [vmem:[%s3 + $0x4e8] sm:$0xf]
  %v909 = vld [vmem:[%s3 + $0x4ec] sm:$0xf]
  %v910 = vld [vmem:[%s3 + $0x4f0] sm:$0xf]
  %v911 = vld [vmem:[%s3 + $0x4f4] sm:$0xf]
  %v912 = vld [vmem:[%s3 + $0x4f8] sm:$0xf]
  %v913 = vld [vmem:[%s3 + $0x4fc] sm:$0xf]
  %v914 = vld [vmem:[%s3 + $0x500] sm:$0xf]
  %v915 = vld [vmem:[%s3 + $0x504] sm:$0xf]
  %v916 = vld [vmem:[%s3 + $0x508] sm:$0xf]
  %v917 = vld [vmem:[%s3 + $0x50c] sm:$0xf]
  %v918 = vld [vmem:[%s3 + $0x510] sm:$0xf]
  %v919 = vld [vmem:[%s3 + $0x514] sm:$0xf]
  %v920 = vld [vmem:[%s3 + $0x518] sm:$0xf]
  %v921 = vld [vmem:[%s3 + $0x51c] sm:$0xf]
  %v922 = vld [vmem:[%s3 + $0x520] sm:$0xf]
  %v923 = vld [vmem:[%s3 + $0x524] sm:$0xf]
  %v924 = vld [vmem:[%s3 + $0x528] sm:$0xf]
  %v925 = vld [vmem:[%s3 + $0x52c] sm:$0xf]
  %v926 = vld [vmem:[%s3 + $0x530] sm:$0xf]
  %v927 = vld [vmem:[%s3 + $0x534] sm:$0xf]
  %v928 = vld [vmem:[%s3 + $0x538] sm:$0xf]
  %v929 = vld [vmem:[%s3 + $0x53c] sm:$0xf]
  %v930 = vld [vmem:[%s3 + $0x540] sm:$0xf]
  %v931 = vld [vmem:[%s3 + $0x544] sm:$0xf]
  %v932 = vld [vmem:[%s3 + $0x548] sm:$0xf]
  %v933 = vld [vmem:[%s3 + $0x54c] sm:$0xf]
  %v934 = vld [vmem:[%s3 + $0x550] sm:$0xf]
  %v935 = vld [vmem:[%s3 + $0x554] sm:$0xf]
  %v936 = vld [vmem:[%s3 + $0x558] sm:$0xf]
  %v937 = vld [vmem:[%s3 + $0x55c] sm:$0xf]
  %v938 = vld [vmem:[%s3 + $0x560] sm:$0xf]
  %v939 = vld [vmem:[%s3 + $0x564] sm:$0xf]
  %v940 = vld [vmem:[%s3 + $0x568] sm:$0xf]
  %v941 = vld [vmem:[%s3 + $0x56c] sm:$0xf]
  %v942 = vld [vmem:[%s3 + $0x570] sm:$0xf]
  %v943 = vld [vmem:[%s3 + $0x574] sm:$0xf]
  %v944 = vld [vmem:[%s3 + $0x578] sm:$0xf]
  %v945 = vld [vmem:[%s3 + $0x57c] sm:$0xf]
  %v946 = vld [vmem:[%s3 + $0x580] sm:$0xf]
  %v947 = vld [vmem:[%s3 + $0x584] sm:$0xf]
  %v948 = vld [vmem:[%s3 + $0x588] sm:$0xf]
  %v949 = vld [vmem:[%s3 + $0x58c] sm:$0xf]
  %v950 = vld [vmem:[%s3 + $0x590] sm:$0xf]
  %v951 = vld [vmem:[%s3 + $0x594] sm:$0xf]
  %v952 = vld [vmem:[%s3 + $0x598] sm:$0xf]
  %v953 = vld [vmem:[%s3 + $0x59c] sm:$0xf]
  %v954 = vld [vmem:[%s3 + $0x5a0] sm:$0xf]
  %v955 = vld [vmem:[%s3 + $0x5a4] sm:$0xf]
  %v956 = vld [vmem:[%s3 + $0x5a8] sm:$0xf]
  %v957 = vld [vmem:[%s3 + $0x5ac] sm:$0xf]
  %v958 = vld [vmem:[%s3 + $0x5b0] sm:$0xf]
  %v959 = vld [vmem:[%s3 + $0x5b4] sm:$0xf]
  %v960 = vld [vmem:[%s3 + $0x5b8] sm:$0xf]
  %v961 = vld [vmem:[%s3 + $0x5bc] sm:$0xf]
  %v962 = vld [vmem:[%s3 + $0x5c0] sm:$0xf]
  %v963 = vld [vmem:[%s3 + $0x5c4] sm:$0xf]
  %v964 = vld [vmem:[%s3 + $0x5c8] sm:$0xf]
  %v965 = vld [vmem:[%s3 + $0x5cc] sm:$0xf]
  %v966 = vld [vmem:[%s3 + $0x5d0] sm:$0xf]
  %v967 = vld [vmem:[%s3 + $0x5d4] sm:$0xf]
  %v968 = vld [vmem:[%s3 + $0x5d8] sm:$0xf]
  %v969 = vld [vmem:[%s3 + $0x5dc] sm:$0xf]
  %v970 = vld [vmem:[%s3 + $0x5e0] sm:$0xf]
  %v971 = vld [vmem:[%s3 + $0x5e4] sm:$0xf]
  %v972 = vld [vmem:[%s3 + $0x5e8] sm:$0xf]
  %v973 = vld [vmem:[%s3 + $0x5ec] sm:$0xf]
  %v974 = vld [vmem:[%s3 + $0x5f0] sm:$0xf]
  %v975 = vld [vmem:[%s3 + $0x5f4] sm:$0xf]
  %v976 = vld [vmem:[%s3 + $0x5f8] sm:$0xf]
  %v977 = vld [vmem:[%s3 + $0x5fc] sm:$0xf]
  %v978 = vld [vmem:[%s3 + $0x600] sm:$0xf]
  %v979 = vld [vmem:[%s3 + $0x604] sm:$0xf]
  %v980 = vld [vmem:[%s3 + $0x608] sm:$0xf]
  %v981 = vld [vmem:[%s3 + $0x60c] sm:$0xf]
  %v982 = vld [vmem:[%s3 + $0x610] sm:$0xf]
  %v983 = vld [vmem:[%s3 + $0x614] sm:$0xf]
  %v984 = vld [vmem:[%s3 + $0x618] sm:$0xf]
  %v985 = vld [vmem:[%s3 + $0x61c] sm:$0xf]
  %v986 = vld [vmem:[%s3 + $0x620] sm:$0xf]
  %v987 = vld [vmem:[%s3 + $0x624] sm:$0xf]
  %v988 = vld [vmem:[%s3 + $0x628] sm:$0xf]
  %v989 = vld [vmem:[%s3 + $0x62c] sm:$0xf]
  %v990 = vld [vmem:[%s3 + $0x630] sm:$0xf]
  %v991 = vld [vmem:[%s3 + $0x634] sm:$0xf]
  %v992 = vld [vmem:[%s3 + $0x638] sm:$0xf]
  %v993 = vld [vmem:[%s3 + $0x63c] sm:$0xf]
  %v994 = vld [vmem:[%s3 + $0x640] sm:$0xf]
  %v995 = vld [vmem:[%s3 + $0x644] sm:$0xf]
  %v996 = vld [vmem:[%s3 + $0x648] sm:$0xf]
  %v997 = vld [vmem:[%s3 + $0x64c] sm:$0xf]
  %v998 = vld [vmem:[%s3 + $0x650] sm:$0xf]
  %v999 = vld [vmem:[%s3 + $0x654] sm:$0xf]
  %v1000 = vld [vmem:[%s3 + $0x658] sm:$0xf]
  %v1001 = vld [vmem:[%s3 + $0x65c] sm:$0xf]
  %v1002 = vld [vmem:[%s3 + $0x660] sm:$0xf]
  %v1003 = vld [vmem:[%s3 + $0x664] sm:$0xf]
  %v1004 = vld [vmem:[%s3 + $0x668] sm:$0xf]
  %v1005 = vld [vmem:[%s3 + $0x66c] sm:$0xf]
  %v1006 = vld [vmem:[%s3 + $0x670] sm:$0xf]
  %v1007 = vld [vmem:[%s3 + $0x674] sm:$0xf]
  %v1008 = vld [vmem:[%s3 + $0x678] sm:$0xf]
  %v1009 = vld [vmem:[%s3 + $0x67c] sm:$0xf]
  %v1010 = vld [vmem:[%s3 + $0x680] sm:$0xf]
  %v1011 = vld [vmem:[%s3 + $0x684] sm:$0xf]
  %v1012 = vld [vmem:[%s3 + $0x688] sm:$0xf]
  %v1013 = vld [vmem:[%s3 + $0x68c] sm:$0xf]
  %v1014 = vld [vmem:[%s3 + $0x690] sm:$0xf]
  %v1015 = vld [vmem:[%s3 + $0x694] sm:$0xf]
  %v1016 = vld [vmem:[%s3 + $0x698] sm:$0xf]
  %v1017 = vld [vmem:[%s3 + $0x69c] sm:$0xf]
  %v1018 = vld [vmem:[%s3 + $0x6a0] sm:$0xf]
  %v1019 = vld [vmem:[%s3 + $0x6a4] sm:$0xf]
  %v1020 = vld [vmem:[%s3 + $0x6a8] sm:$0xf]
  %v1021 = vld [vmem:[%s3 + $0x6ac] sm:$0xf]
  %v1022 = vld [vmem:[%s3 + $0x6b0] sm:$0xf]
  %v1023 = vld [vmem:[%s3 + $0x6b4] sm:$0xf]
  %v1024 = vld [vmem:[%s3 + $0x6b8] sm:$0xf]
  %v1025 = vld [vmem:[%s3 + $0x6bc] sm:$0xf]
  %v1026 = vld [vmem:[%s3 + $0x6c0] sm:$0xf]
  %v1027 = vld [vmem:[%s3 + $0x6c4] sm:$0xf]
  %v1028 = vld [vmem:[%s3 + $0x6c8] sm:$0xf]
  %v1029 = vld [vmem:[%s3 + $0x6cc] sm:$0xf]
  %v1030 = vld [vmem:[%s3 + $0x6d0] sm:$0xf]
  %v1031 = vld [vmem:[%s3 + $0x6d4] sm:$0xf]
  %v1032 = vld [vmem:[%s3 + $0x6d8] sm:$0xf]
  %v1033 = vld [vmem:[%s3 + $0x6dc] sm:$0xf]
  %v1034 = vld [vmem:[%s3 + $0x6e0] sm:$0xf]
  %v1035 = vld [vmem:[%s3 + $0x6e4] sm:$0xf]
  %v1036 = vld [vmem:[%s3 + $0x6e8] sm:$0xf]
  %v1037 = vld [vmem:[%s3 + $0x6ec] sm:$0xf]
  %v1038 = vld [vmem:[%s3 + $0x6f0] sm:$0xf]
  %v1039 = vld [vmem:[%s3 + $0x6f4] sm:$0xf]
  %v1040 = vld [vmem:[%s3 + $0x6f8] sm:$0xf]
  %v1041 = vld [vmem:[%s3 + $0x6fc] sm:$0xf]
  %v1042 = vld [vmem:[%s3 + $0x700] sm:$0xf]
  %v1043 = vld [vmem:[%s3 + $0x704] sm:$0xf]
  %v1044 = vld [vmem:[%s3 + $0x708] sm:$0xf]
  %v1045 = vld [vmem:[%s3 + $0x70c] sm:$0xf]
  %v1046 = vld [vmem:[%s3 + $0x710] sm:$0xf]
  %v1047 = vld [vmem:[%s3 + $0x714] sm:$0xf]
  %v1048 = vld [vmem:[%s3 + $0x718] sm:$0xf]
  %v1049 = vld [vmem:[%s3 + $0x71c] sm:$0xf]
  %v1050 = vld [vmem:[%s3 + $0x720] sm:$0xf]
  %v1051 = vld [vmem:[%s3 + $0x724] sm:$0xf]
  %v1052 = vld [vmem:[%s3 + $0x728] sm:$0xf]
  %v1053 = vld [vmem:[%s3 + $0x72c] sm:$0xf]
  %v1054 = vld [vmem:[%s3 + $0x730] sm:$0xf]
  %v1055 = vld [vmem:[%s3 + $0x734] sm:$0xf]
  %v1056 = vld [vmem:[%s3 + $0x738] sm:$0xf]
  %v1057 = vld [vmem:[%s3 + $0x73c] sm:$0xf]
  %v1058 = vld [vmem:[%s3 + $0x740] sm:$0xf]
  %v1059 = vld [vmem:[%s3 + $0x744] sm:$0xf]
  %v1060 = vld [vmem:[%s3 + $0x748] sm:$0xf]
  %v1061 = vld [vmem:[%s3 + $0x74c] sm:$0xf]
  %v1062 = vld [vmem:[%s3 + $0x750] sm:$0xf]
  %v1063 = vld [vmem:[%s3 + $0x754] sm:$0xf]
  %v1064 = vld [vmem:[%s3 + $0x758] sm:$0xf]
  %v1065 = vld [vmem:[%s3 + $0x75c] sm:$0xf]
  %v1066 = vld [vmem:[%s3 + $0x760] sm:$0xf]
  %v1067 = vld [vmem:[%s3 + $0x764] sm:$0xf]
  %v1068 = vld [vmem:[%s3 + $0x768] sm:$0xf]
  %v1069 = vld [vmem:[%s3 + $0x76c] sm:$0xf]
  %v1070 = vld [vmem:[%s3 + $0x770] sm:$0xf]
  %v1071 = vld [vmem:[%s3 + $0x774] sm:$0xf]
  %v1072 = vld [vmem:[%s3 + $0x778] sm:$0xf]
  %v1073 = vld [vmem:[%s3 + $0x77c] sm:$0xf]
  %v1074 = vld [vmem:[%s3 + $0x780] sm:$0xf]
  %v1075 = vld [vmem:[%s3 + $0x784] sm:$0xf]
  %v1076 = vld [vmem:[%s3 + $0x788] sm:$0xf]
  %v1077 = vld [vmem:[%s3 + $0x78c] sm:$0xf]
  %v1078 = vld [vmem:[%s3 + $0x790] sm:$0xf]
  %v1079 = vld [vmem:[%s3 + $0x794] sm:$0xf]
  %v1080 = vld [vmem:[%s3 + $0x798] sm:$0xf]
  %v1081 = vld [vmem:[%s3 + $0x79c] sm:$0xf]
  %v1082 = vld [vmem:[%s3 + $0x7a0] sm:$0xf]
  %v1083 = vld [vmem:[%s3 + $0x7a4] sm:$0xf]
  %v1084 = vld [vmem:[%s3 + $0x7a8] sm:$0xf]
  %v1085 = vld [vmem:[%s3 + $0x7ac] sm:$0xf]
  %v1086 = vld [vmem:[%s3 + $0x7b0] sm:$0xf]
  %v1087 = vld [vmem:[%s3 + $0x7b4] sm:$0xf]
  %v1088 = vld [vmem:[%s3 + $0x7b8] sm:$0xf]
  %v1089 = vld [vmem:[%s3 + $0x7bc] sm:$0xf]
  %v1090 = vld [vmem:[%s3 + $0x7c0] sm:$0xf]
  %v1091 = vld [vmem:[%s3 + $0x7c4] sm:$0xf]
  %v1092 = vld [vmem:[%s3 + $0x7c8] sm:$0xf]
  %v1093 = vld [vmem:[%s3 + $0x7cc] sm:$0xf]
  %v1094 = vld [vmem:[%s3 + $0x7d0] sm:$0xf]
  %v1095 = vld [vmem:[%s3 + $0x7d4] sm:$0xf]
  %v1096 = vld [vmem:[%s3 + $0x7d8] sm:$0xf]
  %v1097 = vld [vmem:[%s3 + $0x7dc] sm:$0xf]
  %v1098 = vld [vmem:[%s3 + $0x7e0] sm:$0xf]
  %v1099 = vld [vmem:[%s3 + $0x7e4] sm:$0xf]
  %v1100 = vld [vmem:[%s3 + $0x7e8] sm:$0xf]
  %v1101 = vld [vmem:[%s3 + $0x7ec] sm:$0xf]
  %v1102 = vld [vmem:[%s3 + $0x7f0] sm:$0xf]
  %v1103 = vld [vmem:[%s3 + $0x7f4] sm:$0xf]
  %v1104 = vld [vmem:[%s3 + $0x7f8] sm:$0xf]
  %v1105 = vld [vmem:[%s3 + $0x7fc] sm:$0xf]
  %v1618 = vunpack.c.l.b16 %v594
  %v1619 = vunpack.c.l.b16 %v595
  %v1620 = vunpack.c.l.b16 %v596
  %v1621 = vunpack.c.l.b16 %v597
  %v1622 = vunpack.c.l.b16 %v598
  %v1623 = vunpack.c.l.b16 %v599
  %v1624 = vunpack.c.l.b16 %v600
  %v1625 = vunpack.c.l.b16 %v601
  %v1626 = vunpack.c.l.b16 %v602
  %v1627 = vunpack.c.l.b16 %v603
  %v1628 = vunpack.c.l.b16 %v604
  %v1629 = vunpack.c.l.b16 %v605
  %v1630 = vunpack.c.l.b16 %v606
  %v1631 = vunpack.c.l.b16 %v607
  %v1632 = vunpack.c.l.b16 %v608
  %v1633 = vunpack.c.l.b16 %v609
  %v1634 = vunpack.c.l.b16 %v610
  %v1635 = vunpack.c.l.b16 %v611
  %v1636 = vunpack.c.l.b16 %v612
  %v1637 = vunpack.c.l.b16 %v613
  %v1638 = vunpack.c.l.b16 %v614
  %v1639 = vunpack.c.l.b16 %v615
  %v1640 = vunpack.c.l.b16 %v616
  %v1641 = vunpack.c.l.b16 %v617
  %v1642 = vunpack.c.l.b16 %v618
  %v1643 = vunpack.c.l.b16 %v619
  %v1644 = vunpack.c.l.b16 %v620
  %v1645 = vunpack.c.l.b16 %v621
  %v1646 = vunpack.c.l.b16 %v622
  %v1647 = vunpack.c.l.b16 %v623
  %v1648 = vunpack.c.l.b16 %v624
  %v1649 = vunpack.c.l.b16 %v625
  %v1650 = vunpack.c.l.b16 %v626
  %v1651 = vunpack.c.l.b16 %v627
  %v1652 = vunpack.c.l.b16 %v628
  %v1653 = vunpack.c.l.b16 %v629
  %v1654 = vunpack.c.l.b16 %v630
  %v1655 = vunpack.c.l.b16 %v631
  %v1656 = vunpack.c.l.b16 %v632
  %v1657 = vunpack.c.l.b16 %v633
  %v1658 = vunpack.c.l.b16 %v634
  %v1659 = vunpack.c.l.b16 %v635
  %v1660 = vunpack.c.l.b16 %v636
  %v1661 = vunpack.c.l.b16 %v637
  %v1662 = vunpack.c.l.b16 %v638
  %v1663 = vunpack.c.l.b16 %v639
  %v1664 = vunpack.c.l.b16 %v640
  %v1665 = vunpack.c.l.b16 %v641
  %v1666 = vunpack.c.l.b16 %v642
  %v1667 = vunpack.c.l.b16 %v643
  %v1668 = vunpack.c.l.b16 %v644
  %v1669 = vunpack.c.l.b16 %v645
  %v1670 = vunpack.c.l.b16 %v646
  %v1671 = vunpack.c.l.b16 %v647
  %v1672 = vunpack.c.l.b16 %v648
  %v1673 = vunpack.c.l.b16 %v649
  %v1674 = vunpack.c.l.b16 %v650
  %v1675 = vunpack.c.l.b16 %v651
  %v1676 = vunpack.c.l.b16 %v652
  %v1677 = vunpack.c.l.b16 %v653
  %v1678 = vunpack.c.l.b16 %v654
  %v1679 = vunpack.c.l.b16 %v655
  %v1680 = vunpack.c.l.b16 %v656
  %v1681 = vunpack.c.l.b16 %v657
  %v1682 = vunpack.c.l.b16 %v658
  %v1683 = vunpack.c.l.b16 %v659
  %v1684 = vunpack.c.l.b16 %v660
  %v1685 = vunpack.c.l.b16 %v661
  %v1686 = vunpack.c.l.b16 %v662
  %v1687 = vunpack.c.l.b16 %v663
  %v1688 = vunpack.c.l.b16 %v664
  %v1689 = vunpack.c.l.b16 %v665
  %v1690 = vunpack.c.l.b16 %v666
  %v1691 = vunpack.c.l.b16 %v667
  %v1692 = vunpack.c.l.b16 %v668
  %v1693 = vunpack.c.l.b16 %v669
  %v1694 = vunpack.c.l.b16 %v670
  %v1695 = vunpack.c.l.b16 %v671
  %v1696 = vunpack.c.l.b16 %v672
  %v1697 = vunpack.c.l.b16 %v673
  %v1698 = vunpack.c.l.b16 %v674
  %v1699 = vunpack.c.l.b16 %v675
  %v1700 = vunpack.c.l.b16 %v676
  %v1701 = vunpack.c.l.b16 %v677
  %v1702 = vunpack.c.l.b16 %v678
  %v1703 = vunpack.c.l.b16 %v679
  %v1704 = vunpack.c.l.b16 %v680
  %v1705 = vunpack.c.l.b16 %v681
  %v1706 = vunpack.c.l.b16 %v682
  %v1707 = vunpack.c.l.b16 %v683
  %v1708 = vunpack.c.l.b16 %v684
  %v1709 = vunpack.c.l.b16 %v685
  %v1710 = vunpack.c.l.b16 %v686
  %v1711 = vunpack.c.l.b16 %v687
  %v1712 = vunpack.c.l.b16 %v688
  %v1713 = vunpack.c.l.b16 %v689
  %v1714 = vunpack.c.l.b16 %v690
  %v1715 = vunpack.c.l.b16 %v691
  %v1716 = vunpack.c.l.b16 %v692
  %v1717 = vunpack.c.l.b16 %v693
  %v1718 = vunpack.c.l.b16 %v694
  %v1719 = vunpack.c.l.b16 %v695
  %v1720 = vunpack.c.l.b16 %v696
  %v1721 = vunpack.c.l.b16 %v697
  %v1722 = vunpack.c.l.b16 %v698
  %v1723 = vunpack.c.l.b16 %v699
  %v1724 = vunpack.c.l.b16 %v700
  %v1725 = vunpack.c.l.b16 %v701
  %v1726 = vunpack.c.l.b16 %v702
  %v1727 = vunpack.c.l.b16 %v703
  %v1728 = vunpack.c.l.b16 %v704
  %v1729 = vunpack.c.l.b16 %v705
  %v1730 = vunpack.c.l.b16 %v706
  %v1731 = vunpack.c.l.b16 %v707
  %v1732 = vunpack.c.l.b16 %v708
  %v1733 = vunpack.c.l.b16 %v709
  %v1734 = vunpack.c.l.b16 %v710
  %v1735 = vunpack.c.l.b16 %v711
  %v1736 = vunpack.c.l.b16 %v712
  %v1737 = vunpack.c.l.b16 %v713
  %v1738 = vunpack.c.l.b16 %v714
  %v1739 = vunpack.c.l.b16 %v715
  %v1740 = vunpack.c.l.b16 %v716
  %v1741 = vunpack.c.l.b16 %v717
  %v1742 = vunpack.c.l.b16 %v718
  %v1743 = vunpack.c.l.b16 %v719
  %v1744 = vunpack.c.l.b16 %v720
  %v1745 = vunpack.c.l.b16 %v721
  %v1746 = vunpack.c.l.b16 %v722
  %v1747 = vunpack.c.l.b16 %v723
  %v1748 = vunpack.c.l.b16 %v724
  %v1749 = vunpack.c.l.b16 %v725
  %v1750 = vunpack.c.l.b16 %v726
  %v1751 = vunpack.c.l.b16 %v727
  %v1752 = vunpack.c.l.b16 %v728
  %v1753 = vunpack.c.l.b16 %v729
  %v1754 = vunpack.c.l.b16 %v730
  %v1755 = vunpack.c.l.b16 %v731
  %v1756 = vunpack.c.l.b16 %v732
  %v1757 = vunpack.c.l.b16 %v733
  %v1758 = vunpack.c.l.b16 %v734
  %v1759 = vunpack.c.l.b16 %v735
  %v1760 = vunpack.c.l.b16 %v736
  %v1761 = vunpack.c.l.b16 %v737
  %v1762 = vunpack.c.l.b16 %v738
  %v1763 = vunpack.c.l.b16 %v739
  %v1764 = vunpack.c.l.b16 %v740
  %v1765 = vunpack.c.l.b16 %v741
  %v1766 = vunpack.c.l.b16 %v742
  %v1767 = vunpack.c.l.b16 %v743
  %v1768 = vunpack.c.l.b16 %v744
  %v1769 = vunpack.c.l.b16 %v745
  %v1770 = vunpack.c.l.b16 %v746
  %v1771 = vunpack.c.l.b16 %v747
  %v1772 = vunpack.c.l.b16 %v748
  %v1773 = vunpack.c.l.b16 %v749
  %v1774 = vunpack.c.l.b16 %v750
  %v1775 = vunpack.c.l.b16 %v751
  %v1776 = vunpack.c.l.b16 %v752
  %v1777 = vunpack.c.l.b16 %v753
  %v1778 = vunpack.c.l.b16 %v754
  %v1779 = vunpack.c.l.b16 %v755
  %v1780 = vunpack.c.l.b16 %v756
  %v1781 = vunpack.c.l.b16 %v757
  %v1782 = vunpack.c.l.b16 %v758
  %v1783 = vunpack.c.l.b16 %v759
  %v1784 = vunpack.c.l.b16 %v760
  %v1785 = vunpack.c.l.b16 %v761
  %v1786 = vunpack.c.l.b16 %v762
  %v1787 = vunpack.c.l.b16 %v763
  %v1788 = vunpack.c.l.b16 %v764
  %v1789 = vunpack.c.l.b16 %v765
  %v1790 = vunpack.c.l.b16 %v766
  %v1791 = vunpack.c.l.b16 %v767
  %v1792 = vunpack.c.l.b16 %v768
  %v1793 = vunpack.c.l.b16 %v769
  %v1794 = vunpack.c.l.b16 %v770
  %v1795 = vunpack.c.l.b16 %v771
  %v1796 = vunpack.c.l.b16 %v772
  %v1797 = vunpack.c.l.b16 %v773
  %v1798 = vunpack.c.l.b16 %v774
  %v1799 = vunpack.c.l.b16 %v775
  %v1800 = vunpack.c.l.b16 %v776
  %v1801 = vunpack.c.l.b16 %v777
  %v1802 = vunpack.c.l.b16 %v778
  %v1803 = vunpack.c.l.b16 %v779
  %v1804 = vunpack.c.l.b16 %v780
  %v1805 = vunpack.c.l.b16 %v781
  %v1806 = vunpack.c.l.b16 %v782
  %v1807 = vunpack.c.l.b16 %v783
  %v1808 = vunpack.c.l.b16 %v784
  %v1809 = vunpack.c.l.b16 %v785
  %v1810 = vunpack.c.l.b16 %v786
  %v1811 = vunpack.c.l.b16 %v787
  %v1812 = vunpack.c.l.b16 %v788
  %v1813 = vunpack.c.l.b16 %v789
  %v1814 = vunpack.c.l.b16 %v790
  %v1815 = vunpack.c.l.b16 %v791
  %v1816 = vunpack.c.l.b16 %v792
  %v1817 = vunpack.c.l.b16 %v793
  %v1818 = vunpack.c.l.b16 %v794
  %v1819 = vunpack.c.l.b16 %v795
  %v1820 = vunpack.c.l.b16 %v796
  %v1821 = vunpack.c.l.b16 %v797
  %v1822 = vunpack.c.l.b16 %v798
  %v1823 = vunpack.c.l.b16 %v799
  %v1824 = vunpack.c.l.b16 %v800
  %v1825 = vunpack.c.l.b16 %v801
  %v1826 = vunpack.c.l.b16 %v802
  %v1827 = vunpack.c.l.b16 %v803
  %v1828 = vunpack.c.l.b16 %v804
  %v1829 = vunpack.c.l.b16 %v805
  %v1830 = vunpack.c.l.b16 %v806
  %v1831 = vunpack.c.l.b16 %v807
  %v1832 = vunpack.c.l.b16 %v808
  %v1833 = vunpack.c.l.b16 %v809
  %v1834 = vunpack.c.l.b16 %v810
  %v1835 = vunpack.c.l.b16 %v811
  %v1836 = vunpack.c.l.b16 %v812
  %v1837 = vunpack.c.l.b16 %v813
  %v1838 = vunpack.c.l.b16 %v814
  %v1839 = vunpack.c.l.b16 %v815
  %v1840 = vunpack.c.l.b16 %v816
  %v1841 = vunpack.c.l.b16 %v817
  %v1842 = vunpack.c.l.b16 %v818
  %v1843 = vunpack.c.l.b16 %v819
  %v1844 = vunpack.c.l.b16 %v820
  %v1845 = vunpack.c.l.b16 %v821
  %v1846 = vunpack.c.l.b16 %v822
  %v1847 = vunpack.c.l.b16 %v823
  %v1848 = vunpack.c.l.b16 %v824
  %v1849 = vunpack.c.l.b16 %v825
  %v1850 = vunpack.c.l.b16 %v826
  %v1851 = vunpack.c.l.b16 %v827
  %v1852 = vunpack.c.l.b16 %v828
  %v1853 = vunpack.c.l.b16 %v829
  %v1854 = vunpack.c.l.b16 %v830
  %v1855 = vunpack.c.l.b16 %v831
  %v1856 = vunpack.c.l.b16 %v832
  %v1857 = vunpack.c.l.b16 %v833
  %v1858 = vunpack.c.l.b16 %v834
  %v1859 = vunpack.c.l.b16 %v835
  %v1860 = vunpack.c.l.b16 %v836
  %v1861 = vunpack.c.l.b16 %v837
  %v1862 = vunpack.c.l.b16 %v838
  %v1863 = vunpack.c.l.b16 %v839
  %v1864 = vunpack.c.l.b16 %v840
  %v1865 = vunpack.c.l.b16 %v841
  %v1866 = vunpack.c.l.b16 %v842
  %v1867 = vunpack.c.l.b16 %v843
  %v1868 = vunpack.c.l.b16 %v844
  %v1869 = vunpack.c.l.b16 %v845
  %v1870 = vunpack.c.l.b16 %v846
  %v1871 = vunpack.c.l.b16 %v847
  %v1872 = vunpack.c.l.b16 %v848
  %v1873 = vunpack.c.l.b16 %v849
  %v1874 = vunpack.c.l.b16 %v850
  %v1875 = vunpack.c.l.b16 %v851
  %v1876 = vunpack.c.l.b16 %v852
  %v1877 = vunpack.c.l.b16 %v853
  %v1878 = vunpack.c.l.b16 %v854
  %v1879 = vunpack.c.l.b16 %v855
  %v1880 = vunpack.c.l.b16 %v856
  %v1881 = vunpack.c.l.b16 %v857
  %v1882 = vunpack.c.l.b16 %v858
  %v1883 = vunpack.c.l.b16 %v859
  %v1884 = vunpack.c.l.b16 %v860
  %v1885 = vunpack.c.l.b16 %v861
  %v1886 = vunpack.c.l.b16 %v862
  %v1887 = vunpack.c.l.b16 %v863
  %v1888 = vunpack.c.l.b16 %v864
  %v1889 = vunpack.c.l.b16 %v865
  %v1890 = vunpack.c.l.b16 %v866
  %v1891 = vunpack.c.l.b16 %v867
  %v1892 = vunpack.c.l.b16 %v868
  %v1893 = vunpack.c.l.b16 %v869
  %v1894 = vunpack.c.l.b16 %v870
  %v1895 = vunpack.c.l.b16 %v871
  %v1896 = vunpack.c.l.b16 %v872
  %v1897 = vunpack.c.l.b16 %v873
  %v1898 = vunpack.c.l.b16 %v874
  %v1899 = vunpack.c.l.b16 %v875
  %v1900 = vunpack.c.l.b16 %v876
  %v1901 = vunpack.c.l.b16 %v877
  %v1902 = vunpack.c.l.b16 %v878
  %v1903 = vunpack.c.l.b16 %v879
  %v1904 = vunpack.c.l.b16 %v880
  %v1905 = vunpack.c.l.b16 %v881
  %v1906 = vunpack.c.l.b16 %v882
  %v1907 = vunpack.c.l.b16 %v883
  %v1908 = vunpack.c.l.b16 %v884
  %v1909 = vunpack.c.l.b16 %v885
  %v1910 = vunpack.c.l.b16 %v886
  %v1911 = vunpack.c.l.b16 %v887
  %v1912 = vunpack.c.l.b16 %v888
  %v1913 = vunpack.c.l.b16 %v889
  %v1914 = vunpack.c.l.b16 %v890
  %v1915 = vunpack.c.l.b16 %v891
  %v1916 = vunpack.c.l.b16 %v892
  %v1917 = vunpack.c.l.b16 %v893
  %v1918 = vunpack.c.l.b16 %v894
  %v1919 = vunpack.c.l.b16 %v895
  %v1920 = vunpack.c.l.b16 %v896
  %v1921 = vunpack.c.l.b16 %v897
  %v1922 = vunpack.c.l.b16 %v898
  %v1923 = vunpack.c.l.b16 %v899
  %v1924 = vunpack.c.l.b16 %v900
  %v1925 = vunpack.c.l.b16 %v901
  %v1926 = vunpack.c.l.b16 %v902
  %v1927 = vunpack.c.l.b16 %v903
  %v1928 = vunpack.c.l.b16 %v904
  %v1929 = vunpack.c.l.b16 %v905
  %v1930 = vunpack.c.l.b16 %v906
  %v1931 = vunpack.c.l.b16 %v907
  %v1932 = vunpack.c.l.b16 %v908
  %v1933 = vunpack.c.l.b16 %v909
  %v1934 = vunpack.c.l.b16 %v910
  %v1935 = vunpack.c.l.b16 %v911
  %v1936 = vunpack.c.l.b16 %v912
  %v1937 = vunpack.c.l.b16 %v913
  %v1938 = vunpack.c.l.b16 %v914
  %v1939 = vunpack.c.l.b16 %v915
  %v1940 = vunpack.c.l.b16 %v916
  %v1941 = vunpack.c.l.b16 %v917
  %v1942 = vunpack.c.l.b16 %v918
  %v1943 = vunpack.c.l.b16 %v919
  %v1944 = vunpack.c.l.b16 %v920
  %v1945 = vunpack.c.l.b16 %v921
  %v1946 = vunpack.c.l.b16 %v922
  %v1947 = vunpack.c.l.b16 %v923
  %v1948 = vunpack.c.l.b16 %v924
  %v1949 = vunpack.c.l.b16 %v925
  %v1950 = vunpack.c.l.b16 %v926
  %v1951 = vunpack.c.l.b16 %v927
  %v1952 = vunpack.c.l.b16 %v928
  %v1953 = vunpack.c.l.b16 %v929
  %v1954 = vunpack.c.l.b16 %v930
  %v1955 = vunpack.c.l.b16 %v931
  %v1956 = vunpack.c.l.b16 %v932
  %v1957 = vunpack.c.l.b16 %v933
  %v1958 = vunpack.c.l.b16 %v934
  %v1959 = vunpack.c.l.b16 %v935
  %v1960 = vunpack.c.l.b16 %v936
  %v1961 = vunpack.c.l.b16 %v937
  %v1962 = vunpack.c.l.b16 %v938
  %v1963 = vunpack.c.l.b16 %v939
  %v1964 = vunpack.c.l.b16 %v940
  %v1965 = vunpack.c.l.b16 %v941
  %v1966 = vunpack.c.l.b16 %v942
  %v1967 = vunpack.c.l.b16 %v943
  %v1968 = vunpack.c.l.b16 %v944
  %v1969 = vunpack.c.l.b16 %v945
  %v1970 = vunpack.c.l.b16 %v946
  %v1971 = vunpack.c.l.b16 %v947
  %v1972 = vunpack.c.l.b16 %v948
  %v1973 = vunpack.c.l.b16 %v949
  %v1974 = vunpack.c.l.b16 %v950
  %v1975 = vunpack.c.l.b16 %v951
  %v1976 = vunpack.c.l.b16 %v952
  %v1977 = vunpack.c.l.b16 %v953
  %v1978 = vunpack.c.l.b16 %v954
  %v1979 = vunpack.c.l.b16 %v955
  %v1980 = vunpack.c.l.b16 %v956
  %v1981 = vunpack.c.l.b16 %v957
  %v1982 = vunpack.c.l.b16 %v958
  %v1983 = vunpack.c.l.b16 %v959
  %v1984 = vunpack.c.l.b16 %v960
  %v1985 = vunpack.c.l.b16 %v961
  %v1986 = vunpack.c.l.b16 %v962
  %v1987 = vunpack.c.l.b16 %v963
  %v1988 = vunpack.c.l.b16 %v964
  %v1989 = vunpack.c.l.b16 %v965
  %v1990 = vunpack.c.l.b16 %v966
  %v1991 = vunpack.c.l.b16 %v967
  %v1992 = vunpack.c.l.b16 %v968
  %v1993 = vunpack.c.l.b16 %v969
  %v1994 = vunpack.c.l.b16 %v970
  %v1995 = vunpack.c.l.b16 %v971
  %v1996 = vunpack.c.l.b16 %v972
  %v1997 = vunpack.c.l.b16 %v973
  %v1998 = vunpack.c.l.b16 %v974
  %v1999 = vunpack.c.l.b16 %v975
  %v2000 = vunpack.c.l.b16 %v976
  %v2001 = vunpack.c.l.b16 %v977
  %v2002 = vunpack.c.l.b16 %v978
  %v2003 = vunpack.c.l.b16 %v979
  %v2004 = vunpack.c.l.b16 %v980
  %v2005 = vunpack.c.l.b16 %v981
  %v2006 = vunpack.c.l.b16 %v982
  %v2007 = vunpack.c.l.b16 %v983
  %v2008 = vunpack.c.l.b16 %v984
  %v2009 = vunpack.c.l.b16 %v985
  %v2010 = vunpack.c.l.b16 %v986
  %v2011 = vunpack.c.l.b16 %v987
  %v2012 = vunpack.c.l.b16 %v988
  %v2013 = vunpack.c.l.b16 %v989
  %v2014 = vunpack.c.l.b16 %v990
  %v2015 = vunpack.c.l.b16 %v991
  %v2016 = vunpack.c.l.b16 %v992
  %v2017 = vunpack.c.l.b16 %v993
  %v2018 = vunpack.c.l.b16 %v994
  %v2019 = vunpack.c.l.b16 %v995
  %v2020 = vunpack.c.l.b16 %v996
  %v2021 = vunpack.c.l.b16 %v997
  %v2022 = vunpack.c.l.b16 %v998
  %v2023 = vunpack.c.l.b16 %v999
  %v2024 = vunpack.c.l.b16 %v1000
  %v2025 = vunpack.c.l.b16 %v1001
  %v2026 = vunpack.c.l.b16 %v1002
  %v2027 = vunpack.c.l.b16 %v1003
  %v2028 = vunpack.c.l.b16 %v1004
  %v2029 = vunpack.c.l.b16 %v1005
  %v2030 = vunpack.c.l.b16 %v1006
  %v2031 = vunpack.c.l.b16 %v1007
  %v2032 = vunpack.c.l.b16 %v1008
  %v2033 = vunpack.c.l.b16 %v1009
  %v2034 = vunpack.c.l.b16 %v1010
  %v2035 = vunpack.c.l.b16 %v1011
  %v2036 = vunpack.c.l.b16 %v1012
  %v2037 = vunpack.c.l.b16 %v1013
  %v2038 = vunpack.c.l.b16 %v1014
  %v2039 = vunpack.c.l.b16 %v1015
  %v2040 = vunpack.c.l.b16 %v1016
  %v2041 = vunpack.c.l.b16 %v1017
  %v2042 = vunpack.c.l.b16 %v1018
  %v2043 = vunpack.c.l.b16 %v1019
  %v2044 = vunpack.c.l.b16 %v1020
  %v2045 = vunpack.c.l.b16 %v1021
  %v2046 = vunpack.c.l.b16 %v1022
  %v2047 = vunpack.c.l.b16 %v1023
  %v2048 = vunpack.c.l.b16 %v1024
  %v2049 = vunpack.c.l.b16 %v1025
  %v2050 = vunpack.c.l.b16 %v1026
  %v2051 = vunpack.c.l.b16 %v1027
  %v2052 = vunpack.c.l.b16 %v1028
  %v2053 = vunpack.c.l.b16 %v1029
  %v2054 = vunpack.c.l.b16 %v1030
  %v2055 = vunpack.c.l.b16 %v1031
  %v2056 = vunpack.c.l.b16 %v1032
  %v2057 = vunpack.c.l.b16 %v1033
  %v2058 = vunpack.c.l.b16 %v1034
  %v2059 = vunpack.c.l.b16 %v1035
  %v2060 = vunpack.c.l.b16 %v1036
  %v2061 = vunpack.c.l.b16 %v1037
  %v2062 = vunpack.c.l.b16 %v1038
  %v2063 = vunpack.c.l.b16 %v1039
  %v2064 = vunpack.c.l.b16 %v1040
  %v2065 = vunpack.c.l.b16 %v1041
  %v2066 = vunpack.c.l.b16 %v1042
  %v2067 = vunpack.c.l.b16 %v1043
  %v2068 = vunpack.c.l.b16 %v1044
  %v2069 = vunpack.c.l.b16 %v1045
  %v2070 = vunpack.c.l.b16 %v1046
  %v2071 = vunpack.c.l.b16 %v1047
  %v2072 = vunpack.c.l.b16 %v1048
  %v2073 = vunpack.c.l.b16 %v1049
  %v2074 = vunpack.c.l.b16 %v1050
  %v2075 = vunpack.c.l.b16 %v1051
  %v2076 = vunpack.c.l.b16 %v1052
  %v2077 = vunpack.c.l.b16 %v1053
  %v2078 = vunpack.c.l.b16 %v1054
  %v2079 = vunpack.c.l.b16 %v1055
  %v2080 = vunpack.c.l.b16 %v1056
  %v2081 = vunpack.c.l.b16 %v1057
  %v2082 = vunpack.c.l.b16 %v1058
  %v2083 = vunpack.c.l.b16 %v1059
  %v2084 = vunpack.c.l.b16 %v1060
  %v2085 = vunpack.c.l.b16 %v1061
  %v2086 = vunpack.c.l.b16 %v1062
  %v2087 = vunpack.c.l.b16 %v1063
  %v2088 = vunpack.c.l.b16 %v1064
  %v2089 = vunpack.c.l.b16 %v1065
  %v2090 = vunpack.c.l.b16 %v1066
  %v2091 = vunpack.c.l.b16 %v1067
  %v2092 = vunpack.c.l.b16 %v1068
  %v2093 = vunpack.c.l.b16 %v1069
  %v2094 = vunpack.c.l.b16 %v1070
  %v2095 = vunpack.c.l.b16 %v1071
  %v2096 = vunpack.c.l.b16 %v1072
  %v2097 = vunpack.c.l.b16 %v1073
  %v2098 = vunpack.c.l.b16 %v1074
  %v2099 = vunpack.c.l.b16 %v1075
  %v2100 = vunpack.c.l.b16 %v1076
  %v2101 = vunpack.c.l.b16 %v1077
  %v2102 = vunpack.c.l.b16 %v1078
  %v2103 = vunpack.c.l.b16 %v1079
  %v2104 = vunpack.c.l.b16 %v1080
  %v2105 = vunpack.c.l.b16 %v1081
  %v2106 = vunpack.c.l.b16 %v1082
  %v2107 = vunpack.c.l.b16 %v1083
  %v2108 = vunpack.c.l.b16 %v1084
  %v2109 = vunpack.c.l.b16 %v1085
  %v2110 = vunpack.c.l.b16 %v1086
  %v2111 = vunpack.c.l.b16 %v1087
  %v2112 = vunpack.c.l.b16 %v1088
  %v2113 = vunpack.c.l.b16 %v1089
  %v2114 = vunpack.c.l.b16 %v1090
  %v2115 = vunpack.c.l.b16 %v1091
  %v2116 = vunpack.c.l.b16 %v1092
  %v2117 = vunpack.c.l.b16 %v1093
  %v2118 = vunpack.c.l.b16 %v1094
  %v2119 = vunpack.c.l.b16 %v1095
  %v2120 = vunpack.c.l.b16 %v1096
  %v2121 = vunpack.c.l.b16 %v1097
  %v2122 = vunpack.c.l.b16 %v1098
  %v2123 = vunpack.c.l.b16 %v1099
  %v2124 = vunpack.c.l.b16 %v1100
  %v2125 = vunpack.c.l.b16 %v1101
  %v2126 = vunpack.c.l.b16 %v1102
  %v2127 = vunpack.c.l.b16 %v1103
  %v2128 = vunpack.c.l.b16 %v1104
  %v2129 = vunpack.c.l.b16 %v1105
  %v2130 = vpack.c.b16 %v1619, %v1618
  %v2131 = vpack.c.b16 %v1621, %v1620
  %v2132 = vpack.c.b16 %v1623, %v1622
  %v2133 = vpack.c.b16 %v1625, %v1624
  %v2134 = vpack.c.b16 %v1627, %v1626
  %v2135 = vpack.c.b16 %v1629, %v1628
  %v2136 = vpack.c.b16 %v1631, %v1630
  %v2137 = vpack.c.b16 %v1633, %v1632
  %v2138 = vpack.c.b16 %v1635, %v1634
  %v2139 = vpack.c.b16 %v1637, %v1636
  %v2140 = vpack.c.b16 %v1639, %v1638
  %v2141 = vpack.c.b16 %v1641, %v1640
  %v2142 = vpack.c.b16 %v1643, %v1642
  %v2143 = vpack.c.b16 %v1645, %v1644
  %v2144 = vpack.c.b16 %v1647, %v1646
  %v2145 = vpack.c.b16 %v1649, %v1648
  %v2146 = vpack.c.b16 %v1651, %v1650
  %v2147 = vpack.c.b16 %v1653, %v1652
  %v2148 = vpack.c.b16 %v1655, %v1654
  %v2149 = vpack.c.b16 %v1657, %v1656
  %v2150 = vpack.c.b16 %v1659, %v1658
  %v2151 = vpack.c.b16 %v1661, %v1660
  %v2152 = vpack.c.b16 %v1663, %v1662
  %v2153 = vpack.c.b16 %v1665, %v1664
  %v2154 = vpack.c.b16 %v1667, %v1666
  %v2155 = vpack.c.b16 %v1669, %v1668
  %v2156 = vpack.c.b16 %v1671, %v1670
  %v2157 = vpack.c.b16 %v1673, %v1672
  %v2158 = vpack.c.b16 %v1675, %v1674
  %v2159 = vpack.c.b16 %v1677, %v1676
  %v2160 = vpack.c.b16 %v1679, %v1678
  %v2161 = vpack.c.b16 %v1681, %v1680
  %v2162 = vpack.c.b16 %v1683, %v1682
  %v2163 = vpack.c.b16 %v1685, %v1684
  %v2164 = vpack.c.b16 %v1687, %v1686
  %v2165 = vpack.c.b16 %v1689, %v1688
  %v2166 = vpack.c.b16 %v1691, %v1690
  %v2167 = vpack.c.b16 %v1693, %v1692
  %v2168 = vpack.c.b16 %v1695, %v1694
  %v2169 = vpack.c.b16 %v1697, %v1696
  %v2170 = vpack.c.b16 %v1699, %v1698
  %v2171 = vpack.c.b16 %v1701, %v1700
  %v2172 = vpack.c.b16 %v1703, %v1702
  %v2173 = vpack.c.b16 %v1705, %v1704
  %v2174 = vpack.c.b16 %v1707, %v1706
  %v2175 = vpack.c.b16 %v1709, %v1708
  %v2176 = vpack.c.b16 %v1711, %v1710
  %v2177 = vpack.c.b16 %v1713, %v1712
  %v2178 = vpack.c.b16 %v1715, %v1714
  %v2179 = vpack.c.b16 %v1717, %v1716
  %v2180 = vpack.c.b16 %v1719, %v1718
  %v2181 = vpack.c.b16 %v1721, %v1720
  %v2182 = vpack.c.b16 %v1723, %v1722
  %v2183 = vpack.c.b16 %v1725, %v1724
  %v2184 = vpack.c.b16 %v1727, %v1726
  %v2185 = vpack.c.b16 %v1729, %v1728
  %v2186 = vpack.c.b16 %v1731, %v1730
  %v2187 = vpack.c.b16 %v1733, %v1732
  %v2188 = vpack.c.b16 %v1735, %v1734
  %v2189 = vpack.c.b16 %v1737, %v1736
  %v2190 = vpack.c.b16 %v1739, %v1738
  %v2191 = vpack.c.b16 %v1741, %v1740
  %v2192 = vpack.c.b16 %v1743, %v1742
  %v2193 = vpack.c.b16 %v1745, %v1744
  %v2194 = vpack.c.b16 %v1747, %v1746
  %v2195 = vpack.c.b16 %v1749, %v1748
  %v2196 = vpack.c.b16 %v1751, %v1750
  %v2197 = vpack.c.b16 %v1753, %v1752
  %v2198 = vpack.c.b16 %v1755, %v1754
  %v2199 = vpack.c.b16 %v1757, %v1756
  %v2200 = vpack.c.b16 %v1759, %v1758
  %v2201 = vpack.c.b16 %v1761, %v1760
  %v2202 = vpack.c.b16 %v1763, %v1762
  %v2203 = vpack.c.b16 %v1765, %v1764
  %v2204 = vpack.c.b16 %v1767, %v1766
  %v2205 = vpack.c.b16 %v1769, %v1768
  %v2206 = vpack.c.b16 %v1771, %v1770
  %v2207 = vpack.c.b16 %v1773, %v1772
  %v2208 = vpack.c.b16 %v1775, %v1774
  %v2209 = vpack.c.b16 %v1777, %v1776
  %v2210 = vpack.c.b16 %v1779, %v1778
  %v2211 = vpack.c.b16 %v1781, %v1780
  %v2212 = vpack.c.b16 %v1783, %v1782
  %v2213 = vpack.c.b16 %v1785, %v1784
  %v2214 = vpack.c.b16 %v1787, %v1786
  %v2215 = vpack.c.b16 %v1789, %v1788
  %v2216 = vpack.c.b16 %v1791, %v1790
  %v2217 = vpack.c.b16 %v1793, %v1792
  %v2218 = vpack.c.b16 %v1795, %v1794
  %v2219 = vpack.c.b16 %v1797, %v1796
  %v2220 = vpack.c.b16 %v1799, %v1798
  %v2221 = vpack.c.b16 %v1801, %v1800
  %v2222 = vpack.c.b16 %v1803, %v1802
  %v2223 = vpack.c.b16 %v1805, %v1804
  %v2224 = vpack.c.b16 %v1807, %v1806
  %v2225 = vpack.c.b16 %v1809, %v1808
  %v2226 = vpack.c.b16 %v1811, %v1810
  %v2227 = vpack.c.b16 %v1813, %v1812
  %v2228 = vpack.c.b16 %v1815, %v1814
  %v2229 = vpack.c.b16 %v1817, %v1816
  %v2230 = vpack.c.b16 %v1819, %v1818
  %v2231 = vpack.c.b16 %v1821, %v1820
  %v2232 = vpack.c.b16 %v1823, %v1822
  %v2233 = vpack.c.b16 %v1825, %v1824
  %v2234 = vpack.c.b16 %v1827, %v1826
  %v2235 = vpack.c.b16 %v1829, %v1828
  %v2236 = vpack.c.b16 %v1831, %v1830
  %v2237 = vpack.c.b16 %v1833, %v1832
  %v2238 = vpack.c.b16 %v1835, %v1834
  %v2239 = vpack.c.b16 %v1837, %v1836
  %v2240 = vpack.c.b16 %v1839, %v1838
  %v2241 = vpack.c.b16 %v1841, %v1840
  %v2242 = vpack.c.b16 %v1843, %v1842
  %v2243 = vpack.c.b16 %v1845, %v1844
  %v2244 = vpack.c.b16 %v1847, %v1846
  %v2245 = vpack.c.b16 %v1849, %v1848
  %v2246 = vpack.c.b16 %v1851, %v1850
  %v2247 = vpack.c.b16 %v1853, %v1852
  %v2248 = vpack.c.b16 %v1855, %v1854
  %v2249 = vpack.c.b16 %v1857, %v1856
  %v2250 = vpack.c.b16 %v1859, %v1858
  %v2251 = vpack.c.b16 %v1861, %v1860
  %v2252 = vpack.c.b16 %v1863, %v1862
  %v2253 = vpack.c.b16 %v1865, %v1864
  %v2254 = vpack.c.b16 %v1867, %v1866
  %v2255 = vpack.c.b16 %v1869, %v1868
  %v2256 = vpack.c.b16 %v1871, %v1870
  %v2257 = vpack.c.b16 %v1873, %v1872
  %v2258 = vpack.c.b16 %v1875, %v1874
  %v2259 = vpack.c.b16 %v1877, %v1876
  %v2260 = vpack.c.b16 %v1879, %v1878
  %v2261 = vpack.c.b16 %v1881, %v1880
  %v2262 = vpack.c.b16 %v1883, %v1882
  %v2263 = vpack.c.b16 %v1885, %v1884
  %v2264 = vpack.c.b16 %v1887, %v1886
  %v2265 = vpack.c.b16 %v1889, %v1888
  %v2266 = vpack.c.b16 %v1891, %v1890
  %v2267 = vpack.c.b16 %v1893, %v1892
  %v2268 = vpack.c.b16 %v1895, %v1894
  %v2269 = vpack.c.b16 %v1897, %v1896
  %v2270 = vpack.c.b16 %v1899, %v1898
  %v2271 = vpack.c.b16 %v1901, %v1900
  %v2272 = vpack.c.b16 %v1903, %v1902
  %v2273 = vpack.c.b16 %v1905, %v1904
  %v2274 = vpack.c.b16 %v1907, %v1906
  %v2275 = vpack.c.b16 %v1909, %v1908
  %v2276 = vpack.c.b16 %v1911, %v1910
  %v2277 = vpack.c.b16 %v1913, %v1912
  %v2278 = vpack.c.b16 %v1915, %v1914
  %v2279 = vpack.c.b16 %v1917, %v1916
  %v2280 = vpack.c.b16 %v1919, %v1918
  %v2281 = vpack.c.b16 %v1921, %v1920
  %v2282 = vpack.c.b16 %v1923, %v1922
  %v2283 = vpack.c.b16 %v1925, %v1924
  %v2284 = vpack.c.b16 %v1927, %v1926
  %v2285 = vpack.c.b16 %v1929, %v1928
  %v2286 = vpack.c.b16 %v1931, %v1930
  %v2287 = vpack.c.b16 %v1933, %v1932
  %v2288 = vpack.c.b16 %v1935, %v1934
  %v2289 = vpack.c.b16 %v1937, %v1936
  %v2290 = vpack.c.b16 %v1939, %v1938
  %v2291 = vpack.c.b16 %v1941, %v1940
  %v2292 = vpack.c.b16 %v1943, %v1942
  %v2293 = vpack.c.b16 %v1945, %v1944
  %v2294 = vpack.c.b16 %v1947, %v1946
  %v2295 = vpack.c.b16 %v1949, %v1948
  %v2296 = vpack.c.b16 %v1951, %v1950
  %v2297 = vpack.c.b16 %v1953, %v1952
  %v2298 = vpack.c.b16 %v1955, %v1954
  %v2299 = vpack.c.b16 %v1957, %v1956
  %v2300 = vpack.c.b16 %v1959, %v1958
  %v2301 = vpack.c.b16 %v1961, %v1960
  %v2302 = vpack.c.b16 %v1963, %v1962
  %v2303 = vpack.c.b16 %v1965, %v1964
  %v2304 = vpack.c.b16 %v1967, %v1966
  %v2305 = vpack.c.b16 %v1969, %v1968
  %v2306 = vpack.c.b16 %v1971, %v1970
  %v2307 = vpack.c.b16 %v1973, %v1972
  %v2308 = vpack.c.b16 %v1975, %v1974
  %v2309 = vpack.c.b16 %v1977, %v1976
  %v2310 = vpack.c.b16 %v1979, %v1978
  %v2311 = vpack.c.b16 %v1981, %v1980
  %v2312 = vpack.c.b16 %v1983, %v1982
  %v2313 = vpack.c.b16 %v1985, %v1984
  %v2314 = vpack.c.b16 %v1987, %v1986
  %v2315 = vpack.c.b16 %v1989, %v1988
  %v2316 = vpack.c.b16 %v1991, %v1990
  %v2317 = vpack.c.b16 %v1993, %v1992
  %v2318 = vpack.c.b16 %v1995, %v1994
  %v2319 = vpack.c.b16 %v1997, %v1996
  %v2320 = vpack.c.b16 %v1999, %v1998
  %v2321 = vpack.c.b16 %v2001, %v2000
  %v2322 = vpack.c.b16 %v2003, %v2002
  %v2323 = vpack.c.b16 %v2005, %v2004
  %v2324 = vpack.c.b16 %v2007, %v2006
  %v2325 = vpack.c.b16 %v2009, %v2008
  %v2326 = vpack.c.b16 %v2011, %v2010
  %v2327 = vpack.c.b16 %v2013, %v2012
  %v2328 = vpack.c.b16 %v2015, %v2014
  %v2329 = vpack.c.b16 %v2017, %v2016
  %v2330 = vpack.c.b16 %v2019, %v2018
  %v2331 = vpack.c.b16 %v2021, %v2020
  %v2332 = vpack.c.b16 %v2023, %v2022
  %v2333 = vpack.c.b16 %v2025, %v2024
  %v2334 = vpack.c.b16 %v2027, %v2026
  %v2335 = vpack.c.b16 %v2029, %v2028
  %v2336 = vpack.c.b16 %v2031, %v2030
  %v2337 = vpack.c.b16 %v2033, %v2032
  %v2338 = vpack.c.b16 %v2035, %v2034
  %v2339 = vpack.c.b16 %v2037, %v2036
  %v2340 = vpack.c.b16 %v2039, %v2038
  %v2341 = vpack.c.b16 %v2041, %v2040
  %v2342 = vpack.c.b16 %v2043, %v2042
  %v2343 = vpack.c.b16 %v2045, %v2044
  %v2344 = vpack.c.b16 %v2047, %v2046
  %v2345 = vpack.c.b16 %v2049, %v2048
  %v2346 = vpack.c.b16 %v2051, %v2050
  %v2347 = vpack.c.b16 %v2053, %v2052
  %v2348 = vpack.c.b16 %v2055, %v2054
  %v2349 = vpack.c.b16 %v2057, %v2056
  %v2350 = vpack.c.b16 %v2059, %v2058
  %v2351 = vpack.c.b16 %v2061, %v2060
  %v2352 = vpack.c.b16 %v2063, %v2062
  %v2353 = vpack.c.b16 %v2065, %v2064
  %v2354 = vpack.c.b16 %v2067, %v2066
  %v2355 = vpack.c.b16 %v2069, %v2068
  %v2356 = vpack.c.b16 %v2071, %v2070
  %v2357 = vpack.c.b16 %v2073, %v2072
  %v2358 = vpack.c.b16 %v2075, %v2074
  %v2359 = vpack.c.b16 %v2077, %v2076
  %v2360 = vpack.c.b16 %v2079, %v2078
  %v2361 = vpack.c.b16 %v2081, %v2080
  %v2362 = vpack.c.b16 %v2083, %v2082
  %v2363 = vpack.c.b16 %v2085, %v2084
  %v2364 = vpack.c.b16 %v2087, %v2086
  %v2365 = vpack.c.b16 %v2089, %v2088
  %v2366 = vpack.c.b16 %v2091, %v2090
  %v2367 = vpack.c.b16 %v2093, %v2092
  %v2368 = vpack.c.b16 %v2095, %v2094
  %v2369 = vpack.c.b16 %v2097, %v2096
  %v2370 = vpack.c.b16 %v2099, %v2098
  %v2371 = vpack.c.b16 %v2101, %v2100
  %v2372 = vpack.c.b16 %v2103, %v2102
  %v2373 = vpack.c.b16 %v2105, %v2104
  %v2374 = vpack.c.b16 %v2107, %v2106
  %v2375 = vpack.c.b16 %v2109, %v2108
  %v2376 = vpack.c.b16 %v2111, %v2110
  %v2377 = vpack.c.b16 %v2113, %v2112
  %v2378 = vpack.c.b16 %v2115, %v2114
  %v2379 = vpack.c.b16 %v2117, %v2116
  %v2380 = vpack.c.b16 %v2119, %v2118
  %v2381 = vpack.c.b16 %v2121, %v2120
  %v2382 = vpack.c.b16 %v2123, %v2122
  %v2383 = vpack.c.b16 %v2125, %v2124
  %v2384 = vpack.c.b16 %v2127, %v2126
  %v2385 = vpack.c.b16 %v2129, %v2128
  %2642 = vmatprep.subr.bf16.mxu0 0
  %2643 = vmatpush1.bf16.msra.mxu0 %v2130
  %2644 = vmatprep.subr.bf16.mxu0 0
  %2645 = vmatpush1.bf16.msra.mxu0 %v2131
  %2646 = vmatprep.subr.bf16.mxu0 0
  %2647 = vmatpush1.bf16.msra.mxu0 %v2132
  %2648 = vmatprep.subr.bf16.mxu0 0
  %2649 = vmatpush1.bf16.msra.mxu0 %v2133
  %2650 = vmatprep.subr.bf16.mxu0 0
  %2651 = vmatpush1.bf16.msra.mxu0 %v2134
  %2652 = vmatprep.subr.bf16.mxu0 0
  %2653 = vmatpush1.bf16.msra.mxu0 %v2135
  %2654 = vmatprep.subr.bf16.mxu0 0
  %2655 = vmatpush1.bf16.msra.mxu0 %v2136
  %2656 = vmatprep.subr.bf16.mxu0 0
  %2657 = vmatpush1.bf16.msra.mxu0 %v2137
  %2658 = vmatprep.subr.bf16.mxu0 0
  %2659 = vmatpush1.bf16.msra.mxu0 %v2138
  %2660 = vmatprep.subr.bf16.mxu0 0
  %2661 = vmatpush1.bf16.msra.mxu0 %v2139
  %2662 = vmatprep.subr.bf16.mxu0 0
  %2663 = vmatpush1.bf16.msra.mxu0 %v2140
  %2664 = vmatprep.subr.bf16.mxu0 0
  %2665 = vmatpush1.bf16.msra.mxu0 %v2141
  %2666 = vmatprep.subr.bf16.mxu0 0
  %2667 = vmatpush1.bf16.msra.mxu0 %v2142
  %2668 = vmatprep.subr.bf16.mxu0 0
  %2669 = vmatpush1.bf16.msra.mxu0 %v2143
  %2670 = vmatprep.subr.bf16.mxu0 0
  %2671 = vmatpush1.bf16.msra.mxu0 %v2144
  %2672 = vmatprep.subr.bf16.mxu0 0
  %2673 = vmatpush1.bf16.msra.mxu0 %v2145
  %2674 = vmatprep.mubr.bf16.mxu0 %v563
  %2675 = vmatmul.mubr.bf16.gmra.mrb[0].mxu0 %v562
  %v2676 = vpop.f32.mrb[0].mxu0
  %v2677 = vadd.f32 0.0, %v2676
  %v2678 = vpop.f32.mrb[0].mxu0
  %v2679 = vpop.f32.mrb[0].mxu0
  %v2680 = vpop.f32.mrb[0].mxu0
  %2681 = vdwg.mxu0
  %2682 = vmatprep.subr.bf16.mxu0 0
  %2683 = vmatpush1.bf16.msra.mxu0 %v2146
  %2684 = vmatprep.subr.bf16.mxu0 0
  %2685 = vmatpush1.bf16.msra.mxu0 %v2147
  %2686 = vmatprep.subr.bf16.mxu0 0
  %2687 = vmatpush1.bf16.msra.mxu0 %v2148
  %2688 = vmatprep.subr.bf16.mxu0 0
  %2689 = vmatpush1.bf16.msra.mxu0 %v2149
  %2690 = vmatprep.subr.bf16.mxu0 0
  %2691 = vmatpush1.bf16.msra.mxu0 %v2150
  %2692 = vmatprep.subr.bf16.mxu0 0
  %2693 = vmatpush1.bf16.msra.mxu0 %v2151
  %2694 = vmatprep.subr.bf16.mxu0 0
  %2695 = vmatpush1.bf16.msra.mxu0 %v2152
  %2696 = vmatprep.subr.bf16.mxu0 0
  %2697 = vmatpush1.bf16.msra.mxu0 %v2153
  %2698 = vmatprep.subr.bf16.mxu0 0
  %2699 = vmatpush1.bf16.msra.mxu0 %v2154
  %2700 = vmatprep.subr.bf16.mxu0 0
  %2701 = vmatpush1.bf16.msra.mxu0 %v2155
  %2702 = vmatprep.subr.bf16.mxu0 0
  %2703 = vmatpush1.bf16.msra.mxu0 %v2156
  %2704 = vmatprep.subr.bf16.mxu0 0
  %2705 = vmatpush1.bf16.msra.mxu0 %v2157
  %2706 = vmatprep.subr.bf16.mxu0 0
  %2707 = vmatpush1.bf16.msra.mxu0 %v2158
  %2708 = vmatprep.subr.bf16.mxu0 0
  %2709 = vmatpush1.bf16.msra.mxu0 %v2159
  %2710 = vmatprep.subr.bf16.mxu0 0
  %2711 = vmatpush1.bf16.msra.mxu0 %v2160
  %2712 = vmatprep.subr.bf16.mxu0 0
  %2713 = vmatpush1.bf16.msra.mxu0 %v2161
  %2714 = vmatprep.mubr.bf16.mxu0 %v565
  %2715 = vmatmul.mubr.bf16.gmra.mrb[0].mxu0 %v564
  %v2716 = vpop.f32.mrb[0].mxu0
  %v2717 = vadd.f32 %v2677, %v2716
  %v2718 = vpop.f32.mrb[0].mxu0
  %v2719 = vpop.f32.mrb[0].mxu0
  %v2720 = vpop.f32.mrb[0].mxu0
  %2721 = vdwg.mxu0
  %2722 = vmatprep.subr.bf16.mxu0 0
  %2723 = vmatpush1.bf16.msra.mxu0 %v2162
  %2724 = vmatprep.subr.bf16.mxu0 0
  %2725 = vmatpush1.bf16.msra.mxu0 %v2163
  %2726 = vmatprep.subr.bf16.mxu0 0
  %2727 = vmatpush1.bf16.msra.mxu0 %v2164
  %2728 = vmatprep.subr.bf16.mxu0 0
  %2729 = vmatpush1.bf16.msra.mxu0 %v2165
  %2730 = vmatprep.subr.bf16.mxu0 0
  %2731 = vmatpush1.bf16.msra.mxu0 %v2166
  %2732 = vmatprep.subr.bf16.mxu0 0
  %2733 = vmatpush1.bf16.msra.mxu0 %v2167
  %2734 = vmatprep.subr.bf16.mxu0 0
  %2735 = vmatpush1.bf16.msra.mxu0 %v2168
  %2736 = vmatprep.subr.bf16.mxu0 0
  %2737 = vmatpush1.bf16.msra.mxu0 %v2169
  %2738 = vmatprep.subr.bf16.mxu0 0
  %2739 = vmatpush1.bf16.msra.mxu0 %v2170
  %2740 = vmatprep.subr.bf16.mxu0 0
  %2741 = vmatpush1.bf16.msra.mxu0 %v2171
  %2742 = vmatprep.subr.bf16.mxu0 0
  %2743 = vmatpush1.bf16.msra.mxu0 %v2172
  %2744 = vmatprep.subr.bf16.mxu0 0
  %2745 = vmatpush1.bf16.msra.mxu0 %v2173
  %2746 = vmatprep.subr.bf16.mxu0 0
  %2747 = vmatpush1.bf16.msra.mxu0 %v2174
  %2748 = vmatprep.subr.bf16.mxu0 0
  %2749 = vmatpush1.bf16.msra.mxu0 %v2175
  %2750 = vmatprep.subr.bf16.mxu0 0
  %2751 = vmatpush1.bf16.msra.mxu0 %v2176
  %2752 = vmatprep.subr.bf16.mxu0 0
  %2753 = vmatpush1.bf16.msra.mxu0 %v2177
  %2754 = vmatprep.mubr.bf16.mxu0 %v567
  %2755 = vmatmul.mubr.bf16.gmra.mrb[0].mxu0 %v566
  %v2756 = vpop.f32.mrb[0].mxu0
  %v2757 = vadd.f32 %v2717, %v2756
  %v2758 = vpop.f32.mrb[0].mxu0
  %v2759 = vpop.f32.mrb[0].mxu0
  %v2760 = vpop.f32.mrb[0].mxu0
  %2761 = vdwg.mxu0
  %2762 = vmatprep.subr.bf16.mxu0 0
  %2763 = vmatpush1.bf16.msra.mxu0 %v2178
  %2764 = vmatprep.subr.bf16.mxu0 0
  %2765 = vmatpush1.bf16.msra.mxu0 %v2179
  %2766 = vmatprep.subr.bf16.mxu0 0
  %2767 = vmatpush1.bf16.msra.mxu0 %v2180
  %2768 = vmatprep.subr.bf16.mxu0 0
  %2769 = vmatpush1.bf16.msra.mxu0 %v2181
  %2770 = vmatprep.subr.bf16.mxu0 0
  %2771 = vmatpush1.bf16.msra.mxu0 %v2182
  %2772 = vmatprep.subr.bf16.mxu0 0
  %2773 = vmatpush1.bf16.msra.mxu0 %v2183
  %2774 = vmatprep.subr.bf16.mxu0 0
  %2775 = vmatpush1.bf16.msra.mxu0 %v2184
  %2776 = vmatprep.subr.bf16.mxu0 0
  %2777 = vmatpush1.bf16.msra.mxu0 %v2185
  %2778 = vmatprep.subr.bf16.mxu0 0
  %2779 = vmatpush1.bf16.msra.mxu0 %v2186
  %2780 = vmatprep.subr.bf16.mxu0 0
  %2781 = vmatpush1.bf16.msra.mxu0 %v2187
  %2782 = vmatprep.subr.bf16.mxu0 0
  %2783 = vmatpush1.bf16.msra.mxu0 %v2188
  %2784 = vmatprep.subr.bf16.mxu0 0
  %2785 = vmatpush1.bf16.msra.mxu0 %v2189
  %2786 = vmatprep.subr.bf16.mxu0 0
  %2787 = vmatpush1.bf16.msra.mxu0 %v2190
  %2788 = vmatprep.subr.bf16.mxu0 0
  %2789 = vmatpush1.bf16.msra.mxu0 %v2191
  %2790 = vmatprep.subr.bf16.mxu0 0
  %2791 = vmatpush1.bf16.msra.mxu0 %v2192
  %2792 = vmatprep.subr.bf16.mxu0 0
  %2793 = vmatpush1.bf16.msra.mxu0 %v2193
  %2794 = vmatprep.mubr.bf16.mxu0 %v569
  %2795 = vmatmul.mubr.bf16.gmra.mrb[0].mxu0 %v568
  %v2796 = vpop.f32.mrb[0].mxu0
  %v2797 = vadd.f32 %v2757, %v2796
  %v2798 = vpop.f32.mrb[0].mxu0
  %v2799 = vpop.f32.mrb[0].mxu0
  %v2800 = vpop.f32.mrb[0].mxu0
  %2801 = vdwg.mxu0
  %2802 = vmatprep.subr.bf16.mxu0 0
  %2803 = vmatpush1.bf16.msra.mxu0 %v2194
  %2804 = vmatprep.subr.bf16.mxu0 0
  %2805 = vmatpush1.bf16.msra.mxu0 %v2195
  %2806 = vmatprep.subr.bf16.mxu0 0
  %2807 = vmatpush1.bf16.msra.mxu0 %v2196
  %2808 = vmatprep.subr.bf16.mxu0 0
  %2809 = vmatpush1.bf16.msra.mxu0 %v2197
  %2810 = vmatprep.subr.bf16.mxu0 0
  %2811 = vmatpush1.bf16.msra.mxu0 %v2198
  %2812 = vmatprep.subr.bf16.mxu0 0
  %2813 = vmatpush1.bf16.msra.mxu0 %v2199
  %2814 = vmatprep.subr.bf16.mxu0 0
  %2815 = vmatpush1.bf16.msra.mxu0 %v2200
  %2816 = vmatprep.subr.bf16.mxu0 0
  %2817 = vmatpush1.bf16.msra.mxu0 %v2201
  %2818 = vmatprep.subr.bf16.mxu0 0
  %2819 = vmatpush1.bf16.msra.mxu0 %v2202
  %2820 = vmatprep.subr.bf16.mxu0 0
  %2821 = vmatpush1.bf16.msra.mxu0 %v2203
  %2822 = vmatprep.subr.bf16.mxu0 0
  %2823 = vmatpush1.bf16.msra.mxu0 %v2204
  %2824 = vmatprep.subr.bf16.mxu0 0
  %2825 = vmatpush1.bf16.msra.mxu0 %v2205
  %2826 = vmatprep.subr.bf16.mxu0 0
  %2827 = vmatpush1.bf16.msra.mxu0 %v2206
  %2828 = vmatprep.subr.bf16.mxu0 0
  %2829 = vmatpush1.bf16.msra.mxu0 %v2207
  %2830 = vmatprep.subr.bf16.mxu0 0
  %2831 = vmatpush1.bf16.msra.mxu0 %v2208
  %2832 = vmatprep.subr.bf16.mxu0 0
  %2833 = vmatpush1.bf16.msra.mxu0 %v2209
  %2834 = vmatprep.mubr.bf16.mxu0 %v571
  %2835 = vmatmul.mubr.bf16.gmra.mrb[0].mxu0 %v570
  %v2836 = vpop.f32.mrb[0].mxu0
  %v2837 = vadd.f32 %v2797, %v2836
  %v2838 = vpop.f32.mrb[0].mxu0
  %v2839 = vpop.f32.mrb[0].mxu0
  %v2840 = vpop.f32.mrb[0].mxu0
  %2841 = vdwg.mxu0
  %2842 = vmatprep.subr.bf16.mxu0 0
  %2843 = vmatpush1.bf16.msra.mxu0 %v2210
  %2844 = vmatprep.subr.bf16.mxu0 0
  %2845 = vmatpush1.bf16.msra.mxu0 %v2211
  %2846 = vmatprep.subr.bf16.mxu0 0
  %2847 = vmatpush1.bf16.msra.mxu0 %v2212
  %2848 = vmatprep.subr.bf16.mxu0 0
  %2849 = vmatpush1.bf16.msra.mxu0 %v2213
  %2850 = vmatprep.subr.bf16.mxu0 0
  %2851 = vmatpush1.bf16.msra.mxu0 %v2214
  %2852 = vmatprep.subr.bf16.mxu0 0
  %2853 = vmatpush1.bf16.msra.mxu0 %v2215
  %2854 = vmatprep.subr.bf16.mxu0 0
  %2855 = vmatpush1.bf16.msra.mxu0 %v2216
  %2856 = vmatprep.subr.bf16.mxu0 0
  %2857 = vmatpush1.bf16.msra.mxu0 %v2217
  %2858 = vmatprep.subr.bf16.mxu0 0
  %2859 = vmatpush1.bf16.msra.mxu0 %v2218
  %2860 = vmatprep.subr.bf16.mxu0 0
  %2861 = vmatpush1.bf16.msra.mxu0 %v2219
  %2862 = vmatprep.subr.bf16.mxu0 0
  %2863 = vmatpush1.bf16.msra.mxu0 %v2220
  %2864 = vmatprep.subr.bf16.mxu0 0
  %2865 = vmatpush1.bf16.msra.mxu0 %v2221
  %2866 = vmatprep.subr.bf16.mxu0 0
  %2867 = vmatpush1.bf16.msra.mxu0 %v2222
  %2868 = vmatprep.subr.bf16.mxu0 0
  %2869 = vmatpush1.bf16.msra.mxu0 %v2223
  %2870 = vmatprep.subr.bf16.mxu0 0
  %2871 = vmatpush1.bf16.msra.mxu0 %v2224
  %2872 = vmatprep.subr.bf16.mxu0 0
  %2873 = vmatpush1.bf16.msra.mxu0 %v2225
  %2874 = vmatprep.mubr.bf16.mxu0 %v573
  %2875 = vmatmul.mubr.bf16.gmra.mrb[0].mxu0 %v572
  %v2876 = vpop.f32.mrb[0].mxu0
  %v2877 = vadd.f32 %v2837, %v2876
  %v2878 = vpop.f32.mrb[0].mxu0
  %v2879 = vpop.f32.mrb[0].mxu0
  %v2880 = vpop.f32.mrb[0].mxu0
  %2881 = vdwg.mxu0
  %2882 = vmatprep.subr.bf16.mxu0 0
  %2883 = vmatpush1.bf16.msra.mxu0 %v2226
  %2884 = vmatprep.subr.bf16.mxu0 0
  %2885 = vmatpush1.bf16.msra.mxu0 %v2227
  %2886 = vmatprep.subr.bf16.mxu0 0
  %2887 = vmatpush1.bf16.msra.mxu0 %v2228
  %2888 = vmatprep.subr.bf16.mxu0 0
  %2889 = vmatpush1.bf16.msra.mxu0 %v2229
  %2890 = vmatprep.subr.bf16.mxu0 0
  %2891 = vmatpush1.bf16.msra.mxu0 %v2230
  %2892 = vmatprep.subr.bf16.mxu0 0
  %2893 = vmatpush1.bf16.msra.mxu0 %v2231
  %2894 = vmatprep.subr.bf16.mxu0 0
  %2895 = vmatpush1.bf16.msra.mxu0 %v2232
  %2896 = vmatprep.subr.bf16.mxu0 0
  %2897 = vmatpush1.bf16.msra.mxu0 %v2233
  %2898 = vmatprep.subr.bf16.mxu0 0
  %2899 = vmatpush1.bf16.msra.mxu0 %v2234
  %2900 = vmatprep.subr.bf16.mxu0 0
  %2901 = vmatpush1.bf16.msra.mxu0 %v2235
  %2902 = vmatprep.subr.bf16.mxu0 0
  %2903 = vmatpush1.bf16.msra.mxu0 %v2236
  %2904 = vmatprep.subr.bf16.mxu0 0
  %2905 = vmatpush1.bf16.msra.mxu0 %v2237
  %2906 = vmatprep.subr.bf16.mxu0 0
  %2907 = vmatpush1.bf16.msra.mxu0 %v2238
  %2908 = vmatprep.subr.bf16.mxu0 0
  %2909 = vmatpush1.bf16.msra.mxu0 %v2239
  %2910 = vmatprep.subr.bf16.mxu0 0
  %2911 = vmatpush1.bf16.msra.mxu0 %v2240
  %2912 = vmatprep.subr.bf16.mxu0 0
  %2913 = vmatpush1.bf16.msra.mxu0 %v2241
  %2914 = vmatprep.mubr.bf16.mxu0 %v575
  %2915 = vmatmul.mubr.bf16.gmra.mrb[0].mxu0 %v574
  %v2916 = vpop.f32.mrb[0].mxu0
  %v2917 = vadd.f32 %v2877, %v2916
  %v2918 = vpop.f32.mrb[0].mxu0
  %v2919 = vpop.f32.mrb[0].mxu0
  %v2920 = vpop.f32.mrb[0].mxu0
  %2921 = vdwg.mxu0
  %2922 = vmatprep.subr.bf16.mxu0 0
  %2923 = vmatpush1.bf16.msra.mxu0 %v2242
  %2924 = vmatprep.subr.bf16.mxu0 0
  %2925 = vmatpush1.bf16.msra.mxu0 %v2243
  %2926 = vmatprep.subr.bf16.mxu0 0
  %2927 = vmatpush1.bf16.msra.mxu0 %v2244
  %2928 = vmatprep.subr.bf16.mxu0 0
  %2929 = vmatpush1.bf16.msra.mxu0 %v2245
  %2930 = vmatprep.subr.bf16.mxu0 0
  %2931 = vmatpush1.bf16.msra.mxu0 %v2246
  %2932 = vmatprep.subr.bf16.mxu0 0
  %2933 = vmatpush1.bf16.msra.mxu0 %v2247
  %2934 = vmatprep.subr.bf16.mxu0 0
  %2935 = vmatpush1.bf16.msra.mxu0 %v2248
  %2936 = vmatprep.subr.bf16.mxu0 0
  %2937 = vmatpush1.bf16.msra.mxu0 %v2249
  %2938 = vmatprep.subr.bf16.mxu0 0
  %2939 = vmatpush1.bf16.msra.mxu0 %v2250
  %2940 = vmatprep.subr.bf16.mxu0 0
  %2941 = vmatpush1.bf16.msra.mxu0 %v2251
  %2942 = vmatprep.subr.bf16.mxu0 0
  %2943 = vmatpush1.bf16.msra.mxu0 %v2252
  %2944 = vmatprep.subr.bf16.mxu0 0
  %2945 = vmatpush1.bf16.msra.mxu0 %v2253
  %2946 = vmatprep.subr.bf16.mxu0 0
  %2947 = vmatpush1.bf16.msra.mxu0 %v2254
  %2948 = vmatprep.subr.bf16.mxu0 0
  %2949 = vmatpush1.bf16.msra.mxu0 %v2255
  %2950 = vmatprep.subr.bf16.mxu0 0
  %2951 = vmatpush1.bf16.msra.mxu0 %v2256
  %2952 = vmatprep.subr.bf16.mxu0 0
  %2953 = vmatpush1.bf16.msra.mxu0 %v2257
  %2954 = vmatprep.mubr.bf16.mxu0 %v577
  %2955 = vmatmul.mubr.bf16.gmra.mrb[0].mxu0 %v576
  %v2956 = vpop.f32.mrb[0].mxu0
  %v2957 = vadd.f32 %v2917, %v2956
  %v2958 = vpop.f32.mrb[0].mxu0
  %v2959 = vpop.f32.mrb[0].mxu0
  %v2960 = vpop.f32.mrb[0].mxu0
  %2961 = vdwg.mxu0
  %2962 = vmatprep.subr.bf16.mxu0 0
  %2963 = vmatpush1.bf16.msra.mxu0 %v2258
  %2964 = vmatprep.subr.bf16.mxu0 0
  %2965 = vmatpush1.bf16.msra.mxu0 %v2259
  %2966 = vmatprep.subr.bf16.mxu0 0
  %2967 = vmatpush1.bf16.msra.mxu0 %v2260
  %2968 = vmatprep.subr.bf16.mxu0 0
  %2969 = vmatpush1.bf16.msra.mxu0 %v2261
  %2970 = vmatprep.subr.bf16.mxu0 0
  %2971 = vmatpush1.bf16.msra.mxu0 %v2262
  %2972 = vmatprep.subr.bf16.mxu0 0
  %2973 = vmatpush1.bf16.msra.mxu0 %v2263
  %2974 = vmatprep.subr.bf16.mxu0 0
  %2975 = vmatpush1.bf16.msra.mxu0 %v2264
  %2976 = vmatprep.subr.bf16.mxu0 0
  %2977 = vmatpush1.bf16.msra.mxu0 %v2265
  %2978 = vmatprep.subr.bf16.mxu0 0
  %2979 = vmatpush1.bf16.msra.mxu0 %v2266
  %2980 = vmatprep.subr.bf16.mxu0 0
  %2981 = vmatpush1.bf16.msra.mxu0 %v2267
  %2982 = vmatprep.subr.bf16.mxu0 0
  %2983 = vmatpush1.bf16.msra.mxu0 %v2268
  %2984 = vmatprep.subr.bf16.mxu0 0
  %2985 = vmatpush1.bf16.msra.mxu0 %v2269
  %2986 = vmatprep.subr.bf16.mxu0 0
  %2987 = vmatpush1.bf16.msra.mxu0 %v2270
  %2988 = vmatprep.subr.bf16.mxu0 0
  %2989 = vmatpush1.bf16.msra.mxu0 %v2271
  %2990 = vmatprep.subr.bf16.mxu0 0
  %2991 = vmatpush1.bf16.msra.mxu0 %v2272
  %2992 = vmatprep.subr.bf16.mxu0 0
  %2993 = vmatpush1.bf16.msra.mxu0 %v2273
  %2994 = vmatprep.mubr.bf16.mxu0 %v579
  %2995 = vmatmul.mubr.bf16.gmra.mrb[0].mxu0 %v578
  %v2996 = vpop.f32.mrb[0].mxu0
  %v2997 = vadd.f32 %v2957, %v2996
  %v2998 = vpop.f32.mrb[0].mxu0
  %v2999 = vpop.f32.mrb[0].mxu0
  %v3000 = vpop.f32.mrb[0].mxu0
  %3001 = vdwg.mxu0
  %3002 = vmatprep.subr.bf16.mxu0 0
  %3003 = vmatpush1.bf16.msra.mxu0 %v2274
  %3004 = vmatprep.subr.bf16.mxu0 0
  %3005 = vmatpush1.bf16.msra.mxu0 %v2275
  %3006 = vmatprep.subr.bf16.mxu0 0
  %3007 = vmatpush1.bf16.msra.mxu0 %v2276
  %3008 = vmatprep.subr.bf16.mxu0 0
  %3009 = vmatpush1.bf16.msra.mxu0 %v2277
  %3010 = vmatprep.subr.bf16.mxu0 0
  %3011 = vmatpush1.bf16.msra.mxu0 %v2278
  %3012 = vmatprep.subr.bf16.mxu0 0
  %3013 = vmatpush1.bf16.msra.mxu0 %v2279
  %3014 = vmatprep.subr.bf16.mxu0 0
  %3015 = vmatpush1.bf16.msra.mxu0 %v2280
  %3016 = vmatprep.subr.bf16.mxu0 0
  %3017 = vmatpush1.bf16.msra.mxu0 %v2281
  %3018 = vmatprep.subr.bf16.mxu0 0
  %3019 = vmatpush1.bf16.msra.mxu0 %v2282
  %3020 = vmatprep.subr.bf16.mxu0 0
  %3021 = vmatpush1.bf16.msra.mxu0 %v2283
  %3022 = vmatprep.subr.bf16.mxu0 0
  %3023 = vmatpush1.bf16.msra.mxu0 %v2284
  %3024 = vmatprep.subr.bf16.mxu0 0
  %3025 = vmatpush1.bf16.msra.mxu0 %v2285
  %3026 = vmatprep.subr.bf16.mxu0 0
  %3027 = vmatpush1.bf16.msra.mxu0 %v2286
  %3028 = vmatprep.subr.bf16.mxu0 0
  %3029 = vmatpush1.bf16.msra.mxu0 %v2287
  %3030 = vmatprep.subr.bf16.mxu0 0
  %3031 = vmatpush1.bf16.msra.mxu0 %v2288
  %3032 = vmatprep.subr.bf16.mxu0 0
  %3033 = vmatpush1.bf16.msra.mxu0 %v2289
  %3034 = vmatprep.mubr.bf16.mxu0 %v581
  %3035 = vmatmul.mubr.bf16.gmra.mrb[0].mxu0 %v580
  %v3036 = vpop.f32.mrb[0].mxu0
  %v3037 = vadd.f32 %v2997, %v3036
  %v3038 = vpop.f32.mrb[0].mxu0
  %v3039 = vpop.f32.mrb[0].mxu0
  %v3040 = vpop.f32.mrb[0].mxu0
  %3041 = vdwg.mxu0
  %3042 = vmatprep.subr.bf16.mxu0 0
  %3043 = vmatpush1.bf16.msra.mxu0 %v2290
  %3044 = vmatprep.subr.bf16.mxu0 0
  %3045 = vmatpush1.bf16.msra.mxu0 %v2291
  %3046 = vmatprep.subr.bf16.mxu0 0
  %3047 = vmatpush1.bf16.msra.mxu0 %v2292
  %3048 = vmatprep.subr.bf16.mxu0 0
  %3049 = vmatpush1.bf16.msra.mxu0 %v2293
  %3050 = vmatprep.subr.bf16.mxu0 0
  %3051 = vmatpush1.bf16.msra.mxu0 %v2294
  %3052 = vmatprep.subr.bf16.mxu0 0
  %3053 = vmatpush1.bf16.msra.mxu0 %v2295
  %3054 = vmatprep.subr.bf16.mxu0 0
  %3055 = vmatpush1.bf16.msra.mxu0 %v2296
  %3056 = vmatprep.subr.bf16.mxu0 0
  %3057 = vmatpush1.bf16.msra.mxu0 %v2297
  %3058 = vmatprep.subr.bf16.mxu0 0
  %3059 = vmatpush1.bf16.msra.mxu0 %v2298
  %3060 = vmatprep.subr.bf16.mxu0 0
  %3061 = vmatpush1.bf16.msra.mxu0 %v2299
  %3062 = vmatprep.subr.bf16.mxu0 0
  %3063 = vmatpush1.bf16.msra.mxu0 %v2300
  %3064 = vmatprep.subr.bf16.mxu0 0
  %3065 = vmatpush1.bf16.msra.mxu0 %v2301
  %3066 = vmatprep.subr.bf16.mxu0 0
  %3067 = vmatpush1.bf16.msra.mxu0 %v2302
  %3068 = vmatprep.subr.bf16.mxu0 0
  %3069 = vmatpush1.bf16.msra.mxu0 %v2303
  %3070 = vmatprep.subr.bf16.mxu0 0
  %3071 = vmatpush1.bf16.msra.mxu0 %v2304
  %3072 = vmatprep.subr.bf16.mxu0 0
  %3073 = vmatpush1.bf16.msra.mxu0 %v2305
  %3074 = vmatprep.mubr.bf16.mxu0 %v583
  %3075 = vmatmul.mubr.bf16.gmra.mrb[0].mxu0 %v582
  %v3076 = vpop.f32.mrb[0].mxu0
  %v3077 = vadd.f32 %v3037, %v3076
  %v3078 = vpop.f32.mrb[0].mxu0
  %v3079 = vpop.f32.mrb[0].mxu0
  %v3080 = vpop.f32.mrb[0].mxu0
  %3081 = vdwg.mxu0
  %3082 = vmatprep.subr.bf16.mxu0 0
  %3083 = vmatpush1.bf16.msra.mxu0 %v2306
  %3084 = vmatprep.subr.bf16.mxu0 0
  %3085 = vmatpush1.bf16.msra.mxu0 %v2307
  %3086 = vmatprep.subr.bf16.mxu0 0
  %3087 = vmatpush1.bf16.msra.mxu0 %v2308
  %3088 = vmatprep.subr.bf16.mxu0 0
  %3089 = vmatpush1.bf16.msra.mxu0 %v2309
  %3090 = vmatprep.subr.bf16.mxu0 0
  %3091 = vmatpush1.bf16.msra.mxu0 %v2310
  %3092 = vmatprep.subr.bf16.mxu0 0
  %3093 = vmatpush1.bf16.msra.mxu0 %v2311
  %3094 = vmatprep.subr.bf16.mxu0 0
  %3095 = vmatpush1.bf16.msra.mxu0 %v2312
  %3096 = vmatprep.subr.bf16.mxu0 0
  %3097 = vmatpush1.bf16.msra.mxu0 %v2313
  %3098 = vmatprep.subr.bf16.mxu0 0
  %3099 = vmatpush1.bf16.msra.mxu0 %v2314
  %3100 = vmatprep.subr.bf16.mxu0 0
  %3101 = vmatpush1.bf16.msra.mxu0 %v2315
  %3102 = vmatprep.subr.bf16.mxu0 0
  %3103 = vmatpush1.bf16.msra.mxu0 %v2316
  %3104 = vmatprep.subr.bf16.mxu0 0
  %3105 = vmatpush1.bf16.msra.mxu0 %v2317
  %3106 = vmatprep.subr.bf16.mxu0 0
  %3107 = vmatpush1.bf16.msra.mxu0 %v2318
  %3108 = vmatprep.subr.bf16.mxu0 0
  %3109 = vmatpush1.bf16.msra.mxu0 %v2319
  %3110 = vmatprep.subr.bf16.mxu0 0
  %3111 = vmatpush1.bf16.msra.mxu0 %v2320
  %3112 = vmatprep.subr.bf16.mxu0 0
  %3113 = vmatpush1.bf16.msra.mxu0 %v2321
  %3114 = vmatprep.mubr.bf16.mxu0 %v585
  %3115 = vmatmul.mubr.bf16.gmra.mrb[0].mxu0 %v584
  %v3116 = vpop.f32.mrb[0].mxu0
  %v3117 = vadd.f32 %v3077, %v3116
  %v3118 = vpop.f32.mrb[0].mxu0
  %v3119 = vpop.f32.mrb[0].mxu0
  %v3120 = vpop.f32.mrb[0].mxu0
  %3121 = vdwg.mxu0
  %3122 = vmatprep.subr.bf16.mxu0 0
  %3123 = vmatpush1.bf16.msra.mxu0 %v2322
  %3124 = vmatprep.subr.bf16.mxu0 0
  %3125 = vmatpush1.bf16.msra.mxu0 %v2323
  %3126 = vmatprep.subr.bf16.mxu0 0
  %3127 = vmatpush1.bf16.msra.mxu0 %v2324
  %3128 = vmatprep.subr.bf16.mxu0 0
  %3129 = vmatpush1.bf16.msra.mxu0 %v2325
  %3130 = vmatprep.subr.bf16.mxu0 0
  %3131 = vmatpush1.bf16.msra.mxu0 %v2326
  %3132 = vmatprep.subr.bf16.mxu0 0
  %3133 = vmatpush1.bf16.msra.mxu0 %v2327
  %3134 = vmatprep.subr.bf16.mxu0 0
  %3135 = vmatpush1.bf16.msra.mxu0 %v2328
  %3136 = vmatprep.subr.bf16.mxu0 0
  %3137 = vmatpush1.bf16.msra.mxu0 %v2329
  %3138 = vmatprep.subr.bf16.mxu0 0
  %3139 = vmatpush1.bf16.msra.mxu0 %v2330
  %3140 = vmatprep.subr.bf16.mxu0 0
  %3141 = vmatpush1.bf16.msra.mxu0 %v2331
  %3142 = vmatprep.subr.bf16.mxu0 0
  %3143 = vmatpush1.bf16.msra.mxu0 %v2332
  %3144 = vmatprep.subr.bf16.mxu0 0
  %3145 = vmatpush1.bf16.msra.mxu0 %v2333
  %3146 = vmatprep.subr.bf16.mxu0 0
  %3147 = vmatpush1.bf16.msra.mxu0 %v2334
  %3148 = vmatprep.subr.bf16.mxu0 0
  %3149 = vmatpush1.bf16.msra.mxu0 %v2335
  %3150 = vmatprep.subr.bf16.mxu0 0
  %3151 = vmatpush1.bf16.msra.mxu0 %v2336
  %3152 = vmatprep.subr.bf16.mxu0 0
  %3153 = vmatpush1.bf16.msra.mxu0 %v2337
  %3154 = vmatprep.mubr.bf16.mxu0 %v587
  %3155 = vmatmul.mubr.bf16.gmra.mrb[0].mxu0 %v586
  %v3156 = vpop.f32.mrb[0].mxu0
  %v3157 = vadd.f32 %v3117, %v3156
  %v3158 = vpop.f32.mrb[0].mxu0
  %v3159 = vpop.f32.mrb[0].mxu0
  %v3160 = vpop.f32.mrb[0].mxu0
  %3161 = vdwg.mxu0
  %3162 = vmatprep.subr.bf16.mxu0 0
  %3163 = vmatpush1.bf16.msra.mxu0 %v2338
  %3164 = vmatprep.subr.bf16.mxu0 0
  %3165 = vmatpush1.bf16.msra.mxu0 %v2339
  %3166 = vmatprep.subr.bf16.mxu0 0
  %3167 = vmatpush1.bf16.msra.mxu0 %v2340
  %3168 = vmatprep.subr.bf16.mxu0 0
  %3169 = vmatpush1.bf16.msra.mxu0 %v2341
  %3170 = vmatprep.subr.bf16.mxu0 0
  %3171 = vmatpush1.bf16.msra.mxu0 %v2342
  %3172 = vmatprep.subr.bf16.mxu0 0
  %3173 = vmatpush1.bf16.msra.mxu0 %v2343
  %3174 = vmatprep.subr.bf16.mxu0 0
  %3175 = vmatpush1.bf16.msra.mxu0 %v2344
  %3176 = vmatprep.subr.bf16.mxu0 0
  %3177 = vmatpush1.bf16.msra.mxu0 %v2345
  %3178 = vmatprep.subr.bf16.mxu0 0
  %3179 = vmatpush1.bf16.msra.mxu0 %v2346
  %3180 = vmatprep.subr.bf16.mxu0 0
  %3181 = vmatpush1.bf16.msra.mxu0 %v2347
  %3182 = vmatprep.subr.bf16.mxu0 0
  %3183 = vmatpush1.bf16.msra.mxu0 %v2348
  %3184 = vmatprep.subr.bf16.mxu0 0
  %3185 = vmatpush1.bf16.msra.mxu0 %v2349
  %3186 = vmatprep.subr.bf16.mxu0 0
  %3187 = vmatpush1.bf16.msra.mxu0 %v2350
  %3188 = vmatprep.subr.bf16.mxu0 0
  %3189 = vmatpush1.bf16.msra.mxu0 %v2351
  %3190 = vmatprep.subr.bf16.mxu0 0
  %3191 = vmatpush1.bf16.msra.mxu0 %v2352
  %3192 = vmatprep.subr.bf16.mxu0 0
  %3193 = vmatpush1.bf16.msra.mxu0 %v2353
  %3194 = vmatprep.mubr.bf16.mxu0 %v589
  %3195 = vmatmul.mubr.bf16.gmra.mrb[0].mxu0 %v588
  %v3196 = vpop.f32.mrb[0].mxu0
  %v3197 = vadd.f32 %v3157, %v3196
  %v3198 = vpop.f32.mrb[0].mxu0
  %v3199 = vpop.f32.mrb[0].mxu0
  %v3200 = vpop.f32.mrb[0].mxu0
  %3201 = vdwg.mxu0
  %3202 = vmatprep.subr.bf16.mxu0 0
  %3203 = vmatpush1.bf16.msra.mxu0 %v2354
  %3204 = vmatprep.subr.bf16.mxu0 0
  %3205 = vmatpush1.bf16.msra.mxu0 %v2355
  %3206 = vmatprep.subr.bf16.mxu0 0
  %3207 = vmatpush1.bf16.msra.mxu0 %v2356
  %3208 = vmatprep.subr.bf16.mxu0 0
  %3209 = vmatpush1.bf16.msra.mxu0 %v2357
  %3210 = vmatprep.subr.bf16.mxu0 0
  %3211 = vmatpush1.bf16.msra.mxu0 %v2358
  %3212 = vmatprep.subr.bf16.mxu0 0
  %3213 = vmatpush1.bf16.msra.mxu0 %v2359
  %3214 = vmatprep.subr.bf16.mxu0 0
  %3215 = vmatpush1.bf16.msra.mxu0 %v2360
  %3216 = vmatprep.subr.bf16.mxu0 0
  %3217 = vmatpush1.bf16.msra.mxu0 %v2361
  %3218 = vmatprep.subr.bf16.mxu0 0
  %3219 = vmatpush1.bf16.msra.mxu0 %v2362
  %3220 = vmatprep.subr.bf16.mxu0 0
  %3221 = vmatpush1.bf16.msra.mxu0 %v2363
  %3222 = vmatprep.subr.bf16.mxu0 0
  %3223 = vmatpush1.bf16.msra.mxu0 %v2364
  %3224 = vmatprep.subr.bf16.mxu0 0
  %3225 = vmatpush1.bf16.msra.mxu0 %v2365
  %3226 = vmatprep.subr.bf16.mxu0 0
  %3227 = vmatpush1.bf16.msra.mxu0 %v2366
  %3228 = vmatprep.subr.bf16.mxu0 0
  %3229 = vmatpush1.bf16.msra.mxu0 %v2367
  %3230 = vmatprep.subr.bf16.mxu0 0
  %3231 = vmatpush1.bf16.msra.mxu0 %v2368
  %3232 = vmatprep.subr.bf16.mxu0 0
  %3233 = vmatpush1.bf16.msra.mxu0 %v2369
  %3234 = vmatprep.mubr.bf16.mxu0 %v591
  %3235 = vmatmul.mubr.bf16.gmra.mrb[0].mxu0 %v590
  %v3236 = vpop.f32.mrb[0].mxu0
  %v3237 = vadd.f32 %v3197, %v3236
  %v3238 = vpop.f32.mrb[0].mxu0
  %v3239 = vpop.f32.mrb[0].mxu0
  %v3240 = vpop.f32.mrb[0].mxu0
  %3241 = vdwg.mxu0
  %3242 = vmatprep.subr.bf16.mxu0 0
  %3243 = vmatpush1.bf16.msra.mxu0 %v2370
  %3244 = vmatprep.subr.bf16.mxu0 0
  %3245 = vmatpush1.bf16.msra.mxu0 %v2371
  %3246 = vmatprep.subr.bf16.mxu0 0
  %3247 = vmatpush1.bf16.msra.mxu0 %v2372
  %3248 = vmatprep.subr.bf16.mxu0 0
  %3249 = vmatpush1.bf16.msra.mxu0 %v2373
  %3250 = vmatprep.subr.bf16.mxu0 0
  %3251 = vmatpush1.bf16.msra.mxu0 %v2374
  %3252 = vmatprep.subr.bf16.mxu0 0
  %3253 = vmatpush1.bf16.msra.mxu0 %v2375
  %3254 = vmatprep.subr.bf16.mxu0 0
  %3255 = vmatpush1.bf16.msra.mxu0 %v2376
  %3256 = vmatprep.subr.bf16.mxu0 0
  %3257 = vmatpush1.bf16.msra.mxu0 %v2377
  %3258 = vmatprep.subr.bf16.mxu0 0
  %3259 = vmatpush1.bf16.msra.mxu0 %v2378
  %3260 = vmatprep.subr.bf16.mxu0 0
  %3261 = vmatpush1.bf16.msra.mxu0 %v2379
  %3262 = vmatprep.subr.bf16.mxu0 0
  %3263 = vmatpush1.bf16.msra.mxu0 %v2380
  %3264 = vmatprep.subr.bf16.mxu0 0
  %3265 = vmatpush1.bf16.msra.mxu0 %v2381
  %3266 = vmatprep.subr.bf16.mxu0 0
  %3267 = vmatpush1.bf16.msra.mxu0 %v2382
  %3268 = vmatprep.subr.bf16.mxu0 0
  %3269 = vmatpush1.bf16.msra.mxu0 %v2383
  %3270 = vmatprep.subr.bf16.mxu0 0
  %3271 = vmatpush1.bf16.msra.mxu0 %v2384
  %3272 = vmatprep.subr.bf16.mxu0 0
  %3273 = vmatpush1.bf16.msra.mxu0 %v2385
  %3274 = vmatprep.mubr.bf16.mxu0 %v593
  %3275 = vmatmul.mubr.bf16.gmra.mrb[0].mxu0 %v592
  %v3276 = vpop.f32.mrb[0].mxu0
  %v3277 = vadd.f32 %v3237, %v3276
  %v3278 = vpop.f32.mrb[0].mxu0
  %v3279 = vpop.f32.mrb[0].mxu0
  %v3280 = vpop.f32.mrb[0].mxu0
  %3281 = vdwg.mxu0
  %3282 = vst [vmem:[%s4] sm:$0xff] %v3277
  // Predicated region
  $region18: #{encoder_forward.9} parent=0 // pred_check
    _
  $region19: #{encoder_forward.9} parent=0 // pred_check_branch
    %3284 = sbr.rel (0) target = $region21
  $region20: #{encoder_forward.9} parent=0 // pred_region
    _
  $region21: #{encoder_forward.9} parent=0 // pred_fallthru
    _
  // Predicated region
  $region22: #{encoder_forward.9} parent=0 // pred_check
    _
  $region23: #{encoder_forward.9} parent=0 // pred_check_branch
    %3286 = sbr.rel (0) target = $region25
  $region24: #{encoder_forward.9} parent=0 // pred_region
    _
  $region25: #{encoder_forward.9} parent=0 // pred_fallthru
    _

</llo_original>
